<compile_context>
chip_gen: v7x
topology: tpu7x:2x2x1
jax: 0.10.0
libtpu: 0.0.40
codegen_flags: <defaults>
</compile_context>

<pallas_src>
import functools

import jax
import jax.numpy as jnp
from jax.experimental import pallas as pl
from jax.experimental.pallas import tpu as pltpu

_LANE = 512            # lane-axis tile width (multiple of 128)
_MAX_BLOCK_ROWS = 1024  # sublane-axis tile (multiple of 8); 1024*512*4B = 2 MB
_NUM_CORES = 2          # leading "parallel" grid axis (megacore split on v7x)


# --------------------------------------------------------------------------
# Pallas kernel: per-core partial sum of |a - b| over (rows, _LANE) slabs
# --------------------------------------------------------------------------
def _l1_sum_kernel(a_ref, b_ref, o_ref, *, block_rows, steps, valid_rows):
    """a_ref/b_ref: (block_rows, _LANE) VMEM input tiles.
    o_ref: (8, _LANE) f32 VMEM output block, resident across the reduction
    axis (same block index for all i) -> acts as the accumulator."""
    c = pl.program_id(0)   # parallel (core) axis
    i = pl.program_id(1)   # arbitrary (reduction) axis

    @pl.when(i == 0)
    def _init():
        o_ref[...] = jnp.zeros_like(o_ref)

    a = a_ref[...].astype(jnp.float32)   # upcast once per tile (bf16-safe on v5e)
    b = b_ref[...].astype(jnp.float32)
    diff = jnp.abs(a - b)                # pure VPU work every step

    # Static check: mask only when the logical 2-core grid over-covers the rows
    # (partial last block and/or clamped duplicate blocks on the second core).
    if _NUM_CORES * steps * block_rows != valid_rows:
        row0 = (c * steps + i) * block_rows
        row_ids = row0 + jax.lax.broadcasted_iota(jnp.int32, diff.shape, 0)
        diff = jnp.where(row_ids < valid_rows, diff, 0.0)

    # Fold (block_rows, LANE) -> (8, LANE) with VPU adds; accumulator stays 16 KB.
    o_ref[...] += diff.reshape(block_rows // 8, 8, _LANE).sum(axis=0)


def _l1_mean_pallas(a, b):
    """mean(|a - b|) over all elements of two same-shaped tensors."""
    n = a.size
    a_flat = a.reshape(-1)               # contiguous -> free reshape, no transpose
    b_flat = b.reshape(-1)

    # Pad only to a (8 * _LANE)-element multiple (rare, tiny; |0-0| = 0 is exact).
    pad = (-n) % (_LANE * 8)
    if pad:
        a_flat = jnp.pad(a_flat, (0, pad))
        b_flat = jnp.pad(b_flat, (0, pad))
    rows = (n + pad) // _LANE            # multiple of 8
    a2 = a_flat.reshape(rows, _LANE)
    b2 = b_flat.reshape(rows, _LANE)

    block_rows = min(_MAX_BLOCK_ROWS, rows)          # multiple of 8, <= rows
    total_blocks = pl.cdiv(rows, block_rows)
    steps = pl.cdiv(total_blocks, _NUM_CORES)        # reduction steps per core
    last_block = total_blocks - 1

    def in_map(c, i):
        # Clamp overflow steps to the last real block; they are fully masked
        # in-kernel via the logical row-id test.
        return (jnp.minimum(c * steps + i, last_block), 0)

    kernel = functools.partial(_l1_sum_kernel, block_rows=block_rows,
                               steps=steps, valid_rows=rows)
    itemsize = jnp.dtype(a2.dtype).itemsize

    partials = pl.pallas_call(
        kernel,
        out_shape=jax.ShapeDtypeStruct((_NUM_CORES * 8, _LANE), jnp.float32),
        grid=(_NUM_CORES, steps),
        in_specs=[
            pl.BlockSpec((block_rows, _LANE), in_map),
            pl.BlockSpec((block_rows, _LANE), in_map),
        ],
        out_specs=pl.BlockSpec((8, _LANE), lambda c, i: (c, 0)),
        compiler_params=pltpu.CompilerParams(
            dimension_semantics=("parallel", "arbitrary")),
        cost_estimate=pl.CostEstimate(
            flops=3 * rows * _LANE,
            transcendentals=0,
            bytes_accessed=2 * rows * _LANE * itemsize
                           + _NUM_CORES * 8 * _LANE * 4),
    )(a2, b2)

    # Tiny (16, 512) final reduce + scale fuses into the surrounding XLA program.
    return jnp.sum(partials) / jnp.float32(n)


# --------------------------------------------------------------------------
# Frozen VGG19-style feature extractor (plain JAX / XLA)
# --------------------------------------------------------------------------
_VGG19_CFG = [
    ("conv", 3, 64), ("out",),                                   # relu1_1
    ("conv", 64, 64), ("pool",),
    ("conv", 64, 128), ("out",),                                 # relu2_1
    ("conv", 128, 128), ("pool",),
    ("conv", 128, 256), ("out",),                                # relu3_1
    ("conv", 256, 256), ("conv", 256, 256), ("conv", 256, 256), ("pool",),
    ("conv", 256, 512), ("out",),                                # relu4_1
    ("conv", 512, 512), ("conv", 512, 512), ("conv", 512, 512), ("pool",),
    ("conv", 512, 512), ("out",),                                # relu5_1
]


def _init_vgg19_params(key):
    params = []
    for entry in _VGG19_CFG:
        if entry[0] == "conv":
            _, cin, cout = entry
            key, k = jax.random.split(key)
            w = jax.random.normal(k, (cout, cin, 3, 3), jnp.float32)
            w = w * jnp.sqrt(2.0 / (cin * 9))
            b = jnp.zeros((cout,), jnp.float32)
            params.append((w, b))
    return params


def _vgg19_features(params, x):
    feats = []
    pi = 0
    h = x
    for entry in _VGG19_CFG:
        if entry[0] == "conv":
            w, b = params[pi]
            pi += 1
            h = jax.lax.conv_general_dilated(
                h, w, window_strides=(1, 1), padding=((1, 1), (1, 1)),
                dimension_numbers=("NCHW", "OIHW", "NCHW"),
                precision=jax.lax.Precision.HIGHEST)
            h = jax.nn.relu(h + b[None, :, None, None])
        elif entry[0] == "pool":
            h = jax.lax.reduce_window(h, -jnp.inf, jax.lax.max,
                                      (1, 1, 2, 2), (1, 1, 2, 2), "VALID")
        else:  # "out"
            feats.append(h)
    return feats


# --------------------------------------------------------------------------
# Whole loss as ONE jitted program: batched VGG pass + 5 Pallas reductions
# --------------------------------------------------------------------------
def _perceptual_loss(params, weights, pred_img, gt_img):
    b = pred_img.shape[0]
    x = jnp.concatenate([pred_img, gt_img], axis=0)   # one conv pass for both
    feats = _vgg19_features(params, x)
    loss = jnp.float32(0.0)
    for k, f in enumerate(feats):
        loss = loss + weights[k] * _l1_mean_pallas(f[:b], f[b:])
    return loss


_perceptual_loss_jit = jax.jit(_perceptual_loss)


# --------------------------------------------------------------------------
# PerceptualLoss module (JAX/Pallas port, forward semantics preserved)
# --------------------------------------------------------------------------
class PerceptualLossPallas:
    def __init__(self, opt=None, subname=""):
        self.opt = opt
        self.weights = [1.0 / 32, 1.0 / 16, 1.0 / 8, 1.0 / 4, 1.0]
        self.subname = subname
        # Frozen backbone (requires_grad=False equivalent).
        self.params = _init_vgg19_params(jax.random.PRNGKey(42))

    def __call__(self, pred_img, gt_img, name="Perceptual"):
        weights = jnp.asarray(self.weights, jnp.float32)
        loss = _perceptual_loss_jit(self.params, weights, pred_img, gt_img)
        return {"Perceptual" + self.subname: loss, "Total Loss": loss}


def _reference_loss(params, weights, pred_img, gt_img):
    """Pure-JAX reference (jnp.mean reductions). Uses the same batched feature
    pass as the module — mathematically identical to the PyTorch module's two
    separate VGG passes, since convolution is independent per batch element."""
    b = pred_img.shape[0]
    feats = _vgg19_features(params, jnp.concatenate([pred_img, gt_img], axis=0))
    loss = jnp.float32(0.0)
    for w, f in zip(weights, feats):
        loss = loss + jnp.float32(w) * jnp.mean(jnp.abs(f[:b] - f[b:]))
    return loss


if __name__ == "__main__":
    key = jax.random.PRNGKey(0)
    k1, k2 = jax.random.split(key)
    # batch=2, channels=3 (RGB), spatial=32x32 (>= 16 so relu5_1 is non-empty)
    pred_img = jax.random.normal(k1, (2, 3, 32, 32), dtype=jnp.float32)
    gt_img = jax.random.normal(k2, (2, 3, 32, 32), dtype=jnp.float32)

    loss_mod = PerceptualLossPallas(opt=None)
    out = loss_mod(pred_img, gt_img)
    jax.block_until_ready(out["Total Loss"])

    ref = _reference_loss(loss_mod.params, loss_mod.weights, pred_img, gt_img)
    assert jnp.allclose(out["Total Loss"], ref, rtol=1e-4, atol=1e-5), (
        out["Total Loss"], ref)
    assert jnp.allclose(out["Perceptual"], out["Total Loss"])

    print("KERNEL_OK")
</pallas_src>

<mosaic_0001>
module attributes {stable_mosaic.version = 11 : i64} {
  func.func @_l1_sum_kernel(%arg0: i32, %arg1: i32, %arg2: memref<32x512xf32, #tpu.memory_space<vmem>>, %arg3: memref<32x512xf32, #tpu.memory_space<vmem>>, %arg4: memref<8x512xf32, #tpu.memory_space<vmem>>) attributes {dimension_semantics = [#tpu.dimension_semantics<parallel>, #tpu.dimension_semantics<arbitrary>], iteration_bounds = array<i64: 2, 1>, scalar_prefetch = 0 : i64, scratch_operands = 0 : i64, tpu.core_type = #tpu.core_type<tc>, window_params = [{transform_indices = @transform_0, window_bounds = array<i64: 32, 512>}, {transform_indices = @transform_1, window_bounds = array<i64: 32, 512>}, {transform_indices = @transform_2, window_bounds = array<i64: 8, 512>}]} {
    %c0_i32 = arith.constant 0 : i32
    %0 = arith.cmpi eq, %arg1, %c0_i32 : i32
    %1 = arith.extui %0 : i1 to i32
    %c0_i32_0 = arith.constant 0 : i32
    %2 = arith.cmpi ne, %1, %c0_i32_0 : i32
    scf.if %2 {
      %cst_10 = arith.constant 0.000000e+00 : f32
      %22 = vector.broadcast %cst_10 : f32 to vector<8x512xf32>
      %c0_11 = arith.constant 0 : index
      %c0_12 = arith.constant 0 : index
      %23 = vector.load %arg4[%c0_11, %c0_12] : memref<8x512xf32, #tpu.memory_space<vmem>>, vector<8x512xf32>
      tpu.vector_store %arg4[%c0_11, %c0_12], %22 {strides = array<i32>} : memref<8x512xf32, #tpu.memory_space<vmem>>, vector<8x512xf32>,
    } else {
    }
    %c0 = arith.constant 0 : index
    %c0_1 = arith.constant 0 : index
    %3 = vector.load %arg2[%c0, %c0_1] : memref<32x512xf32, #tpu.memory_space<vmem>>, vector<32x512xf32>
    %c0_2 = arith.constant 0 : index
    %c0_3 = arith.constant 0 : index
    %4 = vector.load %arg3[%c0_2, %c0_3] : memref<32x512xf32, #tpu.memory_space<vmem>>, vector<32x512xf32>
    %5 = arith.subf %3, %4 : vector<32x512xf32>
    %6 = math.absf %5 : vector<32x512xf32>
    %c1_i32 = arith.constant 1 : i32
    %7 = arith.muli %arg0, %c1_i32 : i32
    %8 = arith.addi %7, %arg1 : i32
    %c32_i32 = arith.constant 32 : i32
    %9 = arith.muli %8, %c32_i32 : i32
    %10 = tpu.iota {dimensions = array<i32: 0>} : vector<32x512xi32>
    %11 = vector.broadcast %9 : i32 to vector<32x512xi32>
    %12 = arith.addi %11, %10 : vector<32x512xi32>
    %c32_i32_4 = arith.constant 32 : i32
    %13 = vector.broadcast %c32_i32_4 : i32 to vector<32x512xi32>
    %14 = arith.cmpi slt, %12, %13 : vector<32x512xi32>
    %cst = arith.constant 0.000000e+00 : f32
    %15 = vector.broadcast %cst : f32 to vector<32x512xf32>
    %16 = arith.select %14, %6, %15 : vector<32x512xi1>, vector<32x512xf32>
    %c0_5 = arith.constant 0 : index
    %c0_6 = arith.constant 0 : index
    %17 = vector.load %arg4[%c0_5, %c0_6] : memref<8x512xf32, #tpu.memory_space<vmem>>, vector<8x512xf32>
    %18 = vector.shape_cast %16 : vector<32x512xf32> to vector<4x8x512xf32>
    %cst_7 = arith.constant dense<0.000000e+00> : vector<8x512xf32>
    %19 = vector.multi_reduction <add>, %18, %cst_7 [0] : vector<4x8x512xf32> to vector<8x512xf32>
    %20 = arith.addf %17, %19 : vector<8x512xf32>
    %c0_8 = arith.constant 0 : index
    %c0_9 = arith.constant 0 : index
    %21 = vector.load %arg4[%c0_8, %c0_9] : memref<8x512xf32, #tpu.memory_space<vmem>>, vector<8x512xf32>
    tpu.vector_store %arg4[%c0_8, %c0_9], %20 {strides = array<i32>} : memref<8x512xf32, #tpu.memory_space<vmem>>, vector<8x512xf32>,
    return
  }
  func.func @transform_0(%arg0: i32, %arg1: i32) -> (i32, i32) {
    %c1_i32 = arith.constant 1 : i32
    %0 = arith.muli %arg0, %c1_i32 : i32
    %1 = arith.addi %0, %arg1 : i32
    %c0_i32 = arith.constant 0 : i32
    %2 = arith.minsi %1, %c0_i32 : i32
    %c0_i32_0 = arith.constant 0 : i32
    %c0_i32_1 = arith.constant 0 : i32
    return %2, %c0_i32_0 : i32, i32
  }
  func.func @transform_1(%arg0: i32, %arg1: i32) -> (i32, i32) {
    %c1_i32 = arith.constant 1 : i32
    %0 = arith.muli %arg0, %c1_i32 : i32
    %1 = arith.addi %0, %arg1 : i32
    %c0_i32 = arith.constant 0 : i32
    %2 = arith.minsi %1, %c0_i32 : i32
    %c0_i32_0 = arith.constant 0 : i32
    %c0_i32_1 = arith.constant 0 : i32
    return %2, %c0_i32_0 : i32, i32
  }
  func.func @transform_2(%arg0: i32, %arg1: i32) -> (i32, i32) {
    %c0_i32 = arith.constant 0 : i32
    %c0_i32_0 = arith.constant 0 : i32
    return %arg0, %c0_i32 : i32, i32
  }
}

module attributes {stable_mosaic.version = 11 : i64} {
  func.func @_l1_sum_kernel(%arg0: i32, %arg1: i32, %arg2: memref<64x512xf32, #tpu.memory_space<vmem>>, %arg3: memref<64x512xf32, #tpu.memory_space<vmem>>, %arg4: memref<8x512xf32, #tpu.memory_space<vmem>>) attributes {dimension_semantics = [#tpu.dimension_semantics<parallel>, #tpu.dimension_semantics<arbitrary>], iteration_bounds = array<i64: 2, 1>, scalar_prefetch = 0 : i64, scratch_operands = 0 : i64, tpu.core_type = #tpu.core_type<tc>, window_params = [{transform_indices = @transform_0, window_bounds = array<i64: 64, 512>}, {transform_indices = @transform_1, window_bounds = array<i64: 64, 512>}, {transform_indices = @transform_2, window_bounds = array<i64: 8, 512>}]} {
    %c0_i32 = arith.constant 0 : i32
    %0 = arith.cmpi eq, %arg1, %c0_i32 : i32
    %1 = arith.extui %0 : i1 to i32
    %c0_i32_0 = arith.constant 0 : i32
    %2 = arith.cmpi ne, %1, %c0_i32_0 : i32
    scf.if %2 {
      %cst_10 = arith.constant 0.000000e+00 : f32
      %22 = vector.broadcast %cst_10 : f32 to vector<8x512xf32>
      %c0_11 = arith.constant 0 : index
      %c0_12 = arith.constant 0 : index
      %23 = vector.load %arg4[%c0_11, %c0_12] : memref<8x512xf32, #tpu.memory_space<vmem>>, vector<8x512xf32>
      tpu.vector_store %arg4[%c0_11, %c0_12], %22 {strides = array<i32>} : memref<8x512xf32, #tpu.memory_space<vmem>>, vector<8x512xf32>,
    } else {
    }
    %c0 = arith.constant 0 : index
    %c0_1 = arith.constant 0 : index
    %3 = vector.load %arg2[%c0, %c0_1] : memref<64x512xf32, #tpu.memory_space<vmem>>, vector<64x512xf32>
    %c0_2 = arith.constant 0 : index
    %c0_3 = arith.constant 0 : index
    %4 = vector.load %arg3[%c0_2, %c0_3] : memref<64x512xf32, #tpu.memory_space<vmem>>, vector<64x512xf32>
    %5 = arith.subf %3, %4 : vector<64x512xf32>
    %6 = math.absf %5 : vector<64x512xf32>
    %c1_i32 = arith.constant 1 : i32
    %7 = arith.muli %arg0, %c1_i32 : i32
    %8 = arith.addi %7, %arg1 : i32
    %c64_i32 = arith.constant 64 : i32
    %9 = arith.muli %8, %c64_i32 : i32
    %10 = tpu.iota {dimensions = array<i32: 0>} : vector<64x512xi32>
    %11 = vector.broadcast %9 : i32 to vector<64x512xi32>
    %12 = arith.addi %11, %10 : vector<64x512xi32>
    %c64_i32_4 = arith.constant 64 : i32
    %13 = vector.broadcast %c64_i32_4 : i32 to vector<64x512xi32>
    %14 = arith.cmpi slt, %12, %13 : vector<64x512xi32>
    %cst = arith.constant 0.000000e+00 : f32
    %15 = vector.broadcast %cst : f32 to vector<64x512xf32>
    %16 = arith.select %14, %6, %15 : vector<64x512xi1>, vector<64x512xf32>
    %c0_5 = arith.constant 0 : index
    %c0_6 = arith.constant 0 : index
    %17 = vector.load %arg4[%c0_5, %c0_6] : memref<8x512xf32, #tpu.memory_space<vmem>>, vector<8x512xf32>
    %18 = vector.shape_cast %16 : vector<64x512xf32> to vector<8x8x512xf32>
    %cst_7 = arith.constant dense<0.000000e+00> : vector<8x512xf32>
    %19 = vector.multi_reduction <add>, %18, %cst_7 [0] : vector<8x8x512xf32> to vector<8x512xf32>
    %20 = arith.addf %17, %19 : vector<8x512xf32>
    %c0_8 = arith.constant 0 : index
    %c0_9 = arith.constant 0 : index
    %21 = vector.load %arg4[%c0_8, %c0_9] : memref<8x512xf32, #tpu.memory_space<vmem>>, vector<8x512xf32>
    tpu.vector_store %arg4[%c0_8, %c0_9], %20 {strides = array<i32>} : memref<8x512xf32, #tpu.memory_space<vmem>>, vector<8x512xf32>,
    return
  }
  func.func @transform_0(%arg0: i32, %arg1: i32) -> (i32, i32) {
    %c1_i32 = arith.constant 1 : i32
    %0 = arith.muli %arg0, %c1_i32 : i32
    %1 = arith.addi %0, %arg1 : i32
    %c0_i32 = arith.constant 0 : i32
    %2 = arith.minsi %1, %c0_i32 : i32
    %c0_i32_0 = arith.constant 0 : i32
    %c0_i32_1 = arith.constant 0 : i32
    return %2, %c0_i32_0 : i32, i32
  }
  func.func @transform_1(%arg0: i32, %arg1: i32) -> (i32, i32) {
    %c1_i32 = arith.constant 1 : i32
    %0 = arith.muli %arg0, %c1_i32 : i32
    %1 = arith.addi %0, %arg1 : i32
    %c0_i32 = arith.constant 0 : i32
    %2 = arith.minsi %1, %c0_i32 : i32
    %c0_i32_0 = arith.constant 0 : i32
    %c0_i32_1 = arith.constant 0 : i32
    return %2, %c0_i32_0 : i32, i32
  }
  func.func @transform_2(%arg0: i32, %arg1: i32) -> (i32, i32) {
    %c0_i32 = arith.constant 0 : i32
    %c0_i32_0 = arith.constant 0 : i32
    return %arg0, %c0_i32 : i32, i32
  }
}

module attributes {stable_mosaic.version = 11 : i64} {
  func.func @_l1_sum_kernel(%arg0: i32, %arg1: i32, %arg2: memref<128x512xf32, #tpu.memory_space<vmem>>, %arg3: memref<128x512xf32, #tpu.memory_space<vmem>>, %arg4: memref<8x512xf32, #tpu.memory_space<vmem>>) attributes {dimension_semantics = [#tpu.dimension_semantics<parallel>, #tpu.dimension_semantics<arbitrary>], iteration_bounds = array<i64: 2, 1>, scalar_prefetch = 0 : i64, scratch_operands = 0 : i64, tpu.core_type = #tpu.core_type<tc>, window_params = [{transform_indices = @transform_0, window_bounds = array<i64: 128, 512>}, {transform_indices = @transform_1, window_bounds = array<i64: 128, 512>}, {transform_indices = @transform_2, window_bounds = array<i64: 8, 512>}]} {
    %c0_i32 = arith.constant 0 : i32
    %0 = arith.cmpi eq, %arg1, %c0_i32 : i32
    %1 = arith.extui %0 : i1 to i32
    %c0_i32_0 = arith.constant 0 : i32
    %2 = arith.cmpi ne, %1, %c0_i32_0 : i32
    scf.if %2 {
      %cst_10 = arith.constant 0.000000e+00 : f32
      %22 = vector.broadcast %cst_10 : f32 to vector<8x512xf32>
      %c0_11 = arith.constant 0 : index
      %c0_12 = arith.constant 0 : index
      %23 = vector.load %arg4[%c0_11, %c0_12] : memref<8x512xf32, #tpu.memory_space<vmem>>, vector<8x512xf32>
      tpu.vector_store %arg4[%c0_11, %c0_12], %22 {strides = array<i32>} : memref<8x512xf32, #tpu.memory_space<vmem>>, vector<8x512xf32>,
    } else {
    }
    %c0 = arith.constant 0 : index
    %c0_1 = arith.constant 0 : index
    %3 = vector.load %arg2[%c0, %c0_1] : memref<128x512xf32, #tpu.memory_space<vmem>>, vector<128x512xf32>
    %c0_2 = arith.constant 0 : index
    %c0_3 = arith.constant 0 : index
    %4 = vector.load %arg3[%c0_2, %c0_3] : memref<128x512xf32, #tpu.memory_space<vmem>>, vector<128x512xf32>
    %5 = arith.subf %3, %4 : vector<128x512xf32>
    %6 = math.absf %5 : vector<128x512xf32>
    %c1_i32 = arith.constant 1 : i32
    %7 = arith.muli %arg0, %c1_i32 : i32
    %8 = arith.addi %7, %arg1 : i32
    %c128_i32 = arith.constant 128 : i32
    %9 = arith.muli %8, %c128_i32 : i32
    %10 = tpu.iota {dimensions = array<i32: 0>} : vector<128x512xi32>
    %11 = vector.broadcast %9 : i32 to vector<128x512xi32>
    %12 = arith.addi %11, %10 : vector<128x512xi32>
    %c128_i32_4 = arith.constant 128 : i32
    %13 = vector.broadcast %c128_i32_4 : i32 to vector<128x512xi32>
    %14 = arith.cmpi slt, %12, %13 : vector<128x512xi32>
    %cst = arith.constant 0.000000e+00 : f32
    %15 = vector.broadcast %cst : f32 to vector<128x512xf32>
    %16 = arith.select %14, %6, %15 : vector<128x512xi1>, vector<128x512xf32>
    %c0_5 = arith.constant 0 : index
    %c0_6 = arith.constant 0 : index
    %17 = vector.load %arg4[%c0_5, %c0_6] : memref<8x512xf32, #tpu.memory_space<vmem>>, vector<8x512xf32>
    %18 = vector.shape_cast %16 : vector<128x512xf32> to vector<16x8x512xf32>
    %cst_7 = arith.constant dense<0.000000e+00> : vector<8x512xf32>
    %19 = vector.multi_reduction <add>, %18, %cst_7 [0] : vector<16x8x512xf32> to vector<8x512xf32>
    %20 = arith.addf %17, %19 : vector<8x512xf32>
    %c0_8 = arith.constant 0 : index
    %c0_9 = arith.constant 0 : index
    %21 = vector.load %arg4[%c0_8, %c0_9] : memref<8x512xf32, #tpu.memory_space<vmem>>, vector<8x512xf32>
    tpu.vector_store %arg4[%c0_8, %c0_9], %20 {strides = array<i32>} : memref<8x512xf32, #tpu.memory_space<vmem>>, vector<8x512xf32>,
    return
  }
  func.func @transform_0(%arg0: i32, %arg1: i32) -> (i32, i32) {
    %c1_i32 = arith.constant 1 : i32
    %0 = arith.muli %arg0, %c1_i32 : i32
    %1 = arith.addi %0, %arg1 : i32
    %c0_i32 = arith.constant 0 : i32
    %2 = arith.minsi %1, %c0_i32 : i32
    %c0_i32_0 = arith.constant 0 : i32
    %c0_i32_1 = arith.constant 0 : i32
    return %2, %c0_i32_0 : i32, i32
  }
  func.func @transform_1(%arg0: i32, %arg1: i32) -> (i32, i32) {
    %c1_i32 = arith.constant 1 : i32
    %0 = arith.muli %arg0, %c1_i32 : i32
    %1 = arith.addi %0, %arg1 : i32
    %c0_i32 = arith.constant 0 : i32
    %2 = arith.minsi %1, %c0_i32 : i32
    %c0_i32_0 = arith.constant 0 : i32
    %c0_i32_1 = arith.constant 0 : i32
    return %2, %c0_i32_0 : i32, i32
  }
  func.func @transform_2(%arg0: i32, %arg1: i32) -> (i32, i32) {
    %c0_i32 = arith.constant 0 : i32
    %c0_i32_0 = arith.constant 0 : i32
    return %arg0, %c0_i32 : i32, i32
  }
}

module attributes {stable_mosaic.version = 11 : i64} {
  func.func @_l1_sum_kernel(%arg0: i32, %arg1: i32, %arg2: memref<256x512xf32, #tpu.memory_space<vmem>>, %arg3: memref<256x512xf32, #tpu.memory_space<vmem>>, %arg4: memref<8x512xf32, #tpu.memory_space<vmem>>) attributes {dimension_semantics = [#tpu.dimension_semantics<parallel>, #tpu.dimension_semantics<arbitrary>], iteration_bounds = array<i64: 2, 1>, scalar_prefetch = 0 : i64, scratch_operands = 0 : i64, tpu.core_type = #tpu.core_type<tc>, window_params = [{transform_indices = @transform_0, window_bounds = array<i64: 256, 512>}, {transform_indices = @transform_1, window_bounds = array<i64: 256, 512>}, {transform_indices = @transform_2, window_bounds = array<i64: 8, 512>}]} {
    %c0_i32 = arith.constant 0 : i32
    %0 = arith.cmpi eq, %arg1, %c0_i32 : i32
    %1 = arith.extui %0 : i1 to i32
    %c0_i32_0 = arith.constant 0 : i32
    %2 = arith.cmpi ne, %1, %c0_i32_0 : i32
    scf.if %2 {
      %cst_10 = arith.constant 0.000000e+00 : f32
      %22 = vector.broadcast %cst_10 : f32 to vector<8x512xf32>
      %c0_11 = arith.constant 0 : index
      %c0_12 = arith.constant 0 : index
      %23 = vector.load %arg4[%c0_11, %c0_12] : memref<8x512xf32, #tpu.memory_space<vmem>>, vector<8x512xf32>
      tpu.vector_store %arg4[%c0_11, %c0_12], %22 {strides = array<i32>} : memref<8x512xf32, #tpu.memory_space<vmem>>, vector<8x512xf32>,
    } else {
    }
    %c0 = arith.constant 0 : index
    %c0_1 = arith.constant 0 : index
    %3 = vector.load %arg2[%c0, %c0_1] : memref<256x512xf32, #tpu.memory_space<vmem>>, vector<256x512xf32>
    %c0_2 = arith.constant 0 : index
    %c0_3 = arith.constant 0 : index
    %4 = vector.load %arg3[%c0_2, %c0_3] : memref<256x512xf32, #tpu.memory_space<vmem>>, vector<256x512xf32>
    %5 = arith.subf %3, %4 : vector<256x512xf32>
    %6 = math.absf %5 : vector<256x512xf32>
    %c1_i32 = arith.constant 1 : i32
    %7 = arith.muli %arg0, %c1_i32 : i32
    %8 = arith.addi %7, %arg1 : i32
    %c256_i32 = arith.constant 256 : i32
    %9 = arith.muli %8, %c256_i32 : i32
    %10 = tpu.iota {dimensions = array<i32: 0>} : vector<256x512xi32>
    %11 = vector.broadcast %9 : i32 to vector<256x512xi32>
    %12 = arith.addi %11, %10 : vector<256x512xi32>
    %c256_i32_4 = arith.constant 256 : i32
    %13 = vector.broadcast %c256_i32_4 : i32 to vector<256x512xi32>
    %14 = arith.cmpi slt, %12, %13 : vector<256x512xi32>
    %cst = arith.constant 0.000000e+00 : f32
    %15 = vector.broadcast %cst : f32 to vector<256x512xf32>
    %16 = arith.select %14, %6, %15 : vector<256x512xi1>, vector<256x512xf32>
    %c0_5 = arith.constant 0 : index
    %c0_6 = arith.constant 0 : index
    %17 = vector.load %arg4[%c0_5, %c0_6] : memref<8x512xf32, #tpu.memory_space<vmem>>, vector<8x512xf32>
    %18 = vector.shape_cast %16 : vector<256x512xf32> to vector<32x8x512xf32>
    %cst_7 = arith.constant dense<0.000000e+00> : vector<8x512xf32>
    %19 = vector.multi_reduction <add>, %18, %cst_7 [0] : vector<32x8x512xf32> to vector<8x512xf32>
    %20 = arith.addf %17, %19 : vector<8x512xf32>
    %c0_8 = arith.constant 0 : index
    %c0_9 = arith.constant 0 : index
    %21 = vector.load %arg4[%c0_8, %c0_9] : memref<8x512xf32, #tpu.memory_space<vmem>>, vector<8x512xf32>
    tpu.vector_store %arg4[%c0_8, %c0_9], %20 {strides = array<i32>} : memref<8x512xf32, #tpu.memory_space<vmem>>, vector<8x512xf32>,
    return
  }
  func.func @transform_0(%arg0: i32, %arg1: i32) -> (i32, i32) {
    %c1_i32 = arith.constant 1 : i32
    %0 = arith.muli %arg0, %c1_i32 : i32
    %1 = arith.addi %0, %arg1 : i32
    %c0_i32 = arith.constant 0 : i32
    %2 = arith.minsi %1, %c0_i32 : i32
    %c0_i32_0 = arith.constant 0 : i32
    %c0_i32_1 = arith.constant 0 : i32
    return %2, %c0_i32_0 : i32, i32
  }
  func.func @transform_1(%arg0: i32, %arg1: i32) -> (i32, i32) {
    %c1_i32 = arith.constant 1 : i32
    %0 = arith.muli %arg0, %c1_i32 : i32
    %1 = arith.addi %0, %arg1 : i32
    %c0_i32 = arith.constant 0 : i32
    %2 = arith.minsi %1, %c0_i32 : i32
    %c0_i32_0 = arith.constant 0 : i32
    %c0_i32_1 = arith.constant 0 : i32
    return %2, %c0_i32_0 : i32, i32
  }
  func.func @transform_2(%arg0: i32, %arg1: i32) -> (i32, i32) {
    %c0_i32 = arith.constant 0 : i32
    %c0_i32_0 = arith.constant 0 : i32
    return %arg0, %c0_i32 : i32, i32
  }
}

module attributes {stable_mosaic.version = 11 : i64} {
  func.func @_l1_sum_kernel(%arg0: i32, %arg1: i32, %arg2: memref<8x512xf32, #tpu.memory_space<vmem>>, %arg3: memref<8x512xf32, #tpu.memory_space<vmem>>, %arg4: memref<8x512xf32, #tpu.memory_space<vmem>>) attributes {dimension_semantics = [#tpu.dimension_semantics<parallel>, #tpu.dimension_semantics<arbitrary>], iteration_bounds = array<i64: 2, 1>, scalar_prefetch = 0 : i64, scratch_operands = 0 : i64, tpu.core_type = #tpu.core_type<tc>, window_params = [{transform_indices = @transform_0, window_bounds = array<i64: 8, 512>}, {transform_indices = @transform_1, window_bounds = array<i64: 8, 512>}, {transform_indices = @transform_2, window_bounds = array<i64: 8, 512>}]} {
    %c0_i32 = arith.constant 0 : i32
    %0 = arith.cmpi eq, %arg1, %c0_i32 : i32
    %1 = arith.extui %0 : i1 to i32
    %c0_i32_0 = arith.constant 0 : i32
    %2 = arith.cmpi ne, %1, %c0_i32_0 : i32
    scf.if %2 {
      %cst_10 = arith.constant 0.000000e+00 : f32
      %22 = vector.broadcast %cst_10 : f32 to vector<8x512xf32>
      %c0_11 = arith.constant 0 : index
      %c0_12 = arith.constant 0 : index
      %23 = vector.load %arg4[%c0_11, %c0_12] : memref<8x512xf32, #tpu.memory_space<vmem>>, vector<8x512xf32>
      tpu.vector_store %arg4[%c0_11, %c0_12], %22 {strides = array<i32>} : memref<8x512xf32, #tpu.memory_space<vmem>>, vector<8x512xf32>,
    } else {
    }
    %c0 = arith.constant 0 : index
    %c0_1 = arith.constant 0 : index
    %3 = vector.load %arg2[%c0, %c0_1] : memref<8x512xf32, #tpu.memory_space<vmem>>, vector<8x512xf32>
    %c0_2 = arith.constant 0 : index
    %c0_3 = arith.constant 0 : index
    %4 = vector.load %arg3[%c0_2, %c0_3] : memref<8x512xf32, #tpu.memory_space<vmem>>, vector<8x512xf32>
    %5 = arith.subf %3, %4 : vector<8x512xf32>
    %6 = math.absf %5 : vector<8x512xf32>
    %c1_i32 = arith.constant 1 : i32
    %7 = arith.muli %arg0, %c1_i32 : i32
    %8 = arith.addi %7, %arg1 : i32
    %c8_i32 = arith.constant 8 : i32
    %9 = arith.muli %8, %c8_i32 : i32
    %10 = tpu.iota {dimensions = array<i32: 0>} : vector<8x512xi32>
    %11 = vector.broadcast %9 : i32 to vector<8x512xi32>
    %12 = arith.addi %11, %10 : vector<8x512xi32>
    %c8_i32_4 = arith.constant 8 : i32
    %13 = vector.broadcast %c8_i32_4 : i32 to vector<8x512xi32>
    %14 = arith.cmpi slt, %12, %13 : vector<8x512xi32>
    %cst = arith.constant 0.000000e+00 : f32
    %15 = vector.broadcast %cst : f32 to vector<8x512xf32>
    %16 = arith.select %14, %6, %15 : vector<8x512xi1>, vector<8x512xf32>
    %c0_5 = arith.constant 0 : index
    %c0_6 = arith.constant 0 : index
    %17 = vector.load %arg4[%c0_5, %c0_6] : memref<8x512xf32, #tpu.memory_space<vmem>>, vector<8x512xf32>
    %18 = vector.shape_cast %16 : vector<8x512xf32> to vector<1x8x512xf32>
    %cst_7 = arith.constant dense<0.000000e+00> : vector<8x512xf32>
    %19 = vector.multi_reduction <add>, %18, %cst_7 [0] : vector<1x8x512xf32> to vector<8x512xf32>
    %20 = arith.addf %17, %19 : vector<8x512xf32>
    %c0_8 = arith.constant 0 : index
    %c0_9 = arith.constant 0 : index
    %21 = vector.load %arg4[%c0_8, %c0_9] : memref<8x512xf32, #tpu.memory_space<vmem>>, vector<8x512xf32>
    tpu.vector_store %arg4[%c0_8, %c0_9], %20 {strides = array<i32>} : memref<8x512xf32, #tpu.memory_space<vmem>>, vector<8x512xf32>,
    return
  }
  func.func @transform_0(%arg0: i32, %arg1: i32) -> (i32, i32) {
    %c1_i32 = arith.constant 1 : i32
    %0 = arith.muli %arg0, %c1_i32 : i32
    %1 = arith.addi %0, %arg1 : i32
    %c0_i32 = arith.constant 0 : i32
    %2 = arith.minsi %1, %c0_i32 : i32
    %c0_i32_0 = arith.constant 0 : i32
    %c0_i32_1 = arith.constant 0 : i32
    return %2, %c0_i32_0 : i32, i32
  }
  func.func @transform_1(%arg0: i32, %arg1: i32) -> (i32, i32) {
    %c1_i32 = arith.constant 1 : i32
    %0 = arith.muli %arg0, %c1_i32 : i32
    %1 = arith.addi %0, %arg1 : i32
    %c0_i32 = arith.constant 0 : i32
    %2 = arith.minsi %1, %c0_i32 : i32
    %c0_i32_0 = arith.constant 0 : i32
    %c0_i32_1 = arith.constant 0 : i32
    return %2, %c0_i32_0 : i32, i32
  }
  func.func @transform_2(%arg0: i32, %arg1: i32) -> (i32, i32) {
    %c0_i32 = arith.constant 0 : i32
    %c0_i32_0 = arith.constant 0 : i32
    return %arg0, %c0_i32 : i32, i32
  }
}

</mosaic_0001>

<llo_original>
// kernel: _perceptual_loss.8
$region0: #{_perceptual_loss.8}
  #allocation0 [shape = 'u32[]', space=smem, size = 0x4, offset = 0x4, fixed_abs, tag = 'smem constant byte address 0x4 - core index']
  #allocation1 [shape = 'u32[144,128]{1,0:T(1,128)}', space=vmem, size = 0x12000, scoped, tag = 'internal scratch']
  %s0 = inlined_call_operand.vmem [shape: f32[32,512], index: 0, kind: input, shape index: {}]
  %s1 = inlined_call_operand.vmem [shape: f32[32,512], index: 1, kind: input, shape index: {}]
  %s2 = inlined_call_operand.vmem [shape: f32[16,512], index: 2, kind: output, shape index: {}]
  %s3 = sld [smem:[#allocation0]]
  $region45: #{_perceptual_loss.8} parent=0
    _
  %s5 = ssub.s32 1, %s3
  %s6 = scalar_select 0, %s5, %s3
  loop: start=0, step=1, limit=4
  $region2: #{_perceptual_loss.8} parent=0 // loop_pre_header
    _
  $region3: #{_perceptual_loss.8} parent=0 // loop_header
    %s8 = sphi 0, %s12
    %p9 = scmp.ge.s32.totalorder %s8, 4
    %s15 = sphi 0, %s27
    %s16 = sphi 0, %s23
    %s17 = sphi 0, %s15
    %s18 = sphi 0, %s16
    %s19 = sphi 0, %s17
    %s20 = sphi 0, %s18
    %s36 = sphi 0, %s38
    %s39 = sphi 0, %s36
    %s40 = sphi 0, %s39
    %s56 = sphi 0, %s40
    %s68 = sphi 0, %s70
    %s71 = sphi 0, %s68
    %s72 = sphi 0, %s71
    %s88 = sphi 0, %s72
    %s94 = sphi 0, %s96
    %s97 = sphi 0, %s94
    %s98 = sphi 0, %s97
    %s114 = sphi 0, %s98
  $region4: #{_perceptual_loss.8} parent=0 // loop_header_branch
    %11 = sbr.rel (%p9) target = $region8
  $region5: #{_perceptual_loss.8} parent=0 // loop_body
    %s13 = ssub.s32 %s8, 1
    %s14 = ssub.s32 %s8, 2
    %s21 = sadd.s32 1, %s16
    %p22 = scmp.ge.s32.totalorder %s21, 1
    %s23 = scalar_select %p22, 0, %s21
    %s24 = sadd.s32 1, %s15
    %s25 = scalar_select %p22, %s24, %s15
    %p26 = scmp.ge.s32.totalorder %s25, 2
    %s27 = scalar_select %p26, 0, %s25
    %s28 = sadd.s32 %s15, %s16
    %p29 = scmp.lt.s32.totalorder %s28, 0
    %s30 = scalar_select %p29, %s28, 0
    %s31 = sadd.s32 %s27, %s23
    %p32 = scmp.lt.s32.totalorder %s31, 0
    %s33 = scalar_select %p32, %s31, 0
    %s34 = ssub.s32 %s30, %s33
    %p35 = scmp.eq.s32.totalorder %s34, 0
    %s37 = sadd.s32 %s36, 1
    %s38 = scalar_select %p35, %s36, %s37
    %p41 = pneg %p35
    %p42 = scmp.eq.s32.totalorder %s8, 1
    %p43 = por %p41, %p42
    %p44 = scmp.ne.s32.totalorder %s36, %s39
    %p45 = scmp.eq.s32.totalorder %s8, 0
    %p46 = por %p44, %p45
    %p47 = scmp.ne.s32.totalorder %s36, %s39
    %p48 = scmp.eq.s32.totalorder %s13, 1
    %p49 = por %p47, %p48
    %p50 = scmp.ne.s32.totalorder %s39, %s40
    %p51 = scmp.eq.s32.totalorder %s13, 0
    %p52 = por %p50, %p51
    %p53 = scmp.ne.s32.totalorder %s39, %s40
    %p54 = scmp.eq.s32.totalorder %s14, 1
    %p55 = por %p53, %p54
    %p57 = scmp.ne.s32.totalorder %s40, %s56
    %p58 = scmp.eq.s32.totalorder %s14, 0
    %p59 = por %p57, %p58
    %s60 = sadd.s32 %s15, %s16
    %p61 = scmp.lt.s32.totalorder %s60, 0
    %s62 = scalar_select %p61, %s60, 0
    %s63 = sadd.s32 %s27, %s23
    %p64 = scmp.lt.s32.totalorder %s63, 0
    %s65 = scalar_select %p64, %s63, 0
    %s66 = ssub.s32 %s62, %s65
    %p67 = scmp.eq.s32.totalorder %s66, 0
    %s69 = sadd.s32 %s68, 1
    %s70 = scalar_select %p67, %s68, %s69
    %p73 = pneg %p67
    %p74 = scmp.eq.s32.totalorder %s8, 1
    %p75 = por %p73, %p74
    %p76 = scmp.ne.s32.totalorder %s68, %s71
    %p77 = scmp.eq.s32.totalorder %s8, 0
    %p78 = por %p76, %p77
    %p79 = scmp.ne.s32.totalorder %s68, %s71
    %p80 = scmp.eq.s32.totalorder %s13, 1
    %p81 = por %p79, %p80
    %p82 = scmp.ne.s32.totalorder %s71, %s72
    %p83 = scmp.eq.s32.totalorder %s13, 0
    %p84 = por %p82, %p83
    %p85 = scmp.ne.s32.totalorder %s71, %s72
    %p86 = scmp.eq.s32.totalorder %s14, 1
    %p87 = por %p85, %p86
    %p89 = scmp.ne.s32.totalorder %s72, %s88
    %p90 = scmp.eq.s32.totalorder %s14, 0
    %p91 = por %p89, %p90
    %s92 = ssub.s32 %s15, %s27
    %p93 = scmp.eq.s32.totalorder %s92, 0
    %s95 = sadd.s32 %s94, 1
    %s96 = scalar_select %p93, %s94, %s95
    %p99 = pneg %p93
    %p100 = scmp.eq.s32.totalorder %s8, 1
    %p101 = por %p99, %p100
    %p102 = scmp.ne.s32.totalorder %s94, %s97
    %p103 = scmp.eq.s32.totalorder %s8, 0
    %p104 = por %p102, %p103
    %p105 = scmp.ne.s32.totalorder %s94, %s97
    %p106 = scmp.eq.s32.totalorder %s13, 1
    %p107 = por %p105, %p106
    %p108 = scmp.ne.s32.totalorder %s97, %s98
    %p109 = scmp.eq.s32.totalorder %s13, 0
    %p110 = por %p108, %p109
    %p111 = scmp.ne.s32.totalorder %s97, %s98
    %p112 = scmp.eq.s32.totalorder %s14, 1
    %p113 = por %p111, %p112
    %p115 = scmp.ne.s32.totalorder %s98, %s114
    %p116 = scmp.eq.s32.totalorder %s14, 0
    %p117 = por %p115, %p116
    %p118 = scmp.le.s32.totalorder 1, %s8
    %p119 = scmp.lt.s32.totalorder %s8, 3
    %p120 = pnand %p118, %p119
    %p121 = pneg %p120
    // Predicated region
    $region9: #{_perceptual_loss.8} parent=5 // pred_check
      _
    $region10: #{_perceptual_loss.8} parent=5 // pred_check_branch
      %123 = sbr.rel (%p120) target = $region12
    $region11: #{_perceptual_loss.8} parent=5 // pred_region
      %s124 = ssub.s32 %s8, 1
    $region12: #{_perceptual_loss.8} parent=5 // pred_fallthru
      _
    %p125 = scmp.lt.s32.totalorder %s8, 2
    // Predicated region
    $region13: #{_perceptual_loss.8} parent=5 // pred_check
      %p126 = pneg %p125
    $region14: #{_perceptual_loss.8} parent=5 // pred_check_branch
      %128 = sbr.rel (%p126) target = $region16
    $region15: #{_perceptual_loss.8} parent=5 // pred_region
      // Predicated region
      $region17: #{_perceptual_loss.8} parent=15 // pred_check
        %p129 = pneg %p46
      $region18: #{_perceptual_loss.8} parent=15 // pred_check_branch
        %131 = sbr.rel (%p129) target = $region20
      $region19: #{_perceptual_loss.8} parent=15 // pred_region
        %s132 = sadd.s32 %s15, %s16
        %p133 = scmp.lt.s32.totalorder %s132, 0
        %s134 = scalar_select %p133, %s132, 0
        %s135 = smul.u32 4, %s134
        %p136 = scmp.lt.s32.totalorder %s135, 3
        %s137 = scalar_select %p136, %s135, 3
        %s138 = smul.addr %s137, 4
        %s139 = smul.addr %s138, 8
        %s140 = scalar_lea.vmem %s0, %s139
        %s141 = sadd.s32 %s15, %s16
        %p142 = scmp.lt.s32.totalorder %s141, 0
        %s143 = scalar_select %p142, %s141, 0
        %s144 = smul.u32 4, %s143
      $region20: #{_perceptual_loss.8} parent=15 // pred_fallthru
        _
      // Predicated region
      $region21: #{_perceptual_loss.8} parent=15 // pred_check
        %p145 = pneg %p78
      $region22: #{_perceptual_loss.8} parent=15 // pred_check_branch
        %147 = sbr.rel (%p145) target = $region24
      $region23: #{_perceptual_loss.8} parent=15 // pred_region
        %s148 = sadd.s32 %s15, %s16
        %p149 = scmp.lt.s32.totalorder %s148, 0
        %s150 = scalar_select %p149, %s148, 0
        %s151 = smul.u32 4, %s150
        %p152 = scmp.lt.s32.totalorder %s151, 3
        %s153 = scalar_select %p152, %s151, 3
        %s154 = smul.addr %s153, 4
        %s155 = smul.addr %s154, 8
        %s156 = scalar_lea.vmem %s1, %s155
        %s157 = sadd.s32 %s15, %s16
        %p158 = scmp.lt.s32.totalorder %s157, 0
        %s159 = scalar_select %p158, %s157, 0
        %s160 = smul.u32 4, %s159
      $region24: #{_perceptual_loss.8} parent=15 // pred_fallthru
        _
    $region16: #{_perceptual_loss.8} parent=5 // pred_fallthru
      _
    %p161 = scmp.le.s32.totalorder 1, %s8
    %p162 = scmp.lt.s32.totalorder %s8, 3
    %p163 = pnand %p161, %p162
    %p164 = pneg %p163
    // Predicated region
    $region25: #{_perceptual_loss.8} parent=5 // pred_check
      _
    $region26: #{_perceptual_loss.8} parent=5 // pred_check_branch
      %166 = sbr.rel (%p163) target = $region28
    $region27: #{_perceptual_loss.8} parent=5 // pred_region
      %s167 = ssub.s32 %s8, 1
      %s168 = sadd.s32 %s17, %s18
      %p169 = scmp.lt.s32.totalorder %s168, 0
      %s170 = scalar_select %p169, %s168, 0
      %s171 = smul.u32 4, %s170
      %p172 = scmp.lt.s32.totalorder %s171, 3
      %s173 = scalar_select %p172, %s171, 3
      %s174 = smul.addr %s173, 4
      %s175 = smul.addr %s174, 8
      %s176 = scalar_lea.vmem %s0, %s175
      %p177 = pneg %p52
      %p178 = pneg %p49
      %s179 = sadd.s32 %s17, %s18
      %p180 = scmp.lt.s32.totalorder %s179, 0
      %s181 = scalar_select %p180, %s179, 0
      %s182 = smul.u32 4, %s181
      %p183 = scmp.lt.s32.totalorder %s182, 3
      %s184 = scalar_select %p183, %s182, 3
      %s185 = smul.addr %s184, 4
      %s186 = smul.addr %s185, 8
      %s187 = scalar_lea.vmem %s1, %s186
      %p188 = pneg %p84
      %p189 = pneg %p81
      %p190 = pneg %p110
      %p191 = pneg %p107
      %p192 = scmp.lt.s32.totalorder %s17, 1
      %s193 = scalar_select %p192, %s17, 1
      %s194 = smul.addr %s193, 4
      %s195 = smul.addr %s194, 8
      %s196 = scalar_lea.vmem %s2, %s195
      %s197 = sadd.s32 %s17, %s18
      %p198 = scmp.lt.s32.totalorder %s197, 0
      %s199 = scalar_select %p198, %s197, 0
      %s200 = smul.u32 4, %s199
      %p201 = scmp.lt.s32.totalorder %s200, 3
      %s202 = scalar_select %p201, %s200, 3
      %s203 = smul.addr %s202, 4
      %s204 = smul.addr %s203, 8
      %s205 = scalar_lea.vmem %s0, %s204
      %s206 = sadd.s32 %s17, %s18
      %p207 = scmp.lt.s32.totalorder %s206, 0
      %s208 = scalar_select %p207, %s206, 0
      %s209 = smul.u32 4, %s208
      %s210 = sadd.s32 %s17, %s18
      %p211 = scmp.lt.s32.totalorder %s210, 0
      %s212 = scalar_select %p211, %s210, 0
      %s213 = smul.u32 4, %s212
      %p214 = scmp.lt.s32.totalorder %s213, 3
      %s215 = scalar_select %p214, %s213, 3
      %s216 = smul.addr %s215, 4
      %s217 = smul.addr %s216, 8
      %s218 = scalar_lea.vmem %s1, %s217
      %s219 = sadd.s32 %s17, %s18
      %p220 = scmp.lt.s32.totalorder %s219, 0
      %s221 = scalar_select %p220, %s219, 0
      %s222 = smul.u32 4, %s221
      %p223 = scmp.lt.s32.totalorder %s17, 1
      %s224 = scalar_select %p223, %s17, 1
      %s225 = smul.addr %s224, 4
      %s226 = smul.addr %s225, 8
      %s227 = scalar_lea.vmem %s2, %s226
      %p228 = scmp.eq.s32.totalorder %s18, 0
      // Predicated region
      $region29: #{_perceptual_loss.8} parent=27 // pred_check
        %p229 = pneg %p228
      $region30: #{_perceptual_loss.8} parent=27 // pred_check_branch
        %231 = sbr.rel (%p229) target = $region32
      $region31: #{_perceptual_loss.8} parent=27 // pred_region
        %232 = vst [vmem:[%s227] sm:$0xff] 0.0
        %233 = vst [vmem:[%s227 + $0x8] sm:$0xff] 0.0
        %234 = vst [vmem:[%s227 + $0x10] sm:$0xff] 0.0
        %235 = vst [vmem:[%s227 + $0x18] sm:$0xff] 0.0
      $region32: #{_perceptual_loss.8} parent=27 // pred_fallthru
        _
      %v236 = vld [vmem:[%s205] sm:$0xff]
      %v237 = vld [vmem:[%s205 + $0x8] sm:$0xff]
      %v238 = vld [vmem:[%s205 + $0x10] sm:$0xff]
      %v239 = vld [vmem:[%s205 + $0x18] sm:$0xff]
      %v240 = vld [vmem:[%s205 + $0x20] sm:$0xff]
      %v241 = vld [vmem:[%s205 + $0x28] sm:$0xff]
      %v242 = vld [vmem:[%s205 + $0x30] sm:$0xff]
      %v243 = vld [vmem:[%s205 + $0x38] sm:$0xff]
      %v244 = vld [vmem:[%s205 + $0x40] sm:$0xff]
      %v245 = vld [vmem:[%s205 + $0x48] sm:$0xff]
      %v246 = vld [vmem:[%s205 + $0x50] sm:$0xff]
      %v247 = vld [vmem:[%s205 + $0x58] sm:$0xff]
      %v248 = vld [vmem:[%s205 + $0x60] sm:$0xff]
      %v249 = vld [vmem:[%s205 + $0x68] sm:$0xff]
      %v250 = vld [vmem:[%s205 + $0x70] sm:$0xff]
      %v251 = vld [vmem:[%s205 + $0x78] sm:$0xff]
      %v252 = vld [vmem:[%s218] sm:$0xff]
      %v253 = vld [vmem:[%s218 + $0x8] sm:$0xff]
      %v254 = vld [vmem:[%s218 + $0x10] sm:$0xff]
      %v255 = vld [vmem:[%s218 + $0x18] sm:$0xff]
      %v256 = vld [vmem:[%s218 + $0x20] sm:$0xff]
      %v257 = vld [vmem:[%s218 + $0x28] sm:$0xff]
      %v258 = vld [vmem:[%s218 + $0x30] sm:$0xff]
      %v259 = vld [vmem:[%s218 + $0x38] sm:$0xff]
      %v260 = vld [vmem:[%s218 + $0x40] sm:$0xff]
      %v261 = vld [vmem:[%s218 + $0x48] sm:$0xff]
      %v262 = vld [vmem:[%s218 + $0x50] sm:$0xff]
      %v263 = vld [vmem:[%s218 + $0x58] sm:$0xff]
      %v264 = vld [vmem:[%s218 + $0x60] sm:$0xff]
      %v265 = vld [vmem:[%s218 + $0x68] sm:$0xff]
      %v266 = vld [vmem:[%s218 + $0x70] sm:$0xff]
      %v267 = vld [vmem:[%s218 + $0x78] sm:$0xff]
      %v268 = vsub.f32 %v236, %v252
      %v269 = vsub.f32 %v237, %v253
      %v270 = vsub.f32 %v238, %v254
      %v271 = vsub.f32 %v239, %v255
      %v272 = vsub.f32 %v240, %v256
      %v273 = vsub.f32 %v241, %v257
      %v274 = vsub.f32 %v242, %v258
      %v275 = vsub.f32 %v243, %v259
      %v276 = vsub.f32 %v244, %v260
      %v277 = vsub.f32 %v245, %v261
      %v278 = vsub.f32 %v246, %v262
      %v279 = vsub.f32 %v247, %v263
      %v280 = vsub.f32 %v248, %v264
      %v281 = vsub.f32 %v249, %v265
      %v282 = vsub.f32 %v250, %v266
      %v283 = vsub.f32 %v251, %v267
      %v284 = vand.u32 2147483647, %v268
      %v285 = vand.u32 2147483647, %v269
      %v286 = vand.u32 2147483647, %v270
      %v287 = vand.u32 2147483647, %v271
      %v288 = vand.u32 2147483647, %v272
      %v289 = vand.u32 2147483647, %v273
      %v290 = vand.u32 2147483647, %v274
      %v291 = vand.u32 2147483647, %v275
      %v292 = vand.u32 2147483647, %v276
      %v293 = vand.u32 2147483647, %v277
      %v294 = vand.u32 2147483647, %v278
      %v295 = vand.u32 2147483647, %v279
      %v296 = vand.u32 2147483647, %v280
      %v297 = vand.u32 2147483647, %v281
      %v298 = vand.u32 2147483647, %v282
      %v299 = vand.u32 2147483647, %v283
      %s300 = sadd.s32 %s17, %s18
      %s301 = smul.u32 %s300, 32
      %v302 = vlaneseq
      %v303 = vshrl.u32 %v302, 7
      %v304 = vadd.s32 %v303, 8
      %v305 = vadd.s32 %v303, 16
      %v306 = vadd.s32 %v303, 24
      %v307 = vstv %s301
      %v308 = vadd.s32 %v307, %v303
      %v309 = vadd.s32 %v307, %v304
      %v310 = vadd.s32 %v307, %v305
      %v311 = vadd.s32 %v307, %v306
      %vm312 = vcmp.lt.s32.totalorder %v308, 32
      %vm313 = vcmp.lt.s32.totalorder %v309, 32
      %vm314 = vcmp.lt.s32.totalorder %v310, 32
      %vm315 = vcmp.lt.s32.totalorder %v311, 32
      %v316 = vsel %vm312, %v284, 0.0
      %v317 = vsel %vm312, %v285, 0.0
      %v318 = vsel %vm312, %v286, 0.0
      %v319 = vsel %vm312, %v287, 0.0
      %v320 = vsel %vm313, %v288, 0.0
      %v321 = vsel %vm313, %v289, 0.0
      %v322 = vsel %vm313, %v290, 0.0
      %v323 = vsel %vm313, %v291, 0.0
      %v324 = vsel %vm314, %v292, 0.0
      %v325 = vsel %vm314, %v293, 0.0
      %v326 = vsel %vm314, %v294, 0.0
      %v327 = vsel %vm314, %v295, 0.0
      %v328 = vsel %vm315, %v296, 0.0
      %v329 = vsel %vm315, %v297, 0.0
      %v330 = vsel %vm315, %v298, 0.0
      %v331 = vsel %vm315, %v299, 0.0
      %v332 = vld [vmem:[%s227] sm:$0xff]
      %v333 = vld [vmem:[%s227 + $0x8] sm:$0xff]
      %v334 = vld [vmem:[%s227 + $0x10] sm:$0xff]
      %v335 = vld [vmem:[%s227 + $0x18] sm:$0xff]
      %v336 = vadd.f32 %v316, %v320
      %v337 = vadd.f32 %v336, %v324
      %v338 = vadd.f32 %v337, %v328
      %v339 = vadd.f32 %v317, %v321
      %v340 = vadd.f32 %v339, %v325
      %v341 = vadd.f32 %v340, %v329
      %v342 = vadd.f32 %v318, %v322
      %v343 = vadd.f32 %v342, %v326
      %v344 = vadd.f32 %v343, %v330
      %v345 = vadd.f32 %v319, %v323
      %v346 = vadd.f32 %v345, %v327
      %v347 = vadd.f32 %v346, %v331
      %v348 = vadd.f32 %v332, %v338
      %v349 = vadd.f32 %v333, %v341
      %v350 = vadd.f32 %v334, %v344
      %v351 = vadd.f32 %v335, %v347
      %352 = vst [vmem:[%s227] sm:$0xff] %v348
      %353 = vst [vmem:[%s227 + $0x8] sm:$0xff] %v349
      %354 = vst [vmem:[%s227 + $0x10] sm:$0xff] %v350
      %355 = vst [vmem:[%s227 + $0x18] sm:$0xff] %v351
      %p356 = scmp.lt.s32.totalorder %s17, 1
      %s357 = scalar_select %p356, %s17, 1
      %s358 = smul.addr %s357, 4
      %s359 = smul.addr %s358, 8
      %s360 = scalar_lea.vmem %s2, %s359
      // Predicated region
      $region33: #{_perceptual_loss.8} parent=27 // pred_check
        %p361 = pneg %p107
      $region34: #{_perceptual_loss.8} parent=27 // pred_check_branch
        %363 = sbr.rel (%p361) target = $region36
      $region35: #{_perceptual_loss.8} parent=27 // pred_region
        _
      $region36: #{_perceptual_loss.8} parent=27 // pred_fallthru
        _
    $region28: #{_perceptual_loss.8} parent=5 // pred_fallthru
      _
    %p364 = scmp.le.s32.totalorder 2, %s8
    // Predicated region
    $region37: #{_perceptual_loss.8} parent=5 // pred_check
      %p365 = pneg %p364
    $region38: #{_perceptual_loss.8} parent=5 // pred_check_branch
      %367 = sbr.rel (%p365) target = $region40
    $region39: #{_perceptual_loss.8} parent=5 // pred_region
      %s368 = ssub.s32 %s8, 2
      // Predicated region
      $region41: #{_perceptual_loss.8} parent=39 // pred_check
        %p369 = pneg %p113
      $region42: #{_perceptual_loss.8} parent=39 // pred_check_branch
        %371 = sbr.rel (%p369) target = $region44
      $region43: #{_perceptual_loss.8} parent=39 // pred_region
        %p372 = scmp.lt.s32.totalorder %s19, 1
        %s373 = scalar_select %p372, %s19, 1
        %s374 = smul.addr %s373, 4
        %s375 = smul.addr %s374, 8
        %s376 = scalar_lea.vmem %s2, %s375
      $region44: #{_perceptual_loss.8} parent=39 // pred_fallthru
        _
    $region40: #{_perceptual_loss.8} parent=5 // pred_fallthru
      _
  $region6: #{_perceptual_loss.8} parent=0 // loop_footer
    %s12 = sadd.s32 1, %s8
  $region7: #{_perceptual_loss.8} parent=0 // loop_footer_branch
    %7 = sbr.rel target = $region3
  $region8: #{_perceptual_loss.8} parent=0 // loop_exit
    _

// kernel: _perceptual_loss.7
$region0: #{_perceptual_loss.7}
  #allocation0 [shape = 'u32[]', space=smem, size = 0x4, offset = 0x4, fixed_abs, tag = 'smem constant byte address 0x4 - core index']
  #allocation1 [shape = 'u32[144,128]{1,0:T(1,128)}', space=vmem, size = 0x12000, scoped, tag = 'internal scratch']
  %s0 = inlined_call_operand.vmem [shape: f32[64,512], index: 0, kind: input, shape index: {}]
  %s1 = inlined_call_operand.vmem [shape: f32[64,512], index: 1, kind: input, shape index: {}]
  %s2 = inlined_call_operand.vmem [shape: f32[16,512], index: 2, kind: output, shape index: {}]
  %s3 = sld [smem:[#allocation0]]
  $region45: #{_perceptual_loss.7} parent=0
    _
  %s5 = ssub.s32 1, %s3
  %s6 = scalar_select 0, %s5, %s3
  loop: start=0, step=1, limit=4
  $region2: #{_perceptual_loss.7} parent=0 // loop_pre_header
    _
  $region3: #{_perceptual_loss.7} parent=0 // loop_header
    %s8 = sphi 0, %s12
    %p9 = scmp.ge.s32.totalorder %s8, 4
    %s15 = sphi 0, %s27
    %s16 = sphi 0, %s23
    %s17 = sphi 0, %s15
    %s18 = sphi 0, %s16
    %s19 = sphi 0, %s17
    %s20 = sphi 0, %s18
    %s36 = sphi 0, %s38
    %s39 = sphi 0, %s36
    %s40 = sphi 0, %s39
    %s56 = sphi 0, %s40
    %s68 = sphi 0, %s70
    %s71 = sphi 0, %s68
    %s72 = sphi 0, %s71
    %s88 = sphi 0, %s72
    %s94 = sphi 0, %s96
    %s97 = sphi 0, %s94
    %s98 = sphi 0, %s97
    %s114 = sphi 0, %s98
  $region4: #{_perceptual_loss.7} parent=0 // loop_header_branch
    %11 = sbr.rel (%p9) target = $region8
  $region5: #{_perceptual_loss.7} parent=0 // loop_body
    %s13 = ssub.s32 %s8, 1
    %s14 = ssub.s32 %s8, 2
    %s21 = sadd.s32 1, %s16
    %p22 = scmp.ge.s32.totalorder %s21, 1
    %s23 = scalar_select %p22, 0, %s21
    %s24 = sadd.s32 1, %s15
    %s25 = scalar_select %p22, %s24, %s15
    %p26 = scmp.ge.s32.totalorder %s25, 2
    %s27 = scalar_select %p26, 0, %s25
    %s28 = sadd.s32 %s15, %s16
    %p29 = scmp.lt.s32.totalorder %s28, 0
    %s30 = scalar_select %p29, %s28, 0
    %s31 = sadd.s32 %s27, %s23
    %p32 = scmp.lt.s32.totalorder %s31, 0
    %s33 = scalar_select %p32, %s31, 0
    %s34 = ssub.s32 %s30, %s33
    %p35 = scmp.eq.s32.totalorder %s34, 0
    %s37 = sadd.s32 %s36, 1
    %s38 = scalar_select %p35, %s36, %s37
    %p41 = pneg %p35
    %p42 = scmp.eq.s32.totalorder %s8, 1
    %p43 = por %p41, %p42
    %p44 = scmp.ne.s32.totalorder %s36, %s39
    %p45 = scmp.eq.s32.totalorder %s8, 0
    %p46 = por %p44, %p45
    %p47 = scmp.ne.s32.totalorder %s36, %s39
    %p48 = scmp.eq.s32.totalorder %s13, 1
    %p49 = por %p47, %p48
    %p50 = scmp.ne.s32.totalorder %s39, %s40
    %p51 = scmp.eq.s32.totalorder %s13, 0
    %p52 = por %p50, %p51
    %p53 = scmp.ne.s32.totalorder %s39, %s40
    %p54 = scmp.eq.s32.totalorder %s14, 1
    %p55 = por %p53, %p54
    %p57 = scmp.ne.s32.totalorder %s40, %s56
    %p58 = scmp.eq.s32.totalorder %s14, 0
    %p59 = por %p57, %p58
    %s60 = sadd.s32 %s15, %s16
    %p61 = scmp.lt.s32.totalorder %s60, 0
    %s62 = scalar_select %p61, %s60, 0
    %s63 = sadd.s32 %s27, %s23
    %p64 = scmp.lt.s32.totalorder %s63, 0
    %s65 = scalar_select %p64, %s63, 0
    %s66 = ssub.s32 %s62, %s65
    %p67 = scmp.eq.s32.totalorder %s66, 0
    %s69 = sadd.s32 %s68, 1
    %s70 = scalar_select %p67, %s68, %s69
    %p73 = pneg %p67
    %p74 = scmp.eq.s32.totalorder %s8, 1
    %p75 = por %p73, %p74
    %p76 = scmp.ne.s32.totalorder %s68, %s71
    %p77 = scmp.eq.s32.totalorder %s8, 0
    %p78 = por %p76, %p77
    %p79 = scmp.ne.s32.totalorder %s68, %s71
    %p80 = scmp.eq.s32.totalorder %s13, 1
    %p81 = por %p79, %p80
    %p82 = scmp.ne.s32.totalorder %s71, %s72
    %p83 = scmp.eq.s32.totalorder %s13, 0
    %p84 = por %p82, %p83
    %p85 = scmp.ne.s32.totalorder %s71, %s72
    %p86 = scmp.eq.s32.totalorder %s14, 1
    %p87 = por %p85, %p86
    %p89 = scmp.ne.s32.totalorder %s72, %s88
    %p90 = scmp.eq.s32.totalorder %s14, 0
    %p91 = por %p89, %p90
    %s92 = ssub.s32 %s15, %s27
    %p93 = scmp.eq.s32.totalorder %s92, 0
    %s95 = sadd.s32 %s94, 1
    %s96 = scalar_select %p93, %s94, %s95
    %p99 = pneg %p93
    %p100 = scmp.eq.s32.totalorder %s8, 1
    %p101 = por %p99, %p100
    %p102 = scmp.ne.s32.totalorder %s94, %s97
    %p103 = scmp.eq.s32.totalorder %s8, 0
    %p104 = por %p102, %p103
    %p105 = scmp.ne.s32.totalorder %s94, %s97
    %p106 = scmp.eq.s32.totalorder %s13, 1
    %p107 = por %p105, %p106
    %p108 = scmp.ne.s32.totalorder %s97, %s98
    %p109 = scmp.eq.s32.totalorder %s13, 0
    %p110 = por %p108, %p109
    %p111 = scmp.ne.s32.totalorder %s97, %s98
    %p112 = scmp.eq.s32.totalorder %s14, 1
    %p113 = por %p111, %p112
    %p115 = scmp.ne.s32.totalorder %s98, %s114
    %p116 = scmp.eq.s32.totalorder %s14, 0
    %p117 = por %p115, %p116
    %p118 = scmp.le.s32.totalorder 1, %s8
    %p119 = scmp.lt.s32.totalorder %s8, 3
    %p120 = pnand %p118, %p119
    %p121 = pneg %p120
    // Predicated region
    $region9: #{_perceptual_loss.7} parent=5 // pred_check
      _
    $region10: #{_perceptual_loss.7} parent=5 // pred_check_branch
      %123 = sbr.rel (%p120) target = $region12
    $region11: #{_perceptual_loss.7} parent=5 // pred_region
      %s124 = ssub.s32 %s8, 1
    $region12: #{_perceptual_loss.7} parent=5 // pred_fallthru
      _
    %p125 = scmp.lt.s32.totalorder %s8, 2
    // Predicated region
    $region13: #{_perceptual_loss.7} parent=5 // pred_check
      %p126 = pneg %p125
    $region14: #{_perceptual_loss.7} parent=5 // pred_check_branch
      %128 = sbr.rel (%p126) target = $region16
    $region15: #{_perceptual_loss.7} parent=5 // pred_region
      // Predicated region
      $region17: #{_perceptual_loss.7} parent=15 // pred_check
        %p129 = pneg %p46
      $region18: #{_perceptual_loss.7} parent=15 // pred_check_branch
        %131 = sbr.rel (%p129) target = $region20
      $region19: #{_perceptual_loss.7} parent=15 // pred_region
        %s132 = sadd.s32 %s15, %s16
        %p133 = scmp.lt.s32.totalorder %s132, 0
        %s134 = scalar_select %p133, %s132, 0
        %s135 = smul.u32 8, %s134
        %p136 = scmp.lt.s32.totalorder %s135, 7
        %s137 = scalar_select %p136, %s135, 7
        %s138 = smul.addr %s137, 4
        %s139 = smul.addr %s138, 8
        %s140 = scalar_lea.vmem %s0, %s139
        %s141 = sadd.s32 %s15, %s16
        %p142 = scmp.lt.s32.totalorder %s141, 0
        %s143 = scalar_select %p142, %s141, 0
        %s144 = smul.u32 8, %s143
      $region20: #{_perceptual_loss.7} parent=15 // pred_fallthru
        _
      // Predicated region
      $region21: #{_perceptual_loss.7} parent=15 // pred_check
        %p145 = pneg %p78
      $region22: #{_perceptual_loss.7} parent=15 // pred_check_branch
        %147 = sbr.rel (%p145) target = $region24
      $region23: #{_perceptual_loss.7} parent=15 // pred_region
        %s148 = sadd.s32 %s15, %s16
        %p149 = scmp.lt.s32.totalorder %s148, 0
        %s150 = scalar_select %p149, %s148, 0
        %s151 = smul.u32 8, %s150
        %p152 = scmp.lt.s32.totalorder %s151, 7
        %s153 = scalar_select %p152, %s151, 7
        %s154 = smul.addr %s153, 4
        %s155 = smul.addr %s154, 8
        %s156 = scalar_lea.vmem %s1, %s155
        %s157 = sadd.s32 %s15, %s16
        %p158 = scmp.lt.s32.totalorder %s157, 0
        %s159 = scalar_select %p158, %s157, 0
        %s160 = smul.u32 8, %s159
      $region24: #{_perceptual_loss.7} parent=15 // pred_fallthru
        _
    $region16: #{_perceptual_loss.7} parent=5 // pred_fallthru
      _
    %p161 = scmp.le.s32.totalorder 1, %s8
    %p162 = scmp.lt.s32.totalorder %s8, 3
    %p163 = pnand %p161, %p162
    %p164 = pneg %p163
    // Predicated region
    $region25: #{_perceptual_loss.7} parent=5 // pred_check
      _
    $region26: #{_perceptual_loss.7} parent=5 // pred_check_branch
      %166 = sbr.rel (%p163) target = $region28
    $region27: #{_perceptual_loss.7} parent=5 // pred_region
      %s167 = ssub.s32 %s8, 1
      %s168 = sadd.s32 %s17, %s18
      %p169 = scmp.lt.s32.totalorder %s168, 0
      %s170 = scalar_select %p169, %s168, 0
      %s171 = smul.u32 8, %s170
      %p172 = scmp.lt.s32.totalorder %s171, 7
      %s173 = scalar_select %p172, %s171, 7
      %s174 = smul.addr %s173, 4
      %s175 = smul.addr %s174, 8
      %s176 = scalar_lea.vmem %s0, %s175
      %p177 = pneg %p52
      %p178 = pneg %p49
      %s179 = sadd.s32 %s17, %s18
      %p180 = scmp.lt.s32.totalorder %s179, 0
      %s181 = scalar_select %p180, %s179, 0
      %s182 = smul.u32 8, %s181
      %p183 = scmp.lt.s32.totalorder %s182, 7
      %s184 = scalar_select %p183, %s182, 7
      %s185 = smul.addr %s184, 4
      %s186 = smul.addr %s185, 8
      %s187 = scalar_lea.vmem %s1, %s186
      %p188 = pneg %p84
      %p189 = pneg %p81
      %p190 = pneg %p110
      %p191 = pneg %p107
      %p192 = scmp.lt.s32.totalorder %s17, 1
      %s193 = scalar_select %p192, %s17, 1
      %s194 = smul.addr %s193, 4
      %s195 = smul.addr %s194, 8
      %s196 = scalar_lea.vmem %s2, %s195
      %s197 = sadd.s32 %s17, %s18
      %p198 = scmp.lt.s32.totalorder %s197, 0
      %s199 = scalar_select %p198, %s197, 0
      %s200 = smul.u32 8, %s199
      %p201 = scmp.lt.s32.totalorder %s200, 7
      %s202 = scalar_select %p201, %s200, 7
      %s203 = smul.addr %s202, 4
      %s204 = smul.addr %s203, 8
      %s205 = scalar_lea.vmem %s0, %s204
      %s206 = sadd.s32 %s17, %s18
      %p207 = scmp.lt.s32.totalorder %s206, 0
      %s208 = scalar_select %p207, %s206, 0
      %s209 = smul.u32 8, %s208
      %s210 = sadd.s32 %s17, %s18
      %p211 = scmp.lt.s32.totalorder %s210, 0
      %s212 = scalar_select %p211, %s210, 0
      %s213 = smul.u32 8, %s212
      %p214 = scmp.lt.s32.totalorder %s213, 7
      %s215 = scalar_select %p214, %s213, 7
      %s216 = smul.addr %s215, 4
      %s217 = smul.addr %s216, 8
      %s218 = scalar_lea.vmem %s1, %s217
      %s219 = sadd.s32 %s17, %s18
      %p220 = scmp.lt.s32.totalorder %s219, 0
      %s221 = scalar_select %p220, %s219, 0
      %s222 = smul.u32 8, %s221
      %p223 = scmp.lt.s32.totalorder %s17, 1
      %s224 = scalar_select %p223, %s17, 1
      %s225 = smul.addr %s224, 4
      %s226 = smul.addr %s225, 8
      %s227 = scalar_lea.vmem %s2, %s226
      %p228 = scmp.eq.s32.totalorder %s18, 0
      // Predicated region
      $region29: #{_perceptual_loss.7} parent=27 // pred_check
        %p229 = pneg %p228
      $region30: #{_perceptual_loss.7} parent=27 // pred_check_branch
        %231 = sbr.rel (%p229) target = $region32
      $region31: #{_perceptual_loss.7} parent=27 // pred_region
        %232 = vst [vmem:[%s227] sm:$0xff] 0.0
        %233 = vst [vmem:[%s227 + $0x8] sm:$0xff] 0.0
        %234 = vst [vmem:[%s227 + $0x10] sm:$0xff] 0.0
        %235 = vst [vmem:[%s227 + $0x18] sm:$0xff] 0.0
      $region32: #{_perceptual_loss.7} parent=27 // pred_fallthru
        _
      %v236 = vld [vmem:[%s205] sm:$0xff]
      %v237 = vld [vmem:[%s205 + $0x8] sm:$0xff]
      %v238 = vld [vmem:[%s205 + $0x10] sm:$0xff]
      %v239 = vld [vmem:[%s205 + $0x18] sm:$0xff]
      %v240 = vld [vmem:[%s205 + $0x20] sm:$0xff]
      %v241 = vld [vmem:[%s205 + $0x28] sm:$0xff]
      %v242 = vld [vmem:[%s205 + $0x30] sm:$0xff]
      %v243 = vld [vmem:[%s205 + $0x38] sm:$0xff]
      %v244 = vld [vmem:[%s205 + $0x40] sm:$0xff]
      %v245 = vld [vmem:[%s205 + $0x48] sm:$0xff]
      %v246 = vld [vmem:[%s205 + $0x50] sm:$0xff]
      %v247 = vld [vmem:[%s205 + $0x58] sm:$0xff]
      %v248 = vld [vmem:[%s205 + $0x60] sm:$0xff]
      %v249 = vld [vmem:[%s205 + $0x68] sm:$0xff]
      %v250 = vld [vmem:[%s205 + $0x70] sm:$0xff]
      %v251 = vld [vmem:[%s205 + $0x78] sm:$0xff]
      %v252 = vld [vmem:[%s205 + $0x80] sm:$0xff]
      %v253 = vld [vmem:[%s205 + $0x88] sm:$0xff]
      %v254 = vld [vmem:[%s205 + $0x90] sm:$0xff]
      %v255 = vld [vmem:[%s205 + $0x98] sm:$0xff]
      %v256 = vld [vmem:[%s205 + $0xa0] sm:$0xff]
      %v257 = vld [vmem:[%s205 + $0xa8] sm:$0xff]
      %v258 = vld [vmem:[%s205 + $0xb0] sm:$0xff]
      %v259 = vld [vmem:[%s205 + $0xb8] sm:$0xff]
      %v260 = vld [vmem:[%s205 + $0xc0] sm:$0xff]
      %v261 = vld [vmem:[%s205 + $0xc8] sm:$0xff]
      %v262 = vld [vmem:[%s205 + $0xd0] sm:$0xff]
      %v263 = vld [vmem:[%s205 + $0xd8] sm:$0xff]
      %v264 = vld [vmem:[%s205 + $0xe0] sm:$0xff]
      %v265 = vld [vmem:[%s205 + $0xe8] sm:$0xff]
      %v266 = vld [vmem:[%s205 + $0xf0] sm:$0xff]
      %v267 = vld [vmem:[%s205 + $0xf8] sm:$0xff]
      %v268 = vld [vmem:[%s218] sm:$0xff]
      %v269 = vld [vmem:[%s218 + $0x8] sm:$0xff]
      %v270 = vld [vmem:[%s218 + $0x10] sm:$0xff]
      %v271 = vld [vmem:[%s218 + $0x18] sm:$0xff]
      %v272 = vld [vmem:[%s218 + $0x20] sm:$0xff]
      %v273 = vld [vmem:[%s218 + $0x28] sm:$0xff]
      %v274 = vld [vmem:[%s218 + $0x30] sm:$0xff]
      %v275 = vld [vmem:[%s218 + $0x38] sm:$0xff]
      %v276 = vld [vmem:[%s218 + $0x40] sm:$0xff]
      %v277 = vld [vmem:[%s218 + $0x48] sm:$0xff]
      %v278 = vld [vmem:[%s218 + $0x50] sm:$0xff]
      %v279 = vld [vmem:[%s218 + $0x58] sm:$0xff]
      %v280 = vld [vmem:[%s218 + $0x60] sm:$0xff]
      %v281 = vld [vmem:[%s218 + $0x68] sm:$0xff]
      %v282 = vld [vmem:[%s218 + $0x70] sm:$0xff]
      %v283 = vld [vmem:[%s218 + $0x78] sm:$0xff]
      %v284 = vld [vmem:[%s218 + $0x80] sm:$0xff]
      %v285 = vld [vmem:[%s218 + $0x88] sm:$0xff]
      %v286 = vld [vmem:[%s218 + $0x90] sm:$0xff]
      %v287 = vld [vmem:[%s218 + $0x98] sm:$0xff]
      %v288 = vld [vmem:[%s218 + $0xa0] sm:$0xff]
      %v289 = vld [vmem:[%s218 + $0xa8] sm:$0xff]
      %v290 = vld [vmem:[%s218 + $0xb0] sm:$0xff]
      %v291 = vld [vmem:[%s218 + $0xb8] sm:$0xff]
      %v292 = vld [vmem:[%s218 + $0xc0] sm:$0xff]
      %v293 = vld [vmem:[%s218 + $0xc8] sm:$0xff]
      %v294 = vld [vmem:[%s218 + $0xd0] sm:$0xff]
      %v295 = vld [vmem:[%s218 + $0xd8] sm:$0xff]
      %v296 = vld [vmem:[%s218 + $0xe0] sm:$0xff]
      %v297 = vld [vmem:[%s218 + $0xe8] sm:$0xff]
      %v298 = vld [vmem:[%s218 + $0xf0] sm:$0xff]
      %v299 = vld [vmem:[%s218 + $0xf8] sm:$0xff]
      %v300 = vsub.f32 %v236, %v268
      %v301 = vsub.f32 %v237, %v269
      %v302 = vsub.f32 %v238, %v270
      %v303 = vsub.f32 %v239, %v271
      %v304 = vsub.f32 %v240, %v272
      %v305 = vsub.f32 %v241, %v273
      %v306 = vsub.f32 %v242, %v274
      %v307 = vsub.f32 %v243, %v275
      %v308 = vsub.f32 %v244, %v276
      %v309 = vsub.f32 %v245, %v277
      %v310 = vsub.f32 %v246, %v278
      %v311 = vsub.f32 %v247, %v279
      %v312 = vsub.f32 %v248, %v280
      %v313 = vsub.f32 %v249, %v281
      %v314 = vsub.f32 %v250, %v282
      %v315 = vsub.f32 %v251, %v283
      %v316 = vsub.f32 %v252, %v284
      %v317 = vsub.f32 %v253, %v285
      %v318 = vsub.f32 %v254, %v286
      %v319 = vsub.f32 %v255, %v287
      %v320 = vsub.f32 %v256, %v288
      %v321 = vsub.f32 %v257, %v289
      %v322 = vsub.f32 %v258, %v290
      %v323 = vsub.f32 %v259, %v291
      %v324 = vsub.f32 %v260, %v292
      %v325 = vsub.f32 %v261, %v293
      %v326 = vsub.f32 %v262, %v294
      %v327 = vsub.f32 %v263, %v295
      %v328 = vsub.f32 %v264, %v296
      %v329 = vsub.f32 %v265, %v297
      %v330 = vsub.f32 %v266, %v298
      %v331 = vsub.f32 %v267, %v299
      %v332 = vand.u32 2147483647, %v300
      %v333 = vand.u32 2147483647, %v301
      %v334 = vand.u32 2147483647, %v302
      %v335 = vand.u32 2147483647, %v303
      %v336 = vand.u32 2147483647, %v304
      %v337 = vand.u32 2147483647, %v305
      %v338 = vand.u32 2147483647, %v306
      %v339 = vand.u32 2147483647, %v307
      %v340 = vand.u32 2147483647, %v308
      %v341 = vand.u32 2147483647, %v309
      %v342 = vand.u32 2147483647, %v310
      %v343 = vand.u32 2147483647, %v311
      %v344 = vand.u32 2147483647, %v312
      %v345 = vand.u32 2147483647, %v313
      %v346 = vand.u32 2147483647, %v314
      %v347 = vand.u32 2147483647, %v315
      %v348 = vand.u32 2147483647, %v316
      %v349 = vand.u32 2147483647, %v317
      %v350 = vand.u32 2147483647, %v318
      %v351 = vand.u32 2147483647, %v319
      %v352 = vand.u32 2147483647, %v320
      %v353 = vand.u32 2147483647, %v321
      %v354 = vand.u32 2147483647, %v322
      %v355 = vand.u32 2147483647, %v323
      %v356 = vand.u32 2147483647, %v324
      %v357 = vand.u32 2147483647, %v325
      %v358 = vand.u32 2147483647, %v326
      %v359 = vand.u32 2147483647, %v327
      %v360 = vand.u32 2147483647, %v328
      %v361 = vand.u32 2147483647, %v329
      %v362 = vand.u32 2147483647, %v330
      %v363 = vand.u32 2147483647, %v331
      %s364 = sadd.s32 %s17, %s18
      %s365 = smul.u32 %s364, 64
      %v366 = vlaneseq
      %v367 = vshrl.u32 %v366, 7
      %v368 = vadd.s32 %v367, 8
      %v369 = vadd.s32 %v367, 16
      %v370 = vadd.s32 %v367, 24
      %v371 = vadd.s32 %v367, 32
      %v372 = vadd.s32 %v367, 40
      %v373 = vadd.s32 %v367, 48
      %v374 = vadd.s32 %v367, 56
      %v375 = vstv %s365
      %v376 = vadd.s32 %v375, %v367
      %v377 = vadd.s32 %v375, %v368
      %v378 = vadd.s32 %v375, %v369
      %v379 = vadd.s32 %v375, %v370
      %v380 = vadd.s32 %v375, %v371
      %v381 = vadd.s32 %v375, %v372
      %v382 = vadd.s32 %v375, %v373
      %v383 = vadd.s32 %v375, %v374
      %vm384 = vcmp.lt.s32.totalorder %v376, 64
      %vm385 = vcmp.lt.s32.totalorder %v377, 64
      %vm386 = vcmp.lt.s32.totalorder %v378, 64
      %vm387 = vcmp.lt.s32.totalorder %v379, 64
      %vm388 = vcmp.lt.s32.totalorder %v380, 64
      %vm389 = vcmp.lt.s32.totalorder %v381, 64
      %vm390 = vcmp.lt.s32.totalorder %v382, 64
      %vm391 = vcmp.lt.s32.totalorder %v383, 64
      %v392 = vsel %vm384, %v332, 0.0
      %v393 = vsel %vm384, %v333, 0.0
      %v394 = vsel %vm384, %v334, 0.0
      %v395 = vsel %vm384, %v335, 0.0
      %v396 = vsel %vm385, %v336, 0.0
      %v397 = vsel %vm385, %v337, 0.0
      %v398 = vsel %vm385, %v338, 0.0
      %v399 = vsel %vm385, %v339, 0.0
      %v400 = vsel %vm386, %v340, 0.0
      %v401 = vsel %vm386, %v341, 0.0
      %v402 = vsel %vm386, %v342, 0.0
      %v403 = vsel %vm386, %v343, 0.0
      %v404 = vsel %vm387, %v344, 0.0
      %v405 = vsel %vm387, %v345, 0.0
      %v406 = vsel %vm387, %v346, 0.0
      %v407 = vsel %vm387, %v347, 0.0
      %v408 = vsel %vm388, %v348, 0.0
      %v409 = vsel %vm388, %v349, 0.0
      %v410 = vsel %vm388, %v350, 0.0
      %v411 = vsel %vm388, %v351, 0.0
      %v412 = vsel %vm389, %v352, 0.0
      %v413 = vsel %vm389, %v353, 0.0
      %v414 = vsel %vm389, %v354, 0.0
      %v415 = vsel %vm389, %v355, 0.0
      %v416 = vsel %vm390, %v356, 0.0
      %v417 = vsel %vm390, %v357, 0.0
      %v418 = vsel %vm390, %v358, 0.0
      %v419 = vsel %vm390, %v359, 0.0
      %v420 = vsel %vm391, %v360, 0.0
      %v421 = vsel %vm391, %v361, 0.0
      %v422 = vsel %vm391, %v362, 0.0
      %v423 = vsel %vm391, %v363, 0.0
      %v424 = vld [vmem:[%s227] sm:$0xff]
      %v425 = vld [vmem:[%s227 + $0x8] sm:$0xff]
      %v426 = vld [vmem:[%s227 + $0x10] sm:$0xff]
      %v427 = vld [vmem:[%s227 + $0x18] sm:$0xff]
      %v428 = vadd.f32 %v392, %v396
      %v429 = vadd.f32 %v428, %v400
      %v430 = vadd.f32 %v429, %v404
      %v431 = vadd.f32 %v430, %v408
      %v432 = vadd.f32 %v431, %v412
      %v433 = vadd.f32 %v432, %v416
      %v434 = vadd.f32 %v433, %v420
      %v435 = vadd.f32 %v393, %v397
      %v436 = vadd.f32 %v435, %v401
      %v437 = vadd.f32 %v436, %v405
      %v438 = vadd.f32 %v437, %v409
      %v439 = vadd.f32 %v438, %v413
      %v440 = vadd.f32 %v439, %v417
      %v441 = vadd.f32 %v440, %v421
      %v442 = vadd.f32 %v394, %v398
      %v443 = vadd.f32 %v442, %v402
      %v444 = vadd.f32 %v443, %v406
      %v445 = vadd.f32 %v444, %v410
      %v446 = vadd.f32 %v445, %v414
      %v447 = vadd.f32 %v446, %v418
      %v448 = vadd.f32 %v447, %v422
      %v449 = vadd.f32 %v395, %v399
      %v450 = vadd.f32 %v449, %v403
      %v451 = vadd.f32 %v450, %v407
      %v452 = vadd.f32 %v451, %v411
      %v453 = vadd.f32 %v452, %v415
      %v454 = vadd.f32 %v453, %v419
      %v455 = vadd.f32 %v454, %v423
      %v456 = vadd.f32 %v424, %v434
      %v457 = vadd.f32 %v425, %v441
      %v458 = vadd.f32 %v426, %v448
      %v459 = vadd.f32 %v427, %v455
      %460 = vst [vmem:[%s227] sm:$0xff] %v456
      %461 = vst [vmem:[%s227 + $0x8] sm:$0xff] %v457
      %462 = vst [vmem:[%s227 + $0x10] sm:$0xff] %v458
      %463 = vst [vmem:[%s227 + $0x18] sm:$0xff] %v459
      %p464 = scmp.lt.s32.totalorder %s17, 1
      %s465 = scalar_select %p464, %s17, 1
      %s466 = smul.addr %s465, 4
      %s467 = smul.addr %s466, 8
      %s468 = scalar_lea.vmem %s2, %s467
      // Predicated region
      $region33: #{_perceptual_loss.7} parent=27 // pred_check
        %p469 = pneg %p107
      $region34: #{_perceptual_loss.7} parent=27 // pred_check_branch
        %471 = sbr.rel (%p469) target = $region36
      $region35: #{_perceptual_loss.7} parent=27 // pred_region
        _
      $region36: #{_perceptual_loss.7} parent=27 // pred_fallthru
        _
    $region28: #{_perceptual_loss.7} parent=5 // pred_fallthru
      _
    %p472 = scmp.le.s32.totalorder 2, %s8
    // Predicated region
    $region37: #{_perceptual_loss.7} parent=5 // pred_check
      %p473 = pneg %p472
    $region38: #{_perceptual_loss.7} parent=5 // pred_check_branch
      %475 = sbr.rel (%p473) target = $region40
    $region39: #{_perceptual_loss.7} parent=5 // pred_region
      %s476 = ssub.s32 %s8, 2
      // Predicated region
      $region41: #{_perceptual_loss.7} parent=39 // pred_check
        %p477 = pneg %p113
      $region42: #{_perceptual_loss.7} parent=39 // pred_check_branch
        %479 = sbr.rel (%p477) target = $region44
      $region43: #{_perceptual_loss.7} parent=39 // pred_region
        %p480 = scmp.lt.s32.totalorder %s19, 1
        %s481 = scalar_select %p480, %s19, 1
        %s482 = smul.addr %s481, 4
        %s483 = smul.addr %s482, 8
        %s484 = scalar_lea.vmem %s2, %s483
      $region44: #{_perceptual_loss.7} parent=39 // pred_fallthru
        _
    $region40: #{_perceptual_loss.7} parent=5 // pred_fallthru
      _
  $region6: #{_perceptual_loss.7} parent=0 // loop_footer
    %s12 = sadd.s32 1, %s8
  $region7: #{_perceptual_loss.7} parent=0 // loop_footer_branch
    %7 = sbr.rel target = $region3
  $region8: #{_perceptual_loss.7} parent=0 // loop_exit
    _

// kernel: _perceptual_loss.6
$region0: #{_perceptual_loss.6}
  #allocation0 [shape = 'u32[]', space=smem, size = 0x4, offset = 0x4, fixed_abs, tag = 'smem constant byte address 0x4 - core index']
  #allocation1 [shape = 'u32[144,128]{1,0:T(1,128)}', space=vmem, size = 0x12000, scoped, tag = 'internal scratch']
  %s0 = inlined_call_operand.vmem [shape: f32[128,512], index: 0, kind: input, shape index: {}]
  %s1 = inlined_call_operand.vmem [shape: f32[128,512], index: 1, kind: input, shape index: {}]
  %s2 = inlined_call_operand.vmem [shape: f32[16,512], index: 2, kind: output, shape index: {}]
  %s3 = sld [smem:[#allocation0]]
  $region45: #{_perceptual_loss.6} parent=0
    _
  %s5 = ssub.s32 1, %s3
  %s6 = scalar_select 0, %s5, %s3
  loop: start=0, step=1, limit=4
  $region2: #{_perceptual_loss.6} parent=0 // loop_pre_header
    _
  $region3: #{_perceptual_loss.6} parent=0 // loop_header
    %s8 = sphi 0, %s12
    %p9 = scmp.ge.s32.totalorder %s8, 4
    %s15 = sphi 0, %s27
    %s16 = sphi 0, %s23
    %s17 = sphi 0, %s15
    %s18 = sphi 0, %s16
    %s19 = sphi 0, %s17
    %s20 = sphi 0, %s18
    %s36 = sphi 0, %s38
    %s39 = sphi 0, %s36
    %s40 = sphi 0, %s39
    %s56 = sphi 0, %s40
    %s68 = sphi 0, %s70
    %s71 = sphi 0, %s68
    %s72 = sphi 0, %s71
    %s88 = sphi 0, %s72
    %s94 = sphi 0, %s96
    %s97 = sphi 0, %s94
    %s98 = sphi 0, %s97
    %s114 = sphi 0, %s98
  $region4: #{_perceptual_loss.6} parent=0 // loop_header_branch
    %11 = sbr.rel (%p9) target = $region8
  $region5: #{_perceptual_loss.6} parent=0 // loop_body
    %s13 = ssub.s32 %s8, 1
    %s14 = ssub.s32 %s8, 2
    %s21 = sadd.s32 1, %s16
    %p22 = scmp.ge.s32.totalorder %s21, 1
    %s23 = scalar_select %p22, 0, %s21
    %s24 = sadd.s32 1, %s15
    %s25 = scalar_select %p22, %s24, %s15
    %p26 = scmp.ge.s32.totalorder %s25, 2
    %s27 = scalar_select %p26, 0, %s25
    %s28 = sadd.s32 %s15, %s16
    %p29 = scmp.lt.s32.totalorder %s28, 0
    %s30 = scalar_select %p29, %s28, 0
    %s31 = sadd.s32 %s27, %s23
    %p32 = scmp.lt.s32.totalorder %s31, 0
    %s33 = scalar_select %p32, %s31, 0
    %s34 = ssub.s32 %s30, %s33
    %p35 = scmp.eq.s32.totalorder %s34, 0
    %s37 = sadd.s32 %s36, 1
    %s38 = scalar_select %p35, %s36, %s37
    %p41 = pneg %p35
    %p42 = scmp.eq.s32.totalorder %s8, 1
    %p43 = por %p41, %p42
    %p44 = scmp.ne.s32.totalorder %s36, %s39
    %p45 = scmp.eq.s32.totalorder %s8, 0
    %p46 = por %p44, %p45
    %p47 = scmp.ne.s32.totalorder %s36, %s39
    %p48 = scmp.eq.s32.totalorder %s13, 1
    %p49 = por %p47, %p48
    %p50 = scmp.ne.s32.totalorder %s39, %s40
    %p51 = scmp.eq.s32.totalorder %s13, 0
    %p52 = por %p50, %p51
    %p53 = scmp.ne.s32.totalorder %s39, %s40
    %p54 = scmp.eq.s32.totalorder %s14, 1
    %p55 = por %p53, %p54
    %p57 = scmp.ne.s32.totalorder %s40, %s56
    %p58 = scmp.eq.s32.totalorder %s14, 0
    %p59 = por %p57, %p58
    %s60 = sadd.s32 %s15, %s16
    %p61 = scmp.lt.s32.totalorder %s60, 0
    %s62 = scalar_select %p61, %s60, 0
    %s63 = sadd.s32 %s27, %s23
    %p64 = scmp.lt.s32.totalorder %s63, 0
    %s65 = scalar_select %p64, %s63, 0
    %s66 = ssub.s32 %s62, %s65
    %p67 = scmp.eq.s32.totalorder %s66, 0
    %s69 = sadd.s32 %s68, 1
    %s70 = scalar_select %p67, %s68, %s69
    %p73 = pneg %p67
    %p74 = scmp.eq.s32.totalorder %s8, 1
    %p75 = por %p73, %p74
    %p76 = scmp.ne.s32.totalorder %s68, %s71
    %p77 = scmp.eq.s32.totalorder %s8, 0
    %p78 = por %p76, %p77
    %p79 = scmp.ne.s32.totalorder %s68, %s71
    %p80 = scmp.eq.s32.totalorder %s13, 1
    %p81 = por %p79, %p80
    %p82 = scmp.ne.s32.totalorder %s71, %s72
    %p83 = scmp.eq.s32.totalorder %s13, 0
    %p84 = por %p82, %p83
    %p85 = scmp.ne.s32.totalorder %s71, %s72
    %p86 = scmp.eq.s32.totalorder %s14, 1
    %p87 = por %p85, %p86
    %p89 = scmp.ne.s32.totalorder %s72, %s88
    %p90 = scmp.eq.s32.totalorder %s14, 0
    %p91 = por %p89, %p90
    %s92 = ssub.s32 %s15, %s27
    %p93 = scmp.eq.s32.totalorder %s92, 0
    %s95 = sadd.s32 %s94, 1
    %s96 = scalar_select %p93, %s94, %s95
    %p99 = pneg %p93
    %p100 = scmp.eq.s32.totalorder %s8, 1
    %p101 = por %p99, %p100
    %p102 = scmp.ne.s32.totalorder %s94, %s97
    %p103 = scmp.eq.s32.totalorder %s8, 0
    %p104 = por %p102, %p103
    %p105 = scmp.ne.s32.totalorder %s94, %s97
    %p106 = scmp.eq.s32.totalorder %s13, 1
    %p107 = por %p105, %p106
    %p108 = scmp.ne.s32.totalorder %s97, %s98
    %p109 = scmp.eq.s32.totalorder %s13, 0
    %p110 = por %p108, %p109
    %p111 = scmp.ne.s32.totalorder %s97, %s98
    %p112 = scmp.eq.s32.totalorder %s14, 1
    %p113 = por %p111, %p112
    %p115 = scmp.ne.s32.totalorder %s98, %s114
    %p116 = scmp.eq.s32.totalorder %s14, 0
    %p117 = por %p115, %p116
    %p118 = scmp.le.s32.totalorder 1, %s8
    %p119 = scmp.lt.s32.totalorder %s8, 3
    %p120 = pnand %p118, %p119
    %p121 = pneg %p120
    // Predicated region
    $region9: #{_perceptual_loss.6} parent=5 // pred_check
      _
    $region10: #{_perceptual_loss.6} parent=5 // pred_check_branch
      %123 = sbr.rel (%p120) target = $region12
    $region11: #{_perceptual_loss.6} parent=5 // pred_region
      %s124 = ssub.s32 %s8, 1
    $region12: #{_perceptual_loss.6} parent=5 // pred_fallthru
      _
    %p125 = scmp.lt.s32.totalorder %s8, 2
    // Predicated region
    $region13: #{_perceptual_loss.6} parent=5 // pred_check
      %p126 = pneg %p125
    $region14: #{_perceptual_loss.6} parent=5 // pred_check_branch
      %128 = sbr.rel (%p126) target = $region16
    $region15: #{_perceptual_loss.6} parent=5 // pred_region
      // Predicated region
      $region17: #{_perceptual_loss.6} parent=15 // pred_check
        %p129 = pneg %p46
      $region18: #{_perceptual_loss.6} parent=15 // pred_check_branch
        %131 = sbr.rel (%p129) target = $region20
      $region19: #{_perceptual_loss.6} parent=15 // pred_region
        %s132 = sadd.s32 %s15, %s16
        %p133 = scmp.lt.s32.totalorder %s132, 0
        %s134 = scalar_select %p133, %s132, 0
        %s135 = smul.u32 16, %s134
        %p136 = scmp.lt.s32.totalorder %s135, 15
        %s137 = scalar_select %p136, %s135, 15
        %s138 = smul.addr %s137, 4
        %s139 = smul.addr %s138, 8
        %s140 = scalar_lea.vmem %s0, %s139
        %s141 = sadd.s32 %s15, %s16
        %p142 = scmp.lt.s32.totalorder %s141, 0
        %s143 = scalar_select %p142, %s141, 0
        %s144 = smul.u32 16, %s143
      $region20: #{_perceptual_loss.6} parent=15 // pred_fallthru
        _
      // Predicated region
      $region21: #{_perceptual_loss.6} parent=15 // pred_check
        %p145 = pneg %p78
      $region22: #{_perceptual_loss.6} parent=15 // pred_check_branch
        %147 = sbr.rel (%p145) target = $region24
      $region23: #{_perceptual_loss.6} parent=15 // pred_region
        %s148 = sadd.s32 %s15, %s16
        %p149 = scmp.lt.s32.totalorder %s148, 0
        %s150 = scalar_select %p149, %s148, 0
        %s151 = smul.u32 16, %s150
        %p152 = scmp.lt.s32.totalorder %s151, 15
        %s153 = scalar_select %p152, %s151, 15
        %s154 = smul.addr %s153, 4
        %s155 = smul.addr %s154, 8
        %s156 = scalar_lea.vmem %s1, %s155
        %s157 = sadd.s32 %s15, %s16
        %p158 = scmp.lt.s32.totalorder %s157, 0
        %s159 = scalar_select %p158, %s157, 0
        %s160 = smul.u32 16, %s159
      $region24: #{_perceptual_loss.6} parent=15 // pred_fallthru
        _
    $region16: #{_perceptual_loss.6} parent=5 // pred_fallthru
      _
    %p161 = scmp.le.s32.totalorder 1, %s8
    %p162 = scmp.lt.s32.totalorder %s8, 3
    %p163 = pnand %p161, %p162
    %p164 = pneg %p163
    // Predicated region
    $region25: #{_perceptual_loss.6} parent=5 // pred_check
      _
    $region26: #{_perceptual_loss.6} parent=5 // pred_check_branch
      %166 = sbr.rel (%p163) target = $region28
    $region27: #{_perceptual_loss.6} parent=5 // pred_region
      %s167 = ssub.s32 %s8, 1
      %s168 = sadd.s32 %s17, %s18
      %p169 = scmp.lt.s32.totalorder %s168, 0
      %s170 = scalar_select %p169, %s168, 0
      %s171 = smul.u32 16, %s170
      %p172 = scmp.lt.s32.totalorder %s171, 15
      %s173 = scalar_select %p172, %s171, 15
      %s174 = smul.addr %s173, 4
      %s175 = smul.addr %s174, 8
      %s176 = scalar_lea.vmem %s0, %s175
      %p177 = pneg %p52
      %p178 = pneg %p49
      %s179 = sadd.s32 %s17, %s18
      %p180 = scmp.lt.s32.totalorder %s179, 0
      %s181 = scalar_select %p180, %s179, 0
      %s182 = smul.u32 16, %s181
      %p183 = scmp.lt.s32.totalorder %s182, 15
      %s184 = scalar_select %p183, %s182, 15
      %s185 = smul.addr %s184, 4
      %s186 = smul.addr %s185, 8
      %s187 = scalar_lea.vmem %s1, %s186
      %p188 = pneg %p84
      %p189 = pneg %p81
      %p190 = pneg %p110
      %p191 = pneg %p107
      %p192 = scmp.lt.s32.totalorder %s17, 1
      %s193 = scalar_select %p192, %s17, 1
      %s194 = smul.addr %s193, 4
      %s195 = smul.addr %s194, 8
      %s196 = scalar_lea.vmem %s2, %s195
      %s197 = sadd.s32 %s17, %s18
      %p198 = scmp.lt.s32.totalorder %s197, 0
      %s199 = scalar_select %p198, %s197, 0
      %s200 = smul.u32 16, %s199
      %p201 = scmp.lt.s32.totalorder %s200, 15
      %s202 = scalar_select %p201, %s200, 15
      %s203 = smul.addr %s202, 4
      %s204 = smul.addr %s203, 8
      %s205 = scalar_lea.vmem %s0, %s204
      %s206 = sadd.s32 %s17, %s18
      %p207 = scmp.lt.s32.totalorder %s206, 0
      %s208 = scalar_select %p207, %s206, 0
      %s209 = smul.u32 16, %s208
      %s210 = sadd.s32 %s17, %s18
      %p211 = scmp.lt.s32.totalorder %s210, 0
      %s212 = scalar_select %p211, %s210, 0
      %s213 = smul.u32 16, %s212
      %p214 = scmp.lt.s32.totalorder %s213, 15
      %s215 = scalar_select %p214, %s213, 15
      %s216 = smul.addr %s215, 4
      %s217 = smul.addr %s216, 8
      %s218 = scalar_lea.vmem %s1, %s217
      %s219 = sadd.s32 %s17, %s18
      %p220 = scmp.lt.s32.totalorder %s219, 0
      %s221 = scalar_select %p220, %s219, 0
      %s222 = smul.u32 16, %s221
      %p223 = scmp.lt.s32.totalorder %s17, 1
      %s224 = scalar_select %p223, %s17, 1
      %s225 = smul.addr %s224, 4
      %s226 = smul.addr %s225, 8
      %s227 = scalar_lea.vmem %s2, %s226
      %p228 = scmp.eq.s32.totalorder %s18, 0
      // Predicated region
      $region29: #{_perceptual_loss.6} parent=27 // pred_check
        %p229 = pneg %p228
      $region30: #{_perceptual_loss.6} parent=27 // pred_check_branch
        %231 = sbr.rel (%p229) target = $region32
      $region31: #{_perceptual_loss.6} parent=27 // pred_region
        %232 = vst [vmem:[%s227] sm:$0xff] 0.0
        %233 = vst [vmem:[%s227 + $0x8] sm:$0xff] 0.0
        %234 = vst [vmem:[%s227 + $0x10] sm:$0xff] 0.0
        %235 = vst [vmem:[%s227 + $0x18] sm:$0xff] 0.0
      $region32: #{_perceptual_loss.6} parent=27 // pred_fallthru
        _
      %v236 = vld [vmem:[%s205] sm:$0xff]
      %v237 = vld [vmem:[%s205 + $0x8] sm:$0xff]
      %v238 = vld [vmem:[%s205 + $0x10] sm:$0xff]
      %v239 = vld [vmem:[%s205 + $0x18] sm:$0xff]
      %v240 = vld [vmem:[%s205 + $0x20] sm:$0xff]
      %v241 = vld [vmem:[%s205 + $0x28] sm:$0xff]
      %v242 = vld [vmem:[%s205 + $0x30] sm:$0xff]
      %v243 = vld [vmem:[%s205 + $0x38] sm:$0xff]
      %v244 = vld [vmem:[%s205 + $0x40] sm:$0xff]
      %v245 = vld [vmem:[%s205 + $0x48] sm:$0xff]
      %v246 = vld [vmem:[%s205 + $0x50] sm:$0xff]
      %v247 = vld [vmem:[%s205 + $0x58] sm:$0xff]
      %v248 = vld [vmem:[%s205 + $0x60] sm:$0xff]
      %v249 = vld [vmem:[%s205 + $0x68] sm:$0xff]
      %v250 = vld [vmem:[%s205 + $0x70] sm:$0xff]
      %v251 = vld [vmem:[%s205 + $0x78] sm:$0xff]
      %v252 = vld [vmem:[%s205 + $0x80] sm:$0xff]
      %v253 = vld [vmem:[%s205 + $0x88] sm:$0xff]
      %v254 = vld [vmem:[%s205 + $0x90] sm:$0xff]
      %v255 = vld [vmem:[%s205 + $0x98] sm:$0xff]
      %v256 = vld [vmem:[%s205 + $0xa0] sm:$0xff]
      %v257 = vld [vmem:[%s205 + $0xa8] sm:$0xff]
      %v258 = vld [vmem:[%s205 + $0xb0] sm:$0xff]
      %v259 = vld [vmem:[%s205 + $0xb8] sm:$0xff]
      %v260 = vld [vmem:[%s205 + $0xc0] sm:$0xff]
      %v261 = vld [vmem:[%s205 + $0xc8] sm:$0xff]
      %v262 = vld [vmem:[%s205 + $0xd0] sm:$0xff]
      %v263 = vld [vmem:[%s205 + $0xd8] sm:$0xff]
      %v264 = vld [vmem:[%s205 + $0xe0] sm:$0xff]
      %v265 = vld [vmem:[%s205 + $0xe8] sm:$0xff]
      %v266 = vld [vmem:[%s205 + $0xf0] sm:$0xff]
      %v267 = vld [vmem:[%s205 + $0xf8] sm:$0xff]
      %v268 = vld [vmem:[%s205 + $0x100] sm:$0xff]
      %v269 = vld [vmem:[%s205 + $0x108] sm:$0xff]
      %v270 = vld [vmem:[%s205 + $0x110] sm:$0xff]
      %v271 = vld [vmem:[%s205 + $0x118] sm:$0xff]
      %v272 = vld [vmem:[%s205 + $0x120] sm:$0xff]
      %v273 = vld [vmem:[%s205 + $0x128] sm:$0xff]
      %v274 = vld [vmem:[%s205 + $0x130] sm:$0xff]
      %v275 = vld [vmem:[%s205 + $0x138] sm:$0xff]
      %v276 = vld [vmem:[%s205 + $0x140] sm:$0xff]
      %v277 = vld [vmem:[%s205 + $0x148] sm:$0xff]
      %v278 = vld [vmem:[%s205 + $0x150] sm:$0xff]
      %v279 = vld [vmem:[%s205 + $0x158] sm:$0xff]
      %v280 = vld [vmem:[%s205 + $0x160] sm:$0xff]
      %v281 = vld [vmem:[%s205 + $0x168] sm:$0xff]
      %v282 = vld [vmem:[%s205 + $0x170] sm:$0xff]
      %v283 = vld [vmem:[%s205 + $0x178] sm:$0xff]
      %v284 = vld [vmem:[%s205 + $0x180] sm:$0xff]
      %v285 = vld [vmem:[%s205 + $0x188] sm:$0xff]
      %v286 = vld [vmem:[%s205 + $0x190] sm:$0xff]
      %v287 = vld [vmem:[%s205 + $0x198] sm:$0xff]
      %v288 = vld [vmem:[%s205 + $0x1a0] sm:$0xff]
      %v289 = vld [vmem:[%s205 + $0x1a8] sm:$0xff]
      %v290 = vld [vmem:[%s205 + $0x1b0] sm:$0xff]
      %v291 = vld [vmem:[%s205 + $0x1b8] sm:$0xff]
      %v292 = vld [vmem:[%s205 + $0x1c0] sm:$0xff]
      %v293 = vld [vmem:[%s205 + $0x1c8] sm:$0xff]
      %v294 = vld [vmem:[%s205 + $0x1d0] sm:$0xff]
      %v295 = vld [vmem:[%s205 + $0x1d8] sm:$0xff]
      %v296 = vld [vmem:[%s205 + $0x1e0] sm:$0xff]
      %v297 = vld [vmem:[%s205 + $0x1e8] sm:$0xff]
      %v298 = vld [vmem:[%s205 + $0x1f0] sm:$0xff]
      %v299 = vld [vmem:[%s205 + $0x1f8] sm:$0xff]
      %v300 = vld [vmem:[%s218] sm:$0xff]
      %v301 = vld [vmem:[%s218 + $0x8] sm:$0xff]
      %v302 = vld [vmem:[%s218 + $0x10] sm:$0xff]
      %v303 = vld [vmem:[%s218 + $0x18] sm:$0xff]
      %v304 = vld [vmem:[%s218 + $0x20] sm:$0xff]
      %v305 = vld [vmem:[%s218 + $0x28] sm:$0xff]
      %v306 = vld [vmem:[%s218 + $0x30] sm:$0xff]
      %v307 = vld [vmem:[%s218 + $0x38] sm:$0xff]
      %v308 = vld [vmem:[%s218 + $0x40] sm:$0xff]
      %v309 = vld [vmem:[%s218 + $0x48] sm:$0xff]
      %v310 = vld [vmem:[%s218 + $0x50] sm:$0xff]
      %v311 = vld [vmem:[%s218 + $0x58] sm:$0xff]
      %v312 = vld [vmem:[%s218 + $0x60] sm:$0xff]
      %v313 = vld [vmem:[%s218 + $0x68] sm:$0xff]
      %v314 = vld [vmem:[%s218 + $0x70] sm:$0xff]
      %v315 = vld [vmem:[%s218 + $0x78] sm:$0xff]
      %v316 = vld [vmem:[%s218 + $0x80] sm:$0xff]
      %v317 = vld [vmem:[%s218 + $0x88] sm:$0xff]
      %v318 = vld [vmem:[%s218 + $0x90] sm:$0xff]
      %v319 = vld [vmem:[%s218 + $0x98] sm:$0xff]
      %v320 = vld [vmem:[%s218 + $0xa0] sm:$0xff]
      %v321 = vld [vmem:[%s218 + $0xa8] sm:$0xff]
      %v322 = vld [vmem:[%s218 + $0xb0] sm:$0xff]
      %v323 = vld [vmem:[%s218 + $0xb8] sm:$0xff]
      %v324 = vld [vmem:[%s218 + $0xc0] sm:$0xff]
      %v325 = vld [vmem:[%s218 + $0xc8] sm:$0xff]
      %v326 = vld [vmem:[%s218 + $0xd0] sm:$0xff]
      %v327 = vld [vmem:[%s218 + $0xd8] sm:$0xff]
      %v328 = vld [vmem:[%s218 + $0xe0] sm:$0xff]
      %v329 = vld [vmem:[%s218 + $0xe8] sm:$0xff]
      %v330 = vld [vmem:[%s218 + $0xf0] sm:$0xff]
      %v331 = vld [vmem:[%s218 + $0xf8] sm:$0xff]
      %v332 = vld [vmem:[%s218 + $0x100] sm:$0xff]
      %v333 = vld [vmem:[%s218 + $0x108] sm:$0xff]
      %v334 = vld [vmem:[%s218 + $0x110] sm:$0xff]
      %v335 = vld [vmem:[%s218 + $0x118] sm:$0xff]
      %v336 = vld [vmem:[%s218 + $0x120] sm:$0xff]
      %v337 = vld [vmem:[%s218 + $0x128] sm:$0xff]
      %v338 = vld [vmem:[%s218 + $0x130] sm:$0xff]
      %v339 = vld [vmem:[%s218 + $0x138] sm:$0xff]
      %v340 = vld [vmem:[%s218 + $0x140] sm:$0xff]
      %v341 = vld [vmem:[%s218 + $0x148] sm:$0xff]
      %v342 = vld [vmem:[%s218 + $0x150] sm:$0xff]
      %v343 = vld [vmem:[%s218 + $0x158] sm:$0xff]
      %v344 = vld [vmem:[%s218 + $0x160] sm:$0xff]
      %v345 = vld [vmem:[%s218 + $0x168] sm:$0xff]
      %v346 = vld [vmem:[%s218 + $0x170] sm:$0xff]
      %v347 = vld [vmem:[%s218 + $0x178] sm:$0xff]
      %v348 = vld [vmem:[%s218 + $0x180] sm:$0xff]
      %v349 = vld [vmem:[%s218 + $0x188] sm:$0xff]
      %v350 = vld [vmem:[%s218 + $0x190] sm:$0xff]
      %v351 = vld [vmem:[%s218 + $0x198] sm:$0xff]
      %v352 = vld [vmem:[%s218 + $0x1a0] sm:$0xff]
      %v353 = vld [vmem:[%s218 + $0x1a8] sm:$0xff]
      %v354 = vld [vmem:[%s218 + $0x1b0] sm:$0xff]
      %v355 = vld [vmem:[%s218 + $0x1b8] sm:$0xff]
      %v356 = vld [vmem:[%s218 + $0x1c0] sm:$0xff]
      %v357 = vld [vmem:[%s218 + $0x1c8] sm:$0xff]
      %v358 = vld [vmem:[%s218 + $0x1d0] sm:$0xff]
      %v359 = vld [vmem:[%s218 + $0x1d8] sm:$0xff]
      %v360 = vld [vmem:[%s218 + $0x1e0] sm:$0xff]
      %v361 = vld [vmem:[%s218 + $0x1e8] sm:$0xff]
      %v362 = vld [vmem:[%s218 + $0x1f0] sm:$0xff]
      %v363 = vld [vmem:[%s218 + $0x1f8] sm:$0xff]
      %v364 = vsub.f32 %v236, %v300
      %v365 = vsub.f32 %v237, %v301
      %v366 = vsub.f32 %v238, %v302
      %v367 = vsub.f32 %v239, %v303
      %v368 = vsub.f32 %v240, %v304
      %v369 = vsub.f32 %v241, %v305
      %v370 = vsub.f32 %v242, %v306
      %v371 = vsub.f32 %v243, %v307
      %v372 = vsub.f32 %v244, %v308
      %v373 = vsub.f32 %v245, %v309
      %v374 = vsub.f32 %v246, %v310
      %v375 = vsub.f32 %v247, %v311
      %v376 = vsub.f32 %v248, %v312
      %v377 = vsub.f32 %v249, %v313
      %v378 = vsub.f32 %v250, %v314
      %v379 = vsub.f32 %v251, %v315
      %v380 = vsub.f32 %v252, %v316
      %v381 = vsub.f32 %v253, %v317
      %v382 = vsub.f32 %v254, %v318
      %v383 = vsub.f32 %v255, %v319
      %v384 = vsub.f32 %v256, %v320
      %v385 = vsub.f32 %v257, %v321
      %v386 = vsub.f32 %v258, %v322
      %v387 = vsub.f32 %v259, %v323
      %v388 = vsub.f32 %v260, %v324
      %v389 = vsub.f32 %v261, %v325
      %v390 = vsub.f32 %v262, %v326
      %v391 = vsub.f32 %v263, %v327
      %v392 = vsub.f32 %v264, %v328
      %v393 = vsub.f32 %v265, %v329
      %v394 = vsub.f32 %v266, %v330
      %v395 = vsub.f32 %v267, %v331
      %v396 = vsub.f32 %v268, %v332
      %v397 = vsub.f32 %v269, %v333
      %v398 = vsub.f32 %v270, %v334
      %v399 = vsub.f32 %v271, %v335
      %v400 = vsub.f32 %v272, %v336
      %v401 = vsub.f32 %v273, %v337
      %v402 = vsub.f32 %v274, %v338
      %v403 = vsub.f32 %v275, %v339
      %v404 = vsub.f32 %v276, %v340
      %v405 = vsub.f32 %v277, %v341
      %v406 = vsub.f32 %v278, %v342
      %v407 = vsub.f32 %v279, %v343
      %v408 = vsub.f32 %v280, %v344
      %v409 = vsub.f32 %v281, %v345
      %v410 = vsub.f32 %v282, %v346
      %v411 = vsub.f32 %v283, %v347
      %v412 = vsub.f32 %v284, %v348
      %v413 = vsub.f32 %v285, %v349
      %v414 = vsub.f32 %v286, %v350
      %v415 = vsub.f32 %v287, %v351
      %v416 = vsub.f32 %v288, %v352
      %v417 = vsub.f32 %v289, %v353
      %v418 = vsub.f32 %v290, %v354
      %v419 = vsub.f32 %v291, %v355
      %v420 = vsub.f32 %v292, %v356
      %v421 = vsub.f32 %v293, %v357
      %v422 = vsub.f32 %v294, %v358
      %v423 = vsub.f32 %v295, %v359
      %v424 = vsub.f32 %v296, %v360
      %v425 = vsub.f32 %v297, %v361
      %v426 = vsub.f32 %v298, %v362
      %v427 = vsub.f32 %v299, %v363
      %v428 = vand.u32 2147483647, %v364
      %v429 = vand.u32 2147483647, %v365
      %v430 = vand.u32 2147483647, %v366
      %v431 = vand.u32 2147483647, %v367
      %v432 = vand.u32 2147483647, %v368
      %v433 = vand.u32 2147483647, %v369
      %v434 = vand.u32 2147483647, %v370
      %v435 = vand.u32 2147483647, %v371
      %v436 = vand.u32 2147483647, %v372
      %v437 = vand.u32 2147483647, %v373
      %v438 = vand.u32 2147483647, %v374
      %v439 = vand.u32 2147483647, %v375
      %v440 = vand.u32 2147483647, %v376
      %v441 = vand.u32 2147483647, %v377
      %v442 = vand.u32 2147483647, %v378
      %v443 = vand.u32 2147483647, %v379
      %v444 = vand.u32 2147483647, %v380
      %v445 = vand.u32 2147483647, %v381
      %v446 = vand.u32 2147483647, %v382
      %v447 = vand.u32 2147483647, %v383
      %v448 = vand.u32 2147483647, %v384
      %v449 = vand.u32 2147483647, %v385
      %v450 = vand.u32 2147483647, %v386
      %v451 = vand.u32 2147483647, %v387
      %v452 = vand.u32 2147483647, %v388
      %v453 = vand.u32 2147483647, %v389
      %v454 = vand.u32 2147483647, %v390
      %v455 = vand.u32 2147483647, %v391
      %v456 = vand.u32 2147483647, %v392
      %v457 = vand.u32 2147483647, %v393
      %v458 = vand.u32 2147483647, %v394
      %v459 = vand.u32 2147483647, %v395
      %v460 = vand.u32 2147483647, %v396
      %v461 = vand.u32 2147483647, %v397
      %v462 = vand.u32 2147483647, %v398
      %v463 = vand.u32 2147483647, %v399
      %v464 = vand.u32 2147483647, %v400
      %v465 = vand.u32 2147483647, %v401
      %v466 = vand.u32 2147483647, %v402
      %v467 = vand.u32 2147483647, %v403
      %v468 = vand.u32 2147483647, %v404
      %v469 = vand.u32 2147483647, %v405
      %v470 = vand.u32 2147483647, %v406
      %v471 = vand.u32 2147483647, %v407
      %v472 = vand.u32 2147483647, %v408
      %v473 = vand.u32 2147483647, %v409
      %v474 = vand.u32 2147483647, %v410
      %v475 = vand.u32 2147483647, %v411
      %v476 = vand.u32 2147483647, %v412
      %v477 = vand.u32 2147483647, %v413
      %v478 = vand.u32 2147483647, %v414
      %v479 = vand.u32 2147483647, %v415
      %v480 = vand.u32 2147483647, %v416
      %v481 = vand.u32 2147483647, %v417
      %v482 = vand.u32 2147483647, %v418
      %v483 = vand.u32 2147483647, %v419
      %v484 = vand.u32 2147483647, %v420
      %v485 = vand.u32 2147483647, %v421
      %v486 = vand.u32 2147483647, %v422
      %v487 = vand.u32 2147483647, %v423
      %v488 = vand.u32 2147483647, %v424
      %v489 = vand.u32 2147483647, %v425
      %v490 = vand.u32 2147483647, %v426
      %v491 = vand.u32 2147483647, %v427
      %s492 = sadd.s32 %s17, %s18
      %s493 = smul.u32 %s492, 128
      %v494 = vlaneseq
      %v495 = vshrl.u32 %v494, 7
      %v496 = vadd.s32 %v495, 8
      %v497 = vadd.s32 %v495, 16
      %v498 = vadd.s32 %v495, 24
      %v499 = vadd.s32 %v495, 32
      %v500 = vadd.s32 %v495, 40
      %v501 = vadd.s32 %v495, 48
      %v502 = vadd.s32 %v495, 56
      %v503 = vadd.s32 %v495, 64
      %v504 = vadd.s32 %v495, 72
      %v505 = vadd.s32 %v495, 80
      %v506 = vadd.s32 %v495, 88
      %v507 = vadd.s32 %v495, 96
      %v508 = vadd.s32 %v495, 104
      %v509 = vadd.s32 %v495, 112
      %v510 = vadd.s32 %v495, 120
      %v511 = vstv %s493
      %v512 = vadd.s32 %v511, %v495
      %v513 = vadd.s32 %v511, %v496
      %v514 = vadd.s32 %v511, %v497
      %v515 = vadd.s32 %v511, %v498
      %v516 = vadd.s32 %v511, %v499
      %v517 = vadd.s32 %v511, %v500
      %v518 = vadd.s32 %v511, %v501
      %v519 = vadd.s32 %v511, %v502
      %v520 = vadd.s32 %v511, %v503
      %v521 = vadd.s32 %v511, %v504
      %v522 = vadd.s32 %v511, %v505
      %v523 = vadd.s32 %v511, %v506
      %v524 = vadd.s32 %v511, %v507
      %v525 = vadd.s32 %v511, %v508
      %v526 = vadd.s32 %v511, %v509
      %v527 = vadd.s32 %v511, %v510
      %vm528 = vcmp.lt.s32.totalorder %v512, 128
      %vm529 = vcmp.lt.s32.totalorder %v513, 128
      %vm530 = vcmp.lt.s32.totalorder %v514, 128
      %vm531 = vcmp.lt.s32.totalorder %v515, 128
      %vm532 = vcmp.lt.s32.totalorder %v516, 128
      %vm533 = vcmp.lt.s32.totalorder %v517, 128
      %vm534 = vcmp.lt.s32.totalorder %v518, 128
      %vm535 = vcmp.lt.s32.totalorder %v519, 128
      %vm536 = vcmp.lt.s32.totalorder %v520, 128
      %vm537 = vcmp.lt.s32.totalorder %v521, 128
      %vm538 = vcmp.lt.s32.totalorder %v522, 128
      %vm539 = vcmp.lt.s32.totalorder %v523, 128
      %vm540 = vcmp.lt.s32.totalorder %v524, 128
      %vm541 = vcmp.lt.s32.totalorder %v525, 128
      %vm542 = vcmp.lt.s32.totalorder %v526, 128
      %vm543 = vcmp.lt.s32.totalorder %v527, 128
      %v544 = vsel %vm528, %v428, 0.0
      %v545 = vsel %vm528, %v429, 0.0
      %v546 = vsel %vm528, %v430, 0.0
      %v547 = vsel %vm528, %v431, 0.0
      %v548 = vsel %vm529, %v432, 0.0
      %v549 = vsel %vm529, %v433, 0.0
      %v550 = vsel %vm529, %v434, 0.0
      %v551 = vsel %vm529, %v435, 0.0
      %v552 = vsel %vm530, %v436, 0.0
      %v553 = vsel %vm530, %v437, 0.0
      %v554 = vsel %vm530, %v438, 0.0
      %v555 = vsel %vm530, %v439, 0.0
      %v556 = vsel %vm531, %v440, 0.0
      %v557 = vsel %vm531, %v441, 0.0
      %v558 = vsel %vm531, %v442, 0.0
      %v559 = vsel %vm531, %v443, 0.0
      %v560 = vsel %vm532, %v444, 0.0
      %v561 = vsel %vm532, %v445, 0.0
      %v562 = vsel %vm532, %v446, 0.0
      %v563 = vsel %vm532, %v447, 0.0
      %v564 = vsel %vm533, %v448, 0.0
      %v565 = vsel %vm533, %v449, 0.0
      %v566 = vsel %vm533, %v450, 0.0
      %v567 = vsel %vm533, %v451, 0.0
      %v568 = vsel %vm534, %v452, 0.0
      %v569 = vsel %vm534, %v453, 0.0
      %v570 = vsel %vm534, %v454, 0.0
      %v571 = vsel %vm534, %v455, 0.0
      %v572 = vsel %vm535, %v456, 0.0
      %v573 = vsel %vm535, %v457, 0.0
      %v574 = vsel %vm535, %v458, 0.0
      %v575 = vsel %vm535, %v459, 0.0
      %v576 = vsel %vm536, %v460, 0.0
      %v577 = vsel %vm536, %v461, 0.0
      %v578 = vsel %vm536, %v462, 0.0
      %v579 = vsel %vm536, %v463, 0.0
      %v580 = vsel %vm537, %v464, 0.0
      %v581 = vsel %vm537, %v465, 0.0
      %v582 = vsel %vm537, %v466, 0.0
      %v583 = vsel %vm537, %v467, 0.0
      %v584 = vsel %vm538, %v468, 0.0
      %v585 = vsel %vm538, %v469, 0.0
      %v586 = vsel %vm538, %v470, 0.0
      %v587 = vsel %vm538, %v471, 0.0
      %v588 = vsel %vm539, %v472, 0.0
      %v589 = vsel %vm539, %v473, 0.0
      %v590 = vsel %vm539, %v474, 0.0
      %v591 = vsel %vm539, %v475, 0.0
      %v592 = vsel %vm540, %v476, 0.0
      %v593 = vsel %vm540, %v477, 0.0
      %v594 = vsel %vm540, %v478, 0.0
      %v595 = vsel %vm540, %v479, 0.0
      %v596 = vsel %vm541, %v480, 0.0
      %v597 = vsel %vm541, %v481, 0.0
      %v598 = vsel %vm541, %v482, 0.0
      %v599 = vsel %vm541, %v483, 0.0
      %v600 = vsel %vm542, %v484, 0.0
      %v601 = vsel %vm542, %v485, 0.0
      %v602 = vsel %vm542, %v486, 0.0
      %v603 = vsel %vm542, %v487, 0.0
      %v604 = vsel %vm543, %v488, 0.0
      %v605 = vsel %vm543, %v489, 0.0
      %v606 = vsel %vm543, %v490, 0.0
      %v607 = vsel %vm543, %v491, 0.0
      %v608 = vld [vmem:[%s227] sm:$0xff]
      %v609 = vld [vmem:[%s227 + $0x8] sm:$0xff]
      %v610 = vld [vmem:[%s227 + $0x10] sm:$0xff]
      %v611 = vld [vmem:[%s227 + $0x18] sm:$0xff]
      %v612 = vadd.f32 %v544, %v548
      %v613 = vadd.f32 %v612, %v552
      %v614 = vadd.f32 %v613, %v556
      %v615 = vadd.f32 %v614, %v560
      %v616 = vadd.f32 %v615, %v564
      %v617 = vadd.f32 %v616, %v568
      %v618 = vadd.f32 %v617, %v572
      %v619 = vadd.f32 %v618, %v576
      %v620 = vadd.f32 %v619, %v580
      %v621 = vadd.f32 %v620, %v584
      %v622 = vadd.f32 %v621, %v588
      %v623 = vadd.f32 %v622, %v592
      %v624 = vadd.f32 %v623, %v596
      %v625 = vadd.f32 %v624, %v600
      %v626 = vadd.f32 %v625, %v604
      %v627 = vadd.f32 %v545, %v549
      %v628 = vadd.f32 %v627, %v553
      %v629 = vadd.f32 %v628, %v557
      %v630 = vadd.f32 %v629, %v561
      %v631 = vadd.f32 %v630, %v565
      %v632 = vadd.f32 %v631, %v569
      %v633 = vadd.f32 %v632, %v573
      %v634 = vadd.f32 %v633, %v577
      %v635 = vadd.f32 %v634, %v581
      %v636 = vadd.f32 %v635, %v585
      %v637 = vadd.f32 %v636, %v589
      %v638 = vadd.f32 %v637, %v593
      %v639 = vadd.f32 %v638, %v597
      %v640 = vadd.f32 %v639, %v601
      %v641 = vadd.f32 %v640, %v605
      %v642 = vadd.f32 %v546, %v550
      %v643 = vadd.f32 %v642, %v554
      %v644 = vadd.f32 %v643, %v558
      %v645 = vadd.f32 %v644, %v562
      %v646 = vadd.f32 %v645, %v566
      %v647 = vadd.f32 %v646, %v570
      %v648 = vadd.f32 %v647, %v574
      %v649 = vadd.f32 %v648, %v578
      %v650 = vadd.f32 %v649, %v582
      %v651 = vadd.f32 %v650, %v586
      %v652 = vadd.f32 %v651, %v590
      %v653 = vadd.f32 %v652, %v594
      %v654 = vadd.f32 %v653, %v598
      %v655 = vadd.f32 %v654, %v602
      %v656 = vadd.f32 %v655, %v606
      %v657 = vadd.f32 %v547, %v551
      %v658 = vadd.f32 %v657, %v555
      %v659 = vadd.f32 %v658, %v559
      %v660 = vadd.f32 %v659, %v563
      %v661 = vadd.f32 %v660, %v567
      %v662 = vadd.f32 %v661, %v571
      %v663 = vadd.f32 %v662, %v575
      %v664 = vadd.f32 %v663, %v579
      %v665 = vadd.f32 %v664, %v583
      %v666 = vadd.f32 %v665, %v587
      %v667 = vadd.f32 %v666, %v591
      %v668 = vadd.f32 %v667, %v595
      %v669 = vadd.f32 %v668, %v599
      %v670 = vadd.f32 %v669, %v603
      %v671 = vadd.f32 %v670, %v607
      %v672 = vadd.f32 %v608, %v626
      %v673 = vadd.f32 %v609, %v641
      %v674 = vadd.f32 %v610, %v656
      %v675 = vadd.f32 %v611, %v671
      %676 = vst [vmem:[%s227] sm:$0xff] %v672
      %677 = vst [vmem:[%s227 + $0x8] sm:$0xff] %v673
      %678 = vst [vmem:[%s227 + $0x10] sm:$0xff] %v674
      %679 = vst [vmem:[%s227 + $0x18] sm:$0xff] %v675
      %p680 = scmp.lt.s32.totalorder %s17, 1
      %s681 = scalar_select %p680, %s17, 1
      %s682 = smul.addr %s681, 4
      %s683 = smul.addr %s682, 8
      %s684 = scalar_lea.vmem %s2, %s683
      // Predicated region
      $region33: #{_perceptual_loss.6} parent=27 // pred_check
        %p685 = pneg %p107
      $region34: #{_perceptual_loss.6} parent=27 // pred_check_branch
        %687 = sbr.rel (%p685) target = $region36
      $region35: #{_perceptual_loss.6} parent=27 // pred_region
        _
      $region36: #{_perceptual_loss.6} parent=27 // pred_fallthru
        _
    $region28: #{_perceptual_loss.6} parent=5 // pred_fallthru
      _
    %p688 = scmp.le.s32.totalorder 2, %s8
    // Predicated region
    $region37: #{_perceptual_loss.6} parent=5 // pred_check
      %p689 = pneg %p688
    $region38: #{_perceptual_loss.6} parent=5 // pred_check_branch
      %691 = sbr.rel (%p689) target = $region40
    $region39: #{_perceptual_loss.6} parent=5 // pred_region
      %s692 = ssub.s32 %s8, 2
      // Predicated region
      $region41: #{_perceptual_loss.6} parent=39 // pred_check
        %p693 = pneg %p113
      $region42: #{_perceptual_loss.6} parent=39 // pred_check_branch
        %695 = sbr.rel (%p693) target = $region44
      $region43: #{_perceptual_loss.6} parent=39 // pred_region
        %p696 = scmp.lt.s32.totalorder %s19, 1
        %s697 = scalar_select %p696, %s19, 1
        %s698 = smul.addr %s697, 4
        %s699 = smul.addr %s698, 8
        %s700 = scalar_lea.vmem %s2, %s699
      $region44: #{_perceptual_loss.6} parent=39 // pred_fallthru
        _
    $region40: #{_perceptual_loss.6} parent=5 // pred_fallthru
      _
  $region6: #{_perceptual_loss.6} parent=0 // loop_footer
    %s12 = sadd.s32 1, %s8
  $region7: #{_perceptual_loss.6} parent=0 // loop_footer_branch
    %7 = sbr.rel target = $region3
  $region8: #{_perceptual_loss.6} parent=0 // loop_exit
    _

// kernel: _perceptual_loss.5
$region0: #{_perceptual_loss.5}
  #allocation0 [shape = 'u32[]', space=smem, size = 0x4, offset = 0x4, fixed_abs, tag = 'smem constant byte address 0x4 - core index']
  #allocation1 [shape = 'u32[144,128]{1,0:T(1,128)}', space=vmem, size = 0x12000, scoped, tag = 'internal scratch']
  %s0 = inlined_call_operand.vmem [shape: f32[256,512], index: 0, kind: input, shape index: {}]
  %s1 = inlined_call_operand.vmem [shape: f32[256,512], index: 1, kind: input, shape index: {}]
  %s2 = inlined_call_operand.vmem [shape: f32[16,512], index: 2, kind: output, shape index: {}]
  %s3 = sld [smem:[#allocation0]]
  $region45: #{_perceptual_loss.5} parent=0
    _
  %s5 = ssub.s32 1, %s3
  %s6 = scalar_select 0, %s5, %s3
  loop: start=0, step=1, limit=4
  $region2: #{_perceptual_loss.5} parent=0 // loop_pre_header
    _
  $region3: #{_perceptual_loss.5} parent=0 // loop_header
    %s8 = sphi 0, %s12
    %p9 = scmp.ge.s32.totalorder %s8, 4
    %s15 = sphi 0, %s27
    %s16 = sphi 0, %s23
    %s17 = sphi 0, %s15
    %s18 = sphi 0, %s16
    %s19 = sphi 0, %s17
    %s20 = sphi 0, %s18
    %s36 = sphi 0, %s38
    %s39 = sphi 0, %s36
    %s40 = sphi 0, %s39
    %s56 = sphi 0, %s40
    %s68 = sphi 0, %s70
    %s71 = sphi 0, %s68
    %s72 = sphi 0, %s71
    %s88 = sphi 0, %s72
    %s94 = sphi 0, %s96
    %s97 = sphi 0, %s94
    %s98 = sphi 0, %s97
    %s114 = sphi 0, %s98
  $region4: #{_perceptual_loss.5} parent=0 // loop_header_branch
    %11 = sbr.rel (%p9) target = $region8
  $region5: #{_perceptual_loss.5} parent=0 // loop_body
    %s13 = ssub.s32 %s8, 1
    %s14 = ssub.s32 %s8, 2
    %s21 = sadd.s32 1, %s16
    %p22 = scmp.ge.s32.totalorder %s21, 1
    %s23 = scalar_select %p22, 0, %s21
    %s24 = sadd.s32 1, %s15
    %s25 = scalar_select %p22, %s24, %s15
    %p26 = scmp.ge.s32.totalorder %s25, 2
    %s27 = scalar_select %p26, 0, %s25
    %s28 = sadd.s32 %s15, %s16
    %p29 = scmp.lt.s32.totalorder %s28, 0
    %s30 = scalar_select %p29, %s28, 0
    %s31 = sadd.s32 %s27, %s23
    %p32 = scmp.lt.s32.totalorder %s31, 0
    %s33 = scalar_select %p32, %s31, 0
    %s34 = ssub.s32 %s30, %s33
    %p35 = scmp.eq.s32.totalorder %s34, 0
    %s37 = sadd.s32 %s36, 1
    %s38 = scalar_select %p35, %s36, %s37
    %p41 = pneg %p35
    %p42 = scmp.eq.s32.totalorder %s8, 1
    %p43 = por %p41, %p42
    %p44 = scmp.ne.s32.totalorder %s36, %s39
    %p45 = scmp.eq.s32.totalorder %s8, 0
    %p46 = por %p44, %p45
    %p47 = scmp.ne.s32.totalorder %s36, %s39
    %p48 = scmp.eq.s32.totalorder %s13, 1
    %p49 = por %p47, %p48
    %p50 = scmp.ne.s32.totalorder %s39, %s40
    %p51 = scmp.eq.s32.totalorder %s13, 0
    %p52 = por %p50, %p51
    %p53 = scmp.ne.s32.totalorder %s39, %s40
    %p54 = scmp.eq.s32.totalorder %s14, 1
    %p55 = por %p53, %p54
    %p57 = scmp.ne.s32.totalorder %s40, %s56
    %p58 = scmp.eq.s32.totalorder %s14, 0
    %p59 = por %p57, %p58
    %s60 = sadd.s32 %s15, %s16
    %p61 = scmp.lt.s32.totalorder %s60, 0
    %s62 = scalar_select %p61, %s60, 0
    %s63 = sadd.s32 %s27, %s23
    %p64 = scmp.lt.s32.totalorder %s63, 0
    %s65 = scalar_select %p64, %s63, 0
    %s66 = ssub.s32 %s62, %s65
    %p67 = scmp.eq.s32.totalorder %s66, 0
    %s69 = sadd.s32 %s68, 1
    %s70 = scalar_select %p67, %s68, %s69
    %p73 = pneg %p67
    %p74 = scmp.eq.s32.totalorder %s8, 1
    %p75 = por %p73, %p74
    %p76 = scmp.ne.s32.totalorder %s68, %s71
    %p77 = scmp.eq.s32.totalorder %s8, 0
    %p78 = por %p76, %p77
    %p79 = scmp.ne.s32.totalorder %s68, %s71
    %p80 = scmp.eq.s32.totalorder %s13, 1
    %p81 = por %p79, %p80
    %p82 = scmp.ne.s32.totalorder %s71, %s72
    %p83 = scmp.eq.s32.totalorder %s13, 0
    %p84 = por %p82, %p83
    %p85 = scmp.ne.s32.totalorder %s71, %s72
    %p86 = scmp.eq.s32.totalorder %s14, 1
    %p87 = por %p85, %p86
    %p89 = scmp.ne.s32.totalorder %s72, %s88
    %p90 = scmp.eq.s32.totalorder %s14, 0
    %p91 = por %p89, %p90
    %s92 = ssub.s32 %s15, %s27
    %p93 = scmp.eq.s32.totalorder %s92, 0
    %s95 = sadd.s32 %s94, 1
    %s96 = scalar_select %p93, %s94, %s95
    %p99 = pneg %p93
    %p100 = scmp.eq.s32.totalorder %s8, 1
    %p101 = por %p99, %p100
    %p102 = scmp.ne.s32.totalorder %s94, %s97
    %p103 = scmp.eq.s32.totalorder %s8, 0
    %p104 = por %p102, %p103
    %p105 = scmp.ne.s32.totalorder %s94, %s97
    %p106 = scmp.eq.s32.totalorder %s13, 1
    %p107 = por %p105, %p106
    %p108 = scmp.ne.s32.totalorder %s97, %s98
    %p109 = scmp.eq.s32.totalorder %s13, 0
    %p110 = por %p108, %p109
    %p111 = scmp.ne.s32.totalorder %s97, %s98
    %p112 = scmp.eq.s32.totalorder %s14, 1
    %p113 = por %p111, %p112
    %p115 = scmp.ne.s32.totalorder %s98, %s114
    %p116 = scmp.eq.s32.totalorder %s14, 0
    %p117 = por %p115, %p116
    %p118 = scmp.le.s32.totalorder 1, %s8
    %p119 = scmp.lt.s32.totalorder %s8, 3
    %p120 = pnand %p118, %p119
    %p121 = pneg %p120
    // Predicated region
    $region9: #{_perceptual_loss.5} parent=5 // pred_check
      _
    $region10: #{_perceptual_loss.5} parent=5 // pred_check_branch
      %123 = sbr.rel (%p120) target = $region12
    $region11: #{_perceptual_loss.5} parent=5 // pred_region
      %s124 = ssub.s32 %s8, 1
    $region12: #{_perceptual_loss.5} parent=5 // pred_fallthru
      _
    %p125 = scmp.lt.s32.totalorder %s8, 2
    // Predicated region
    $region13: #{_perceptual_loss.5} parent=5 // pred_check
      %p126 = pneg %p125
    $region14: #{_perceptual_loss.5} parent=5 // pred_check_branch
      %128 = sbr.rel (%p126) target = $region16
    $region15: #{_perceptual_loss.5} parent=5 // pred_region
      // Predicated region
      $region17: #{_perceptual_loss.5} parent=15 // pred_check
        %p129 = pneg %p46
      $region18: #{_perceptual_loss.5} parent=15 // pred_check_branch
        %131 = sbr.rel (%p129) target = $region20
      $region19: #{_perceptual_loss.5} parent=15 // pred_region
        %s132 = sadd.s32 %s15, %s16
        %p133 = scmp.lt.s32.totalorder %s132, 0
        %s134 = scalar_select %p133, %s132, 0
        %s135 = smul.u32 32, %s134
        %p136 = scmp.lt.s32.totalorder %s135, 31
        %s137 = scalar_select %p136, %s135, 31
        %s138 = smul.addr %s137, 4
        %s139 = smul.addr %s138, 8
        %s140 = scalar_lea.vmem %s0, %s139
        %s141 = sadd.s32 %s15, %s16
        %p142 = scmp.lt.s32.totalorder %s141, 0
        %s143 = scalar_select %p142, %s141, 0
        %s144 = smul.u32 32, %s143
      $region20: #{_perceptual_loss.5} parent=15 // pred_fallthru
        _
      // Predicated region
      $region21: #{_perceptual_loss.5} parent=15 // pred_check
        %p145 = pneg %p78
      $region22: #{_perceptual_loss.5} parent=15 // pred_check_branch
        %147 = sbr.rel (%p145) target = $region24
      $region23: #{_perceptual_loss.5} parent=15 // pred_region
        %s148 = sadd.s32 %s15, %s16
        %p149 = scmp.lt.s32.totalorder %s148, 0
        %s150 = scalar_select %p149, %s148, 0
        %s151 = smul.u32 32, %s150
        %p152 = scmp.lt.s32.totalorder %s151, 31
        %s153 = scalar_select %p152, %s151, 31
        %s154 = smul.addr %s153, 4
        %s155 = smul.addr %s154, 8
        %s156 = scalar_lea.vmem %s1, %s155
        %s157 = sadd.s32 %s15, %s16
        %p158 = scmp.lt.s32.totalorder %s157, 0
        %s159 = scalar_select %p158, %s157, 0
        %s160 = smul.u32 32, %s159
      $region24: #{_perceptual_loss.5} parent=15 // pred_fallthru
        _
    $region16: #{_perceptual_loss.5} parent=5 // pred_fallthru
      _
    %p161 = scmp.le.s32.totalorder 1, %s8
    %p162 = scmp.lt.s32.totalorder %s8, 3
    %p163 = pnand %p161, %p162
    %p164 = pneg %p163
    // Predicated region
    $region25: #{_perceptual_loss.5} parent=5 // pred_check
      _
    $region26: #{_perceptual_loss.5} parent=5 // pred_check_branch
      %166 = sbr.rel (%p163) target = $region28
    $region27: #{_perceptual_loss.5} parent=5 // pred_region
      %s167 = ssub.s32 %s8, 1
      %s168 = sadd.s32 %s17, %s18
      %p169 = scmp.lt.s32.totalorder %s168, 0
      %s170 = scalar_select %p169, %s168, 0
      %s171 = smul.u32 32, %s170
      %p172 = scmp.lt.s32.totalorder %s171, 31
      %s173 = scalar_select %p172, %s171, 31
      %s174 = smul.addr %s173, 4
      %s175 = smul.addr %s174, 8
      %s176 = scalar_lea.vmem %s0, %s175
      %p177 = pneg %p52
      %p178 = pneg %p49
      %s179 = sadd.s32 %s17, %s18
      %p180 = scmp.lt.s32.totalorder %s179, 0
      %s181 = scalar_select %p180, %s179, 0
      %s182 = smul.u32 32, %s181
      %p183 = scmp.lt.s32.totalorder %s182, 31
      %s184 = scalar_select %p183, %s182, 31
      %s185 = smul.addr %s184, 4
      %s186 = smul.addr %s185, 8
      %s187 = scalar_lea.vmem %s1, %s186
      %p188 = pneg %p84
      %p189 = pneg %p81
      %p190 = pneg %p110
      %p191 = pneg %p107
      %p192 = scmp.lt.s32.totalorder %s17, 1
      %s193 = scalar_select %p192, %s17, 1
      %s194 = smul.addr %s193, 4
      %s195 = smul.addr %s194, 8
      %s196 = scalar_lea.vmem %s2, %s195
      %s197 = sadd.s32 %s17, %s18
      %p198 = scmp.lt.s32.totalorder %s197, 0
      %s199 = scalar_select %p198, %s197, 0
      %s200 = smul.u32 32, %s199
      %p201 = scmp.lt.s32.totalorder %s200, 31
      %s202 = scalar_select %p201, %s200, 31
      %s203 = smul.addr %s202, 4
      %s204 = smul.addr %s203, 8
      %s205 = scalar_lea.vmem %s0, %s204
      %s206 = sadd.s32 %s17, %s18
      %p207 = scmp.lt.s32.totalorder %s206, 0
      %s208 = scalar_select %p207, %s206, 0
      %s209 = smul.u32 32, %s208
      %s210 = sadd.s32 %s17, %s18
      %p211 = scmp.lt.s32.totalorder %s210, 0
      %s212 = scalar_select %p211, %s210, 0
      %s213 = smul.u32 32, %s212
      %p214 = scmp.lt.s32.totalorder %s213, 31
      %s215 = scalar_select %p214, %s213, 31
      %s216 = smul.addr %s215, 4
      %s217 = smul.addr %s216, 8
      %s218 = scalar_lea.vmem %s1, %s217
      %s219 = sadd.s32 %s17, %s18
      %p220 = scmp.lt.s32.totalorder %s219, 0
      %s221 = scalar_select %p220, %s219, 0
      %s222 = smul.u32 32, %s221
      %p223 = scmp.lt.s32.totalorder %s17, 1
      %s224 = scalar_select %p223, %s17, 1
      %s225 = smul.addr %s224, 4
      %s226 = smul.addr %s225, 8
      %s227 = scalar_lea.vmem %s2, %s226
      %p228 = scmp.eq.s32.totalorder %s18, 0
      // Predicated region
      $region29: #{_perceptual_loss.5} parent=27 // pred_check
        %p229 = pneg %p228
      $region30: #{_perceptual_loss.5} parent=27 // pred_check_branch
        %231 = sbr.rel (%p229) target = $region32
      $region31: #{_perceptual_loss.5} parent=27 // pred_region
        %232 = vst [vmem:[%s227] sm:$0xff] 0.0
        %233 = vst [vmem:[%s227 + $0x8] sm:$0xff] 0.0
        %234 = vst [vmem:[%s227 + $0x10] sm:$0xff] 0.0
        %235 = vst [vmem:[%s227 + $0x18] sm:$0xff] 0.0
      $region32: #{_perceptual_loss.5} parent=27 // pred_fallthru
        _
      %v236 = vld [vmem:[%s205] sm:$0xff]
      %v237 = vld [vmem:[%s205 + $0x8] sm:$0xff]
      %v238 = vld [vmem:[%s205 + $0x10] sm:$0xff]
      %v239 = vld [vmem:[%s205 + $0x18] sm:$0xff]
      %v240 = vld [vmem:[%s205 + $0x20] sm:$0xff]
      %v241 = vld [vmem:[%s205 + $0x28] sm:$0xff]
      %v242 = vld [vmem:[%s205 + $0x30] sm:$0xff]
      %v243 = vld [vmem:[%s205 + $0x38] sm:$0xff]
      %v244 = vld [vmem:[%s205 + $0x40] sm:$0xff]
      %v245 = vld [vmem:[%s205 + $0x48] sm:$0xff]
      %v246 = vld [vmem:[%s205 + $0x50] sm:$0xff]
      %v247 = vld [vmem:[%s205 + $0x58] sm:$0xff]
      %v248 = vld [vmem:[%s205 + $0x60] sm:$0xff]
      %v249 = vld [vmem:[%s205 + $0x68] sm:$0xff]
      %v250 = vld [vmem:[%s205 + $0x70] sm:$0xff]
      %v251 = vld [vmem:[%s205 + $0x78] sm:$0xff]
      %v252 = vld [vmem:[%s205 + $0x80] sm:$0xff]
      %v253 = vld [vmem:[%s205 + $0x88] sm:$0xff]
      %v254 = vld [vmem:[%s205 + $0x90] sm:$0xff]
      %v255 = vld [vmem:[%s205 + $0x98] sm:$0xff]
      %v256 = vld [vmem:[%s205 + $0xa0] sm:$0xff]
      %v257 = vld [vmem:[%s205 + $0xa8] sm:$0xff]
      %v258 = vld [vmem:[%s205 + $0xb0] sm:$0xff]
      %v259 = vld [vmem:[%s205 + $0xb8] sm:$0xff]
      %v260 = vld [vmem:[%s205 + $0xc0] sm:$0xff]
      %v261 = vld [vmem:[%s205 + $0xc8] sm:$0xff]
      %v262 = vld [vmem:[%s205 + $0xd0] sm:$0xff]
      %v263 = vld [vmem:[%s205 + $0xd8] sm:$0xff]
      %v264 = vld [vmem:[%s205 + $0xe0] sm:$0xff]
      %v265 = vld [vmem:[%s205 + $0xe8] sm:$0xff]
      %v266 = vld [vmem:[%s205 + $0xf0] sm:$0xff]
      %v267 = vld [vmem:[%s205 + $0xf8] sm:$0xff]
      %v268 = vld [vmem:[%s205 + $0x100] sm:$0xff]
      %v269 = vld [vmem:[%s205 + $0x108] sm:$0xff]
      %v270 = vld [vmem:[%s205 + $0x110] sm:$0xff]
      %v271 = vld [vmem:[%s205 + $0x118] sm:$0xff]
      %v272 = vld [vmem:[%s205 + $0x120] sm:$0xff]
      %v273 = vld [vmem:[%s205 + $0x128] sm:$0xff]
      %v274 = vld [vmem:[%s205 + $0x130] sm:$0xff]
      %v275 = vld [vmem:[%s205 + $0x138] sm:$0xff]
      %v276 = vld [vmem:[%s205 + $0x140] sm:$0xff]
      %v277 = vld [vmem:[%s205 + $0x148] sm:$0xff]
      %v278 = vld [vmem:[%s205 + $0x150] sm:$0xff]
      %v279 = vld [vmem:[%s205 + $0x158] sm:$0xff]
      %v280 = vld [vmem:[%s205 + $0x160] sm:$0xff]
      %v281 = vld [vmem:[%s205 + $0x168] sm:$0xff]
      %v282 = vld [vmem:[%s205 + $0x170] sm:$0xff]
      %v283 = vld [vmem:[%s205 + $0x178] sm:$0xff]
      %v284 = vld [vmem:[%s205 + $0x180] sm:$0xff]
      %v285 = vld [vmem:[%s205 + $0x188] sm:$0xff]
      %v286 = vld [vmem:[%s205 + $0x190] sm:$0xff]
      %v287 = vld [vmem:[%s205 + $0x198] sm:$0xff]
      %v288 = vld [vmem:[%s205 + $0x1a0] sm:$0xff]
      %v289 = vld [vmem:[%s205 + $0x1a8] sm:$0xff]
      %v290 = vld [vmem:[%s205 + $0x1b0] sm:$0xff]
      %v291 = vld [vmem:[%s205 + $0x1b8] sm:$0xff]
      %v292 = vld [vmem:[%s205 + $0x1c0] sm:$0xff]
      %v293 = vld [vmem:[%s205 + $0x1c8] sm:$0xff]
      %v294 = vld [vmem:[%s205 + $0x1d0] sm:$0xff]
      %v295 = vld [vmem:[%s205 + $0x1d8] sm:$0xff]
      %v296 = vld [vmem:[%s205 + $0x1e0] sm:$0xff]
      %v297 = vld [vmem:[%s205 + $0x1e8] sm:$0xff]
      %v298 = vld [vmem:[%s205 + $0x1f0] sm:$0xff]
      %v299 = vld [vmem:[%s205 + $0x1f8] sm:$0xff]
      %v300 = vld [vmem:[%s205 + $0x200] sm:$0xff]
      %v301 = vld [vmem:[%s205 + $0x208] sm:$0xff]
      %v302 = vld [vmem:[%s205 + $0x210] sm:$0xff]
      %v303 = vld [vmem:[%s205 + $0x218] sm:$0xff]
      %v304 = vld [vmem:[%s205 + $0x220] sm:$0xff]
      %v305 = vld [vmem:[%s205 + $0x228] sm:$0xff]
      %v306 = vld [vmem:[%s205 + $0x230] sm:$0xff]
      %v307 = vld [vmem:[%s205 + $0x238] sm:$0xff]
      %v308 = vld [vmem:[%s205 + $0x240] sm:$0xff]
      %v309 = vld [vmem:[%s205 + $0x248] sm:$0xff]
      %v310 = vld [vmem:[%s205 + $0x250] sm:$0xff]
      %v311 = vld [vmem:[%s205 + $0x258] sm:$0xff]
      %v312 = vld [vmem:[%s205 + $0x260] sm:$0xff]
      %v313 = vld [vmem:[%s205 + $0x268] sm:$0xff]
      %v314 = vld [vmem:[%s205 + $0x270] sm:$0xff]
      %v315 = vld [vmem:[%s205 + $0x278] sm:$0xff]
      %v316 = vld [vmem:[%s205 + $0x280] sm:$0xff]
      %v317 = vld [vmem:[%s205 + $0x288] sm:$0xff]
      %v318 = vld [vmem:[%s205 + $0x290] sm:$0xff]
      %v319 = vld [vmem:[%s205 + $0x298] sm:$0xff]
      %v320 = vld [vmem:[%s205 + $0x2a0] sm:$0xff]
      %v321 = vld [vmem:[%s205 + $0x2a8] sm:$0xff]
      %v322 = vld [vmem:[%s205 + $0x2b0] sm:$0xff]
      %v323 = vld [vmem:[%s205 + $0x2b8] sm:$0xff]
      %v324 = vld [vmem:[%s205 + $0x2c0] sm:$0xff]
      %v325 = vld [vmem:[%s205 + $0x2c8] sm:$0xff]
      %v326 = vld [vmem:[%s205 + $0x2d0] sm:$0xff]
      %v327 = vld [vmem:[%s205 + $0x2d8] sm:$0xff]
      %v328 = vld [vmem:[%s205 + $0x2e0] sm:$0xff]
      %v329 = vld [vmem:[%s205 + $0x2e8] sm:$0xff]
      %v330 = vld [vmem:[%s205 + $0x2f0] sm:$0xff]
      %v331 = vld [vmem:[%s205 + $0x2f8] sm:$0xff]
      %v332 = vld [vmem:[%s205 + $0x300] sm:$0xff]
      %v333 = vld [vmem:[%s205 + $0x308] sm:$0xff]
      %v334 = vld [vmem:[%s205 + $0x310] sm:$0xff]
      %v335 = vld [vmem:[%s205 + $0x318] sm:$0xff]
      %v336 = vld [vmem:[%s205 + $0x320] sm:$0xff]
      %v337 = vld [vmem:[%s205 + $0x328] sm:$0xff]
      %v338 = vld [vmem:[%s205 + $0x330] sm:$0xff]
      %v339 = vld [vmem:[%s205 + $0x338] sm:$0xff]
      %v340 = vld [vmem:[%s205 + $0x340] sm:$0xff]
      %v341 = vld [vmem:[%s205 + $0x348] sm:$0xff]
      %v342 = vld [vmem:[%s205 + $0x350] sm:$0xff]
      %v343 = vld [vmem:[%s205 + $0x358] sm:$0xff]
      %v344 = vld [vmem:[%s205 + $0x360] sm:$0xff]
      %v345 = vld [vmem:[%s205 + $0x368] sm:$0xff]
      %v346 = vld [vmem:[%s205 + $0x370] sm:$0xff]
      %v347 = vld [vmem:[%s205 + $0x378] sm:$0xff]
      %v348 = vld [vmem:[%s205 + $0x380] sm:$0xff]
      %v349 = vld [vmem:[%s205 + $0x388] sm:$0xff]
      %v350 = vld [vmem:[%s205 + $0x390] sm:$0xff]
      %v351 = vld [vmem:[%s205 + $0x398] sm:$0xff]
      %v352 = vld [vmem:[%s205 + $0x3a0] sm:$0xff]
      %v353 = vld [vmem:[%s205 + $0x3a8] sm:$0xff]
      %v354 = vld [vmem:[%s205 + $0x3b0] sm:$0xff]
      %v355 = vld [vmem:[%s205 + $0x3b8] sm:$0xff]
      %v356 = vld [vmem:[%s205 + $0x3c0] sm:$0xff]
      %v357 = vld [vmem:[%s205 + $0x3c8] sm:$0xff]
      %v358 = vld [vmem:[%s205 + $0x3d0] sm:$0xff]
      %v359 = vld [vmem:[%s205 + $0x3d8] sm:$0xff]
      %v360 = vld [vmem:[%s205 + $0x3e0] sm:$0xff]
      %v361 = vld [vmem:[%s205 + $0x3e8] sm:$0xff]
      %v362 = vld [vmem:[%s205 + $0x3f0] sm:$0xff]
      %v363 = vld [vmem:[%s205 + $0x3f8] sm:$0xff]
      %v364 = vld [vmem:[%s218] sm:$0xff]
      %v365 = vld [vmem:[%s218 + $0x8] sm:$0xff]
      %v366 = vld [vmem:[%s218 + $0x10] sm:$0xff]
      %v367 = vld [vmem:[%s218 + $0x18] sm:$0xff]
      %v368 = vld [vmem:[%s218 + $0x20] sm:$0xff]
      %v369 = vld [vmem:[%s218 + $0x28] sm:$0xff]
      %v370 = vld [vmem:[%s218 + $0x30] sm:$0xff]
      %v371 = vld [vmem:[%s218 + $0x38] sm:$0xff]
      %v372 = vld [vmem:[%s218 + $0x40] sm:$0xff]
      %v373 = vld [vmem:[%s218 + $0x48] sm:$0xff]
      %v374 = vld [vmem:[%s218 + $0x50] sm:$0xff]
      %v375 = vld [vmem:[%s218 + $0x58] sm:$0xff]
      %v376 = vld [vmem:[%s218 + $0x60] sm:$0xff]
      %v377 = vld [vmem:[%s218 + $0x68] sm:$0xff]
      %v378 = vld [vmem:[%s218 + $0x70] sm:$0xff]
      %v379 = vld [vmem:[%s218 + $0x78] sm:$0xff]
      %v380 = vld [vmem:[%s218 + $0x80] sm:$0xff]
      %v381 = vld [vmem:[%s218 + $0x88] sm:$0xff]
      %v382 = vld [vmem:[%s218 + $0x90] sm:$0xff]
      %v383 = vld [vmem:[%s218 + $0x98] sm:$0xff]
      %v384 = vld [vmem:[%s218 + $0xa0] sm:$0xff]
      %v385 = vld [vmem:[%s218 + $0xa8] sm:$0xff]
      %v386 = vld [vmem:[%s218 + $0xb0] sm:$0xff]
      %v387 = vld [vmem:[%s218 + $0xb8] sm:$0xff]
      %v388 = vld [vmem:[%s218 + $0xc0] sm:$0xff]
      %v389 = vld [vmem:[%s218 + $0xc8] sm:$0xff]
      %v390 = vld [vmem:[%s218 + $0xd0] sm:$0xff]
      %v391 = vld [vmem:[%s218 + $0xd8] sm:$0xff]
      %v392 = vld [vmem:[%s218 + $0xe0] sm:$0xff]
      %v393 = vld [vmem:[%s218 + $0xe8] sm:$0xff]
      %v394 = vld [vmem:[%s218 + $0xf0] sm:$0xff]
      %v395 = vld [vmem:[%s218 + $0xf8] sm:$0xff]
      %v396 = vld [vmem:[%s218 + $0x100] sm:$0xff]
      %v397 = vld [vmem:[%s218 + $0x108] sm:$0xff]
      %v398 = vld [vmem:[%s218 + $0x110] sm:$0xff]
      %v399 = vld [vmem:[%s218 + $0x118] sm:$0xff]
      %v400 = vld [vmem:[%s218 + $0x120] sm:$0xff]
      %v401 = vld [vmem:[%s218 + $0x128] sm:$0xff]
      %v402 = vld [vmem:[%s218 + $0x130] sm:$0xff]
      %v403 = vld [vmem:[%s218 + $0x138] sm:$0xff]
      %v404 = vld [vmem:[%s218 + $0x140] sm:$0xff]
      %v405 = vld [vmem:[%s218 + $0x148] sm:$0xff]
      %v406 = vld [vmem:[%s218 + $0x150] sm:$0xff]
      %v407 = vld [vmem:[%s218 + $0x158] sm:$0xff]
      %v408 = vld [vmem:[%s218 + $0x160] sm:$0xff]
      %v409 = vld [vmem:[%s218 + $0x168] sm:$0xff]
      %v410 = vld [vmem:[%s218 + $0x170] sm:$0xff]
      %v411 = vld [vmem:[%s218 + $0x178] sm:$0xff]
      %v412 = vld [vmem:[%s218 + $0x180] sm:$0xff]
      %v413 = vld [vmem:[%s218 + $0x188] sm:$0xff]
      %v414 = vld [vmem:[%s218 + $0x190] sm:$0xff]
      %v415 = vld [vmem:[%s218 + $0x198] sm:$0xff]
      %v416 = vld [vmem:[%s218 + $0x1a0] sm:$0xff]
      %v417 = vld [vmem:[%s218 + $0x1a8] sm:$0xff]
      %v418 = vld [vmem:[%s218 + $0x1b0] sm:$0xff]
      %v419 = vld [vmem:[%s218 + $0x1b8] sm:$0xff]
      %v420 = vld [vmem:[%s218 + $0x1c0] sm:$0xff]
      %v421 = vld [vmem:[%s218 + $0x1c8] sm:$0xff]
      %v422 = vld [vmem:[%s218 + $0x1d0] sm:$0xff]
      %v423 = vld [vmem:[%s218 + $0x1d8] sm:$0xff]
      %v424 = vld [vmem:[%s218 + $0x1e0] sm:$0xff]
      %v425 = vld [vmem:[%s218 + $0x1e8] sm:$0xff]
      %v426 = vld [vmem:[%s218 + $0x1f0] sm:$0xff]
      %v427 = vld [vmem:[%s218 + $0x1f8] sm:$0xff]
      %v428 = vld [vmem:[%s218 + $0x200] sm:$0xff]
      %v429 = vld [vmem:[%s218 + $0x208] sm:$0xff]
      %v430 = vld [vmem:[%s218 + $0x210] sm:$0xff]
      %v431 = vld [vmem:[%s218 + $0x218] sm:$0xff]
      %v432 = vld [vmem:[%s218 + $0x220] sm:$0xff]
      %v433 = vld [vmem:[%s218 + $0x228] sm:$0xff]
      %v434 = vld [vmem:[%s218 + $0x230] sm:$0xff]
      %v435 = vld [vmem:[%s218 + $0x238] sm:$0xff]
      %v436 = vld [vmem:[%s218 + $0x240] sm:$0xff]
      %v437 = vld [vmem:[%s218 + $0x248] sm:$0xff]
      %v438 = vld [vmem:[%s218 + $0x250] sm:$0xff]
      %v439 = vld [vmem:[%s218 + $0x258] sm:$0xff]
      %v440 = vld [vmem:[%s218 + $0x260] sm:$0xff]
      %v441 = vld [vmem:[%s218 + $0x268] sm:$0xff]
      %v442 = vld [vmem:[%s218 + $0x270] sm:$0xff]
      %v443 = vld [vmem:[%s218 + $0x278] sm:$0xff]
      %v444 = vld [vmem:[%s218 + $0x280] sm:$0xff]
      %v445 = vld [vmem:[%s218 + $0x288] sm:$0xff]
      %v446 = vld [vmem:[%s218 + $0x290] sm:$0xff]
      %v447 = vld [vmem:[%s218 + $0x298] sm:$0xff]
      %v448 = vld [vmem:[%s218 + $0x2a0] sm:$0xff]
      %v449 = vld [vmem:[%s218 + $0x2a8] sm:$0xff]
      %v450 = vld [vmem:[%s218 + $0x2b0] sm:$0xff]
      %v451 = vld [vmem:[%s218 + $0x2b8] sm:$0xff]
      %v452 = vld [vmem:[%s218 + $0x2c0] sm:$0xff]
      %v453 = vld [vmem:[%s218 + $0x2c8] sm:$0xff]
      %v454 = vld [vmem:[%s218 + $0x2d0] sm:$0xff]
      %v455 = vld [vmem:[%s218 + $0x2d8] sm:$0xff]
      %v456 = vld [vmem:[%s218 + $0x2e0] sm:$0xff]
      %v457 = vld [vmem:[%s218 + $0x2e8] sm:$0xff]
      %v458 = vld [vmem:[%s218 + $0x2f0] sm:$0xff]
      %v459 = vld [vmem:[%s218 + $0x2f8] sm:$0xff]
      %v460 = vld [vmem:[%s218 + $0x300] sm:$0xff]
      %v461 = vld [vmem:[%s218 + $0x308] sm:$0xff]
      %v462 = vld [vmem:[%s218 + $0x310] sm:$0xff]
      %v463 = vld [vmem:[%s218 + $0x318] sm:$0xff]
      %v464 = vld [vmem:[%s218 + $0x320] sm:$0xff]
      %v465 = vld [vmem:[%s218 + $0x328] sm:$0xff]
      %v466 = vld [vmem:[%s218 + $0x330] sm:$0xff]
      %v467 = vld [vmem:[%s218 + $0x338] sm:$0xff]
      %v468 = vld [vmem:[%s218 + $0x340] sm:$0xff]
      %v469 = vld [vmem:[%s218 + $0x348] sm:$0xff]
      %v470 = vld [vmem:[%s218 + $0x350] sm:$0xff]
      %v471 = vld [vmem:[%s218 + $0x358] sm:$0xff]
      %v472 = vld [vmem:[%s218 + $0x360] sm:$0xff]
      %v473 = vld [vmem:[%s218 + $0x368] sm:$0xff]
      %v474 = vld [vmem:[%s218 + $0x370] sm:$0xff]
      %v475 = vld [vmem:[%s218 + $0x378] sm:$0xff]
      %v476 = vld [vmem:[%s218 + $0x380] sm:$0xff]
      %v477 = vld [vmem:[%s218 + $0x388] sm:$0xff]
      %v478 = vld [vmem:[%s218 + $0x390] sm:$0xff]
      %v479 = vld [vmem:[%s218 + $0x398] sm:$0xff]
      %v480 = vld [vmem:[%s218 + $0x3a0] sm:$0xff]
      %v481 = vld [vmem:[%s218 + $0x3a8] sm:$0xff]
      %v482 = vld [vmem:[%s218 + $0x3b0] sm:$0xff]
      %v483 = vld [vmem:[%s218 + $0x3b8] sm:$0xff]
      %v484 = vld [vmem:[%s218 + $0x3c0] sm:$0xff]
      %v485 = vld [vmem:[%s218 + $0x3c8] sm:$0xff]
      %v486 = vld [vmem:[%s218 + $0x3d0] sm:$0xff]
      %v487 = vld [vmem:[%s218 + $0x3d8] sm:$0xff]
      %v488 = vld [vmem:[%s218 + $0x3e0] sm:$0xff]
      %v489 = vld [vmem:[%s218 + $0x3e8] sm:$0xff]
      %v490 = vld [vmem:[%s218 + $0x3f0] sm:$0xff]
      %v491 = vld [vmem:[%s218 + $0x3f8] sm:$0xff]
      %v492 = vsub.f32 %v236, %v364
      %v493 = vsub.f32 %v237, %v365
      %v494 = vsub.f32 %v238, %v366
      %v495 = vsub.f32 %v239, %v367
      %v496 = vsub.f32 %v240, %v368
      %v497 = vsub.f32 %v241, %v369
      %v498 = vsub.f32 %v242, %v370
      %v499 = vsub.f32 %v243, %v371
      %v500 = vsub.f32 %v244, %v372
      %v501 = vsub.f32 %v245, %v373
      %v502 = vsub.f32 %v246, %v374
      %v503 = vsub.f32 %v247, %v375
      %v504 = vsub.f32 %v248, %v376
      %v505 = vsub.f32 %v249, %v377
      %v506 = vsub.f32 %v250, %v378
      %v507 = vsub.f32 %v251, %v379
      %v508 = vsub.f32 %v252, %v380
      %v509 = vsub.f32 %v253, %v381
      %v510 = vsub.f32 %v254, %v382
      %v511 = vsub.f32 %v255, %v383
      %v512 = vsub.f32 %v256, %v384
      %v513 = vsub.f32 %v257, %v385
      %v514 = vsub.f32 %v258, %v386
      %v515 = vsub.f32 %v259, %v387
      %v516 = vsub.f32 %v260, %v388
      %v517 = vsub.f32 %v261, %v389
      %v518 = vsub.f32 %v262, %v390
      %v519 = vsub.f32 %v263, %v391
      %v520 = vsub.f32 %v264, %v392
      %v521 = vsub.f32 %v265, %v393
      %v522 = vsub.f32 %v266, %v394
      %v523 = vsub.f32 %v267, %v395
      %v524 = vsub.f32 %v268, %v396
      %v525 = vsub.f32 %v269, %v397
      %v526 = vsub.f32 %v270, %v398
      %v527 = vsub.f32 %v271, %v399
      %v528 = vsub.f32 %v272, %v400
      %v529 = vsub.f32 %v273, %v401
      %v530 = vsub.f32 %v274, %v402
      %v531 = vsub.f32 %v275, %v403
      %v532 = vsub.f32 %v276, %v404
      %v533 = vsub.f32 %v277, %v405
      %v534 = vsub.f32 %v278, %v406
      %v535 = vsub.f32 %v279, %v407
      %v536 = vsub.f32 %v280, %v408
      %v537 = vsub.f32 %v281, %v409
      %v538 = vsub.f32 %v282, %v410
      %v539 = vsub.f32 %v283, %v411
      %v540 = vsub.f32 %v284, %v412
      %v541 = vsub.f32 %v285, %v413
      %v542 = vsub.f32 %v286, %v414
      %v543 = vsub.f32 %v287, %v415
      %v544 = vsub.f32 %v288, %v416
      %v545 = vsub.f32 %v289, %v417
      %v546 = vsub.f32 %v290, %v418
      %v547 = vsub.f32 %v291, %v419
      %v548 = vsub.f32 %v292, %v420
      %v549 = vsub.f32 %v293, %v421
      %v550 = vsub.f32 %v294, %v422
      %v551 = vsub.f32 %v295, %v423
      %v552 = vsub.f32 %v296, %v424
      %v553 = vsub.f32 %v297, %v425
      %v554 = vsub.f32 %v298, %v426
      %v555 = vsub.f32 %v299, %v427
      %v556 = vsub.f32 %v300, %v428
      %v557 = vsub.f32 %v301, %v429
      %v558 = vsub.f32 %v302, %v430
      %v559 = vsub.f32 %v303, %v431
      %v560 = vsub.f32 %v304, %v432
      %v561 = vsub.f32 %v305, %v433
      %v562 = vsub.f32 %v306, %v434
      %v563 = vsub.f32 %v307, %v435
      %v564 = vsub.f32 %v308, %v436
      %v565 = vsub.f32 %v309, %v437
      %v566 = vsub.f32 %v310, %v438
      %v567 = vsub.f32 %v311, %v439
      %v568 = vsub.f32 %v312, %v440
      %v569 = vsub.f32 %v313, %v441
      %v570 = vsub.f32 %v314, %v442
      %v571 = vsub.f32 %v315, %v443
      %v572 = vsub.f32 %v316, %v444
      %v573 = vsub.f32 %v317, %v445
      %v574 = vsub.f32 %v318, %v446
      %v575 = vsub.f32 %v319, %v447
      %v576 = vsub.f32 %v320, %v448
      %v577 = vsub.f32 %v321, %v449
      %v578 = vsub.f32 %v322, %v450
      %v579 = vsub.f32 %v323, %v451
      %v580 = vsub.f32 %v324, %v452
      %v581 = vsub.f32 %v325, %v453
      %v582 = vsub.f32 %v326, %v454
      %v583 = vsub.f32 %v327, %v455
      %v584 = vsub.f32 %v328, %v456
      %v585 = vsub.f32 %v329, %v457
      %v586 = vsub.f32 %v330, %v458
      %v587 = vsub.f32 %v331, %v459
      %v588 = vsub.f32 %v332, %v460
      %v589 = vsub.f32 %v333, %v461
      %v590 = vsub.f32 %v334, %v462
      %v591 = vsub.f32 %v335, %v463
      %v592 = vsub.f32 %v336, %v464
      %v593 = vsub.f32 %v337, %v465
      %v594 = vsub.f32 %v338, %v466
      %v595 = vsub.f32 %v339, %v467
      %v596 = vsub.f32 %v340, %v468
      %v597 = vsub.f32 %v341, %v469
      %v598 = vsub.f32 %v342, %v470
      %v599 = vsub.f32 %v343, %v471
      %v600 = vsub.f32 %v344, %v472
      %v601 = vsub.f32 %v345, %v473
      %v602 = vsub.f32 %v346, %v474
      %v603 = vsub.f32 %v347, %v475
      %v604 = vsub.f32 %v348, %v476
      %v605 = vsub.f32 %v349, %v477
      %v606 = vsub.f32 %v350, %v478
      %v607 = vsub.f32 %v351, %v479
      %v608 = vsub.f32 %v352, %v480
      %v609 = vsub.f32 %v353, %v481
      %v610 = vsub.f32 %v354, %v482
      %v611 = vsub.f32 %v355, %v483
      %v612 = vsub.f32 %v356, %v484
      %v613 = vsub.f32 %v357, %v485
      %v614 = vsub.f32 %v358, %v486
      %v615 = vsub.f32 %v359, %v487
      %v616 = vsub.f32 %v360, %v488
      %v617 = vsub.f32 %v361, %v489
      %v618 = vsub.f32 %v362, %v490
      %v619 = vsub.f32 %v363, %v491
      %v620 = vand.u32 2147483647, %v492
      %v621 = vand.u32 2147483647, %v493
      %v622 = vand.u32 2147483647, %v494
      %v623 = vand.u32 2147483647, %v495
      %v624 = vand.u32 2147483647, %v496
      %v625 = vand.u32 2147483647, %v497
      %v626 = vand.u32 2147483647, %v498
      %v627 = vand.u32 2147483647, %v499
      %v628 = vand.u32 2147483647, %v500
      %v629 = vand.u32 2147483647, %v501
      %v630 = vand.u32 2147483647, %v502
      %v631 = vand.u32 2147483647, %v503
      %v632 = vand.u32 2147483647, %v504
      %v633 = vand.u32 2147483647, %v505
      %v634 = vand.u32 2147483647, %v506
      %v635 = vand.u32 2147483647, %v507
      %v636 = vand.u32 2147483647, %v508
      %v637 = vand.u32 2147483647, %v509
      %v638 = vand.u32 2147483647, %v510
      %v639 = vand.u32 2147483647, %v511
      %v640 = vand.u32 2147483647, %v512
      %v641 = vand.u32 2147483647, %v513
      %v642 = vand.u32 2147483647, %v514
      %v643 = vand.u32 2147483647, %v515
      %v644 = vand.u32 2147483647, %v516
      %v645 = vand.u32 2147483647, %v517
      %v646 = vand.u32 2147483647, %v518
      %v647 = vand.u32 2147483647, %v519
      %v648 = vand.u32 2147483647, %v520
      %v649 = vand.u32 2147483647, %v521
      %v650 = vand.u32 2147483647, %v522
      %v651 = vand.u32 2147483647, %v523
      %v652 = vand.u32 2147483647, %v524
      %v653 = vand.u32 2147483647, %v525
      %v654 = vand.u32 2147483647, %v526
      %v655 = vand.u32 2147483647, %v527
      %v656 = vand.u32 2147483647, %v528
      %v657 = vand.u32 2147483647, %v529
      %v658 = vand.u32 2147483647, %v530
      %v659 = vand.u32 2147483647, %v531
      %v660 = vand.u32 2147483647, %v532
      %v661 = vand.u32 2147483647, %v533
      %v662 = vand.u32 2147483647, %v534
      %v663 = vand.u32 2147483647, %v535
      %v664 = vand.u32 2147483647, %v536
      %v665 = vand.u32 2147483647, %v537
      %v666 = vand.u32 2147483647, %v538
      %v667 = vand.u32 2147483647, %v539
      %v668 = vand.u32 2147483647, %v540
      %v669 = vand.u32 2147483647, %v541
      %v670 = vand.u32 2147483647, %v542
      %v671 = vand.u32 2147483647, %v543
      %v672 = vand.u32 2147483647, %v544
      %v673 = vand.u32 2147483647, %v545
      %v674 = vand.u32 2147483647, %v546
      %v675 = vand.u32 2147483647, %v547
      %v676 = vand.u32 2147483647, %v548
      %v677 = vand.u32 2147483647, %v549
      %v678 = vand.u32 2147483647, %v550
      %v679 = vand.u32 2147483647, %v551
      %v680 = vand.u32 2147483647, %v552
      %v681 = vand.u32 2147483647, %v553
      %v682 = vand.u32 2147483647, %v554
      %v683 = vand.u32 2147483647, %v555
      %v684 = vand.u32 2147483647, %v556
      %v685 = vand.u32 2147483647, %v557
      %v686 = vand.u32 2147483647, %v558
      %v687 = vand.u32 2147483647, %v559
      %v688 = vand.u32 2147483647, %v560
      %v689 = vand.u32 2147483647, %v561
      %v690 = vand.u32 2147483647, %v562
      %v691 = vand.u32 2147483647, %v563
      %v692 = vand.u32 2147483647, %v564
      %v693 = vand.u32 2147483647, %v565
      %v694 = vand.u32 2147483647, %v566
      %v695 = vand.u32 2147483647, %v567
      %v696 = vand.u32 2147483647, %v568
      %v697 = vand.u32 2147483647, %v569
      %v698 = vand.u32 2147483647, %v570
      %v699 = vand.u32 2147483647, %v571
      %v700 = vand.u32 2147483647, %v572
      %v701 = vand.u32 2147483647, %v573
      %v702 = vand.u32 2147483647, %v574
      %v703 = vand.u32 2147483647, %v575
      %v704 = vand.u32 2147483647, %v576
      %v705 = vand.u32 2147483647, %v577
      %v706 = vand.u32 2147483647, %v578
      %v707 = vand.u32 2147483647, %v579
      %v708 = vand.u32 2147483647, %v580
      %v709 = vand.u32 2147483647, %v581
      %v710 = vand.u32 2147483647, %v582
      %v711 = vand.u32 2147483647, %v583
      %v712 = vand.u32 2147483647, %v584
      %v713 = vand.u32 2147483647, %v585
      %v714 = vand.u32 2147483647, %v586
      %v715 = vand.u32 2147483647, %v587
      %v716 = vand.u32 2147483647, %v588
      %v717 = vand.u32 2147483647, %v589
      %v718 = vand.u32 2147483647, %v590
      %v719 = vand.u32 2147483647, %v591
      %v720 = vand.u32 2147483647, %v592
      %v721 = vand.u32 2147483647, %v593
      %v722 = vand.u32 2147483647, %v594
      %v723 = vand.u32 2147483647, %v595
      %v724 = vand.u32 2147483647, %v596
      %v725 = vand.u32 2147483647, %v597
      %v726 = vand.u32 2147483647, %v598
      %v727 = vand.u32 2147483647, %v599
      %v728 = vand.u32 2147483647, %v600
      %v729 = vand.u32 2147483647, %v601
      %v730 = vand.u32 2147483647, %v602
      %v731 = vand.u32 2147483647, %v603
      %v732 = vand.u32 2147483647, %v604
      %v733 = vand.u32 2147483647, %v605
      %v734 = vand.u32 2147483647, %v606
      %v735 = vand.u32 2147483647, %v607
      %v736 = vand.u32 2147483647, %v608
      %v737 = vand.u32 2147483647, %v609
      %v738 = vand.u32 2147483647, %v610
      %v739 = vand.u32 2147483647, %v611
      %v740 = vand.u32 2147483647, %v612
      %v741 = vand.u32 2147483647, %v613
      %v742 = vand.u32 2147483647, %v614
      %v743 = vand.u32 2147483647, %v615
      %v744 = vand.u32 2147483647, %v616
      %v745 = vand.u32 2147483647, %v617
      %v746 = vand.u32 2147483647, %v618
      %v747 = vand.u32 2147483647, %v619
      %s748 = sadd.s32 %s17, %s18
      %s749 = smul.u32 %s748, 256
      %v750 = vlaneseq
      %v751 = vshrl.u32 %v750, 7
      %v752 = vadd.s32 %v751, 8
      %v753 = vadd.s32 %v751, 16
      %v754 = vadd.s32 %v751, 24
      %v755 = vadd.s32 %v751, 32
      %v756 = vadd.s32 %v751, 40
      %v757 = vadd.s32 %v751, 48
      %v758 = vadd.s32 %v751, 56
      %v759 = vadd.s32 %v751, 64
      %v760 = vadd.s32 %v751, 72
      %v761 = vadd.s32 %v751, 80
      %v762 = vadd.s32 %v751, 88
      %v763 = vadd.s32 %v751, 96
      %v764 = vadd.s32 %v751, 104
      %v765 = vadd.s32 %v751, 112
      %v766 = vadd.s32 %v751, 120
      %v767 = vadd.s32 %v751, 128
      %v768 = vadd.s32 %v751, 136
      %v769 = vadd.s32 %v751, 144
      %v770 = vadd.s32 %v751, 152
      %v771 = vadd.s32 %v751, 160
      %v772 = vadd.s32 %v751, 168
      %v773 = vadd.s32 %v751, 176
      %v774 = vadd.s32 %v751, 184
      %v775 = vadd.s32 %v751, 192
      %v776 = vadd.s32 %v751, 200
      %v777 = vadd.s32 %v751, 208
      %v778 = vadd.s32 %v751, 216
      %v779 = vadd.s32 %v751, 224
      %v780 = vadd.s32 %v751, 232
      %v781 = vadd.s32 %v751, 240
      %v782 = vadd.s32 %v751, 248
      %v783 = vstv %s749
      %v784 = vadd.s32 %v783, %v751
      %v785 = vadd.s32 %v783, %v752
      %v786 = vadd.s32 %v783, %v753
      %v787 = vadd.s32 %v783, %v754
      %v788 = vadd.s32 %v783, %v755
      %v789 = vadd.s32 %v783, %v756
      %v790 = vadd.s32 %v783, %v757
      %v791 = vadd.s32 %v783, %v758
      %v792 = vadd.s32 %v783, %v759
      %v793 = vadd.s32 %v783, %v760
      %v794 = vadd.s32 %v783, %v761
      %v795 = vadd.s32 %v783, %v762
      %v796 = vadd.s32 %v783, %v763
      %v797 = vadd.s32 %v783, %v764
      %v798 = vadd.s32 %v783, %v765
      %v799 = vadd.s32 %v783, %v766
      %v800 = vadd.s32 %v783, %v767
      %v801 = vadd.s32 %v783, %v768
      %v802 = vadd.s32 %v783, %v769
      %v803 = vadd.s32 %v783, %v770
      %v804 = vadd.s32 %v783, %v771
      %v805 = vadd.s32 %v783, %v772
      %v806 = vadd.s32 %v783, %v773
      %v807 = vadd.s32 %v783, %v774
      %v808 = vadd.s32 %v783, %v775
      %v809 = vadd.s32 %v783, %v776
      %v810 = vadd.s32 %v783, %v777
      %v811 = vadd.s32 %v783, %v778
      %v812 = vadd.s32 %v783, %v779
      %v813 = vadd.s32 %v783, %v780
      %v814 = vadd.s32 %v783, %v781
      %v815 = vadd.s32 %v783, %v782
      %vm816 = vcmp.lt.s32.totalorder %v784, 256
      %vm817 = vcmp.lt.s32.totalorder %v785, 256
      %vm818 = vcmp.lt.s32.totalorder %v786, 256
      %vm819 = vcmp.lt.s32.totalorder %v787, 256
      %vm820 = vcmp.lt.s32.totalorder %v788, 256
      %vm821 = vcmp.lt.s32.totalorder %v789, 256
      %vm822 = vcmp.lt.s32.totalorder %v790, 256
      %vm823 = vcmp.lt.s32.totalorder %v791, 256
      %vm824 = vcmp.lt.s32.totalorder %v792, 256
      %vm825 = vcmp.lt.s32.totalorder %v793, 256
      %vm826 = vcmp.lt.s32.totalorder %v794, 256
      %vm827 = vcmp.lt.s32.totalorder %v795, 256
      %vm828 = vcmp.lt.s32.totalorder %v796, 256
      %vm829 = vcmp.lt.s32.totalorder %v797, 256
      %vm830 = vcmp.lt.s32.totalorder %v798, 256
      %vm831 = vcmp.lt.s32.totalorder %v799, 256
      %vm832 = vcmp.lt.s32.totalorder %v800, 256
      %vm833 = vcmp.lt.s32.totalorder %v801, 256
      %vm834 = vcmp.lt.s32.totalorder %v802, 256
      %vm835 = vcmp.lt.s32.totalorder %v803, 256
      %vm836 = vcmp.lt.s32.totalorder %v804, 256
      %vm837 = vcmp.lt.s32.totalorder %v805, 256
      %vm838 = vcmp.lt.s32.totalorder %v806, 256
      %vm839 = vcmp.lt.s32.totalorder %v807, 256
      %vm840 = vcmp.lt.s32.totalorder %v808, 256
      %vm841 = vcmp.lt.s32.totalorder %v809, 256
      %vm842 = vcmp.lt.s32.totalorder %v810, 256
      %vm843 = vcmp.lt.s32.totalorder %v811, 256
      %vm844 = vcmp.lt.s32.totalorder %v812, 256
      %vm845 = vcmp.lt.s32.totalorder %v813, 256
      %vm846 = vcmp.lt.s32.totalorder %v814, 256
      %vm847 = vcmp.lt.s32.totalorder %v815, 256
      %v848 = vsel %vm816, %v620, 0.0
      %v849 = vsel %vm816, %v621, 0.0
      %v850 = vsel %vm816, %v622, 0.0
      %v851 = vsel %vm816, %v623, 0.0
      %v852 = vsel %vm817, %v624, 0.0
      %v853 = vsel %vm817, %v625, 0.0
      %v854 = vsel %vm817, %v626, 0.0
      %v855 = vsel %vm817, %v627, 0.0
      %v856 = vsel %vm818, %v628, 0.0
      %v857 = vsel %vm818, %v629, 0.0
      %v858 = vsel %vm818, %v630, 0.0
      %v859 = vsel %vm818, %v631, 0.0
      %v860 = vsel %vm819, %v632, 0.0
      %v861 = vsel %vm819, %v633, 0.0
      %v862 = vsel %vm819, %v634, 0.0
      %v863 = vsel %vm819, %v635, 0.0
      %v864 = vsel %vm820, %v636, 0.0
      %v865 = vsel %vm820, %v637, 0.0
      %v866 = vsel %vm820, %v638, 0.0
      %v867 = vsel %vm820, %v639, 0.0
      %v868 = vsel %vm821, %v640, 0.0
      %v869 = vsel %vm821, %v641, 0.0
      %v870 = vsel %vm821, %v642, 0.0
      %v871 = vsel %vm821, %v643, 0.0
      %v872 = vsel %vm822, %v644, 0.0
      %v873 = vsel %vm822, %v645, 0.0
      %v874 = vsel %vm822, %v646, 0.0
      %v875 = vsel %vm822, %v647, 0.0
      %v876 = vsel %vm823, %v648, 0.0
      %v877 = vsel %vm823, %v649, 0.0
      %v878 = vsel %vm823, %v650, 0.0
      %v879 = vsel %vm823, %v651, 0.0
      %v880 = vsel %vm824, %v652, 0.0
      %v881 = vsel %vm824, %v653, 0.0
      %v882 = vsel %vm824, %v654, 0.0
      %v883 = vsel %vm824, %v655, 0.0
      %v884 = vsel %vm825, %v656, 0.0
      %v885 = vsel %vm825, %v657, 0.0
      %v886 = vsel %vm825, %v658, 0.0
      %v887 = vsel %vm825, %v659, 0.0
      %v888 = vsel %vm826, %v660, 0.0
      %v889 = vsel %vm826, %v661, 0.0
      %v890 = vsel %vm826, %v662, 0.0
      %v891 = vsel %vm826, %v663, 0.0
      %v892 = vsel %vm827, %v664, 0.0
      %v893 = vsel %vm827, %v665, 0.0
      %v894 = vsel %vm827, %v666, 0.0
      %v895 = vsel %vm827, %v667, 0.0
      %v896 = vsel %vm828, %v668, 0.0
      %v897 = vsel %vm828, %v669, 0.0
      %v898 = vsel %vm828, %v670, 0.0
      %v899 = vsel %vm828, %v671, 0.0
      %v900 = vsel %vm829, %v672, 0.0
      %v901 = vsel %vm829, %v673, 0.0
      %v902 = vsel %vm829, %v674, 0.0
      %v903 = vsel %vm829, %v675, 0.0
      %v904 = vsel %vm830, %v676, 0.0
      %v905 = vsel %vm830, %v677, 0.0
      %v906 = vsel %vm830, %v678, 0.0
      %v907 = vsel %vm830, %v679, 0.0
      %v908 = vsel %vm831, %v680, 0.0
      %v909 = vsel %vm831, %v681, 0.0
      %v910 = vsel %vm831, %v682, 0.0
      %v911 = vsel %vm831, %v683, 0.0
      %v912 = vsel %vm832, %v684, 0.0
      %v913 = vsel %vm832, %v685, 0.0
      %v914 = vsel %vm832, %v686, 0.0
      %v915 = vsel %vm832, %v687, 0.0
      %v916 = vsel %vm833, %v688, 0.0
      %v917 = vsel %vm833, %v689, 0.0
      %v918 = vsel %vm833, %v690, 0.0
      %v919 = vsel %vm833, %v691, 0.0
      %v920 = vsel %vm834, %v692, 0.0
      %v921 = vsel %vm834, %v693, 0.0
      %v922 = vsel %vm834, %v694, 0.0
      %v923 = vsel %vm834, %v695, 0.0
      %v924 = vsel %vm835, %v696, 0.0
      %v925 = vsel %vm835, %v697, 0.0
      %v926 = vsel %vm835, %v698, 0.0
      %v927 = vsel %vm835, %v699, 0.0
      %v928 = vsel %vm836, %v700, 0.0
      %v929 = vsel %vm836, %v701, 0.0
      %v930 = vsel %vm836, %v702, 0.0
      %v931 = vsel %vm836, %v703, 0.0
      %v932 = vsel %vm837, %v704, 0.0
      %v933 = vsel %vm837, %v705, 0.0
      %v934 = vsel %vm837, %v706, 0.0
      %v935 = vsel %vm837, %v707, 0.0
      %v936 = vsel %vm838, %v708, 0.0
      %v937 = vsel %vm838, %v709, 0.0
      %v938 = vsel %vm838, %v710, 0.0
      %v939 = vsel %vm838, %v711, 0.0
      %v940 = vsel %vm839, %v712, 0.0
      %v941 = vsel %vm839, %v713, 0.0
      %v942 = vsel %vm839, %v714, 0.0
      %v943 = vsel %vm839, %v715, 0.0
      %v944 = vsel %vm840, %v716, 0.0
      %v945 = vsel %vm840, %v717, 0.0
      %v946 = vsel %vm840, %v718, 0.0
      %v947 = vsel %vm840, %v719, 0.0
      %v948 = vsel %vm841, %v720, 0.0
      %v949 = vsel %vm841, %v721, 0.0
      %v950 = vsel %vm841, %v722, 0.0
      %v951 = vsel %vm841, %v723, 0.0
      %v952 = vsel %vm842, %v724, 0.0
      %v953 = vsel %vm842, %v725, 0.0
      %v954 = vsel %vm842, %v726, 0.0
      %v955 = vsel %vm842, %v727, 0.0
      %v956 = vsel %vm843, %v728, 0.0
      %v957 = vsel %vm843, %v729, 0.0
      %v958 = vsel %vm843, %v730, 0.0
      %v959 = vsel %vm843, %v731, 0.0
      %v960 = vsel %vm844, %v732, 0.0
      %v961 = vsel %vm844, %v733, 0.0
      %v962 = vsel %vm844, %v734, 0.0
      %v963 = vsel %vm844, %v735, 0.0
      %v964 = vsel %vm845, %v736, 0.0
      %v965 = vsel %vm845, %v737, 0.0
      %v966 = vsel %vm845, %v738, 0.0
      %v967 = vsel %vm845, %v739, 0.0
      %v968 = vsel %vm846, %v740, 0.0
      %v969 = vsel %vm846, %v741, 0.0
      %v970 = vsel %vm846, %v742, 0.0
      %v971 = vsel %vm846, %v743, 0.0
      %v972 = vsel %vm847, %v744, 0.0
      %v973 = vsel %vm847, %v745, 0.0
      %v974 = vsel %vm847, %v746, 0.0
      %v975 = vsel %vm847, %v747, 0.0
      %v976 = vld [vmem:[%s227] sm:$0xff]
      %v977 = vld [vmem:[%s227 + $0x8] sm:$0xff]
      %v978 = vld [vmem:[%s227 + $0x10] sm:$0xff]
      %v979 = vld [vmem:[%s227 + $0x18] sm:$0xff]
      %v980 = vadd.f32 %v848, %v852
      %v981 = vadd.f32 %v980, %v856
      %v982 = vadd.f32 %v981, %v860
      %v983 = vadd.f32 %v982, %v864
      %v984 = vadd.f32 %v983, %v868
      %v985 = vadd.f32 %v984, %v872
      %v986 = vadd.f32 %v985, %v876
      %v987 = vadd.f32 %v986, %v880
      %v988 = vadd.f32 %v987, %v884
      %v989 = vadd.f32 %v988, %v888
      %v990 = vadd.f32 %v989, %v892
      %v991 = vadd.f32 %v990, %v896
      %v992 = vadd.f32 %v991, %v900
      %v993 = vadd.f32 %v992, %v904
      %v994 = vadd.f32 %v993, %v908
      %v995 = vadd.f32 %v994, %v912
      %v996 = vadd.f32 %v995, %v916
      %v997 = vadd.f32 %v996, %v920
      %v998 = vadd.f32 %v997, %v924
      %v999 = vadd.f32 %v998, %v928
      %v1000 = vadd.f32 %v999, %v932
      %v1001 = vadd.f32 %v1000, %v936
      %v1002 = vadd.f32 %v1001, %v940
      %v1003 = vadd.f32 %v1002, %v944
      %v1004 = vadd.f32 %v1003, %v948
      %v1005 = vadd.f32 %v1004, %v952
      %v1006 = vadd.f32 %v1005, %v956
      %v1007 = vadd.f32 %v1006, %v960
      %v1008 = vadd.f32 %v1007, %v964
      %v1009 = vadd.f32 %v1008, %v968
      %v1010 = vadd.f32 %v1009, %v972
      %v1011 = vadd.f32 %v849, %v853
      %v1012 = vadd.f32 %v1011, %v857
      %v1013 = vadd.f32 %v1012, %v861
      %v1014 = vadd.f32 %v1013, %v865
      %v1015 = vadd.f32 %v1014, %v869
      %v1016 = vadd.f32 %v1015, %v873
      %v1017 = vadd.f32 %v1016, %v877
      %v1018 = vadd.f32 %v1017, %v881
      %v1019 = vadd.f32 %v1018, %v885
      %v1020 = vadd.f32 %v1019, %v889
      %v1021 = vadd.f32 %v1020, %v893
      %v1022 = vadd.f32 %v1021, %v897
      %v1023 = vadd.f32 %v1022, %v901
      %v1024 = vadd.f32 %v1023, %v905
      %v1025 = vadd.f32 %v1024, %v909
      %v1026 = vadd.f32 %v1025, %v913
      %v1027 = vadd.f32 %v1026, %v917
      %v1028 = vadd.f32 %v1027, %v921
      %v1029 = vadd.f32 %v1028, %v925
      %v1030 = vadd.f32 %v1029, %v929
      %v1031 = vadd.f32 %v1030, %v933
      %v1032 = vadd.f32 %v1031, %v937
      %v1033 = vadd.f32 %v1032, %v941
      %v1034 = vadd.f32 %v1033, %v945
      %v1035 = vadd.f32 %v1034, %v949
      %v1036 = vadd.f32 %v1035, %v953
      %v1037 = vadd.f32 %v1036, %v957
      %v1038 = vadd.f32 %v1037, %v961
      %v1039 = vadd.f32 %v1038, %v965
      %v1040 = vadd.f32 %v1039, %v969
      %v1041 = vadd.f32 %v1040, %v973
      %v1042 = vadd.f32 %v850, %v854
      %v1043 = vadd.f32 %v1042, %v858
      %v1044 = vadd.f32 %v1043, %v862
      %v1045 = vadd.f32 %v1044, %v866
      %v1046 = vadd.f32 %v1045, %v870
      %v1047 = vadd.f32 %v1046, %v874
      %v1048 = vadd.f32 %v1047, %v878
      %v1049 = vadd.f32 %v1048, %v882
      %v1050 = vadd.f32 %v1049, %v886
      %v1051 = vadd.f32 %v1050, %v890
      %v1052 = vadd.f32 %v1051, %v894
      %v1053 = vadd.f32 %v1052, %v898
      %v1054 = vadd.f32 %v1053, %v902
      %v1055 = vadd.f32 %v1054, %v906
      %v1056 = vadd.f32 %v1055, %v910
      %v1057 = vadd.f32 %v1056, %v914
      %v1058 = vadd.f32 %v1057, %v918
      %v1059 = vadd.f32 %v1058, %v922
      %v1060 = vadd.f32 %v1059, %v926
      %v1061 = vadd.f32 %v1060, %v930
      %v1062 = vadd.f32 %v1061, %v934
      %v1063 = vadd.f32 %v1062, %v938
      %v1064 = vadd.f32 %v1063, %v942
      %v1065 = vadd.f32 %v1064, %v946
      %v1066 = vadd.f32 %v1065, %v950
      %v1067 = vadd.f32 %v1066, %v954
      %v1068 = vadd.f32 %v1067, %v958
      %v1069 = vadd.f32 %v1068, %v962
      %v1070 = vadd.f32 %v1069, %v966
      %v1071 = vadd.f32 %v1070, %v970
      %v1072 = vadd.f32 %v1071, %v974
      %v1073 = vadd.f32 %v851, %v855
      %v1074 = vadd.f32 %v1073, %v859
      %v1075 = vadd.f32 %v1074, %v863
      %v1076 = vadd.f32 %v1075, %v867
      %v1077 = vadd.f32 %v1076, %v871
      %v1078 = vadd.f32 %v1077, %v875
      %v1079 = vadd.f32 %v1078, %v879
      %v1080 = vadd.f32 %v1079, %v883
      %v1081 = vadd.f32 %v1080, %v887
      %v1082 = vadd.f32 %v1081, %v891
      %v1083 = vadd.f32 %v1082, %v895
      %v1084 = vadd.f32 %v1083, %v899
      %v1085 = vadd.f32 %v1084, %v903
      %v1086 = vadd.f32 %v1085, %v907
      %v1087 = vadd.f32 %v1086, %v911
      %v1088 = vadd.f32 %v1087, %v915
      %v1089 = vadd.f32 %v1088, %v919
      %v1090 = vadd.f32 %v1089, %v923
      %v1091 = vadd.f32 %v1090, %v927
      %v1092 = vadd.f32 %v1091, %v931
      %v1093 = vadd.f32 %v1092, %v935
      %v1094 = vadd.f32 %v1093, %v939
      %v1095 = vadd.f32 %v1094, %v943
      %v1096 = vadd.f32 %v1095, %v947
      %v1097 = vadd.f32 %v1096, %v951
      %v1098 = vadd.f32 %v1097, %v955
      %v1099 = vadd.f32 %v1098, %v959
      %v1100 = vadd.f32 %v1099, %v963
      %v1101 = vadd.f32 %v1100, %v967
      %v1102 = vadd.f32 %v1101, %v971
      %v1103 = vadd.f32 %v1102, %v975
      %v1104 = vadd.f32 %v976, %v1010
      %v1105 = vadd.f32 %v977, %v1041
      %v1106 = vadd.f32 %v978, %v1072
      %v1107 = vadd.f32 %v979, %v1103
      %1108 = vst [vmem:[%s227] sm:$0xff] %v1104
      %1109 = vst [vmem:[%s227 + $0x8] sm:$0xff] %v1105
      %1110 = vst [vmem:[%s227 + $0x10] sm:$0xff] %v1106
      %1111 = vst [vmem:[%s227 + $0x18] sm:$0xff] %v1107
      %p1112 = scmp.lt.s32.totalorder %s17, 1
      %s1113 = scalar_select %p1112, %s17, 1
      %s1114 = smul.addr %s1113, 4
      %s1115 = smul.addr %s1114, 8
      %s1116 = scalar_lea.vmem %s2, %s1115
      // Predicated region
      $region33: #{_perceptual_loss.5} parent=27 // pred_check
        %p1117 = pneg %p107
      $region34: #{_perceptual_loss.5} parent=27 // pred_check_branch
        %1119 = sbr.rel (%p1117) target = $region36
      $region35: #{_perceptual_loss.5} parent=27 // pred_region
        _
      $region36: #{_perceptual_loss.5} parent=27 // pred_fallthru
        _
    $region28: #{_perceptual_loss.5} parent=5 // pred_fallthru
      _
    %p1120 = scmp.le.s32.totalorder 2, %s8
    // Predicated region
    $region37: #{_perceptual_loss.5} parent=5 // pred_check
      %p1121 = pneg %p1120
    $region38: #{_perceptual_loss.5} parent=5 // pred_check_branch
      %1123 = sbr.rel (%p1121) target = $region40
    $region39: #{_perceptual_loss.5} parent=5 // pred_region
      %s1124 = ssub.s32 %s8, 2
      // Predicated region
      $region41: #{_perceptual_loss.5} parent=39 // pred_check
        %p1125 = pneg %p113
      $region42: #{_perceptual_loss.5} parent=39 // pred_check_branch
        %1127 = sbr.rel (%p1125) target = $region44
      $region43: #{_perceptual_loss.5} parent=39 // pred_region
        %p1128 = scmp.lt.s32.totalorder %s19, 1
        %s1129 = scalar_select %p1128, %s19, 1
        %s1130 = smul.addr %s1129, 4
        %s1131 = smul.addr %s1130, 8
        %s1132 = scalar_lea.vmem %s2, %s1131
      $region44: #{_perceptual_loss.5} parent=39 // pred_fallthru
        _
    $region40: #{_perceptual_loss.5} parent=5 // pred_fallthru
      _
  $region6: #{_perceptual_loss.5} parent=0 // loop_footer
    %s12 = sadd.s32 1, %s8
  $region7: #{_perceptual_loss.5} parent=0 // loop_footer_branch
    %7 = sbr.rel target = $region3
  $region8: #{_perceptual_loss.5} parent=0 // loop_exit
    _

// kernel: reverse
$region0: #{reverse}
  #allocation0 [shape = 's32[1]{0}', space=sflag, size = 0x4, scoped, tag = 'scoped memory for reverse']
  %s0 = inlined_call_operand.vmem [shape: f32[512,512,3,3], index: 0, kind: input, shape index: {}]
  %s1 = inlined_call_operand.vmem [shape: f32[512,512,3,3], index: 1, kind: output, shape index: {}]
  loop: start=0, step=1, limit=4
  $region2: #{reverse} parent=0 // loop_pre_header
    _
  $region3: #{reverse} parent=0 // loop_header
    %s3 = sphi 0, %s7
    %p4 = scmp.ge.s32.totalorder %s3, 4
    %s10 = sphi 0, %s36
    %s11 = sphi 0, %s32
    %s12 = sphi 0, %s28
    %s13 = sphi 0, %s24
    %s14 = sphi 0, %s10
    %s15 = sphi 0, %s11
    %s16 = sphi 0, %s12
    %s17 = sphi 0, %s13
    %s18 = sphi 0, %s14
    %s19 = sphi 0, %s15
    %s20 = sphi 0, %s16
    %s21 = sphi 0, %s17
  $region4: #{reverse} parent=0 // loop_header_branch
    %6 = sbr.rel (%p4) target = $region8
  $region5: #{reverse} parent=0 // loop_body
    %s8 = ssub.s32 %s3, 1
    %s9 = ssub.s32 %s3, 2
    %s22 = sadd.s32 1, %s13
    %p23 = scmp.ge.s32.totalorder %s22, 1
    %s24 = scalar_select %p23, 0, %s22
    %s25 = sadd.s32 1, %s12
    %s26 = scalar_select %p23, %s25, %s12
    %p27 = scmp.ge.s32.totalorder %s26, 2
    %s28 = scalar_select %p27, 0, %s26
    %s29 = sadd.s32 1, %s11
    %s30 = scalar_select %p27, %s29, %s11
    %p31 = scmp.ge.s32.totalorder %s30, 1
    %s32 = scalar_select %p31, 0, %s30
    %s33 = sadd.s32 1, %s10
    %s34 = scalar_select %p31, %s33, %s10
    %p35 = scmp.ge.s32.totalorder %s34, 1
    %s36 = scalar_select %p35, 0, %s34
    %p37 = scmp.le.s32.totalorder 1, %s3
    %p38 = scmp.lt.s32.totalorder %s3, 3
    %p39 = pnand %p37, %p38
    %p40 = pneg %p39
    // Predicated region
    $region9: #{reverse} parent=5 // pred_check
      _
    $region10: #{reverse} parent=5 // pred_check_branch
      %42 = sbr.rel (%p39) target = $region12
    $region11: #{reverse} parent=5 // pred_region
      %s43 = ssub.s32 %s3, 1
    $region12: #{reverse} parent=5 // pred_fallthru
      _
    %p44 = scmp.lt.s32.totalorder %s3, 2
    // Predicated region
    $region13: #{reverse} parent=5 // pred_check
      %p45 = pneg %p44
    $region14: #{reverse} parent=5 // pred_check_branch
      %47 = sbr.rel (%p45) target = $region16
    $region15: #{reverse} parent=5 // pred_region
      %s48 = ssub.s32 0, %s10
      %s49 = ssub.s32 0, %s11
      %s50 = smul.u32 3, %s48
      %s51 = smul.u32 3, %s49
      %s52 = smul.u32 32, %s12
      %s53 = smul.u32 4, %s13
      %p54 = scmp.lt.s32.totalorder %s50, 2
      %s55 = scalar_select %p54, %s50, 2
      %p56 = scmp.lt.s32.totalorder %s51, 2
      %s57 = scalar_select %p56, %s51, 2
      %p58 = scmp.lt.s32.totalorder %s52, 63
      %s59 = scalar_select %p58, %s52, 63
      %p60 = scmp.lt.s32.totalorder %s53, 3
      %s61 = scalar_select %p60, %s53, 3
      %s62 = smul.addr %s59, 4
      %s63 = sadd.s32 %s61, %s62
      %s64 = smul.addr %s57, 256
      %s65 = sadd.s32 %s63, %s64
      %s66 = smul.addr %s55, 768
      %s67 = sadd.s32 %s65, %s66
      %s68 = smul.addr %s67, 8
      %s69 = scalar_lea.vmem %s0, %s68
      %s70 = ssub.s32 0, %s10
      %s71 = ssub.s32 0, %s11
      %s72 = smul.u32 3, %s70
      %s73 = smul.u32 3, %s71
      %s74 = smul.u32 32, %s12
      %s75 = smul.u32 4, %s13
    $region16: #{reverse} parent=5 // pred_fallthru
      _
    %p76 = scmp.le.s32.totalorder 1, %s3
    %p77 = scmp.lt.s32.totalorder %s3, 3
    %p78 = pnand %p76, %p77
    %p79 = pneg %p78
    // Predicated region
    $region17: #{reverse} parent=5 // pred_check
      _
    $region18: #{reverse} parent=5 // pred_check_branch
      %81 = sbr.rel (%p78) target = $region20
    $region19: #{reverse} parent=5 // pred_region
      %s82 = ssub.s32 %s3, 1
      %s83 = ssub.s32 0, %s14
      %s84 = ssub.s32 0, %s15
      %s85 = smul.u32 3, %s83
      %s86 = smul.u32 3, %s84
      %s87 = smul.u32 32, %s16
      %s88 = smul.u32 4, %s17
      %p89 = scmp.lt.s32.totalorder %s85, 2
      %s90 = scalar_select %p89, %s85, 2
      %p91 = scmp.lt.s32.totalorder %s86, 2
      %s92 = scalar_select %p91, %s86, 2
      %p93 = scmp.lt.s32.totalorder %s87, 63
      %s94 = scalar_select %p93, %s87, 63
      %p95 = scmp.lt.s32.totalorder %s88, 3
      %s96 = scalar_select %p95, %s88, 3
      %s97 = smul.addr %s94, 4
      %s98 = sadd.s32 %s96, %s97
      %s99 = smul.addr %s92, 256
      %s100 = sadd.s32 %s98, %s99
      %s101 = smul.addr %s90, 768
      %s102 = sadd.s32 %s100, %s101
      %s103 = smul.addr %s102, 8
      %s104 = scalar_lea.vmem %s0, %s103
      %s105 = smul.u32 3, %s14
      %s106 = smul.u32 3, %s15
      %s107 = smul.u32 32, %s16
      %s108 = smul.u32 4, %s17
      %p109 = scmp.lt.s32.totalorder %s105, 2
      %s110 = scalar_select %p109, %s105, 2
      %p111 = scmp.lt.s32.totalorder %s106, 2
      %s112 = scalar_select %p111, %s106, 2
      %p113 = scmp.lt.s32.totalorder %s107, 63
      %s114 = scalar_select %p113, %s107, 63
      %p115 = scmp.lt.s32.totalorder %s108, 3
      %s116 = scalar_select %p115, %s108, 3
      %s117 = smul.addr %s114, 4
      %s118 = sadd.s32 %s116, %s117
      %s119 = smul.addr %s112, 256
      %s120 = sadd.s32 %s118, %s119
      %s121 = smul.addr %s110, 768
      %s122 = sadd.s32 %s120, %s121
      %s123 = smul.addr %s122, 8
      %s124 = scalar_lea.vmem %s1, %s123
      %s125 = smul.u32 3, %s14
      %s126 = smul.u32 3, %s15
      %s127 = smul.u32 32, %s16
      %s128 = smul.u32 4, %s17
      %s129 = ssub.s32 0, %s14
      %s130 = ssub.s32 0, %s15
      %s131 = smul.u32 3, %s129
      %s132 = smul.u32 3, %s130
      %s133 = smul.u32 32, %s16
      %s134 = smul.u32 4, %s17
      %p135 = scmp.lt.s32.totalorder %s131, 2
      %s136 = scalar_select %p135, %s131, 2
      %p137 = scmp.lt.s32.totalorder %s132, 2
      %s138 = scalar_select %p137, %s132, 2
      %p139 = scmp.lt.s32.totalorder %s133, 63
      %s140 = scalar_select %p139, %s133, 63
      %p141 = scmp.lt.s32.totalorder %s134, 3
      %s142 = scalar_select %p141, %s134, 3
      %s143 = smul.addr %s140, 4
      %s144 = sadd.s32 %s142, %s143
      %s145 = smul.addr %s138, 256
      %s146 = sadd.s32 %s144, %s145
      %s147 = smul.addr %s136, 768
      %s148 = sadd.s32 %s146, %s147
      %s149 = smul.addr %s148, 8
      %s150 = scalar_lea.vmem %s0, %s149
      %s151 = ssub.s32 0, %s14
      %s152 = ssub.s32 0, %s15
      %s153 = smul.u32 3, %s151
      %s154 = smul.u32 3, %s152
      %s155 = smul.u32 32, %s16
      %s156 = smul.u32 4, %s17
      %s157 = smul.u32 3, %s14
      %s158 = smul.u32 3, %s15
      %s159 = smul.u32 32, %s16
      %s160 = smul.u32 4, %s17
      %p161 = scmp.lt.s32.totalorder %s157, 2
      %s162 = scalar_select %p161, %s157, 2
      %p163 = scmp.lt.s32.totalorder %s158, 2
      %s164 = scalar_select %p163, %s158, 2
      %p165 = scmp.lt.s32.totalorder %s159, 63
      %s166 = scalar_select %p165, %s159, 63
      %p167 = scmp.lt.s32.totalorder %s160, 3
      %s168 = scalar_select %p167, %s160, 3
      %s169 = smul.addr %s166, 4
      %s170 = sadd.s32 %s168, %s169
      %s171 = smul.addr %s164, 256
      %s172 = sadd.s32 %s170, %s171
      %s173 = smul.addr %s162, 768
      %s174 = sadd.s32 %s172, %s173
      %s175 = smul.addr %s174, 8
      %s176 = scalar_lea.vmem %s1, %s175
      %s177 = smul.u32 3, %s14
      %s178 = smul.u32 3, %s15
      %s179 = smul.u32 32, %s16
      %s180 = smul.u32 4, %s17
      %s181 = scalar_lea.vmem %s150, 16384
      %v182 = vld [vmem:[%s181] sm:$0xff]
      %183 = vst [vmem:[%s176] sm:$0xff] %v182
      %s184 = scalar_lea.vmem %s150, 10240
      %v185 = vld [vmem:[%s184] sm:$0xff]
      %s186 = scalar_lea.vmem %s176, 6144
      %187 = vst [vmem:[%s186] sm:$0xff] %v185
      %s188 = scalar_lea.vmem %s150, 4096
      %v189 = vld [vmem:[%s188] sm:$0xff]
      %s190 = scalar_lea.vmem %s176, 12288
      %191 = vst [vmem:[%s190] sm:$0xff] %v189
      %s192 = scalar_lea.vmem %s150, 14336
      %v193 = vld [vmem:[%s192] sm:$0xff]
      %s194 = scalar_lea.vmem %s176, 2048
      %195 = vst [vmem:[%s194] sm:$0xff] %v193
      %s196 = scalar_lea.vmem %s150, 8192
      %v197 = vld [vmem:[%s196] sm:$0xff]
      %s198 = scalar_lea.vmem %s176, 8192
      %199 = vst [vmem:[%s198] sm:$0xff] %v197
      %s200 = scalar_lea.vmem %s150, 2048
      %v201 = vld [vmem:[%s200] sm:$0xff]
      %s202 = scalar_lea.vmem %s176, 14336
      %203 = vst [vmem:[%s202] sm:$0xff] %v201
      %s204 = scalar_lea.vmem %s150, 12288
      %v205 = vld [vmem:[%s204] sm:$0xff]
      %s206 = scalar_lea.vmem %s176, 4096
      %207 = vst [vmem:[%s206] sm:$0xff] %v205
      %s208 = scalar_lea.vmem %s150, 6144
      %v209 = vld [vmem:[%s208] sm:$0xff]
      %s210 = scalar_lea.vmem %s176, 10240
      %211 = vst [vmem:[%s210] sm:$0xff] %v209
      %v212 = vld [vmem:[%s150] sm:$0xff]
      %s213 = scalar_lea.vmem %s176, 16384
      %214 = vst [vmem:[%s213] sm:$0xff] %v212
      %s215 = scalar_lea.vmem %s150, 16416
      %v216 = vld [vmem:[%s215] sm:$0xff]
      %s217 = scalar_lea.vmem %s176, 32
      %218 = vst [vmem:[%s217] sm:$0xff] %v216
      %s219 = scalar_lea.vmem %s150, 10272
      %v220 = vld [vmem:[%s219] sm:$0xff]
      %s221 = scalar_lea.vmem %s176, 6176
      %222 = vst [vmem:[%s221] sm:$0xff] %v220
      %s223 = scalar_lea.vmem %s150, 4128
      %v224 = vld [vmem:[%s223] sm:$0xff]
      %s225 = scalar_lea.vmem %s176, 12320
      %226 = vst [vmem:[%s225] sm:$0xff] %v224
      %s227 = scalar_lea.vmem %s150, 14368
      %v228 = vld [vmem:[%s227] sm:$0xff]
      %s229 = scalar_lea.vmem %s176, 2080
      %230 = vst [vmem:[%s229] sm:$0xff] %v228
      %s231 = scalar_lea.vmem %s150, 8224
      %v232 = vld [vmem:[%s231] sm:$0xff]
      %s233 = scalar_lea.vmem %s176, 8224
      %234 = vst [vmem:[%s233] sm:$0xff] %v232
      %s235 = scalar_lea.vmem %s150, 2080
      %v236 = vld [vmem:[%s235] sm:$0xff]
      %s237 = scalar_lea.vmem %s176, 14368
      %238 = vst [vmem:[%s237] sm:$0xff] %v236
      %s239 = scalar_lea.vmem %s150, 12320
      %v240 = vld [vmem:[%s239] sm:$0xff]
      %s241 = scalar_lea.vmem %s176, 4128
      %242 = vst [vmem:[%s241] sm:$0xff] %v240
      %s243 = scalar_lea.vmem %s150, 6176
      %v244 = vld [vmem:[%s243] sm:$0xff]
      %s245 = scalar_lea.vmem %s176, 10272
      %246 = vst [vmem:[%s245] sm:$0xff] %v244
      %s247 = scalar_lea.vmem %s150, 32
      %v248 = vld [vmem:[%s247] sm:$0xff]
      %s249 = scalar_lea.vmem %s176, 16416
      %250 = vst [vmem:[%s249] sm:$0xff] %v248
      %s251 = scalar_lea.vmem %s150, 16448
      %v252 = vld [vmem:[%s251] sm:$0xff]
      %s253 = scalar_lea.vmem %s176, 64
      %254 = vst [vmem:[%s253] sm:$0xff] %v252
      %s255 = scalar_lea.vmem %s150, 10304
      %v256 = vld [vmem:[%s255] sm:$0xff]
      %s257 = scalar_lea.vmem %s176, 6208
      %258 = vst [vmem:[%s257] sm:$0xff] %v256
      %s259 = scalar_lea.vmem %s150, 4160
      %v260 = vld [vmem:[%s259] sm:$0xff]
      %s261 = scalar_lea.vmem %s176, 12352
      %262 = vst [vmem:[%s261] sm:$0xff] %v260
      %s263 = scalar_lea.vmem %s150, 14400
      %v264 = vld [vmem:[%s263] sm:$0xff]
      %s265 = scalar_lea.vmem %s176, 2112
      %266 = vst [vmem:[%s265] sm:$0xff] %v264
      %s267 = scalar_lea.vmem %s150, 8256
      %v268 = vld [vmem:[%s267] sm:$0xff]
      %s269 = scalar_lea.vmem %s176, 8256
      %270 = vst [vmem:[%s269] sm:$0xff] %v268
      %s271 = scalar_lea.vmem %s150, 2112
      %v272 = vld [vmem:[%s271] sm:$0xff]
      %s273 = scalar_lea.vmem %s176, 14400
      %274 = vst [vmem:[%s273] sm:$0xff] %v272
      %s275 = scalar_lea.vmem %s150, 12352
      %v276 = vld [vmem:[%s275] sm:$0xff]
      %s277 = scalar_lea.vmem %s176, 4160
      %278 = vst [vmem:[%s277] sm:$0xff] %v276
      %s279 = scalar_lea.vmem %s150, 6208
      %v280 = vld [vmem:[%s279] sm:$0xff]
      %s281 = scalar_lea.vmem %s176, 10304
      %282 = vst [vmem:[%s281] sm:$0xff] %v280
      %s283 = scalar_lea.vmem %s150, 64
      %v284 = vld [vmem:[%s283] sm:$0xff]
      %s285 = scalar_lea.vmem %s176, 16448
      %286 = vst [vmem:[%s285] sm:$0xff] %v284
      %s287 = scalar_lea.vmem %s150, 16480
      %v288 = vld [vmem:[%s287] sm:$0xff]
      %s289 = scalar_lea.vmem %s176, 96
      %290 = vst [vmem:[%s289] sm:$0xff] %v288
      %s291 = scalar_lea.vmem %s150, 10336
      %v292 = vld [vmem:[%s291] sm:$0xff]
      %s293 = scalar_lea.vmem %s176, 6240
      %294 = vst [vmem:[%s293] sm:$0xff] %v292
      %s295 = scalar_lea.vmem %s150, 4192
      %v296 = vld [vmem:[%s295] sm:$0xff]
      %s297 = scalar_lea.vmem %s176, 12384
      %298 = vst [vmem:[%s297] sm:$0xff] %v296
      %s299 = scalar_lea.vmem %s150, 14432
      %v300 = vld [vmem:[%s299] sm:$0xff]
      %s301 = scalar_lea.vmem %s176, 2144
      %302 = vst [vmem:[%s301] sm:$0xff] %v300
      %s303 = scalar_lea.vmem %s150, 8288
      %v304 = vld [vmem:[%s303] sm:$0xff]
      %s305 = scalar_lea.vmem %s176, 8288
      %306 = vst [vmem:[%s305] sm:$0xff] %v304
      %s307 = scalar_lea.vmem %s150, 2144
      %v308 = vld [vmem:[%s307] sm:$0xff]
      %s309 = scalar_lea.vmem %s176, 14432
      %310 = vst [vmem:[%s309] sm:$0xff] %v308
      %s311 = scalar_lea.vmem %s150, 12384
      %v312 = vld [vmem:[%s311] sm:$0xff]
      %s313 = scalar_lea.vmem %s176, 4192
      %314 = vst [vmem:[%s313] sm:$0xff] %v312
      %s315 = scalar_lea.vmem %s150, 6240
      %v316 = vld [vmem:[%s315] sm:$0xff]
      %s317 = scalar_lea.vmem %s176, 10336
      %318 = vst [vmem:[%s317] sm:$0xff] %v316
      %s319 = scalar_lea.vmem %s150, 96
      %v320 = vld [vmem:[%s319] sm:$0xff]
      %s321 = scalar_lea.vmem %s176, 16480
      %322 = vst [vmem:[%s321] sm:$0xff] %v320
      %s323 = scalar_lea.vmem %s150, 16512
      %v324 = vld [vmem:[%s323] sm:$0xff]
      %s325 = scalar_lea.vmem %s176, 128
      %326 = vst [vmem:[%s325] sm:$0xff] %v324
      %s327 = scalar_lea.vmem %s150, 10368
      %v328 = vld [vmem:[%s327] sm:$0xff]
      %s329 = scalar_lea.vmem %s176, 6272
      %330 = vst [vmem:[%s329] sm:$0xff] %v328
      %s331 = scalar_lea.vmem %s150, 4224
      %v332 = vld [vmem:[%s331] sm:$0xff]
      %s333 = scalar_lea.vmem %s176, 12416
      %334 = vst [vmem:[%s333] sm:$0xff] %v332
      %s335 = scalar_lea.vmem %s150, 14464
      %v336 = vld [vmem:[%s335] sm:$0xff]
      %s337 = scalar_lea.vmem %s176, 2176
      %338 = vst [vmem:[%s337] sm:$0xff] %v336
      %s339 = scalar_lea.vmem %s150, 8320
      %v340 = vld [vmem:[%s339] sm:$0xff]
      %s341 = scalar_lea.vmem %s176, 8320
      %342 = vst [vmem:[%s341] sm:$0xff] %v340
      %s343 = scalar_lea.vmem %s150, 2176
      %v344 = vld [vmem:[%s343] sm:$0xff]
      %s345 = scalar_lea.vmem %s176, 14464
      %346 = vst [vmem:[%s345] sm:$0xff] %v344
      %s347 = scalar_lea.vmem %s150, 12416
      %v348 = vld [vmem:[%s347] sm:$0xff]
      %s349 = scalar_lea.vmem %s176, 4224
      %350 = vst [vmem:[%s349] sm:$0xff] %v348
      %s351 = scalar_lea.vmem %s150, 6272
      %v352 = vld [vmem:[%s351] sm:$0xff]
      %s353 = scalar_lea.vmem %s176, 10368
      %354 = vst [vmem:[%s353] sm:$0xff] %v352
      %s355 = scalar_lea.vmem %s150, 128
      %v356 = vld [vmem:[%s355] sm:$0xff]
      %s357 = scalar_lea.vmem %s176, 16512
      %358 = vst [vmem:[%s357] sm:$0xff] %v356
      %s359 = scalar_lea.vmem %s150, 16544
      %v360 = vld [vmem:[%s359] sm:$0xff]
      %s361 = scalar_lea.vmem %s176, 160
      %362 = vst [vmem:[%s361] sm:$0xff] %v360
      %s363 = scalar_lea.vmem %s150, 10400
      %v364 = vld [vmem:[%s363] sm:$0xff]
      %s365 = scalar_lea.vmem %s176, 6304
      %366 = vst [vmem:[%s365] sm:$0xff] %v364
      %s367 = scalar_lea.vmem %s150, 4256
      %v368 = vld [vmem:[%s367] sm:$0xff]
      %s369 = scalar_lea.vmem %s176, 12448
      %370 = vst [vmem:[%s369] sm:$0xff] %v368
      %s371 = scalar_lea.vmem %s150, 14496
      %v372 = vld [vmem:[%s371] sm:$0xff]
      %s373 = scalar_lea.vmem %s176, 2208
      %374 = vst [vmem:[%s373] sm:$0xff] %v372
      %s375 = scalar_lea.vmem %s150, 8352
      %v376 = vld [vmem:[%s375] sm:$0xff]
      %s377 = scalar_lea.vmem %s176, 8352
      %378 = vst [vmem:[%s377] sm:$0xff] %v376
      %s379 = scalar_lea.vmem %s150, 2208
      %v380 = vld [vmem:[%s379] sm:$0xff]
      %s381 = scalar_lea.vmem %s176, 14496
      %382 = vst [vmem:[%s381] sm:$0xff] %v380
      %s383 = scalar_lea.vmem %s150, 12448
      %v384 = vld [vmem:[%s383] sm:$0xff]
      %s385 = scalar_lea.vmem %s176, 4256
      %386 = vst [vmem:[%s385] sm:$0xff] %v384
      %s387 = scalar_lea.vmem %s150, 6304
      %v388 = vld [vmem:[%s387] sm:$0xff]
      %s389 = scalar_lea.vmem %s176, 10400
      %390 = vst [vmem:[%s389] sm:$0xff] %v388
      %s391 = scalar_lea.vmem %s150, 160
      %v392 = vld [vmem:[%s391] sm:$0xff]
      %s393 = scalar_lea.vmem %s176, 16544
      %394 = vst [vmem:[%s393] sm:$0xff] %v392
      %s395 = scalar_lea.vmem %s150, 16576
      %v396 = vld [vmem:[%s395] sm:$0xff]
      %s397 = scalar_lea.vmem %s176, 192
      %398 = vst [vmem:[%s397] sm:$0xff] %v396
      %s399 = scalar_lea.vmem %s150, 10432
      %v400 = vld [vmem:[%s399] sm:$0xff]
      %s401 = scalar_lea.vmem %s176, 6336
      %402 = vst [vmem:[%s401] sm:$0xff] %v400
      %s403 = scalar_lea.vmem %s150, 4288
      %v404 = vld [vmem:[%s403] sm:$0xff]
      %s405 = scalar_lea.vmem %s176, 12480
      %406 = vst [vmem:[%s405] sm:$0xff] %v404
      %s407 = scalar_lea.vmem %s150, 14528
      %v408 = vld [vmem:[%s407] sm:$0xff]
      %s409 = scalar_lea.vmem %s176, 2240
      %410 = vst [vmem:[%s409] sm:$0xff] %v408
      %s411 = scalar_lea.vmem %s150, 8384
      %v412 = vld [vmem:[%s411] sm:$0xff]
      %s413 = scalar_lea.vmem %s176, 8384
      %414 = vst [vmem:[%s413] sm:$0xff] %v412
      %s415 = scalar_lea.vmem %s150, 2240
      %v416 = vld [vmem:[%s415] sm:$0xff]
      %s417 = scalar_lea.vmem %s176, 14528
      %418 = vst [vmem:[%s417] sm:$0xff] %v416
      %s419 = scalar_lea.vmem %s150, 12480
      %v420 = vld [vmem:[%s419] sm:$0xff]
      %s421 = scalar_lea.vmem %s176, 4288
      %422 = vst [vmem:[%s421] sm:$0xff] %v420
      %s423 = scalar_lea.vmem %s150, 6336
      %v424 = vld [vmem:[%s423] sm:$0xff]
      %s425 = scalar_lea.vmem %s176, 10432
      %426 = vst [vmem:[%s425] sm:$0xff] %v424
      %s427 = scalar_lea.vmem %s150, 192
      %v428 = vld [vmem:[%s427] sm:$0xff]
      %s429 = scalar_lea.vmem %s176, 16576
      %430 = vst [vmem:[%s429] sm:$0xff] %v428
      %s431 = scalar_lea.vmem %s150, 16608
      %v432 = vld [vmem:[%s431] sm:$0xff]
      %s433 = scalar_lea.vmem %s176, 224
      %434 = vst [vmem:[%s433] sm:$0xff] %v432
      %s435 = scalar_lea.vmem %s150, 10464
      %v436 = vld [vmem:[%s435] sm:$0xff]
      %s437 = scalar_lea.vmem %s176, 6368
      %438 = vst [vmem:[%s437] sm:$0xff] %v436
      %s439 = scalar_lea.vmem %s150, 4320
      %v440 = vld [vmem:[%s439] sm:$0xff]
      %s441 = scalar_lea.vmem %s176, 12512
      %442 = vst [vmem:[%s441] sm:$0xff] %v440
      %s443 = scalar_lea.vmem %s150, 14560
      %v444 = vld [vmem:[%s443] sm:$0xff]
      %s445 = scalar_lea.vmem %s176, 2272
      %446 = vst [vmem:[%s445] sm:$0xff] %v444
      %s447 = scalar_lea.vmem %s150, 8416
      %v448 = vld [vmem:[%s447] sm:$0xff]
      %s449 = scalar_lea.vmem %s176, 8416
      %450 = vst [vmem:[%s449] sm:$0xff] %v448
      %s451 = scalar_lea.vmem %s150, 2272
      %v452 = vld [vmem:[%s451] sm:$0xff]
      %s453 = scalar_lea.vmem %s176, 14560
      %454 = vst [vmem:[%s453] sm:$0xff] %v452
      %s455 = scalar_lea.vmem %s150, 12512
      %v456 = vld [vmem:[%s455] sm:$0xff]
      %s457 = scalar_lea.vmem %s176, 4320
      %458 = vst [vmem:[%s457] sm:$0xff] %v456
      %s459 = scalar_lea.vmem %s150, 6368
      %v460 = vld [vmem:[%s459] sm:$0xff]
      %s461 = scalar_lea.vmem %s176, 10464
      %462 = vst [vmem:[%s461] sm:$0xff] %v460
      %s463 = scalar_lea.vmem %s150, 224
      %v464 = vld [vmem:[%s463] sm:$0xff]
      %s465 = scalar_lea.vmem %s176, 16608
      %466 = vst [vmem:[%s465] sm:$0xff] %v464
      %s467 = scalar_lea.vmem %s150, 16640
      %v468 = vld [vmem:[%s467] sm:$0xff]
      %s469 = scalar_lea.vmem %s176, 256
      %470 = vst [vmem:[%s469] sm:$0xff] %v468
      %s471 = scalar_lea.vmem %s150, 10496
      %v472 = vld [vmem:[%s471] sm:$0xff]
      %s473 = scalar_lea.vmem %s176, 6400
      %474 = vst [vmem:[%s473] sm:$0xff] %v472
      %s475 = scalar_lea.vmem %s150, 4352
      %v476 = vld [vmem:[%s475] sm:$0xff]
      %s477 = scalar_lea.vmem %s176, 12544
      %478 = vst [vmem:[%s477] sm:$0xff] %v476
      %s479 = scalar_lea.vmem %s150, 14592
      %v480 = vld [vmem:[%s479] sm:$0xff]
      %s481 = scalar_lea.vmem %s176, 2304
      %482 = vst [vmem:[%s481] sm:$0xff] %v480
      %s483 = scalar_lea.vmem %s150, 8448
      %v484 = vld [vmem:[%s483] sm:$0xff]
      %s485 = scalar_lea.vmem %s176, 8448
      %486 = vst [vmem:[%s485] sm:$0xff] %v484
      %s487 = scalar_lea.vmem %s150, 2304
      %v488 = vld [vmem:[%s487] sm:$0xff]
      %s489 = scalar_lea.vmem %s176, 14592
      %490 = vst [vmem:[%s489] sm:$0xff] %v488
      %s491 = scalar_lea.vmem %s150, 12544
      %v492 = vld [vmem:[%s491] sm:$0xff]
      %s493 = scalar_lea.vmem %s176, 4352
      %494 = vst [vmem:[%s493] sm:$0xff] %v492
      %s495 = scalar_lea.vmem %s150, 6400
      %v496 = vld [vmem:[%s495] sm:$0xff]
      %s497 = scalar_lea.vmem %s176, 10496
      %498 = vst [vmem:[%s497] sm:$0xff] %v496
      %s499 = scalar_lea.vmem %s150, 256
      %v500 = vld [vmem:[%s499] sm:$0xff]
      %s501 = scalar_lea.vmem %s176, 16640
      %502 = vst [vmem:[%s501] sm:$0xff] %v500
      %s503 = scalar_lea.vmem %s150, 16672
      %v504 = vld [vmem:[%s503] sm:$0xff]
      %s505 = scalar_lea.vmem %s176, 288
      %506 = vst [vmem:[%s505] sm:$0xff] %v504
      %s507 = scalar_lea.vmem %s150, 10528
      %v508 = vld [vmem:[%s507] sm:$0xff]
      %s509 = scalar_lea.vmem %s176, 6432
      %510 = vst [vmem:[%s509] sm:$0xff] %v508
      %s511 = scalar_lea.vmem %s150, 4384
      %v512 = vld [vmem:[%s511] sm:$0xff]
      %s513 = scalar_lea.vmem %s176, 12576
      %514 = vst [vmem:[%s513] sm:$0xff] %v512
      %s515 = scalar_lea.vmem %s150, 14624
      %v516 = vld [vmem:[%s515] sm:$0xff]
      %s517 = scalar_lea.vmem %s176, 2336
      %518 = vst [vmem:[%s517] sm:$0xff] %v516
      %s519 = scalar_lea.vmem %s150, 8480
      %v520 = vld [vmem:[%s519] sm:$0xff]
      %s521 = scalar_lea.vmem %s176, 8480
      %522 = vst [vmem:[%s521] sm:$0xff] %v520
      %s523 = scalar_lea.vmem %s150, 2336
      %v524 = vld [vmem:[%s523] sm:$0xff]
      %s525 = scalar_lea.vmem %s176, 14624
      %526 = vst [vmem:[%s525] sm:$0xff] %v524
      %s527 = scalar_lea.vmem %s150, 12576
      %v528 = vld [vmem:[%s527] sm:$0xff]
      %s529 = scalar_lea.vmem %s176, 4384
      %530 = vst [vmem:[%s529] sm:$0xff] %v528
      %s531 = scalar_lea.vmem %s150, 6432
      %v532 = vld [vmem:[%s531] sm:$0xff]
      %s533 = scalar_lea.vmem %s176, 10528
      %534 = vst [vmem:[%s533] sm:$0xff] %v532
      %s535 = scalar_lea.vmem %s150, 288
      %v536 = vld [vmem:[%s535] sm:$0xff]
      %s537 = scalar_lea.vmem %s176, 16672
      %538 = vst [vmem:[%s537] sm:$0xff] %v536
      %s539 = scalar_lea.vmem %s150, 16704
      %v540 = vld [vmem:[%s539] sm:$0xff]
      %s541 = scalar_lea.vmem %s176, 320
      %542 = vst [vmem:[%s541] sm:$0xff] %v540
      %s543 = scalar_lea.vmem %s150, 10560
      %v544 = vld [vmem:[%s543] sm:$0xff]
      %s545 = scalar_lea.vmem %s176, 6464
      %546 = vst [vmem:[%s545] sm:$0xff] %v544
      %s547 = scalar_lea.vmem %s150, 4416
      %v548 = vld [vmem:[%s547] sm:$0xff]
      %s549 = scalar_lea.vmem %s176, 12608
      %550 = vst [vmem:[%s549] sm:$0xff] %v548
      %s551 = scalar_lea.vmem %s150, 14656
      %v552 = vld [vmem:[%s551] sm:$0xff]
      %s553 = scalar_lea.vmem %s176, 2368
      %554 = vst [vmem:[%s553] sm:$0xff] %v552
      %s555 = scalar_lea.vmem %s150, 8512
      %v556 = vld [vmem:[%s555] sm:$0xff]
      %s557 = scalar_lea.vmem %s176, 8512
      %558 = vst [vmem:[%s557] sm:$0xff] %v556
      %s559 = scalar_lea.vmem %s150, 2368
      %v560 = vld [vmem:[%s559] sm:$0xff]
      %s561 = scalar_lea.vmem %s176, 14656
      %562 = vst [vmem:[%s561] sm:$0xff] %v560
      %s563 = scalar_lea.vmem %s150, 12608
      %v564 = vld [vmem:[%s563] sm:$0xff]
      %s565 = scalar_lea.vmem %s176, 4416
      %566 = vst [vmem:[%s565] sm:$0xff] %v564
      %s567 = scalar_lea.vmem %s150, 6464
      %v568 = vld [vmem:[%s567] sm:$0xff]
      %s569 = scalar_lea.vmem %s176, 10560
      %570 = vst [vmem:[%s569] sm:$0xff] %v568
      %s571 = scalar_lea.vmem %s150, 320
      %v572 = vld [vmem:[%s571] sm:$0xff]
      %s573 = scalar_lea.vmem %s176, 16704
      %574 = vst [vmem:[%s573] sm:$0xff] %v572
      %s575 = scalar_lea.vmem %s150, 16736
      %v576 = vld [vmem:[%s575] sm:$0xff]
      %s577 = scalar_lea.vmem %s176, 352
      %578 = vst [vmem:[%s577] sm:$0xff] %v576
      %s579 = scalar_lea.vmem %s150, 10592
      %v580 = vld [vmem:[%s579] sm:$0xff]
      %s581 = scalar_lea.vmem %s176, 6496
      %582 = vst [vmem:[%s581] sm:$0xff] %v580
      %s583 = scalar_lea.vmem %s150, 4448
      %v584 = vld [vmem:[%s583] sm:$0xff]
      %s585 = scalar_lea.vmem %s176, 12640
      %586 = vst [vmem:[%s585] sm:$0xff] %v584
      %s587 = scalar_lea.vmem %s150, 14688
      %v588 = vld [vmem:[%s587] sm:$0xff]
      %s589 = scalar_lea.vmem %s176, 2400
      %590 = vst [vmem:[%s589] sm:$0xff] %v588
      %s591 = scalar_lea.vmem %s150, 8544
      %v592 = vld [vmem:[%s591] sm:$0xff]
      %s593 = scalar_lea.vmem %s176, 8544
      %594 = vst [vmem:[%s593] sm:$0xff] %v592
      %s595 = scalar_lea.vmem %s150, 2400
      %v596 = vld [vmem:[%s595] sm:$0xff]
      %s597 = scalar_lea.vmem %s176, 14688
      %598 = vst [vmem:[%s597] sm:$0xff] %v596
      %s599 = scalar_lea.vmem %s150, 12640
      %v600 = vld [vmem:[%s599] sm:$0xff]
      %s601 = scalar_lea.vmem %s176, 4448
      %602 = vst [vmem:[%s601] sm:$0xff] %v600
      %s603 = scalar_lea.vmem %s150, 6496
      %v604 = vld [vmem:[%s603] sm:$0xff]
      %s605 = scalar_lea.vmem %s176, 10592
      %606 = vst [vmem:[%s605] sm:$0xff] %v604
      %s607 = scalar_lea.vmem %s150, 352
      %v608 = vld [vmem:[%s607] sm:$0xff]
      %s609 = scalar_lea.vmem %s176, 16736
      %610 = vst [vmem:[%s609] sm:$0xff] %v608
      %s611 = scalar_lea.vmem %s150, 16768
      %v612 = vld [vmem:[%s611] sm:$0xff]
      %s613 = scalar_lea.vmem %s176, 384
      %614 = vst [vmem:[%s613] sm:$0xff] %v612
      %s615 = scalar_lea.vmem %s150, 10624
      %v616 = vld [vmem:[%s615] sm:$0xff]
      %s617 = scalar_lea.vmem %s176, 6528
      %618 = vst [vmem:[%s617] sm:$0xff] %v616
      %s619 = scalar_lea.vmem %s150, 4480
      %v620 = vld [vmem:[%s619] sm:$0xff]
      %s621 = scalar_lea.vmem %s176, 12672
      %622 = vst [vmem:[%s621] sm:$0xff] %v620
      %s623 = scalar_lea.vmem %s150, 14720
      %v624 = vld [vmem:[%s623] sm:$0xff]
      %s625 = scalar_lea.vmem %s176, 2432
      %626 = vst [vmem:[%s625] sm:$0xff] %v624
      %s627 = scalar_lea.vmem %s150, 8576
      %v628 = vld [vmem:[%s627] sm:$0xff]
      %s629 = scalar_lea.vmem %s176, 8576
      %630 = vst [vmem:[%s629] sm:$0xff] %v628
      %s631 = scalar_lea.vmem %s150, 2432
      %v632 = vld [vmem:[%s631] sm:$0xff]
      %s633 = scalar_lea.vmem %s176, 14720
      %634 = vst [vmem:[%s633] sm:$0xff] %v632
      %s635 = scalar_lea.vmem %s150, 12672
      %v636 = vld [vmem:[%s635] sm:$0xff]
      %s637 = scalar_lea.vmem %s176, 4480
      %638 = vst [vmem:[%s637] sm:$0xff] %v636
      %s639 = scalar_lea.vmem %s150, 6528
      %v640 = vld [vmem:[%s639] sm:$0xff]
      %s641 = scalar_lea.vmem %s176, 10624
      %642 = vst [vmem:[%s641] sm:$0xff] %v640
      %s643 = scalar_lea.vmem %s150, 384
      %v644 = vld [vmem:[%s643] sm:$0xff]
      %s645 = scalar_lea.vmem %s176, 16768
      %646 = vst [vmem:[%s645] sm:$0xff] %v644
      %s647 = scalar_lea.vmem %s150, 16800
      %v648 = vld [vmem:[%s647] sm:$0xff]
      %s649 = scalar_lea.vmem %s176, 416
      %650 = vst [vmem:[%s649] sm:$0xff] %v648
      %s651 = scalar_lea.vmem %s150, 10656
      %v652 = vld [vmem:[%s651] sm:$0xff]
      %s653 = scalar_lea.vmem %s176, 6560
      %654 = vst [vmem:[%s653] sm:$0xff] %v652
      %s655 = scalar_lea.vmem %s150, 4512
      %v656 = vld [vmem:[%s655] sm:$0xff]
      %s657 = scalar_lea.vmem %s176, 12704
      %658 = vst [vmem:[%s657] sm:$0xff] %v656
      %s659 = scalar_lea.vmem %s150, 14752
      %v660 = vld [vmem:[%s659] sm:$0xff]
      %s661 = scalar_lea.vmem %s176, 2464
      %662 = vst [vmem:[%s661] sm:$0xff] %v660
      %s663 = scalar_lea.vmem %s150, 8608
      %v664 = vld [vmem:[%s663] sm:$0xff]
      %s665 = scalar_lea.vmem %s176, 8608
      %666 = vst [vmem:[%s665] sm:$0xff] %v664
      %s667 = scalar_lea.vmem %s150, 2464
      %v668 = vld [vmem:[%s667] sm:$0xff]
      %s669 = scalar_lea.vmem %s176, 14752
      %670 = vst [vmem:[%s669] sm:$0xff] %v668
      %s671 = scalar_lea.vmem %s150, 12704
      %v672 = vld [vmem:[%s671] sm:$0xff]
      %s673 = scalar_lea.vmem %s176, 4512
      %674 = vst [vmem:[%s673] sm:$0xff] %v672
      %s675 = scalar_lea.vmem %s150, 6560
      %v676 = vld [vmem:[%s675] sm:$0xff]
      %s677 = scalar_lea.vmem %s176, 10656
      %678 = vst [vmem:[%s677] sm:$0xff] %v676
      %s679 = scalar_lea.vmem %s150, 416
      %v680 = vld [vmem:[%s679] sm:$0xff]
      %s681 = scalar_lea.vmem %s176, 16800
      %682 = vst [vmem:[%s681] sm:$0xff] %v680
      %s683 = scalar_lea.vmem %s150, 16832
      %v684 = vld [vmem:[%s683] sm:$0xff]
      %s685 = scalar_lea.vmem %s176, 448
      %686 = vst [vmem:[%s685] sm:$0xff] %v684
      %s687 = scalar_lea.vmem %s150, 10688
      %v688 = vld [vmem:[%s687] sm:$0xff]
      %s689 = scalar_lea.vmem %s176, 6592
      %690 = vst [vmem:[%s689] sm:$0xff] %v688
      %s691 = scalar_lea.vmem %s150, 4544
      %v692 = vld [vmem:[%s691] sm:$0xff]
      %s693 = scalar_lea.vmem %s176, 12736
      %694 = vst [vmem:[%s693] sm:$0xff] %v692
      %s695 = scalar_lea.vmem %s150, 14784
      %v696 = vld [vmem:[%s695] sm:$0xff]
      %s697 = scalar_lea.vmem %s176, 2496
      %698 = vst [vmem:[%s697] sm:$0xff] %v696
      %s699 = scalar_lea.vmem %s150, 8640
      %v700 = vld [vmem:[%s699] sm:$0xff]
      %s701 = scalar_lea.vmem %s176, 8640
      %702 = vst [vmem:[%s701] sm:$0xff] %v700
      %s703 = scalar_lea.vmem %s150, 2496
      %v704 = vld [vmem:[%s703] sm:$0xff]
      %s705 = scalar_lea.vmem %s176, 14784
      %706 = vst [vmem:[%s705] sm:$0xff] %v704
      %s707 = scalar_lea.vmem %s150, 12736
      %v708 = vld [vmem:[%s707] sm:$0xff]
      %s709 = scalar_lea.vmem %s176, 4544
      %710 = vst [vmem:[%s709] sm:$0xff] %v708
      %s711 = scalar_lea.vmem %s150, 6592
      %v712 = vld [vmem:[%s711] sm:$0xff]
      %s713 = scalar_lea.vmem %s176, 10688
      %714 = vst [vmem:[%s713] sm:$0xff] %v712
      %s715 = scalar_lea.vmem %s150, 448
      %v716 = vld [vmem:[%s715] sm:$0xff]
      %s717 = scalar_lea.vmem %s176, 16832
      %718 = vst [vmem:[%s717] sm:$0xff] %v716
      %s719 = scalar_lea.vmem %s150, 16864
      %v720 = vld [vmem:[%s719] sm:$0xff]
      %s721 = scalar_lea.vmem %s176, 480
      %722 = vst [vmem:[%s721] sm:$0xff] %v720
      %s723 = scalar_lea.vmem %s150, 10720
      %v724 = vld [vmem:[%s723] sm:$0xff]
      %s725 = scalar_lea.vmem %s176, 6624
      %726 = vst [vmem:[%s725] sm:$0xff] %v724
      %s727 = scalar_lea.vmem %s150, 4576
      %v728 = vld [vmem:[%s727] sm:$0xff]
      %s729 = scalar_lea.vmem %s176, 12768
      %730 = vst [vmem:[%s729] sm:$0xff] %v728
      %s731 = scalar_lea.vmem %s150, 14816
      %v732 = vld [vmem:[%s731] sm:$0xff]
      %s733 = scalar_lea.vmem %s176, 2528
      %734 = vst [vmem:[%s733] sm:$0xff] %v732
      %s735 = scalar_lea.vmem %s150, 8672
      %v736 = vld [vmem:[%s735] sm:$0xff]
      %s737 = scalar_lea.vmem %s176, 8672
      %738 = vst [vmem:[%s737] sm:$0xff] %v736
      %s739 = scalar_lea.vmem %s150, 2528
      %v740 = vld [vmem:[%s739] sm:$0xff]
      %s741 = scalar_lea.vmem %s176, 14816
      %742 = vst [vmem:[%s741] sm:$0xff] %v740
      %s743 = scalar_lea.vmem %s150, 12768
      %v744 = vld [vmem:[%s743] sm:$0xff]
      %s745 = scalar_lea.vmem %s176, 4576
      %746 = vst [vmem:[%s745] sm:$0xff] %v744
      %s747 = scalar_lea.vmem %s150, 6624
      %v748 = vld [vmem:[%s747] sm:$0xff]
      %s749 = scalar_lea.vmem %s176, 10720
      %750 = vst [vmem:[%s749] sm:$0xff] %v748
      %s751 = scalar_lea.vmem %s150, 480
      %v752 = vld [vmem:[%s751] sm:$0xff]
      %s753 = scalar_lea.vmem %s176, 16864
      %754 = vst [vmem:[%s753] sm:$0xff] %v752
      %s755 = scalar_lea.vmem %s150, 16896
      %v756 = vld [vmem:[%s755] sm:$0xff]
      %s757 = scalar_lea.vmem %s176, 512
      %758 = vst [vmem:[%s757] sm:$0xff] %v756
      %s759 = scalar_lea.vmem %s150, 10752
      %v760 = vld [vmem:[%s759] sm:$0xff]
      %s761 = scalar_lea.vmem %s176, 6656
      %762 = vst [vmem:[%s761] sm:$0xff] %v760
      %s763 = scalar_lea.vmem %s150, 4608
      %v764 = vld [vmem:[%s763] sm:$0xff]
      %s765 = scalar_lea.vmem %s176, 12800
      %766 = vst [vmem:[%s765] sm:$0xff] %v764
      %s767 = scalar_lea.vmem %s150, 14848
      %v768 = vld [vmem:[%s767] sm:$0xff]
      %s769 = scalar_lea.vmem %s176, 2560
      %770 = vst [vmem:[%s769] sm:$0xff] %v768
      %s771 = scalar_lea.vmem %s150, 8704
      %v772 = vld [vmem:[%s771] sm:$0xff]
      %s773 = scalar_lea.vmem %s176, 8704
      %774 = vst [vmem:[%s773] sm:$0xff] %v772
      %s775 = scalar_lea.vmem %s150, 2560
      %v776 = vld [vmem:[%s775] sm:$0xff]
      %s777 = scalar_lea.vmem %s176, 14848
      %778 = vst [vmem:[%s777] sm:$0xff] %v776
      %s779 = scalar_lea.vmem %s150, 12800
      %v780 = vld [vmem:[%s779] sm:$0xff]
      %s781 = scalar_lea.vmem %s176, 4608
      %782 = vst [vmem:[%s781] sm:$0xff] %v780
      %s783 = scalar_lea.vmem %s150, 6656
      %v784 = vld [vmem:[%s783] sm:$0xff]
      %s785 = scalar_lea.vmem %s176, 10752
      %786 = vst [vmem:[%s785] sm:$0xff] %v784
      %s787 = scalar_lea.vmem %s150, 512
      %v788 = vld [vmem:[%s787] sm:$0xff]
      %s789 = scalar_lea.vmem %s176, 16896
      %790 = vst [vmem:[%s789] sm:$0xff] %v788
      %s791 = scalar_lea.vmem %s150, 16928
      %v792 = vld [vmem:[%s791] sm:$0xff]
      %s793 = scalar_lea.vmem %s176, 544
      %794 = vst [vmem:[%s793] sm:$0xff] %v792
      %s795 = scalar_lea.vmem %s150, 10784
      %v796 = vld [vmem:[%s795] sm:$0xff]
      %s797 = scalar_lea.vmem %s176, 6688
      %798 = vst [vmem:[%s797] sm:$0xff] %v796
      %s799 = scalar_lea.vmem %s150, 4640
      %v800 = vld [vmem:[%s799] sm:$0xff]
      %s801 = scalar_lea.vmem %s176, 12832
      %802 = vst [vmem:[%s801] sm:$0xff] %v800
      %s803 = scalar_lea.vmem %s150, 14880
      %v804 = vld [vmem:[%s803] sm:$0xff]
      %s805 = scalar_lea.vmem %s176, 2592
      %806 = vst [vmem:[%s805] sm:$0xff] %v804
      %s807 = scalar_lea.vmem %s150, 8736
      %v808 = vld [vmem:[%s807] sm:$0xff]
      %s809 = scalar_lea.vmem %s176, 8736
      %810 = vst [vmem:[%s809] sm:$0xff] %v808
      %s811 = scalar_lea.vmem %s150, 2592
      %v812 = vld [vmem:[%s811] sm:$0xff]
      %s813 = scalar_lea.vmem %s176, 14880
      %814 = vst [vmem:[%s813] sm:$0xff] %v812
      %s815 = scalar_lea.vmem %s150, 12832
      %v816 = vld [vmem:[%s815] sm:$0xff]
      %s817 = scalar_lea.vmem %s176, 4640
      %818 = vst [vmem:[%s817] sm:$0xff] %v816
      %s819 = scalar_lea.vmem %s150, 6688
      %v820 = vld [vmem:[%s819] sm:$0xff]
      %s821 = scalar_lea.vmem %s176, 10784
      %822 = vst [vmem:[%s821] sm:$0xff] %v820
      %s823 = scalar_lea.vmem %s150, 544
      %v824 = vld [vmem:[%s823] sm:$0xff]
      %s825 = scalar_lea.vmem %s176, 16928
      %826 = vst [vmem:[%s825] sm:$0xff] %v824
      %s827 = scalar_lea.vmem %s150, 16960
      %v828 = vld [vmem:[%s827] sm:$0xff]
      %s829 = scalar_lea.vmem %s176, 576
      %830 = vst [vmem:[%s829] sm:$0xff] %v828
      %s831 = scalar_lea.vmem %s150, 10816
      %v832 = vld [vmem:[%s831] sm:$0xff]
      %s833 = scalar_lea.vmem %s176, 6720
      %834 = vst [vmem:[%s833] sm:$0xff] %v832
      %s835 = scalar_lea.vmem %s150, 4672
      %v836 = vld [vmem:[%s835] sm:$0xff]
      %s837 = scalar_lea.vmem %s176, 12864
      %838 = vst [vmem:[%s837] sm:$0xff] %v836
      %s839 = scalar_lea.vmem %s150, 14912
      %v840 = vld [vmem:[%s839] sm:$0xff]
      %s841 = scalar_lea.vmem %s176, 2624
      %842 = vst [vmem:[%s841] sm:$0xff] %v840
      %s843 = scalar_lea.vmem %s150, 8768
      %v844 = vld [vmem:[%s843] sm:$0xff]
      %s845 = scalar_lea.vmem %s176, 8768
      %846 = vst [vmem:[%s845] sm:$0xff] %v844
      %s847 = scalar_lea.vmem %s150, 2624
      %v848 = vld [vmem:[%s847] sm:$0xff]
      %s849 = scalar_lea.vmem %s176, 14912
      %850 = vst [vmem:[%s849] sm:$0xff] %v848
      %s851 = scalar_lea.vmem %s150, 12864
      %v852 = vld [vmem:[%s851] sm:$0xff]
      %s853 = scalar_lea.vmem %s176, 4672
      %854 = vst [vmem:[%s853] sm:$0xff] %v852
      %s855 = scalar_lea.vmem %s150, 6720
      %v856 = vld [vmem:[%s855] sm:$0xff]
      %s857 = scalar_lea.vmem %s176, 10816
      %858 = vst [vmem:[%s857] sm:$0xff] %v856
      %s859 = scalar_lea.vmem %s150, 576
      %v860 = vld [vmem:[%s859] sm:$0xff]
      %s861 = scalar_lea.vmem %s176, 16960
      %862 = vst [vmem:[%s861] sm:$0xff] %v860
      %s863 = scalar_lea.vmem %s150, 16992
      %v864 = vld [vmem:[%s863] sm:$0xff]
      %s865 = scalar_lea.vmem %s176, 608
      %866 = vst [vmem:[%s865] sm:$0xff] %v864
      %s867 = scalar_lea.vmem %s150, 10848
      %v868 = vld [vmem:[%s867] sm:$0xff]
      %s869 = scalar_lea.vmem %s176, 6752
      %870 = vst [vmem:[%s869] sm:$0xff] %v868
      %s871 = scalar_lea.vmem %s150, 4704
      %v872 = vld [vmem:[%s871] sm:$0xff]
      %s873 = scalar_lea.vmem %s176, 12896
      %874 = vst [vmem:[%s873] sm:$0xff] %v872
      %s875 = scalar_lea.vmem %s150, 14944
      %v876 = vld [vmem:[%s875] sm:$0xff]
      %s877 = scalar_lea.vmem %s176, 2656
      %878 = vst [vmem:[%s877] sm:$0xff] %v876
      %s879 = scalar_lea.vmem %s150, 8800
      %v880 = vld [vmem:[%s879] sm:$0xff]
      %s881 = scalar_lea.vmem %s176, 8800
      %882 = vst [vmem:[%s881] sm:$0xff] %v880
      %s883 = scalar_lea.vmem %s150, 2656
      %v884 = vld [vmem:[%s883] sm:$0xff]
      %s885 = scalar_lea.vmem %s176, 14944
      %886 = vst [vmem:[%s885] sm:$0xff] %v884
      %s887 = scalar_lea.vmem %s150, 12896
      %v888 = vld [vmem:[%s887] sm:$0xff]
      %s889 = scalar_lea.vmem %s176, 4704
      %890 = vst [vmem:[%s889] sm:$0xff] %v888
      %s891 = scalar_lea.vmem %s150, 6752
      %v892 = vld [vmem:[%s891] sm:$0xff]
      %s893 = scalar_lea.vmem %s176, 10848
      %894 = vst [vmem:[%s893] sm:$0xff] %v892
      %s895 = scalar_lea.vmem %s150, 608
      %v896 = vld [vmem:[%s895] sm:$0xff]
      %s897 = scalar_lea.vmem %s176, 16992
      %898 = vst [vmem:[%s897] sm:$0xff] %v896
      %s899 = scalar_lea.vmem %s150, 17024
      %v900 = vld [vmem:[%s899] sm:$0xff]
      %s901 = scalar_lea.vmem %s176, 640
      %902 = vst [vmem:[%s901] sm:$0xff] %v900
      %s903 = scalar_lea.vmem %s150, 10880
      %v904 = vld [vmem:[%s903] sm:$0xff]
      %s905 = scalar_lea.vmem %s176, 6784
      %906 = vst [vmem:[%s905] sm:$0xff] %v904
      %s907 = scalar_lea.vmem %s150, 4736
      %v908 = vld [vmem:[%s907] sm:$0xff]
      %s909 = scalar_lea.vmem %s176, 12928
      %910 = vst [vmem:[%s909] sm:$0xff] %v908
      %s911 = scalar_lea.vmem %s150, 14976
      %v912 = vld [vmem:[%s911] sm:$0xff]
      %s913 = scalar_lea.vmem %s176, 2688
      %914 = vst [vmem:[%s913] sm:$0xff] %v912
      %s915 = scalar_lea.vmem %s150, 8832
      %v916 = vld [vmem:[%s915] sm:$0xff]
      %s917 = scalar_lea.vmem %s176, 8832
      %918 = vst [vmem:[%s917] sm:$0xff] %v916
      %s919 = scalar_lea.vmem %s150, 2688
      %v920 = vld [vmem:[%s919] sm:$0xff]
      %s921 = scalar_lea.vmem %s176, 14976
      %922 = vst [vmem:[%s921] sm:$0xff] %v920
      %s923 = scalar_lea.vmem %s150, 12928
      %v924 = vld [vmem:[%s923] sm:$0xff]
      %s925 = scalar_lea.vmem %s176, 4736
      %926 = vst [vmem:[%s925] sm:$0xff] %v924
      %s927 = scalar_lea.vmem %s150, 6784
      %v928 = vld [vmem:[%s927] sm:$0xff]
      %s929 = scalar_lea.vmem %s176, 10880
      %930 = vst [vmem:[%s929] sm:$0xff] %v928
      %s931 = scalar_lea.vmem %s150, 640
      %v932 = vld [vmem:[%s931] sm:$0xff]
      %s933 = scalar_lea.vmem %s176, 17024
      %934 = vst [vmem:[%s933] sm:$0xff] %v932
      %s935 = scalar_lea.vmem %s150, 17056
      %v936 = vld [vmem:[%s935] sm:$0xff]
      %s937 = scalar_lea.vmem %s176, 672
      %938 = vst [vmem:[%s937] sm:$0xff] %v936
      %s939 = scalar_lea.vmem %s150, 10912
      %v940 = vld [vmem:[%s939] sm:$0xff]
      %s941 = scalar_lea.vmem %s176, 6816
      %942 = vst [vmem:[%s941] sm:$0xff] %v940
      %s943 = scalar_lea.vmem %s150, 4768
      %v944 = vld [vmem:[%s943] sm:$0xff]
      %s945 = scalar_lea.vmem %s176, 12960
      %946 = vst [vmem:[%s945] sm:$0xff] %v944
      %s947 = scalar_lea.vmem %s150, 15008
      %v948 = vld [vmem:[%s947] sm:$0xff]
      %s949 = scalar_lea.vmem %s176, 2720
      %950 = vst [vmem:[%s949] sm:$0xff] %v948
      %s951 = scalar_lea.vmem %s150, 8864
      %v952 = vld [vmem:[%s951] sm:$0xff]
      %s953 = scalar_lea.vmem %s176, 8864
      %954 = vst [vmem:[%s953] sm:$0xff] %v952
      %s955 = scalar_lea.vmem %s150, 2720
      %v956 = vld [vmem:[%s955] sm:$0xff]
      %s957 = scalar_lea.vmem %s176, 15008
      %958 = vst [vmem:[%s957] sm:$0xff] %v956
      %s959 = scalar_lea.vmem %s150, 12960
      %v960 = vld [vmem:[%s959] sm:$0xff]
      %s961 = scalar_lea.vmem %s176, 4768
      %962 = vst [vmem:[%s961] sm:$0xff] %v960
      %s963 = scalar_lea.vmem %s150, 6816
      %v964 = vld [vmem:[%s963] sm:$0xff]
      %s965 = scalar_lea.vmem %s176, 10912
      %966 = vst [vmem:[%s965] sm:$0xff] %v964
      %s967 = scalar_lea.vmem %s150, 672
      %v968 = vld [vmem:[%s967] sm:$0xff]
      %s969 = scalar_lea.vmem %s176, 17056
      %970 = vst [vmem:[%s969] sm:$0xff] %v968
      %s971 = scalar_lea.vmem %s150, 17088
      %v972 = vld [vmem:[%s971] sm:$0xff]
      %s973 = scalar_lea.vmem %s176, 704
      %974 = vst [vmem:[%s973] sm:$0xff] %v972
      %s975 = scalar_lea.vmem %s150, 10944
      %v976 = vld [vmem:[%s975] sm:$0xff]
      %s977 = scalar_lea.vmem %s176, 6848
      %978 = vst [vmem:[%s977] sm:$0xff] %v976
      %s979 = scalar_lea.vmem %s150, 4800
      %v980 = vld [vmem:[%s979] sm:$0xff]
      %s981 = scalar_lea.vmem %s176, 12992
      %982 = vst [vmem:[%s981] sm:$0xff] %v980
      %s983 = scalar_lea.vmem %s150, 15040
      %v984 = vld [vmem:[%s983] sm:$0xff]
      %s985 = scalar_lea.vmem %s176, 2752
      %986 = vst [vmem:[%s985] sm:$0xff] %v984
      %s987 = scalar_lea.vmem %s150, 8896
      %v988 = vld [vmem:[%s987] sm:$0xff]
      %s989 = scalar_lea.vmem %s176, 8896
      %990 = vst [vmem:[%s989] sm:$0xff] %v988
      %s991 = scalar_lea.vmem %s150, 2752
      %v992 = vld [vmem:[%s991] sm:$0xff]
      %s993 = scalar_lea.vmem %s176, 15040
      %994 = vst [vmem:[%s993] sm:$0xff] %v992
      %s995 = scalar_lea.vmem %s150, 12992
      %v996 = vld [vmem:[%s995] sm:$0xff]
      %s997 = scalar_lea.vmem %s176, 4800
      %998 = vst [vmem:[%s997] sm:$0xff] %v996
      %s999 = scalar_lea.vmem %s150, 6848
      %v1000 = vld [vmem:[%s999] sm:$0xff]
      %s1001 = scalar_lea.vmem %s176, 10944
      %1002 = vst [vmem:[%s1001] sm:$0xff] %v1000
      %s1003 = scalar_lea.vmem %s150, 704
      %v1004 = vld [vmem:[%s1003] sm:$0xff]
      %s1005 = scalar_lea.vmem %s176, 17088
      %1006 = vst [vmem:[%s1005] sm:$0xff] %v1004
      %s1007 = scalar_lea.vmem %s150, 17120
      %v1008 = vld [vmem:[%s1007] sm:$0xff]
      %s1009 = scalar_lea.vmem %s176, 736
      %1010 = vst [vmem:[%s1009] sm:$0xff] %v1008
      %s1011 = scalar_lea.vmem %s150, 10976
      %v1012 = vld [vmem:[%s1011] sm:$0xff]
      %s1013 = scalar_lea.vmem %s176, 6880
      %1014 = vst [vmem:[%s1013] sm:$0xff] %v1012
      %s1015 = scalar_lea.vmem %s150, 4832
      %v1016 = vld [vmem:[%s1015] sm:$0xff]
      %s1017 = scalar_lea.vmem %s176, 13024
      %1018 = vst [vmem:[%s1017] sm:$0xff] %v1016
      %s1019 = scalar_lea.vmem %s150, 15072
      %v1020 = vld [vmem:[%s1019] sm:$0xff]
      %s1021 = scalar_lea.vmem %s176, 2784
      %1022 = vst [vmem:[%s1021] sm:$0xff] %v1020
      %s1023 = scalar_lea.vmem %s150, 8928
      %v1024 = vld [vmem:[%s1023] sm:$0xff]
      %s1025 = scalar_lea.vmem %s176, 8928
      %1026 = vst [vmem:[%s1025] sm:$0xff] %v1024
      %s1027 = scalar_lea.vmem %s150, 2784
      %v1028 = vld [vmem:[%s1027] sm:$0xff]
      %s1029 = scalar_lea.vmem %s176, 15072
      %1030 = vst [vmem:[%s1029] sm:$0xff] %v1028
      %s1031 = scalar_lea.vmem %s150, 13024
      %v1032 = vld [vmem:[%s1031] sm:$0xff]
      %s1033 = scalar_lea.vmem %s176, 4832
      %1034 = vst [vmem:[%s1033] sm:$0xff] %v1032
      %s1035 = scalar_lea.vmem %s150, 6880
      %v1036 = vld [vmem:[%s1035] sm:$0xff]
      %s1037 = scalar_lea.vmem %s176, 10976
      %1038 = vst [vmem:[%s1037] sm:$0xff] %v1036
      %s1039 = scalar_lea.vmem %s150, 736
      %v1040 = vld [vmem:[%s1039] sm:$0xff]
      %s1041 = scalar_lea.vmem %s176, 17120
      %1042 = vst [vmem:[%s1041] sm:$0xff] %v1040
      %s1043 = scalar_lea.vmem %s150, 17152
      %v1044 = vld [vmem:[%s1043] sm:$0xff]
      %s1045 = scalar_lea.vmem %s176, 768
      %1046 = vst [vmem:[%s1045] sm:$0xff] %v1044
      %s1047 = scalar_lea.vmem %s150, 11008
      %v1048 = vld [vmem:[%s1047] sm:$0xff]
      %s1049 = scalar_lea.vmem %s176, 6912
      %1050 = vst [vmem:[%s1049] sm:$0xff] %v1048
      %s1051 = scalar_lea.vmem %s150, 4864
      %v1052 = vld [vmem:[%s1051] sm:$0xff]
      %s1053 = scalar_lea.vmem %s176, 13056
      %1054 = vst [vmem:[%s1053] sm:$0xff] %v1052
      %s1055 = scalar_lea.vmem %s150, 15104
      %v1056 = vld [vmem:[%s1055] sm:$0xff]
      %s1057 = scalar_lea.vmem %s176, 2816
      %1058 = vst [vmem:[%s1057] sm:$0xff] %v1056
      %s1059 = scalar_lea.vmem %s150, 8960
      %v1060 = vld [vmem:[%s1059] sm:$0xff]
      %s1061 = scalar_lea.vmem %s176, 8960
      %1062 = vst [vmem:[%s1061] sm:$0xff] %v1060
      %s1063 = scalar_lea.vmem %s150, 2816
      %v1064 = vld [vmem:[%s1063] sm:$0xff]
      %s1065 = scalar_lea.vmem %s176, 15104
      %1066 = vst [vmem:[%s1065] sm:$0xff] %v1064
      %s1067 = scalar_lea.vmem %s150, 13056
      %v1068 = vld [vmem:[%s1067] sm:$0xff]
      %s1069 = scalar_lea.vmem %s176, 4864
      %1070 = vst [vmem:[%s1069] sm:$0xff] %v1068
      %s1071 = scalar_lea.vmem %s150, 6912
      %v1072 = vld [vmem:[%s1071] sm:$0xff]
      %s1073 = scalar_lea.vmem %s176, 11008
      %1074 = vst [vmem:[%s1073] sm:$0xff] %v1072
      %s1075 = scalar_lea.vmem %s150, 768
      %v1076 = vld [vmem:[%s1075] sm:$0xff]
      %s1077 = scalar_lea.vmem %s176, 17152
      %1078 = vst [vmem:[%s1077] sm:$0xff] %v1076
      %s1079 = scalar_lea.vmem %s150, 17184
      %v1080 = vld [vmem:[%s1079] sm:$0xff]
      %s1081 = scalar_lea.vmem %s176, 800
      %1082 = vst [vmem:[%s1081] sm:$0xff] %v1080
      %s1083 = scalar_lea.vmem %s150, 11040
      %v1084 = vld [vmem:[%s1083] sm:$0xff]
      %s1085 = scalar_lea.vmem %s176, 6944
      %1086 = vst [vmem:[%s1085] sm:$0xff] %v1084
      %s1087 = scalar_lea.vmem %s150, 4896
      %v1088 = vld [vmem:[%s1087] sm:$0xff]
      %s1089 = scalar_lea.vmem %s176, 13088
      %1090 = vst [vmem:[%s1089] sm:$0xff] %v1088
      %s1091 = scalar_lea.vmem %s150, 15136
      %v1092 = vld [vmem:[%s1091] sm:$0xff]
      %s1093 = scalar_lea.vmem %s176, 2848
      %1094 = vst [vmem:[%s1093] sm:$0xff] %v1092
      %s1095 = scalar_lea.vmem %s150, 8992
      %v1096 = vld [vmem:[%s1095] sm:$0xff]
      %s1097 = scalar_lea.vmem %s176, 8992
      %1098 = vst [vmem:[%s1097] sm:$0xff] %v1096
      %s1099 = scalar_lea.vmem %s150, 2848
      %v1100 = vld [vmem:[%s1099] sm:$0xff]
      %s1101 = scalar_lea.vmem %s176, 15136
      %1102 = vst [vmem:[%s1101] sm:$0xff] %v1100
      %s1103 = scalar_lea.vmem %s150, 13088
      %v1104 = vld [vmem:[%s1103] sm:$0xff]
      %s1105 = scalar_lea.vmem %s176, 4896
      %1106 = vst [vmem:[%s1105] sm:$0xff] %v1104
      %s1107 = scalar_lea.vmem %s150, 6944
      %v1108 = vld [vmem:[%s1107] sm:$0xff]
      %s1109 = scalar_lea.vmem %s176, 11040
      %1110 = vst [vmem:[%s1109] sm:$0xff] %v1108
      %s1111 = scalar_lea.vmem %s150, 800
      %v1112 = vld [vmem:[%s1111] sm:$0xff]
      %s1113 = scalar_lea.vmem %s176, 17184
      %1114 = vst [vmem:[%s1113] sm:$0xff] %v1112
      %s1115 = scalar_lea.vmem %s150, 17216
      %v1116 = vld [vmem:[%s1115] sm:$0xff]
      %s1117 = scalar_lea.vmem %s176, 832
      %1118 = vst [vmem:[%s1117] sm:$0xff] %v1116
      %s1119 = scalar_lea.vmem %s150, 11072
      %v1120 = vld [vmem:[%s1119] sm:$0xff]
      %s1121 = scalar_lea.vmem %s176, 6976
      %1122 = vst [vmem:[%s1121] sm:$0xff] %v1120
      %s1123 = scalar_lea.vmem %s150, 4928
      %v1124 = vld [vmem:[%s1123] sm:$0xff]
      %s1125 = scalar_lea.vmem %s176, 13120
      %1126 = vst [vmem:[%s1125] sm:$0xff] %v1124
      %s1127 = scalar_lea.vmem %s150, 15168
      %v1128 = vld [vmem:[%s1127] sm:$0xff]
      %s1129 = scalar_lea.vmem %s176, 2880
      %1130 = vst [vmem:[%s1129] sm:$0xff] %v1128
      %s1131 = scalar_lea.vmem %s150, 9024
      %v1132 = vld [vmem:[%s1131] sm:$0xff]
      %s1133 = scalar_lea.vmem %s176, 9024
      %1134 = vst [vmem:[%s1133] sm:$0xff] %v1132
      %s1135 = scalar_lea.vmem %s150, 2880
      %v1136 = vld [vmem:[%s1135] sm:$0xff]
      %s1137 = scalar_lea.vmem %s176, 15168
      %1138 = vst [vmem:[%s1137] sm:$0xff] %v1136
      %s1139 = scalar_lea.vmem %s150, 13120
      %v1140 = vld [vmem:[%s1139] sm:$0xff]
      %s1141 = scalar_lea.vmem %s176, 4928
      %1142 = vst [vmem:[%s1141] sm:$0xff] %v1140
      %s1143 = scalar_lea.vmem %s150, 6976
      %v1144 = vld [vmem:[%s1143] sm:$0xff]
      %s1145 = scalar_lea.vmem %s176, 11072
      %1146 = vst [vmem:[%s1145] sm:$0xff] %v1144
      %s1147 = scalar_lea.vmem %s150, 832
      %v1148 = vld [vmem:[%s1147] sm:$0xff]
      %s1149 = scalar_lea.vmem %s176, 17216
      %1150 = vst [vmem:[%s1149] sm:$0xff] %v1148
      %s1151 = scalar_lea.vmem %s150, 17248
      %v1152 = vld [vmem:[%s1151] sm:$0xff]
      %s1153 = scalar_lea.vmem %s176, 864
      %1154 = vst [vmem:[%s1153] sm:$0xff] %v1152
      %s1155 = scalar_lea.vmem %s150, 11104
      %v1156 = vld [vmem:[%s1155] sm:$0xff]
      %s1157 = scalar_lea.vmem %s176, 7008
      %1158 = vst [vmem:[%s1157] sm:$0xff] %v1156
      %s1159 = scalar_lea.vmem %s150, 4960
      %v1160 = vld [vmem:[%s1159] sm:$0xff]
      %s1161 = scalar_lea.vmem %s176, 13152
      %1162 = vst [vmem:[%s1161] sm:$0xff] %v1160
      %s1163 = scalar_lea.vmem %s150, 15200
      %v1164 = vld [vmem:[%s1163] sm:$0xff]
      %s1165 = scalar_lea.vmem %s176, 2912
      %1166 = vst [vmem:[%s1165] sm:$0xff] %v1164
      %s1167 = scalar_lea.vmem %s150, 9056
      %v1168 = vld [vmem:[%s1167] sm:$0xff]
      %s1169 = scalar_lea.vmem %s176, 9056
      %1170 = vst [vmem:[%s1169] sm:$0xff] %v1168
      %s1171 = scalar_lea.vmem %s150, 2912
      %v1172 = vld [vmem:[%s1171] sm:$0xff]
      %s1173 = scalar_lea.vmem %s176, 15200
      %1174 = vst [vmem:[%s1173] sm:$0xff] %v1172
      %s1175 = scalar_lea.vmem %s150, 13152
      %v1176 = vld [vmem:[%s1175] sm:$0xff]
      %s1177 = scalar_lea.vmem %s176, 4960
      %1178 = vst [vmem:[%s1177] sm:$0xff] %v1176
      %s1179 = scalar_lea.vmem %s150, 7008
      %v1180 = vld [vmem:[%s1179] sm:$0xff]
      %s1181 = scalar_lea.vmem %s176, 11104
      %1182 = vst [vmem:[%s1181] sm:$0xff] %v1180
      %s1183 = scalar_lea.vmem %s150, 864
      %v1184 = vld [vmem:[%s1183] sm:$0xff]
      %s1185 = scalar_lea.vmem %s176, 17248
      %1186 = vst [vmem:[%s1185] sm:$0xff] %v1184
      %s1187 = scalar_lea.vmem %s150, 17280
      %v1188 = vld [vmem:[%s1187] sm:$0xff]
      %s1189 = scalar_lea.vmem %s176, 896
      %1190 = vst [vmem:[%s1189] sm:$0xff] %v1188
      %s1191 = scalar_lea.vmem %s150, 11136
      %v1192 = vld [vmem:[%s1191] sm:$0xff]
      %s1193 = scalar_lea.vmem %s176, 7040
      %1194 = vst [vmem:[%s1193] sm:$0xff] %v1192
      %s1195 = scalar_lea.vmem %s150, 4992
      %v1196 = vld [vmem:[%s1195] sm:$0xff]
      %s1197 = scalar_lea.vmem %s176, 13184
      %1198 = vst [vmem:[%s1197] sm:$0xff] %v1196
      %s1199 = scalar_lea.vmem %s150, 15232
      %v1200 = vld [vmem:[%s1199] sm:$0xff]
      %s1201 = scalar_lea.vmem %s176, 2944
      %1202 = vst [vmem:[%s1201] sm:$0xff] %v1200
      %s1203 = scalar_lea.vmem %s150, 9088
      %v1204 = vld [vmem:[%s1203] sm:$0xff]
      %s1205 = scalar_lea.vmem %s176, 9088
      %1206 = vst [vmem:[%s1205] sm:$0xff] %v1204
      %s1207 = scalar_lea.vmem %s150, 2944
      %v1208 = vld [vmem:[%s1207] sm:$0xff]
      %s1209 = scalar_lea.vmem %s176, 15232
      %1210 = vst [vmem:[%s1209] sm:$0xff] %v1208
      %s1211 = scalar_lea.vmem %s150, 13184
      %v1212 = vld [vmem:[%s1211] sm:$0xff]
      %s1213 = scalar_lea.vmem %s176, 4992
      %1214 = vst [vmem:[%s1213] sm:$0xff] %v1212
      %s1215 = scalar_lea.vmem %s150, 7040
      %v1216 = vld [vmem:[%s1215] sm:$0xff]
      %s1217 = scalar_lea.vmem %s176, 11136
      %1218 = vst [vmem:[%s1217] sm:$0xff] %v1216
      %s1219 = scalar_lea.vmem %s150, 896
      %v1220 = vld [vmem:[%s1219] sm:$0xff]
      %s1221 = scalar_lea.vmem %s176, 17280
      %1222 = vst [vmem:[%s1221] sm:$0xff] %v1220
      %s1223 = scalar_lea.vmem %s150, 17312
      %v1224 = vld [vmem:[%s1223] sm:$0xff]
      %s1225 = scalar_lea.vmem %s176, 928
      %1226 = vst [vmem:[%s1225] sm:$0xff] %v1224
      %s1227 = scalar_lea.vmem %s150, 11168
      %v1228 = vld [vmem:[%s1227] sm:$0xff]
      %s1229 = scalar_lea.vmem %s176, 7072
      %1230 = vst [vmem:[%s1229] sm:$0xff] %v1228
      %s1231 = scalar_lea.vmem %s150, 5024
      %v1232 = vld [vmem:[%s1231] sm:$0xff]
      %s1233 = scalar_lea.vmem %s176, 13216
      %1234 = vst [vmem:[%s1233] sm:$0xff] %v1232
      %s1235 = scalar_lea.vmem %s150, 15264
      %v1236 = vld [vmem:[%s1235] sm:$0xff]
      %s1237 = scalar_lea.vmem %s176, 2976
      %1238 = vst [vmem:[%s1237] sm:$0xff] %v1236
      %s1239 = scalar_lea.vmem %s150, 9120
      %v1240 = vld [vmem:[%s1239] sm:$0xff]
      %s1241 = scalar_lea.vmem %s176, 9120
      %1242 = vst [vmem:[%s1241] sm:$0xff] %v1240
      %s1243 = scalar_lea.vmem %s150, 2976
      %v1244 = vld [vmem:[%s1243] sm:$0xff]
      %s1245 = scalar_lea.vmem %s176, 15264
      %1246 = vst [vmem:[%s1245] sm:$0xff] %v1244
      %s1247 = scalar_lea.vmem %s150, 13216
      %v1248 = vld [vmem:[%s1247] sm:$0xff]
      %s1249 = scalar_lea.vmem %s176, 5024
      %1250 = vst [vmem:[%s1249] sm:$0xff] %v1248
      %s1251 = scalar_lea.vmem %s150, 7072
      %v1252 = vld [vmem:[%s1251] sm:$0xff]
      %s1253 = scalar_lea.vmem %s176, 11168
      %1254 = vst [vmem:[%s1253] sm:$0xff] %v1252
      %s1255 = scalar_lea.vmem %s150, 928
      %v1256 = vld [vmem:[%s1255] sm:$0xff]
      %s1257 = scalar_lea.vmem %s176, 17312
      %1258 = vst [vmem:[%s1257] sm:$0xff] %v1256
      %s1259 = scalar_lea.vmem %s150, 17344
      %v1260 = vld [vmem:[%s1259] sm:$0xff]
      %s1261 = scalar_lea.vmem %s176, 960
      %1262 = vst [vmem:[%s1261] sm:$0xff] %v1260
      %s1263 = scalar_lea.vmem %s150, 11200
      %v1264 = vld [vmem:[%s1263] sm:$0xff]
      %s1265 = scalar_lea.vmem %s176, 7104
      %1266 = vst [vmem:[%s1265] sm:$0xff] %v1264
      %s1267 = scalar_lea.vmem %s150, 5056
      %v1268 = vld [vmem:[%s1267] sm:$0xff]
      %s1269 = scalar_lea.vmem %s176, 13248
      %1270 = vst [vmem:[%s1269] sm:$0xff] %v1268
      %s1271 = scalar_lea.vmem %s150, 15296
      %v1272 = vld [vmem:[%s1271] sm:$0xff]
      %s1273 = scalar_lea.vmem %s176, 3008
      %1274 = vst [vmem:[%s1273] sm:$0xff] %v1272
      %s1275 = scalar_lea.vmem %s150, 9152
      %v1276 = vld [vmem:[%s1275] sm:$0xff]
      %s1277 = scalar_lea.vmem %s176, 9152
      %1278 = vst [vmem:[%s1277] sm:$0xff] %v1276
      %s1279 = scalar_lea.vmem %s150, 3008
      %v1280 = vld [vmem:[%s1279] sm:$0xff]
      %s1281 = scalar_lea.vmem %s176, 15296
      %1282 = vst [vmem:[%s1281] sm:$0xff] %v1280
      %s1283 = scalar_lea.vmem %s150, 13248
      %v1284 = vld [vmem:[%s1283] sm:$0xff]
      %s1285 = scalar_lea.vmem %s176, 5056
      %1286 = vst [vmem:[%s1285] sm:$0xff] %v1284
      %s1287 = scalar_lea.vmem %s150, 7104
      %v1288 = vld [vmem:[%s1287] sm:$0xff]
      %s1289 = scalar_lea.vmem %s176, 11200
      %1290 = vst [vmem:[%s1289] sm:$0xff] %v1288
      %s1291 = scalar_lea.vmem %s150, 960
      %v1292 = vld [vmem:[%s1291] sm:$0xff]
      %s1293 = scalar_lea.vmem %s176, 17344
      %1294 = vst [vmem:[%s1293] sm:$0xff] %v1292
      %s1295 = scalar_lea.vmem %s150, 17376
      %v1296 = vld [vmem:[%s1295] sm:$0xff]
      %s1297 = scalar_lea.vmem %s176, 992
      %1298 = vst [vmem:[%s1297] sm:$0xff] %v1296
      %s1299 = scalar_lea.vmem %s150, 11232
      %v1300 = vld [vmem:[%s1299] sm:$0xff]
      %s1301 = scalar_lea.vmem %s176, 7136
      %1302 = vst [vmem:[%s1301] sm:$0xff] %v1300
      %s1303 = scalar_lea.vmem %s150, 5088
      %v1304 = vld [vmem:[%s1303] sm:$0xff]
      %s1305 = scalar_lea.vmem %s176, 13280
      %1306 = vst [vmem:[%s1305] sm:$0xff] %v1304
      %s1307 = scalar_lea.vmem %s150, 15328
      %v1308 = vld [vmem:[%s1307] sm:$0xff]
      %s1309 = scalar_lea.vmem %s176, 3040
      %1310 = vst [vmem:[%s1309] sm:$0xff] %v1308
      %s1311 = scalar_lea.vmem %s150, 9184
      %v1312 = vld [vmem:[%s1311] sm:$0xff]
      %s1313 = scalar_lea.vmem %s176, 9184
      %1314 = vst [vmem:[%s1313] sm:$0xff] %v1312
      %s1315 = scalar_lea.vmem %s150, 3040
      %v1316 = vld [vmem:[%s1315] sm:$0xff]
      %s1317 = scalar_lea.vmem %s176, 15328
      %1318 = vst [vmem:[%s1317] sm:$0xff] %v1316
      %s1319 = scalar_lea.vmem %s150, 13280
      %v1320 = vld [vmem:[%s1319] sm:$0xff]
      %s1321 = scalar_lea.vmem %s176, 5088
      %1322 = vst [vmem:[%s1321] sm:$0xff] %v1320
      %s1323 = scalar_lea.vmem %s150, 7136
      %v1324 = vld [vmem:[%s1323] sm:$0xff]
      %s1325 = scalar_lea.vmem %s176, 11232
      %1326 = vst [vmem:[%s1325] sm:$0xff] %v1324
      %s1327 = scalar_lea.vmem %s150, 992
      %v1328 = vld [vmem:[%s1327] sm:$0xff]
      %s1329 = scalar_lea.vmem %s176, 17376
      %1330 = vst [vmem:[%s1329] sm:$0xff] %v1328
      %s1331 = scalar_lea.vmem %s150, 16392
      %v1332 = vld [vmem:[%s1331] sm:$0xff]
      %s1333 = scalar_lea.vmem %s176, 8
      %1334 = vst [vmem:[%s1333] sm:$0xff] %v1332
      %s1335 = scalar_lea.vmem %s150, 10248
      %v1336 = vld [vmem:[%s1335] sm:$0xff]
      %s1337 = scalar_lea.vmem %s176, 6152
      %1338 = vst [vmem:[%s1337] sm:$0xff] %v1336
      %s1339 = scalar_lea.vmem %s150, 4104
      %v1340 = vld [vmem:[%s1339] sm:$0xff]
      %s1341 = scalar_lea.vmem %s176, 12296
      %1342 = vst [vmem:[%s1341] sm:$0xff] %v1340
      %s1343 = scalar_lea.vmem %s150, 14344
      %v1344 = vld [vmem:[%s1343] sm:$0xff]
      %s1345 = scalar_lea.vmem %s176, 2056
      %1346 = vst [vmem:[%s1345] sm:$0xff] %v1344
      %s1347 = scalar_lea.vmem %s150, 8200
      %v1348 = vld [vmem:[%s1347] sm:$0xff]
      %s1349 = scalar_lea.vmem %s176, 8200
      %1350 = vst [vmem:[%s1349] sm:$0xff] %v1348
      %s1351 = scalar_lea.vmem %s150, 2056
      %v1352 = vld [vmem:[%s1351] sm:$0xff]
      %s1353 = scalar_lea.vmem %s176, 14344
      %1354 = vst [vmem:[%s1353] sm:$0xff] %v1352
      %s1355 = scalar_lea.vmem %s150, 12296
      %v1356 = vld [vmem:[%s1355] sm:$0xff]
      %s1357 = scalar_lea.vmem %s176, 4104
      %1358 = vst [vmem:[%s1357] sm:$0xff] %v1356
      %s1359 = scalar_lea.vmem %s150, 6152
      %v1360 = vld [vmem:[%s1359] sm:$0xff]
      %s1361 = scalar_lea.vmem %s176, 10248
      %1362 = vst [vmem:[%s1361] sm:$0xff] %v1360
      %s1363 = scalar_lea.vmem %s150, 8
      %v1364 = vld [vmem:[%s1363] sm:$0xff]
      %s1365 = scalar_lea.vmem %s176, 16392
      %1366 = vst [vmem:[%s1365] sm:$0xff] %v1364
      %s1367 = scalar_lea.vmem %s150, 16424
      %v1368 = vld [vmem:[%s1367] sm:$0xff]
      %s1369 = scalar_lea.vmem %s176, 40
      %1370 = vst [vmem:[%s1369] sm:$0xff] %v1368
      %s1371 = scalar_lea.vmem %s150, 10280
      %v1372 = vld [vmem:[%s1371] sm:$0xff]
      %s1373 = scalar_lea.vmem %s176, 6184
      %1374 = vst [vmem:[%s1373] sm:$0xff] %v1372
      %s1375 = scalar_lea.vmem %s150, 4136
      %v1376 = vld [vmem:[%s1375] sm:$0xff]
      %s1377 = scalar_lea.vmem %s176, 12328
      %1378 = vst [vmem:[%s1377] sm:$0xff] %v1376
      %s1379 = scalar_lea.vmem %s150, 14376
      %v1380 = vld [vmem:[%s1379] sm:$0xff]
      %s1381 = scalar_lea.vmem %s176, 2088
      %1382 = vst [vmem:[%s1381] sm:$0xff] %v1380
      %s1383 = scalar_lea.vmem %s150, 8232
      %v1384 = vld [vmem:[%s1383] sm:$0xff]
      %s1385 = scalar_lea.vmem %s176, 8232
      %1386 = vst [vmem:[%s1385] sm:$0xff] %v1384
      %s1387 = scalar_lea.vmem %s150, 2088
      %v1388 = vld [vmem:[%s1387] sm:$0xff]
      %s1389 = scalar_lea.vmem %s176, 14376
      %1390 = vst [vmem:[%s1389] sm:$0xff] %v1388
      %s1391 = scalar_lea.vmem %s150, 12328
      %v1392 = vld [vmem:[%s1391] sm:$0xff]
      %s1393 = scalar_lea.vmem %s176, 4136
      %1394 = vst [vmem:[%s1393] sm:$0xff] %v1392
      %s1395 = scalar_lea.vmem %s150, 6184
      %v1396 = vld [vmem:[%s1395] sm:$0xff]
      %s1397 = scalar_lea.vmem %s176, 10280
      %1398 = vst [vmem:[%s1397] sm:$0xff] %v1396
      %s1399 = scalar_lea.vmem %s150, 40
      %v1400 = vld [vmem:[%s1399] sm:$0xff]
      %s1401 = scalar_lea.vmem %s176, 16424
      %1402 = vst [vmem:[%s1401] sm:$0xff] %v1400
      %s1403 = scalar_lea.vmem %s150, 16456
      %v1404 = vld [vmem:[%s1403] sm:$0xff]
      %s1405 = scalar_lea.vmem %s176, 72
      %1406 = vst [vmem:[%s1405] sm:$0xff] %v1404
      %s1407 = scalar_lea.vmem %s150, 10312
      %v1408 = vld [vmem:[%s1407] sm:$0xff]
      %s1409 = scalar_lea.vmem %s176, 6216
      %1410 = vst [vmem:[%s1409] sm:$0xff] %v1408
      %s1411 = scalar_lea.vmem %s150, 4168
      %v1412 = vld [vmem:[%s1411] sm:$0xff]
      %s1413 = scalar_lea.vmem %s176, 12360
      %1414 = vst [vmem:[%s1413] sm:$0xff] %v1412
      %s1415 = scalar_lea.vmem %s150, 14408
      %v1416 = vld [vmem:[%s1415] sm:$0xff]
      %s1417 = scalar_lea.vmem %s176, 2120
      %1418 = vst [vmem:[%s1417] sm:$0xff] %v1416
      %s1419 = scalar_lea.vmem %s150, 8264
      %v1420 = vld [vmem:[%s1419] sm:$0xff]
      %s1421 = scalar_lea.vmem %s176, 8264
      %1422 = vst [vmem:[%s1421] sm:$0xff] %v1420
      %s1423 = scalar_lea.vmem %s150, 2120
      %v1424 = vld [vmem:[%s1423] sm:$0xff]
      %s1425 = scalar_lea.vmem %s176, 14408
      %1426 = vst [vmem:[%s1425] sm:$0xff] %v1424
      %s1427 = scalar_lea.vmem %s150, 12360
      %v1428 = vld [vmem:[%s1427] sm:$0xff]
      %s1429 = scalar_lea.vmem %s176, 4168
      %1430 = vst [vmem:[%s1429] sm:$0xff] %v1428
      %s1431 = scalar_lea.vmem %s150, 6216
      %v1432 = vld [vmem:[%s1431] sm:$0xff]
      %s1433 = scalar_lea.vmem %s176, 10312
      %1434 = vst [vmem:[%s1433] sm:$0xff] %v1432
      %s1435 = scalar_lea.vmem %s150, 72
      %v1436 = vld [vmem:[%s1435] sm:$0xff]
      %s1437 = scalar_lea.vmem %s176, 16456
      %1438 = vst [vmem:[%s1437] sm:$0xff] %v1436
      %s1439 = scalar_lea.vmem %s150, 16488
      %v1440 = vld [vmem:[%s1439] sm:$0xff]
      %s1441 = scalar_lea.vmem %s176, 104
      %1442 = vst [vmem:[%s1441] sm:$0xff] %v1440
      %s1443 = scalar_lea.vmem %s150, 10344
      %v1444 = vld [vmem:[%s1443] sm:$0xff]
      %s1445 = scalar_lea.vmem %s176, 6248
      %1446 = vst [vmem:[%s1445] sm:$0xff] %v1444
      %s1447 = scalar_lea.vmem %s150, 4200
      %v1448 = vld [vmem:[%s1447] sm:$0xff]
      %s1449 = scalar_lea.vmem %s176, 12392
      %1450 = vst [vmem:[%s1449] sm:$0xff] %v1448
      %s1451 = scalar_lea.vmem %s150, 14440
      %v1452 = vld [vmem:[%s1451] sm:$0xff]
      %s1453 = scalar_lea.vmem %s176, 2152
      %1454 = vst [vmem:[%s1453] sm:$0xff] %v1452
      %s1455 = scalar_lea.vmem %s150, 8296
      %v1456 = vld [vmem:[%s1455] sm:$0xff]
      %s1457 = scalar_lea.vmem %s176, 8296
      %1458 = vst [vmem:[%s1457] sm:$0xff] %v1456
      %s1459 = scalar_lea.vmem %s150, 2152
      %v1460 = vld [vmem:[%s1459] sm:$0xff]
      %s1461 = scalar_lea.vmem %s176, 14440
      %1462 = vst [vmem:[%s1461] sm:$0xff] %v1460
      %s1463 = scalar_lea.vmem %s150, 12392
      %v1464 = vld [vmem:[%s1463] sm:$0xff]
      %s1465 = scalar_lea.vmem %s176, 4200
      %1466 = vst [vmem:[%s1465] sm:$0xff] %v1464
      %s1467 = scalar_lea.vmem %s150, 6248
      %v1468 = vld [vmem:[%s1467] sm:$0xff]
      %s1469 = scalar_lea.vmem %s176, 10344
      %1470 = vst [vmem:[%s1469] sm:$0xff] %v1468
      %s1471 = scalar_lea.vmem %s150, 104
      %v1472 = vld [vmem:[%s1471] sm:$0xff]
      %s1473 = scalar_lea.vmem %s176, 16488
      %1474 = vst [vmem:[%s1473] sm:$0xff] %v1472
      %s1475 = scalar_lea.vmem %s150, 16520
      %v1476 = vld [vmem:[%s1475] sm:$0xff]
      %s1477 = scalar_lea.vmem %s176, 136
      %1478 = vst [vmem:[%s1477] sm:$0xff] %v1476
      %s1479 = scalar_lea.vmem %s150, 10376
      %v1480 = vld [vmem:[%s1479] sm:$0xff]
      %s1481 = scalar_lea.vmem %s176, 6280
      %1482 = vst [vmem:[%s1481] sm:$0xff] %v1480
      %s1483 = scalar_lea.vmem %s150, 4232
      %v1484 = vld [vmem:[%s1483] sm:$0xff]
      %s1485 = scalar_lea.vmem %s176, 12424
      %1486 = vst [vmem:[%s1485] sm:$0xff] %v1484
      %s1487 = scalar_lea.vmem %s150, 14472
      %v1488 = vld [vmem:[%s1487] sm:$0xff]
      %s1489 = scalar_lea.vmem %s176, 2184
      %1490 = vst [vmem:[%s1489] sm:$0xff] %v1488
      %s1491 = scalar_lea.vmem %s150, 8328
      %v1492 = vld [vmem:[%s1491] sm:$0xff]
      %s1493 = scalar_lea.vmem %s176, 8328
      %1494 = vst [vmem:[%s1493] sm:$0xff] %v1492
      %s1495 = scalar_lea.vmem %s150, 2184
      %v1496 = vld [vmem:[%s1495] sm:$0xff]
      %s1497 = scalar_lea.vmem %s176, 14472
      %1498 = vst [vmem:[%s1497] sm:$0xff] %v1496
      %s1499 = scalar_lea.vmem %s150, 12424
      %v1500 = vld [vmem:[%s1499] sm:$0xff]
      %s1501 = scalar_lea.vmem %s176, 4232
      %1502 = vst [vmem:[%s1501] sm:$0xff] %v1500
      %s1503 = scalar_lea.vmem %s150, 6280
      %v1504 = vld [vmem:[%s1503] sm:$0xff]
      %s1505 = scalar_lea.vmem %s176, 10376
      %1506 = vst [vmem:[%s1505] sm:$0xff] %v1504
      %s1507 = scalar_lea.vmem %s150, 136
      %v1508 = vld [vmem:[%s1507] sm:$0xff]
      %s1509 = scalar_lea.vmem %s176, 16520
      %1510 = vst [vmem:[%s1509] sm:$0xff] %v1508
      %s1511 = scalar_lea.vmem %s150, 16552
      %v1512 = vld [vmem:[%s1511] sm:$0xff]
      %s1513 = scalar_lea.vmem %s176, 168
      %1514 = vst [vmem:[%s1513] sm:$0xff] %v1512
      %s1515 = scalar_lea.vmem %s150, 10408
      %v1516 = vld [vmem:[%s1515] sm:$0xff]
      %s1517 = scalar_lea.vmem %s176, 6312
      %1518 = vst [vmem:[%s1517] sm:$0xff] %v1516
      %s1519 = scalar_lea.vmem %s150, 4264
      %v1520 = vld [vmem:[%s1519] sm:$0xff]
      %s1521 = scalar_lea.vmem %s176, 12456
      %1522 = vst [vmem:[%s1521] sm:$0xff] %v1520
      %s1523 = scalar_lea.vmem %s150, 14504
      %v1524 = vld [vmem:[%s1523] sm:$0xff]
      %s1525 = scalar_lea.vmem %s176, 2216
      %1526 = vst [vmem:[%s1525] sm:$0xff] %v1524
      %s1527 = scalar_lea.vmem %s150, 8360
      %v1528 = vld [vmem:[%s1527] sm:$0xff]
      %s1529 = scalar_lea.vmem %s176, 8360
      %1530 = vst [vmem:[%s1529] sm:$0xff] %v1528
      %s1531 = scalar_lea.vmem %s150, 2216
      %v1532 = vld [vmem:[%s1531] sm:$0xff]
      %s1533 = scalar_lea.vmem %s176, 14504
      %1534 = vst [vmem:[%s1533] sm:$0xff] %v1532
      %s1535 = scalar_lea.vmem %s150, 12456
      %v1536 = vld [vmem:[%s1535] sm:$0xff]
      %s1537 = scalar_lea.vmem %s176, 4264
      %1538 = vst [vmem:[%s1537] sm:$0xff] %v1536
      %s1539 = scalar_lea.vmem %s150, 6312
      %v1540 = vld [vmem:[%s1539] sm:$0xff]
      %s1541 = scalar_lea.vmem %s176, 10408
      %1542 = vst [vmem:[%s1541] sm:$0xff] %v1540
      %s1543 = scalar_lea.vmem %s150, 168
      %v1544 = vld [vmem:[%s1543] sm:$0xff]
      %s1545 = scalar_lea.vmem %s176, 16552
      %1546 = vst [vmem:[%s1545] sm:$0xff] %v1544
      %s1547 = scalar_lea.vmem %s150, 16584
      %v1548 = vld [vmem:[%s1547] sm:$0xff]
      %s1549 = scalar_lea.vmem %s176, 200
      %1550 = vst [vmem:[%s1549] sm:$0xff] %v1548
      %s1551 = scalar_lea.vmem %s150, 10440
      %v1552 = vld [vmem:[%s1551] sm:$0xff]
      %s1553 = scalar_lea.vmem %s176, 6344
      %1554 = vst [vmem:[%s1553] sm:$0xff] %v1552
      %s1555 = scalar_lea.vmem %s150, 4296
      %v1556 = vld [vmem:[%s1555] sm:$0xff]
      %s1557 = scalar_lea.vmem %s176, 12488
      %1558 = vst [vmem:[%s1557] sm:$0xff] %v1556
      %s1559 = scalar_lea.vmem %s150, 14536
      %v1560 = vld [vmem:[%s1559] sm:$0xff]
      %s1561 = scalar_lea.vmem %s176, 2248
      %1562 = vst [vmem:[%s1561] sm:$0xff] %v1560
      %s1563 = scalar_lea.vmem %s150, 8392
      %v1564 = vld [vmem:[%s1563] sm:$0xff]
      %s1565 = scalar_lea.vmem %s176, 8392
      %1566 = vst [vmem:[%s1565] sm:$0xff] %v1564
      %s1567 = scalar_lea.vmem %s150, 2248
      %v1568 = vld [vmem:[%s1567] sm:$0xff]
      %s1569 = scalar_lea.vmem %s176, 14536
      %1570 = vst [vmem:[%s1569] sm:$0xff] %v1568
      %s1571 = scalar_lea.vmem %s150, 12488
      %v1572 = vld [vmem:[%s1571] sm:$0xff]
      %s1573 = scalar_lea.vmem %s176, 4296
      %1574 = vst [vmem:[%s1573] sm:$0xff] %v1572
      %s1575 = scalar_lea.vmem %s150, 6344
      %v1576 = vld [vmem:[%s1575] sm:$0xff]
      %s1577 = scalar_lea.vmem %s176, 10440
      %1578 = vst [vmem:[%s1577] sm:$0xff] %v1576
      %s1579 = scalar_lea.vmem %s150, 200
      %v1580 = vld [vmem:[%s1579] sm:$0xff]
      %s1581 = scalar_lea.vmem %s176, 16584
      %1582 = vst [vmem:[%s1581] sm:$0xff] %v1580
      %s1583 = scalar_lea.vmem %s150, 16616
      %v1584 = vld [vmem:[%s1583] sm:$0xff]
      %s1585 = scalar_lea.vmem %s176, 232
      %1586 = vst [vmem:[%s1585] sm:$0xff] %v1584
      %s1587 = scalar_lea.vmem %s150, 10472
      %v1588 = vld [vmem:[%s1587] sm:$0xff]
      %s1589 = scalar_lea.vmem %s176, 6376
      %1590 = vst [vmem:[%s1589] sm:$0xff] %v1588
      %s1591 = scalar_lea.vmem %s150, 4328
      %v1592 = vld [vmem:[%s1591] sm:$0xff]
      %s1593 = scalar_lea.vmem %s176, 12520
      %1594 = vst [vmem:[%s1593] sm:$0xff] %v1592
      %s1595 = scalar_lea.vmem %s150, 14568
      %v1596 = vld [vmem:[%s1595] sm:$0xff]
      %s1597 = scalar_lea.vmem %s176, 2280
      %1598 = vst [vmem:[%s1597] sm:$0xff] %v1596
      %s1599 = scalar_lea.vmem %s150, 8424
      %v1600 = vld [vmem:[%s1599] sm:$0xff]
      %s1601 = scalar_lea.vmem %s176, 8424
      %1602 = vst [vmem:[%s1601] sm:$0xff] %v1600
      %s1603 = scalar_lea.vmem %s150, 2280
      %v1604 = vld [vmem:[%s1603] sm:$0xff]
      %s1605 = scalar_lea.vmem %s176, 14568
      %1606 = vst [vmem:[%s1605] sm:$0xff] %v1604
      %s1607 = scalar_lea.vmem %s150, 12520
      %v1608 = vld [vmem:[%s1607] sm:$0xff]
      %s1609 = scalar_lea.vmem %s176, 4328
      %1610 = vst [vmem:[%s1609] sm:$0xff] %v1608
      %s1611 = scalar_lea.vmem %s150, 6376
      %v1612 = vld [vmem:[%s1611] sm:$0xff]
      %s1613 = scalar_lea.vmem %s176, 10472
      %1614 = vst [vmem:[%s1613] sm:$0xff] %v1612
      %s1615 = scalar_lea.vmem %s150, 232
      %v1616 = vld [vmem:[%s1615] sm:$0xff]
      %s1617 = scalar_lea.vmem %s176, 16616
      %1618 = vst [vmem:[%s1617] sm:$0xff] %v1616
      %s1619 = scalar_lea.vmem %s150, 16648
      %v1620 = vld [vmem:[%s1619] sm:$0xff]
      %s1621 = scalar_lea.vmem %s176, 264
      %1622 = vst [vmem:[%s1621] sm:$0xff] %v1620
      %s1623 = scalar_lea.vmem %s150, 10504
      %v1624 = vld [vmem:[%s1623] sm:$0xff]
      %s1625 = scalar_lea.vmem %s176, 6408
      %1626 = vst [vmem:[%s1625] sm:$0xff] %v1624
      %s1627 = scalar_lea.vmem %s150, 4360
      %v1628 = vld [vmem:[%s1627] sm:$0xff]
      %s1629 = scalar_lea.vmem %s176, 12552
      %1630 = vst [vmem:[%s1629] sm:$0xff] %v1628
      %s1631 = scalar_lea.vmem %s150, 14600
      %v1632 = vld [vmem:[%s1631] sm:$0xff]
      %s1633 = scalar_lea.vmem %s176, 2312
      %1634 = vst [vmem:[%s1633] sm:$0xff] %v1632
      %s1635 = scalar_lea.vmem %s150, 8456
      %v1636 = vld [vmem:[%s1635] sm:$0xff]
      %s1637 = scalar_lea.vmem %s176, 8456
      %1638 = vst [vmem:[%s1637] sm:$0xff] %v1636
      %s1639 = scalar_lea.vmem %s150, 2312
      %v1640 = vld [vmem:[%s1639] sm:$0xff]
      %s1641 = scalar_lea.vmem %s176, 14600
      %1642 = vst [vmem:[%s1641] sm:$0xff] %v1640
      %s1643 = scalar_lea.vmem %s150, 12552
      %v1644 = vld [vmem:[%s1643] sm:$0xff]
      %s1645 = scalar_lea.vmem %s176, 4360
      %1646 = vst [vmem:[%s1645] sm:$0xff] %v1644
      %s1647 = scalar_lea.vmem %s150, 6408
      %v1648 = vld [vmem:[%s1647] sm:$0xff]
      %s1649 = scalar_lea.vmem %s176, 10504
      %1650 = vst [vmem:[%s1649] sm:$0xff] %v1648
      %s1651 = scalar_lea.vmem %s150, 264
      %v1652 = vld [vmem:[%s1651] sm:$0xff]
      %s1653 = scalar_lea.vmem %s176, 16648
      %1654 = vst [vmem:[%s1653] sm:$0xff] %v1652
      %s1655 = scalar_lea.vmem %s150, 16680
      %v1656 = vld [vmem:[%s1655] sm:$0xff]
      %s1657 = scalar_lea.vmem %s176, 296
      %1658 = vst [vmem:[%s1657] sm:$0xff] %v1656
      %s1659 = scalar_lea.vmem %s150, 10536
      %v1660 = vld [vmem:[%s1659] sm:$0xff]
      %s1661 = scalar_lea.vmem %s176, 6440
      %1662 = vst [vmem:[%s1661] sm:$0xff] %v1660
      %s1663 = scalar_lea.vmem %s150, 4392
      %v1664 = vld [vmem:[%s1663] sm:$0xff]
      %s1665 = scalar_lea.vmem %s176, 12584
      %1666 = vst [vmem:[%s1665] sm:$0xff] %v1664
      %s1667 = scalar_lea.vmem %s150, 14632
      %v1668 = vld [vmem:[%s1667] sm:$0xff]
      %s1669 = scalar_lea.vmem %s176, 2344
      %1670 = vst [vmem:[%s1669] sm:$0xff] %v1668
      %s1671 = scalar_lea.vmem %s150, 8488
      %v1672 = vld [vmem:[%s1671] sm:$0xff]
      %s1673 = scalar_lea.vmem %s176, 8488
      %1674 = vst [vmem:[%s1673] sm:$0xff] %v1672
      %s1675 = scalar_lea.vmem %s150, 2344
      %v1676 = vld [vmem:[%s1675] sm:$0xff]
      %s1677 = scalar_lea.vmem %s176, 14632
      %1678 = vst [vmem:[%s1677] sm:$0xff] %v1676
      %s1679 = scalar_lea.vmem %s150, 12584
      %v1680 = vld [vmem:[%s1679] sm:$0xff]
      %s1681 = scalar_lea.vmem %s176, 4392
      %1682 = vst [vmem:[%s1681] sm:$0xff] %v1680
      %s1683 = scalar_lea.vmem %s150, 6440
      %v1684 = vld [vmem:[%s1683] sm:$0xff]
      %s1685 = scalar_lea.vmem %s176, 10536
      %1686 = vst [vmem:[%s1685] sm:$0xff] %v1684
      %s1687 = scalar_lea.vmem %s150, 296
      %v1688 = vld [vmem:[%s1687] sm:$0xff]
      %s1689 = scalar_lea.vmem %s176, 16680
      %1690 = vst [vmem:[%s1689] sm:$0xff] %v1688
      %s1691 = scalar_lea.vmem %s150, 16712
      %v1692 = vld [vmem:[%s1691] sm:$0xff]
      %s1693 = scalar_lea.vmem %s176, 328
      %1694 = vst [vmem:[%s1693] sm:$0xff] %v1692
      %s1695 = scalar_lea.vmem %s150, 10568
      %v1696 = vld [vmem:[%s1695] sm:$0xff]
      %s1697 = scalar_lea.vmem %s176, 6472
      %1698 = vst [vmem:[%s1697] sm:$0xff] %v1696
      %s1699 = scalar_lea.vmem %s150, 4424
      %v1700 = vld [vmem:[%s1699] sm:$0xff]
      %s1701 = scalar_lea.vmem %s176, 12616
      %1702 = vst [vmem:[%s1701] sm:$0xff] %v1700
      %s1703 = scalar_lea.vmem %s150, 14664
      %v1704 = vld [vmem:[%s1703] sm:$0xff]
      %s1705 = scalar_lea.vmem %s176, 2376
      %1706 = vst [vmem:[%s1705] sm:$0xff] %v1704
      %s1707 = scalar_lea.vmem %s150, 8520
      %v1708 = vld [vmem:[%s1707] sm:$0xff]
      %s1709 = scalar_lea.vmem %s176, 8520
      %1710 = vst [vmem:[%s1709] sm:$0xff] %v1708
      %s1711 = scalar_lea.vmem %s150, 2376
      %v1712 = vld [vmem:[%s1711] sm:$0xff]
      %s1713 = scalar_lea.vmem %s176, 14664
      %1714 = vst [vmem:[%s1713] sm:$0xff] %v1712
      %s1715 = scalar_lea.vmem %s150, 12616
      %v1716 = vld [vmem:[%s1715] sm:$0xff]
      %s1717 = scalar_lea.vmem %s176, 4424
      %1718 = vst [vmem:[%s1717] sm:$0xff] %v1716
      %s1719 = scalar_lea.vmem %s150, 6472
      %v1720 = vld [vmem:[%s1719] sm:$0xff]
      %s1721 = scalar_lea.vmem %s176, 10568
      %1722 = vst [vmem:[%s1721] sm:$0xff] %v1720
      %s1723 = scalar_lea.vmem %s150, 328
      %v1724 = vld [vmem:[%s1723] sm:$0xff]
      %s1725 = scalar_lea.vmem %s176, 16712
      %1726 = vst [vmem:[%s1725] sm:$0xff] %v1724
      %s1727 = scalar_lea.vmem %s150, 16744
      %v1728 = vld [vmem:[%s1727] sm:$0xff]
      %s1729 = scalar_lea.vmem %s176, 360
      %1730 = vst [vmem:[%s1729] sm:$0xff] %v1728
      %s1731 = scalar_lea.vmem %s150, 10600
      %v1732 = vld [vmem:[%s1731] sm:$0xff]
      %s1733 = scalar_lea.vmem %s176, 6504
      %1734 = vst [vmem:[%s1733] sm:$0xff] %v1732
      %s1735 = scalar_lea.vmem %s150, 4456
      %v1736 = vld [vmem:[%s1735] sm:$0xff]
      %s1737 = scalar_lea.vmem %s176, 12648
      %1738 = vst [vmem:[%s1737] sm:$0xff] %v1736
      %s1739 = scalar_lea.vmem %s150, 14696
      %v1740 = vld [vmem:[%s1739] sm:$0xff]
      %s1741 = scalar_lea.vmem %s176, 2408
      %1742 = vst [vmem:[%s1741] sm:$0xff] %v1740
      %s1743 = scalar_lea.vmem %s150, 8552
      %v1744 = vld [vmem:[%s1743] sm:$0xff]
      %s1745 = scalar_lea.vmem %s176, 8552
      %1746 = vst [vmem:[%s1745] sm:$0xff] %v1744
      %s1747 = scalar_lea.vmem %s150, 2408
      %v1748 = vld [vmem:[%s1747] sm:$0xff]
      %s1749 = scalar_lea.vmem %s176, 14696
      %1750 = vst [vmem:[%s1749] sm:$0xff] %v1748
      %s1751 = scalar_lea.vmem %s150, 12648
      %v1752 = vld [vmem:[%s1751] sm:$0xff]
      %s1753 = scalar_lea.vmem %s176, 4456
      %1754 = vst [vmem:[%s1753] sm:$0xff] %v1752
      %s1755 = scalar_lea.vmem %s150, 6504
      %v1756 = vld [vmem:[%s1755] sm:$0xff]
      %s1757 = scalar_lea.vmem %s176, 10600
      %1758 = vst [vmem:[%s1757] sm:$0xff] %v1756
      %s1759 = scalar_lea.vmem %s150, 360
      %v1760 = vld [vmem:[%s1759] sm:$0xff]
      %s1761 = scalar_lea.vmem %s176, 16744
      %1762 = vst [vmem:[%s1761] sm:$0xff] %v1760
      %s1763 = scalar_lea.vmem %s150, 16776
      %v1764 = vld [vmem:[%s1763] sm:$0xff]
      %s1765 = scalar_lea.vmem %s176, 392
      %1766 = vst [vmem:[%s1765] sm:$0xff] %v1764
      %s1767 = scalar_lea.vmem %s150, 10632
      %v1768 = vld [vmem:[%s1767] sm:$0xff]
      %s1769 = scalar_lea.vmem %s176, 6536
      %1770 = vst [vmem:[%s1769] sm:$0xff] %v1768
      %s1771 = scalar_lea.vmem %s150, 4488
      %v1772 = vld [vmem:[%s1771] sm:$0xff]
      %s1773 = scalar_lea.vmem %s176, 12680
      %1774 = vst [vmem:[%s1773] sm:$0xff] %v1772
      %s1775 = scalar_lea.vmem %s150, 14728
      %v1776 = vld [vmem:[%s1775] sm:$0xff]
      %s1777 = scalar_lea.vmem %s176, 2440
      %1778 = vst [vmem:[%s1777] sm:$0xff] %v1776
      %s1779 = scalar_lea.vmem %s150, 8584
      %v1780 = vld [vmem:[%s1779] sm:$0xff]
      %s1781 = scalar_lea.vmem %s176, 8584
      %1782 = vst [vmem:[%s1781] sm:$0xff] %v1780
      %s1783 = scalar_lea.vmem %s150, 2440
      %v1784 = vld [vmem:[%s1783] sm:$0xff]
      %s1785 = scalar_lea.vmem %s176, 14728
      %1786 = vst [vmem:[%s1785] sm:$0xff] %v1784
      %s1787 = scalar_lea.vmem %s150, 12680
      %v1788 = vld [vmem:[%s1787] sm:$0xff]
      %s1789 = scalar_lea.vmem %s176, 4488
      %1790 = vst [vmem:[%s1789] sm:$0xff] %v1788
      %s1791 = scalar_lea.vmem %s150, 6536
      %v1792 = vld [vmem:[%s1791] sm:$0xff]
      %s1793 = scalar_lea.vmem %s176, 10632
      %1794 = vst [vmem:[%s1793] sm:$0xff] %v1792
      %s1795 = scalar_lea.vmem %s150, 392
      %v1796 = vld [vmem:[%s1795] sm:$0xff]
      %s1797 = scalar_lea.vmem %s176, 16776
      %1798 = vst [vmem:[%s1797] sm:$0xff] %v1796
      %s1799 = scalar_lea.vmem %s150, 16808
      %v1800 = vld [vmem:[%s1799] sm:$0xff]
      %s1801 = scalar_lea.vmem %s176, 424
      %1802 = vst [vmem:[%s1801] sm:$0xff] %v1800
      %s1803 = scalar_lea.vmem %s150, 10664
      %v1804 = vld [vmem:[%s1803] sm:$0xff]
      %s1805 = scalar_lea.vmem %s176, 6568
      %1806 = vst [vmem:[%s1805] sm:$0xff] %v1804
      %s1807 = scalar_lea.vmem %s150, 4520
      %v1808 = vld [vmem:[%s1807] sm:$0xff]
      %s1809 = scalar_lea.vmem %s176, 12712
      %1810 = vst [vmem:[%s1809] sm:$0xff] %v1808
      %s1811 = scalar_lea.vmem %s150, 14760
      %v1812 = vld [vmem:[%s1811] sm:$0xff]
      %s1813 = scalar_lea.vmem %s176, 2472
      %1814 = vst [vmem:[%s1813] sm:$0xff] %v1812
      %s1815 = scalar_lea.vmem %s150, 8616
      %v1816 = vld [vmem:[%s1815] sm:$0xff]
      %s1817 = scalar_lea.vmem %s176, 8616
      %1818 = vst [vmem:[%s1817] sm:$0xff] %v1816
      %s1819 = scalar_lea.vmem %s150, 2472
      %v1820 = vld [vmem:[%s1819] sm:$0xff]
      %s1821 = scalar_lea.vmem %s176, 14760
      %1822 = vst [vmem:[%s1821] sm:$0xff] %v1820
      %s1823 = scalar_lea.vmem %s150, 12712
      %v1824 = vld [vmem:[%s1823] sm:$0xff]
      %s1825 = scalar_lea.vmem %s176, 4520
      %1826 = vst [vmem:[%s1825] sm:$0xff] %v1824
      %s1827 = scalar_lea.vmem %s150, 6568
      %v1828 = vld [vmem:[%s1827] sm:$0xff]
      %s1829 = scalar_lea.vmem %s176, 10664
      %1830 = vst [vmem:[%s1829] sm:$0xff] %v1828
      %s1831 = scalar_lea.vmem %s150, 424
      %v1832 = vld [vmem:[%s1831] sm:$0xff]
      %s1833 = scalar_lea.vmem %s176, 16808
      %1834 = vst [vmem:[%s1833] sm:$0xff] %v1832
      %s1835 = scalar_lea.vmem %s150, 16840
      %v1836 = vld [vmem:[%s1835] sm:$0xff]
      %s1837 = scalar_lea.vmem %s176, 456
      %1838 = vst [vmem:[%s1837] sm:$0xff] %v1836
      %s1839 = scalar_lea.vmem %s150, 10696
      %v1840 = vld [vmem:[%s1839] sm:$0xff]
      %s1841 = scalar_lea.vmem %s176, 6600
      %1842 = vst [vmem:[%s1841] sm:$0xff] %v1840
      %s1843 = scalar_lea.vmem %s150, 4552
      %v1844 = vld [vmem:[%s1843] sm:$0xff]
      %s1845 = scalar_lea.vmem %s176, 12744
      %1846 = vst [vmem:[%s1845] sm:$0xff] %v1844
      %s1847 = scalar_lea.vmem %s150, 14792
      %v1848 = vld [vmem:[%s1847] sm:$0xff]
      %s1849 = scalar_lea.vmem %s176, 2504
      %1850 = vst [vmem:[%s1849] sm:$0xff] %v1848
      %s1851 = scalar_lea.vmem %s150, 8648
      %v1852 = vld [vmem:[%s1851] sm:$0xff]
      %s1853 = scalar_lea.vmem %s176, 8648
      %1854 = vst [vmem:[%s1853] sm:$0xff] %v1852
      %s1855 = scalar_lea.vmem %s150, 2504
      %v1856 = vld [vmem:[%s1855] sm:$0xff]
      %s1857 = scalar_lea.vmem %s176, 14792
      %1858 = vst [vmem:[%s1857] sm:$0xff] %v1856
      %s1859 = scalar_lea.vmem %s150, 12744
      %v1860 = vld [vmem:[%s1859] sm:$0xff]
      %s1861 = scalar_lea.vmem %s176, 4552
      %1862 = vst [vmem:[%s1861] sm:$0xff] %v1860
      %s1863 = scalar_lea.vmem %s150, 6600
      %v1864 = vld [vmem:[%s1863] sm:$0xff]
      %s1865 = scalar_lea.vmem %s176, 10696
      %1866 = vst [vmem:[%s1865] sm:$0xff] %v1864
      %s1867 = scalar_lea.vmem %s150, 456
      %v1868 = vld [vmem:[%s1867] sm:$0xff]
      %s1869 = scalar_lea.vmem %s176, 16840
      %1870 = vst [vmem:[%s1869] sm:$0xff] %v1868
      %s1871 = scalar_lea.vmem %s150, 16872
      %v1872 = vld [vmem:[%s1871] sm:$0xff]
      %s1873 = scalar_lea.vmem %s176, 488
      %1874 = vst [vmem:[%s1873] sm:$0xff] %v1872
      %s1875 = scalar_lea.vmem %s150, 10728
      %v1876 = vld [vmem:[%s1875] sm:$0xff]
      %s1877 = scalar_lea.vmem %s176, 6632
      %1878 = vst [vmem:[%s1877] sm:$0xff] %v1876
      %s1879 = scalar_lea.vmem %s150, 4584
      %v1880 = vld [vmem:[%s1879] sm:$0xff]
      %s1881 = scalar_lea.vmem %s176, 12776
      %1882 = vst [vmem:[%s1881] sm:$0xff] %v1880
      %s1883 = scalar_lea.vmem %s150, 14824
      %v1884 = vld [vmem:[%s1883] sm:$0xff]
      %s1885 = scalar_lea.vmem %s176, 2536
      %1886 = vst [vmem:[%s1885] sm:$0xff] %v1884
      %s1887 = scalar_lea.vmem %s150, 8680
      %v1888 = vld [vmem:[%s1887] sm:$0xff]
      %s1889 = scalar_lea.vmem %s176, 8680
      %1890 = vst [vmem:[%s1889] sm:$0xff] %v1888
      %s1891 = scalar_lea.vmem %s150, 2536
      %v1892 = vld [vmem:[%s1891] sm:$0xff]
      %s1893 = scalar_lea.vmem %s176, 14824
      %1894 = vst [vmem:[%s1893] sm:$0xff] %v1892
      %s1895 = scalar_lea.vmem %s150, 12776
      %v1896 = vld [vmem:[%s1895] sm:$0xff]
      %s1897 = scalar_lea.vmem %s176, 4584
      %1898 = vst [vmem:[%s1897] sm:$0xff] %v1896
      %s1899 = scalar_lea.vmem %s150, 6632
      %v1900 = vld [vmem:[%s1899] sm:$0xff]
      %s1901 = scalar_lea.vmem %s176, 10728
      %1902 = vst [vmem:[%s1901] sm:$0xff] %v1900
      %s1903 = scalar_lea.vmem %s150, 488
      %v1904 = vld [vmem:[%s1903] sm:$0xff]
      %s1905 = scalar_lea.vmem %s176, 16872
      %1906 = vst [vmem:[%s1905] sm:$0xff] %v1904
      %s1907 = scalar_lea.vmem %s150, 16904
      %v1908 = vld [vmem:[%s1907] sm:$0xff]
      %s1909 = scalar_lea.vmem %s176, 520
      %1910 = vst [vmem:[%s1909] sm:$0xff] %v1908
      %s1911 = scalar_lea.vmem %s150, 10760
      %v1912 = vld [vmem:[%s1911] sm:$0xff]
      %s1913 = scalar_lea.vmem %s176, 6664
      %1914 = vst [vmem:[%s1913] sm:$0xff] %v1912
      %s1915 = scalar_lea.vmem %s150, 4616
      %v1916 = vld [vmem:[%s1915] sm:$0xff]
      %s1917 = scalar_lea.vmem %s176, 12808
      %1918 = vst [vmem:[%s1917] sm:$0xff] %v1916
      %s1919 = scalar_lea.vmem %s150, 14856
      %v1920 = vld [vmem:[%s1919] sm:$0xff]
      %s1921 = scalar_lea.vmem %s176, 2568
      %1922 = vst [vmem:[%s1921] sm:$0xff] %v1920
      %s1923 = scalar_lea.vmem %s150, 8712
      %v1924 = vld [vmem:[%s1923] sm:$0xff]
      %s1925 = scalar_lea.vmem %s176, 8712
      %1926 = vst [vmem:[%s1925] sm:$0xff] %v1924
      %s1927 = scalar_lea.vmem %s150, 2568
      %v1928 = vld [vmem:[%s1927] sm:$0xff]
      %s1929 = scalar_lea.vmem %s176, 14856
      %1930 = vst [vmem:[%s1929] sm:$0xff] %v1928
      %s1931 = scalar_lea.vmem %s150, 12808
      %v1932 = vld [vmem:[%s1931] sm:$0xff]
      %s1933 = scalar_lea.vmem %s176, 4616
      %1934 = vst [vmem:[%s1933] sm:$0xff] %v1932
      %s1935 = scalar_lea.vmem %s150, 6664
      %v1936 = vld [vmem:[%s1935] sm:$0xff]
      %s1937 = scalar_lea.vmem %s176, 10760
      %1938 = vst [vmem:[%s1937] sm:$0xff] %v1936
      %s1939 = scalar_lea.vmem %s150, 520
      %v1940 = vld [vmem:[%s1939] sm:$0xff]
      %s1941 = scalar_lea.vmem %s176, 16904
      %1942 = vst [vmem:[%s1941] sm:$0xff] %v1940
      %s1943 = scalar_lea.vmem %s150, 16936
      %v1944 = vld [vmem:[%s1943] sm:$0xff]
      %s1945 = scalar_lea.vmem %s176, 552
      %1946 = vst [vmem:[%s1945] sm:$0xff] %v1944
      %s1947 = scalar_lea.vmem %s150, 10792
      %v1948 = vld [vmem:[%s1947] sm:$0xff]
      %s1949 = scalar_lea.vmem %s176, 6696
      %1950 = vst [vmem:[%s1949] sm:$0xff] %v1948
      %s1951 = scalar_lea.vmem %s150, 4648
      %v1952 = vld [vmem:[%s1951] sm:$0xff]
      %s1953 = scalar_lea.vmem %s176, 12840
      %1954 = vst [vmem:[%s1953] sm:$0xff] %v1952
      %s1955 = scalar_lea.vmem %s150, 14888
      %v1956 = vld [vmem:[%s1955] sm:$0xff]
      %s1957 = scalar_lea.vmem %s176, 2600
      %1958 = vst [vmem:[%s1957] sm:$0xff] %v1956
      %s1959 = scalar_lea.vmem %s150, 8744
      %v1960 = vld [vmem:[%s1959] sm:$0xff]
      %s1961 = scalar_lea.vmem %s176, 8744
      %1962 = vst [vmem:[%s1961] sm:$0xff] %v1960
      %s1963 = scalar_lea.vmem %s150, 2600
      %v1964 = vld [vmem:[%s1963] sm:$0xff]
      %s1965 = scalar_lea.vmem %s176, 14888
      %1966 = vst [vmem:[%s1965] sm:$0xff] %v1964
      %s1967 = scalar_lea.vmem %s150, 12840
      %v1968 = vld [vmem:[%s1967] sm:$0xff]
      %s1969 = scalar_lea.vmem %s176, 4648
      %1970 = vst [vmem:[%s1969] sm:$0xff] %v1968
      %s1971 = scalar_lea.vmem %s150, 6696
      %v1972 = vld [vmem:[%s1971] sm:$0xff]
      %s1973 = scalar_lea.vmem %s176, 10792
      %1974 = vst [vmem:[%s1973] sm:$0xff] %v1972
      %s1975 = scalar_lea.vmem %s150, 552
      %v1976 = vld [vmem:[%s1975] sm:$0xff]
      %s1977 = scalar_lea.vmem %s176, 16936
      %1978 = vst [vmem:[%s1977] sm:$0xff] %v1976
      %s1979 = scalar_lea.vmem %s150, 16968
      %v1980 = vld [vmem:[%s1979] sm:$0xff]
      %s1981 = scalar_lea.vmem %s176, 584
      %1982 = vst [vmem:[%s1981] sm:$0xff] %v1980
      %s1983 = scalar_lea.vmem %s150, 10824
      %v1984 = vld [vmem:[%s1983] sm:$0xff]
      %s1985 = scalar_lea.vmem %s176, 6728
      %1986 = vst [vmem:[%s1985] sm:$0xff] %v1984
      %s1987 = scalar_lea.vmem %s150, 4680
      %v1988 = vld [vmem:[%s1987] sm:$0xff]
      %s1989 = scalar_lea.vmem %s176, 12872
      %1990 = vst [vmem:[%s1989] sm:$0xff] %v1988
      %s1991 = scalar_lea.vmem %s150, 14920
      %v1992 = vld [vmem:[%s1991] sm:$0xff]
      %s1993 = scalar_lea.vmem %s176, 2632
      %1994 = vst [vmem:[%s1993] sm:$0xff] %v1992
      %s1995 = scalar_lea.vmem %s150, 8776
      %v1996 = vld [vmem:[%s1995] sm:$0xff]
      %s1997 = scalar_lea.vmem %s176, 8776
      %1998 = vst [vmem:[%s1997] sm:$0xff] %v1996
      %s1999 = scalar_lea.vmem %s150, 2632
      %v2000 = vld [vmem:[%s1999] sm:$0xff]
      %s2001 = scalar_lea.vmem %s176, 14920
      %2002 = vst [vmem:[%s2001] sm:$0xff] %v2000
      %s2003 = scalar_lea.vmem %s150, 12872
      %v2004 = vld [vmem:[%s2003] sm:$0xff]
      %s2005 = scalar_lea.vmem %s176, 4680
      %2006 = vst [vmem:[%s2005] sm:$0xff] %v2004
      %s2007 = scalar_lea.vmem %s150, 6728
      %v2008 = vld [vmem:[%s2007] sm:$0xff]
      %s2009 = scalar_lea.vmem %s176, 10824
      %2010 = vst [vmem:[%s2009] sm:$0xff] %v2008
      %s2011 = scalar_lea.vmem %s150, 584
      %v2012 = vld [vmem:[%s2011] sm:$0xff]
      %s2013 = scalar_lea.vmem %s176, 16968
      %2014 = vst [vmem:[%s2013] sm:$0xff] %v2012
      %s2015 = scalar_lea.vmem %s150, 17000
      %v2016 = vld [vmem:[%s2015] sm:$0xff]
      %s2017 = scalar_lea.vmem %s176, 616
      %2018 = vst [vmem:[%s2017] sm:$0xff] %v2016
      %s2019 = scalar_lea.vmem %s150, 10856
      %v2020 = vld [vmem:[%s2019] sm:$0xff]
      %s2021 = scalar_lea.vmem %s176, 6760
      %2022 = vst [vmem:[%s2021] sm:$0xff] %v2020
      %s2023 = scalar_lea.vmem %s150, 4712
      %v2024 = vld [vmem:[%s2023] sm:$0xff]
      %s2025 = scalar_lea.vmem %s176, 12904
      %2026 = vst [vmem:[%s2025] sm:$0xff] %v2024
      %s2027 = scalar_lea.vmem %s150, 14952
      %v2028 = vld [vmem:[%s2027] sm:$0xff]
      %s2029 = scalar_lea.vmem %s176, 2664
      %2030 = vst [vmem:[%s2029] sm:$0xff] %v2028
      %s2031 = scalar_lea.vmem %s150, 8808
      %v2032 = vld [vmem:[%s2031] sm:$0xff]
      %s2033 = scalar_lea.vmem %s176, 8808
      %2034 = vst [vmem:[%s2033] sm:$0xff] %v2032
      %s2035 = scalar_lea.vmem %s150, 2664
      %v2036 = vld [vmem:[%s2035] sm:$0xff]
      %s2037 = scalar_lea.vmem %s176, 14952
      %2038 = vst [vmem:[%s2037] sm:$0xff] %v2036
      %s2039 = scalar_lea.vmem %s150, 12904
      %v2040 = vld [vmem:[%s2039] sm:$0xff]
      %s2041 = scalar_lea.vmem %s176, 4712
      %2042 = vst [vmem:[%s2041] sm:$0xff] %v2040
      %s2043 = scalar_lea.vmem %s150, 6760
      %v2044 = vld [vmem:[%s2043] sm:$0xff]
      %s2045 = scalar_lea.vmem %s176, 10856
      %2046 = vst [vmem:[%s2045] sm:$0xff] %v2044
      %s2047 = scalar_lea.vmem %s150, 616
      %v2048 = vld [vmem:[%s2047] sm:$0xff]
      %s2049 = scalar_lea.vmem %s176, 17000
      %2050 = vst [vmem:[%s2049] sm:$0xff] %v2048
      %s2051 = scalar_lea.vmem %s150, 17032
      %v2052 = vld [vmem:[%s2051] sm:$0xff]
      %s2053 = scalar_lea.vmem %s176, 648
      %2054 = vst [vmem:[%s2053] sm:$0xff] %v2052
      %s2055 = scalar_lea.vmem %s150, 10888
      %v2056 = vld [vmem:[%s2055] sm:$0xff]
      %s2057 = scalar_lea.vmem %s176, 6792
      %2058 = vst [vmem:[%s2057] sm:$0xff] %v2056
      %s2059 = scalar_lea.vmem %s150, 4744
      %v2060 = vld [vmem:[%s2059] sm:$0xff]
      %s2061 = scalar_lea.vmem %s176, 12936
      %2062 = vst [vmem:[%s2061] sm:$0xff] %v2060
      %s2063 = scalar_lea.vmem %s150, 14984
      %v2064 = vld [vmem:[%s2063] sm:$0xff]
      %s2065 = scalar_lea.vmem %s176, 2696
      %2066 = vst [vmem:[%s2065] sm:$0xff] %v2064
      %s2067 = scalar_lea.vmem %s150, 8840
      %v2068 = vld [vmem:[%s2067] sm:$0xff]
      %s2069 = scalar_lea.vmem %s176, 8840
      %2070 = vst [vmem:[%s2069] sm:$0xff] %v2068
      %s2071 = scalar_lea.vmem %s150, 2696
      %v2072 = vld [vmem:[%s2071] sm:$0xff]
      %s2073 = scalar_lea.vmem %s176, 14984
      %2074 = vst [vmem:[%s2073] sm:$0xff] %v2072
      %s2075 = scalar_lea.vmem %s150, 12936
      %v2076 = vld [vmem:[%s2075] sm:$0xff]
      %s2077 = scalar_lea.vmem %s176, 4744
      %2078 = vst [vmem:[%s2077] sm:$0xff] %v2076
      %s2079 = scalar_lea.vmem %s150, 6792
      %v2080 = vld [vmem:[%s2079] sm:$0xff]
      %s2081 = scalar_lea.vmem %s176, 10888
      %2082 = vst [vmem:[%s2081] sm:$0xff] %v2080
      %s2083 = scalar_lea.vmem %s150, 648
      %v2084 = vld [vmem:[%s2083] sm:$0xff]
      %s2085 = scalar_lea.vmem %s176, 17032
      %2086 = vst [vmem:[%s2085] sm:$0xff] %v2084
      %s2087 = scalar_lea.vmem %s150, 17064
      %v2088 = vld [vmem:[%s2087] sm:$0xff]
      %s2089 = scalar_lea.vmem %s176, 680
      %2090 = vst [vmem:[%s2089] sm:$0xff] %v2088
      %s2091 = scalar_lea.vmem %s150, 10920
      %v2092 = vld [vmem:[%s2091] sm:$0xff]
      %s2093 = scalar_lea.vmem %s176, 6824
      %2094 = vst [vmem:[%s2093] sm:$0xff] %v2092
      %s2095 = scalar_lea.vmem %s150, 4776
      %v2096 = vld [vmem:[%s2095] sm:$0xff]
      %s2097 = scalar_lea.vmem %s176, 12968
      %2098 = vst [vmem:[%s2097] sm:$0xff] %v2096
      %s2099 = scalar_lea.vmem %s150, 15016
      %v2100 = vld [vmem:[%s2099] sm:$0xff]
      %s2101 = scalar_lea.vmem %s176, 2728
      %2102 = vst [vmem:[%s2101] sm:$0xff] %v2100
      %s2103 = scalar_lea.vmem %s150, 8872
      %v2104 = vld [vmem:[%s2103] sm:$0xff]
      %s2105 = scalar_lea.vmem %s176, 8872
      %2106 = vst [vmem:[%s2105] sm:$0xff] %v2104
      %s2107 = scalar_lea.vmem %s150, 2728
      %v2108 = vld [vmem:[%s2107] sm:$0xff]
      %s2109 = scalar_lea.vmem %s176, 15016
      %2110 = vst [vmem:[%s2109] sm:$0xff] %v2108
      %s2111 = scalar_lea.vmem %s150, 12968
      %v2112 = vld [vmem:[%s2111] sm:$0xff]
      %s2113 = scalar_lea.vmem %s176, 4776
      %2114 = vst [vmem:[%s2113] sm:$0xff] %v2112
      %s2115 = scalar_lea.vmem %s150, 6824
      %v2116 = vld [vmem:[%s2115] sm:$0xff]
      %s2117 = scalar_lea.vmem %s176, 10920
      %2118 = vst [vmem:[%s2117] sm:$0xff] %v2116
      %s2119 = scalar_lea.vmem %s150, 680
      %v2120 = vld [vmem:[%s2119] sm:$0xff]
      %s2121 = scalar_lea.vmem %s176, 17064
      %2122 = vst [vmem:[%s2121] sm:$0xff] %v2120
      %s2123 = scalar_lea.vmem %s150, 17096
      %v2124 = vld [vmem:[%s2123] sm:$0xff]
      %s2125 = scalar_lea.vmem %s176, 712
      %2126 = vst [vmem:[%s2125] sm:$0xff] %v2124
      %s2127 = scalar_lea.vmem %s150, 10952
      %v2128 = vld [vmem:[%s2127] sm:$0xff]
      %s2129 = scalar_lea.vmem %s176, 6856
      %2130 = vst [vmem:[%s2129] sm:$0xff] %v2128
      %s2131 = scalar_lea.vmem %s150, 4808
      %v2132 = vld [vmem:[%s2131] sm:$0xff]
      %s2133 = scalar_lea.vmem %s176, 13000
      %2134 = vst [vmem:[%s2133] sm:$0xff] %v2132
      %s2135 = scalar_lea.vmem %s150, 15048
      %v2136 = vld [vmem:[%s2135] sm:$0xff]
      %s2137 = scalar_lea.vmem %s176, 2760
      %2138 = vst [vmem:[%s2137] sm:$0xff] %v2136
      %s2139 = scalar_lea.vmem %s150, 8904
      %v2140 = vld [vmem:[%s2139] sm:$0xff]
      %s2141 = scalar_lea.vmem %s176, 8904
      %2142 = vst [vmem:[%s2141] sm:$0xff] %v2140
      %s2143 = scalar_lea.vmem %s150, 2760
      %v2144 = vld [vmem:[%s2143] sm:$0xff]
      %s2145 = scalar_lea.vmem %s176, 15048
      %2146 = vst [vmem:[%s2145] sm:$0xff] %v2144
      %s2147 = scalar_lea.vmem %s150, 13000
      %v2148 = vld [vmem:[%s2147] sm:$0xff]
      %s2149 = scalar_lea.vmem %s176, 4808
      %2150 = vst [vmem:[%s2149] sm:$0xff] %v2148
      %s2151 = scalar_lea.vmem %s150, 6856
      %v2152 = vld [vmem:[%s2151] sm:$0xff]
      %s2153 = scalar_lea.vmem %s176, 10952
      %2154 = vst [vmem:[%s2153] sm:$0xff] %v2152
      %s2155 = scalar_lea.vmem %s150, 712
      %v2156 = vld [vmem:[%s2155] sm:$0xff]
      %s2157 = scalar_lea.vmem %s176, 17096
      %2158 = vst [vmem:[%s2157] sm:$0xff] %v2156
      %s2159 = scalar_lea.vmem %s150, 17128
      %v2160 = vld [vmem:[%s2159] sm:$0xff]
      %s2161 = scalar_lea.vmem %s176, 744
      %2162 = vst [vmem:[%s2161] sm:$0xff] %v2160
      %s2163 = scalar_lea.vmem %s150, 10984
      %v2164 = vld [vmem:[%s2163] sm:$0xff]
      %s2165 = scalar_lea.vmem %s176, 6888
      %2166 = vst [vmem:[%s2165] sm:$0xff] %v2164
      %s2167 = scalar_lea.vmem %s150, 4840
      %v2168 = vld [vmem:[%s2167] sm:$0xff]
      %s2169 = scalar_lea.vmem %s176, 13032
      %2170 = vst [vmem:[%s2169] sm:$0xff] %v2168
      %s2171 = scalar_lea.vmem %s150, 15080
      %v2172 = vld [vmem:[%s2171] sm:$0xff]
      %s2173 = scalar_lea.vmem %s176, 2792
      %2174 = vst [vmem:[%s2173] sm:$0xff] %v2172
      %s2175 = scalar_lea.vmem %s150, 8936
      %v2176 = vld [vmem:[%s2175] sm:$0xff]
      %s2177 = scalar_lea.vmem %s176, 8936
      %2178 = vst [vmem:[%s2177] sm:$0xff] %v2176
      %s2179 = scalar_lea.vmem %s150, 2792
      %v2180 = vld [vmem:[%s2179] sm:$0xff]
      %s2181 = scalar_lea.vmem %s176, 15080
      %2182 = vst [vmem:[%s2181] sm:$0xff] %v2180
      %s2183 = scalar_lea.vmem %s150, 13032
      %v2184 = vld [vmem:[%s2183] sm:$0xff]
      %s2185 = scalar_lea.vmem %s176, 4840
      %2186 = vst [vmem:[%s2185] sm:$0xff] %v2184
      %s2187 = scalar_lea.vmem %s150, 6888
      %v2188 = vld [vmem:[%s2187] sm:$0xff]
      %s2189 = scalar_lea.vmem %s176, 10984
      %2190 = vst [vmem:[%s2189] sm:$0xff] %v2188
      %s2191 = scalar_lea.vmem %s150, 744
      %v2192 = vld [vmem:[%s2191] sm:$0xff]
      %s2193 = scalar_lea.vmem %s176, 17128
      %2194 = vst [vmem:[%s2193] sm:$0xff] %v2192
      %s2195 = scalar_lea.vmem %s150, 17160
      %v2196 = vld [vmem:[%s2195] sm:$0xff]
      %s2197 = scalar_lea.vmem %s176, 776
      %2198 = vst [vmem:[%s2197] sm:$0xff] %v2196
      %s2199 = scalar_lea.vmem %s150, 11016
      %v2200 = vld [vmem:[%s2199] sm:$0xff]
      %s2201 = scalar_lea.vmem %s176, 6920
      %2202 = vst [vmem:[%s2201] sm:$0xff] %v2200
      %s2203 = scalar_lea.vmem %s150, 4872
      %v2204 = vld [vmem:[%s2203] sm:$0xff]
      %s2205 = scalar_lea.vmem %s176, 13064
      %2206 = vst [vmem:[%s2205] sm:$0xff] %v2204
      %s2207 = scalar_lea.vmem %s150, 15112
      %v2208 = vld [vmem:[%s2207] sm:$0xff]
      %s2209 = scalar_lea.vmem %s176, 2824
      %2210 = vst [vmem:[%s2209] sm:$0xff] %v2208
      %s2211 = scalar_lea.vmem %s150, 8968
      %v2212 = vld [vmem:[%s2211] sm:$0xff]
      %s2213 = scalar_lea.vmem %s176, 8968
      %2214 = vst [vmem:[%s2213] sm:$0xff] %v2212
      %s2215 = scalar_lea.vmem %s150, 2824
      %v2216 = vld [vmem:[%s2215] sm:$0xff]
      %s2217 = scalar_lea.vmem %s176, 15112
      %2218 = vst [vmem:[%s2217] sm:$0xff] %v2216
      %s2219 = scalar_lea.vmem %s150, 13064
      %v2220 = vld [vmem:[%s2219] sm:$0xff]
      %s2221 = scalar_lea.vmem %s176, 4872
      %2222 = vst [vmem:[%s2221] sm:$0xff] %v2220
      %s2223 = scalar_lea.vmem %s150, 6920
      %v2224 = vld [vmem:[%s2223] sm:$0xff]
      %s2225 = scalar_lea.vmem %s176, 11016
      %2226 = vst [vmem:[%s2225] sm:$0xff] %v2224
      %s2227 = scalar_lea.vmem %s150, 776
      %v2228 = vld [vmem:[%s2227] sm:$0xff]
      %s2229 = scalar_lea.vmem %s176, 17160
      %2230 = vst [vmem:[%s2229] sm:$0xff] %v2228
      %s2231 = scalar_lea.vmem %s150, 17192
      %v2232 = vld [vmem:[%s2231] sm:$0xff]
      %s2233 = scalar_lea.vmem %s176, 808
      %2234 = vst [vmem:[%s2233] sm:$0xff] %v2232
      %s2235 = scalar_lea.vmem %s150, 11048
      %v2236 = vld [vmem:[%s2235] sm:$0xff]
      %s2237 = scalar_lea.vmem %s176, 6952
      %2238 = vst [vmem:[%s2237] sm:$0xff] %v2236
      %s2239 = scalar_lea.vmem %s150, 4904
      %v2240 = vld [vmem:[%s2239] sm:$0xff]
      %s2241 = scalar_lea.vmem %s176, 13096
      %2242 = vst [vmem:[%s2241] sm:$0xff] %v2240
      %s2243 = scalar_lea.vmem %s150, 15144
      %v2244 = vld [vmem:[%s2243] sm:$0xff]
      %s2245 = scalar_lea.vmem %s176, 2856
      %2246 = vst [vmem:[%s2245] sm:$0xff] %v2244
      %s2247 = scalar_lea.vmem %s150, 9000
      %v2248 = vld [vmem:[%s2247] sm:$0xff]
      %s2249 = scalar_lea.vmem %s176, 9000
      %2250 = vst [vmem:[%s2249] sm:$0xff] %v2248
      %s2251 = scalar_lea.vmem %s150, 2856
      %v2252 = vld [vmem:[%s2251] sm:$0xff]
      %s2253 = scalar_lea.vmem %s176, 15144
      %2254 = vst [vmem:[%s2253] sm:$0xff] %v2252
      %s2255 = scalar_lea.vmem %s150, 13096
      %v2256 = vld [vmem:[%s2255] sm:$0xff]
      %s2257 = scalar_lea.vmem %s176, 4904
      %2258 = vst [vmem:[%s2257] sm:$0xff] %v2256
      %s2259 = scalar_lea.vmem %s150, 6952
      %v2260 = vld [vmem:[%s2259] sm:$0xff]
      %s2261 = scalar_lea.vmem %s176, 11048
      %2262 = vst [vmem:[%s2261] sm:$0xff] %v2260
      %s2263 = scalar_lea.vmem %s150, 808
      %v2264 = vld [vmem:[%s2263] sm:$0xff]
      %s2265 = scalar_lea.vmem %s176, 17192
      %2266 = vst [vmem:[%s2265] sm:$0xff] %v2264
      %s2267 = scalar_lea.vmem %s150, 17224
      %v2268 = vld [vmem:[%s2267] sm:$0xff]
      %s2269 = scalar_lea.vmem %s176, 840
      %2270 = vst [vmem:[%s2269] sm:$0xff] %v2268
      %s2271 = scalar_lea.vmem %s150, 11080
      %v2272 = vld [vmem:[%s2271] sm:$0xff]
      %s2273 = scalar_lea.vmem %s176, 6984
      %2274 = vst [vmem:[%s2273] sm:$0xff] %v2272
      %s2275 = scalar_lea.vmem %s150, 4936
      %v2276 = vld [vmem:[%s2275] sm:$0xff]
      %s2277 = scalar_lea.vmem %s176, 13128
      %2278 = vst [vmem:[%s2277] sm:$0xff] %v2276
      %s2279 = scalar_lea.vmem %s150, 15176
      %v2280 = vld [vmem:[%s2279] sm:$0xff]
      %s2281 = scalar_lea.vmem %s176, 2888
      %2282 = vst [vmem:[%s2281] sm:$0xff] %v2280
      %s2283 = scalar_lea.vmem %s150, 9032
      %v2284 = vld [vmem:[%s2283] sm:$0xff]
      %s2285 = scalar_lea.vmem %s176, 9032
      %2286 = vst [vmem:[%s2285] sm:$0xff] %v2284
      %s2287 = scalar_lea.vmem %s150, 2888
      %v2288 = vld [vmem:[%s2287] sm:$0xff]
      %s2289 = scalar_lea.vmem %s176, 15176
      %2290 = vst [vmem:[%s2289] sm:$0xff] %v2288
      %s2291 = scalar_lea.vmem %s150, 13128
      %v2292 = vld [vmem:[%s2291] sm:$0xff]
      %s2293 = scalar_lea.vmem %s176, 4936
      %2294 = vst [vmem:[%s2293] sm:$0xff] %v2292
      %s2295 = scalar_lea.vmem %s150, 6984
      %v2296 = vld [vmem:[%s2295] sm:$0xff]
      %s2297 = scalar_lea.vmem %s176, 11080
      %2298 = vst [vmem:[%s2297] sm:$0xff] %v2296
      %s2299 = scalar_lea.vmem %s150, 840
      %v2300 = vld [vmem:[%s2299] sm:$0xff]
      %s2301 = scalar_lea.vmem %s176, 17224
      %2302 = vst [vmem:[%s2301] sm:$0xff] %v2300
      %s2303 = scalar_lea.vmem %s150, 17256
      %v2304 = vld [vmem:[%s2303] sm:$0xff]
      %s2305 = scalar_lea.vmem %s176, 872
      %2306 = vst [vmem:[%s2305] sm:$0xff] %v2304
      %s2307 = scalar_lea.vmem %s150, 11112
      %v2308 = vld [vmem:[%s2307] sm:$0xff]
      %s2309 = scalar_lea.vmem %s176, 7016
      %2310 = vst [vmem:[%s2309] sm:$0xff] %v2308
      %s2311 = scalar_lea.vmem %s150, 4968
      %v2312 = vld [vmem:[%s2311] sm:$0xff]
      %s2313 = scalar_lea.vmem %s176, 13160
      %2314 = vst [vmem:[%s2313] sm:$0xff] %v2312
      %s2315 = scalar_lea.vmem %s150, 15208
      %v2316 = vld [vmem:[%s2315] sm:$0xff]
      %s2317 = scalar_lea.vmem %s176, 2920
      %2318 = vst [vmem:[%s2317] sm:$0xff] %v2316
      %s2319 = scalar_lea.vmem %s150, 9064
      %v2320 = vld [vmem:[%s2319] sm:$0xff]
      %s2321 = scalar_lea.vmem %s176, 9064
      %2322 = vst [vmem:[%s2321] sm:$0xff] %v2320
      %s2323 = scalar_lea.vmem %s150, 2920
      %v2324 = vld [vmem:[%s2323] sm:$0xff]
      %s2325 = scalar_lea.vmem %s176, 15208
      %2326 = vst [vmem:[%s2325] sm:$0xff] %v2324
      %s2327 = scalar_lea.vmem %s150, 13160
      %v2328 = vld [vmem:[%s2327] sm:$0xff]
      %s2329 = scalar_lea.vmem %s176, 4968
      %2330 = vst [vmem:[%s2329] sm:$0xff] %v2328
      %s2331 = scalar_lea.vmem %s150, 7016
      %v2332 = vld [vmem:[%s2331] sm:$0xff]
      %s2333 = scalar_lea.vmem %s176, 11112
      %2334 = vst [vmem:[%s2333] sm:$0xff] %v2332
      %s2335 = scalar_lea.vmem %s150, 872
      %v2336 = vld [vmem:[%s2335] sm:$0xff]
      %s2337 = scalar_lea.vmem %s176, 17256
      %2338 = vst [vmem:[%s2337] sm:$0xff] %v2336
      %s2339 = scalar_lea.vmem %s150, 17288
      %v2340 = vld [vmem:[%s2339] sm:$0xff]
      %s2341 = scalar_lea.vmem %s176, 904
      %2342 = vst [vmem:[%s2341] sm:$0xff] %v2340
      %s2343 = scalar_lea.vmem %s150, 11144
      %v2344 = vld [vmem:[%s2343] sm:$0xff]
      %s2345 = scalar_lea.vmem %s176, 7048
      %2346 = vst [vmem:[%s2345] sm:$0xff] %v2344
      %s2347 = scalar_lea.vmem %s150, 5000
      %v2348 = vld [vmem:[%s2347] sm:$0xff]
      %s2349 = scalar_lea.vmem %s176, 13192
      %2350 = vst [vmem:[%s2349] sm:$0xff] %v2348
      %s2351 = scalar_lea.vmem %s150, 15240
      %v2352 = vld [vmem:[%s2351] sm:$0xff]
      %s2353 = scalar_lea.vmem %s176, 2952
      %2354 = vst [vmem:[%s2353] sm:$0xff] %v2352
      %s2355 = scalar_lea.vmem %s150, 9096
      %v2356 = vld [vmem:[%s2355] sm:$0xff]
      %s2357 = scalar_lea.vmem %s176, 9096
      %2358 = vst [vmem:[%s2357] sm:$0xff] %v2356
      %s2359 = scalar_lea.vmem %s150, 2952
      %v2360 = vld [vmem:[%s2359] sm:$0xff]
      %s2361 = scalar_lea.vmem %s176, 15240
      %2362 = vst [vmem:[%s2361] sm:$0xff] %v2360
      %s2363 = scalar_lea.vmem %s150, 13192
      %v2364 = vld [vmem:[%s2363] sm:$0xff]
      %s2365 = scalar_lea.vmem %s176, 5000
      %2366 = vst [vmem:[%s2365] sm:$0xff] %v2364
      %s2367 = scalar_lea.vmem %s150, 7048
      %v2368 = vld [vmem:[%s2367] sm:$0xff]
      %s2369 = scalar_lea.vmem %s176, 11144
      %2370 = vst [vmem:[%s2369] sm:$0xff] %v2368
      %s2371 = scalar_lea.vmem %s150, 904
      %v2372 = vld [vmem:[%s2371] sm:$0xff]
      %s2373 = scalar_lea.vmem %s176, 17288
      %2374 = vst [vmem:[%s2373] sm:$0xff] %v2372
      %s2375 = scalar_lea.vmem %s150, 17320
      %v2376 = vld [vmem:[%s2375] sm:$0xff]
      %s2377 = scalar_lea.vmem %s176, 936
      %2378 = vst [vmem:[%s2377] sm:$0xff] %v2376
      %s2379 = scalar_lea.vmem %s150, 11176
      %v2380 = vld [vmem:[%s2379] sm:$0xff]
      %s2381 = scalar_lea.vmem %s176, 7080
      %2382 = vst [vmem:[%s2381] sm:$0xff] %v2380
      %s2383 = scalar_lea.vmem %s150, 5032
      %v2384 = vld [vmem:[%s2383] sm:$0xff]
      %s2385 = scalar_lea.vmem %s176, 13224
      %2386 = vst [vmem:[%s2385] sm:$0xff] %v2384
      %s2387 = scalar_lea.vmem %s150, 15272
      %v2388 = vld [vmem:[%s2387] sm:$0xff]
      %s2389 = scalar_lea.vmem %s176, 2984
      %2390 = vst [vmem:[%s2389] sm:$0xff] %v2388
      %s2391 = scalar_lea.vmem %s150, 9128
      %v2392 = vld [vmem:[%s2391] sm:$0xff]
      %s2393 = scalar_lea.vmem %s176, 9128
      %2394 = vst [vmem:[%s2393] sm:$0xff] %v2392
      %s2395 = scalar_lea.vmem %s150, 2984
      %v2396 = vld [vmem:[%s2395] sm:$0xff]
      %s2397 = scalar_lea.vmem %s176, 15272
      %2398 = vst [vmem:[%s2397] sm:$0xff] %v2396
      %s2399 = scalar_lea.vmem %s150, 13224
      %v2400 = vld [vmem:[%s2399] sm:$0xff]
      %s2401 = scalar_lea.vmem %s176, 5032
      %2402 = vst [vmem:[%s2401] sm:$0xff] %v2400
      %s2403 = scalar_lea.vmem %s150, 7080
      %v2404 = vld [vmem:[%s2403] sm:$0xff]
      %s2405 = scalar_lea.vmem %s176, 11176
      %2406 = vst [vmem:[%s2405] sm:$0xff] %v2404
      %s2407 = scalar_lea.vmem %s150, 936
      %v2408 = vld [vmem:[%s2407] sm:$0xff]
      %s2409 = scalar_lea.vmem %s176, 17320
      %2410 = vst [vmem:[%s2409] sm:$0xff] %v2408
      %s2411 = scalar_lea.vmem %s150, 17352
      %v2412 = vld [vmem:[%s2411] sm:$0xff]
      %s2413 = scalar_lea.vmem %s176, 968
      %2414 = vst [vmem:[%s2413] sm:$0xff] %v2412
      %s2415 = scalar_lea.vmem %s150, 11208
      %v2416 = vld [vmem:[%s2415] sm:$0xff]
      %s2417 = scalar_lea.vmem %s176, 7112
      %2418 = vst [vmem:[%s2417] sm:$0xff] %v2416
      %s2419 = scalar_lea.vmem %s150, 5064
      %v2420 = vld [vmem:[%s2419] sm:$0xff]
      %s2421 = scalar_lea.vmem %s176, 13256
      %2422 = vst [vmem:[%s2421] sm:$0xff] %v2420
      %s2423 = scalar_lea.vmem %s150, 15304
      %v2424 = vld [vmem:[%s2423] sm:$0xff]
      %s2425 = scalar_lea.vmem %s176, 3016
      %2426 = vst [vmem:[%s2425] sm:$0xff] %v2424
      %s2427 = scalar_lea.vmem %s150, 9160
      %v2428 = vld [vmem:[%s2427] sm:$0xff]
      %s2429 = scalar_lea.vmem %s176, 9160
      %2430 = vst [vmem:[%s2429] sm:$0xff] %v2428
      %s2431 = scalar_lea.vmem %s150, 3016
      %v2432 = vld [vmem:[%s2431] sm:$0xff]
      %s2433 = scalar_lea.vmem %s176, 15304
      %2434 = vst [vmem:[%s2433] sm:$0xff] %v2432
      %s2435 = scalar_lea.vmem %s150, 13256
      %v2436 = vld [vmem:[%s2435] sm:$0xff]
      %s2437 = scalar_lea.vmem %s176, 5064
      %2438 = vst [vmem:[%s2437] sm:$0xff] %v2436
      %s2439 = scalar_lea.vmem %s150, 7112
      %v2440 = vld [vmem:[%s2439] sm:$0xff]
      %s2441 = scalar_lea.vmem %s176, 11208
      %2442 = vst [vmem:[%s2441] sm:$0xff] %v2440
      %s2443 = scalar_lea.vmem %s150, 968
      %v2444 = vld [vmem:[%s2443] sm:$0xff]
      %s2445 = scalar_lea.vmem %s176, 17352
      %2446 = vst [vmem:[%s2445] sm:$0xff] %v2444
      %s2447 = scalar_lea.vmem %s150, 17384
      %v2448 = vld [vmem:[%s2447] sm:$0xff]
      %s2449 = scalar_lea.vmem %s176, 1000
      %2450 = vst [vmem:[%s2449] sm:$0xff] %v2448
      %s2451 = scalar_lea.vmem %s150, 11240
      %v2452 = vld [vmem:[%s2451] sm:$0xff]
      %s2453 = scalar_lea.vmem %s176, 7144
      %2454 = vst [vmem:[%s2453] sm:$0xff] %v2452
      %s2455 = scalar_lea.vmem %s150, 5096
      %v2456 = vld [vmem:[%s2455] sm:$0xff]
      %s2457 = scalar_lea.vmem %s176, 13288
      %2458 = vst [vmem:[%s2457] sm:$0xff] %v2456
      %s2459 = scalar_lea.vmem %s150, 15336
      %v2460 = vld [vmem:[%s2459] sm:$0xff]
      %s2461 = scalar_lea.vmem %s176, 3048
      %2462 = vst [vmem:[%s2461] sm:$0xff] %v2460
      %s2463 = scalar_lea.vmem %s150, 9192
      %v2464 = vld [vmem:[%s2463] sm:$0xff]
      %s2465 = scalar_lea.vmem %s176, 9192
      %2466 = vst [vmem:[%s2465] sm:$0xff] %v2464
      %s2467 = scalar_lea.vmem %s150, 3048
      %v2468 = vld [vmem:[%s2467] sm:$0xff]
      %s2469 = scalar_lea.vmem %s176, 15336
      %2470 = vst [vmem:[%s2469] sm:$0xff] %v2468
      %s2471 = scalar_lea.vmem %s150, 13288
      %v2472 = vld [vmem:[%s2471] sm:$0xff]
      %s2473 = scalar_lea.vmem %s176, 5096
      %2474 = vst [vmem:[%s2473] sm:$0xff] %v2472
      %s2475 = scalar_lea.vmem %s150, 7144
      %v2476 = vld [vmem:[%s2475] sm:$0xff]
      %s2477 = scalar_lea.vmem %s176, 11240
      %2478 = vst [vmem:[%s2477] sm:$0xff] %v2476
      %s2479 = scalar_lea.vmem %s150, 1000
      %v2480 = vld [vmem:[%s2479] sm:$0xff]
      %s2481 = scalar_lea.vmem %s176, 17384
      %2482 = vst [vmem:[%s2481] sm:$0xff] %v2480
      %s2483 = scalar_lea.vmem %s150, 16400
      %v2484 = vld [vmem:[%s2483] sm:$0xff]
      %s2485 = scalar_lea.vmem %s176, 16
      %2486 = vst [vmem:[%s2485] sm:$0xff] %v2484
      %s2487 = scalar_lea.vmem %s150, 10256
      %v2488 = vld [vmem:[%s2487] sm:$0xff]
      %s2489 = scalar_lea.vmem %s176, 6160
      %2490 = vst [vmem:[%s2489] sm:$0xff] %v2488
      %s2491 = scalar_lea.vmem %s150, 4112
      %v2492 = vld [vmem:[%s2491] sm:$0xff]
      %s2493 = scalar_lea.vmem %s176, 12304
      %2494 = vst [vmem:[%s2493] sm:$0xff] %v2492
      %s2495 = scalar_lea.vmem %s150, 14352
      %v2496 = vld [vmem:[%s2495] sm:$0xff]
      %s2497 = scalar_lea.vmem %s176, 2064
      %2498 = vst [vmem:[%s2497] sm:$0xff] %v2496
      %s2499 = scalar_lea.vmem %s150, 8208
      %v2500 = vld [vmem:[%s2499] sm:$0xff]
      %s2501 = scalar_lea.vmem %s176, 8208
      %2502 = vst [vmem:[%s2501] sm:$0xff] %v2500
      %s2503 = scalar_lea.vmem %s150, 2064
      %v2504 = vld [vmem:[%s2503] sm:$0xff]
      %s2505 = scalar_lea.vmem %s176, 14352
      %2506 = vst [vmem:[%s2505] sm:$0xff] %v2504
      %s2507 = scalar_lea.vmem %s150, 12304
      %v2508 = vld [vmem:[%s2507] sm:$0xff]
      %s2509 = scalar_lea.vmem %s176, 4112
      %2510 = vst [vmem:[%s2509] sm:$0xff] %v2508
      %s2511 = scalar_lea.vmem %s150, 6160
      %v2512 = vld [vmem:[%s2511] sm:$0xff]
      %s2513 = scalar_lea.vmem %s176, 10256
      %2514 = vst [vmem:[%s2513] sm:$0xff] %v2512
      %s2515 = scalar_lea.vmem %s150, 16
      %v2516 = vld [vmem:[%s2515] sm:$0xff]
      %s2517 = scalar_lea.vmem %s176, 16400
      %2518 = vst [vmem:[%s2517] sm:$0xff] %v2516
      %s2519 = scalar_lea.vmem %s150, 16432
      %v2520 = vld [vmem:[%s2519] sm:$0xff]
      %s2521 = scalar_lea.vmem %s176, 48
      %2522 = vst [vmem:[%s2521] sm:$0xff] %v2520
      %s2523 = scalar_lea.vmem %s150, 10288
      %v2524 = vld [vmem:[%s2523] sm:$0xff]
      %s2525 = scalar_lea.vmem %s176, 6192
      %2526 = vst [vmem:[%s2525] sm:$0xff] %v2524
      %s2527 = scalar_lea.vmem %s150, 4144
      %v2528 = vld [vmem:[%s2527] sm:$0xff]
      %s2529 = scalar_lea.vmem %s176, 12336
      %2530 = vst [vmem:[%s2529] sm:$0xff] %v2528
      %s2531 = scalar_lea.vmem %s150, 14384
      %v2532 = vld [vmem:[%s2531] sm:$0xff]
      %s2533 = scalar_lea.vmem %s176, 2096
      %2534 = vst [vmem:[%s2533] sm:$0xff] %v2532
      %s2535 = scalar_lea.vmem %s150, 8240
      %v2536 = vld [vmem:[%s2535] sm:$0xff]
      %s2537 = scalar_lea.vmem %s176, 8240
      %2538 = vst [vmem:[%s2537] sm:$0xff] %v2536
      %s2539 = scalar_lea.vmem %s150, 2096
      %v2540 = vld [vmem:[%s2539] sm:$0xff]
      %s2541 = scalar_lea.vmem %s176, 14384
      %2542 = vst [vmem:[%s2541] sm:$0xff] %v2540
      %s2543 = scalar_lea.vmem %s150, 12336
      %v2544 = vld [vmem:[%s2543] sm:$0xff]
      %s2545 = scalar_lea.vmem %s176, 4144
      %2546 = vst [vmem:[%s2545] sm:$0xff] %v2544
      %s2547 = scalar_lea.vmem %s150, 6192
      %v2548 = vld [vmem:[%s2547] sm:$0xff]
      %s2549 = scalar_lea.vmem %s176, 10288
      %2550 = vst [vmem:[%s2549] sm:$0xff] %v2548
      %s2551 = scalar_lea.vmem %s150, 48
      %v2552 = vld [vmem:[%s2551] sm:$0xff]
      %s2553 = scalar_lea.vmem %s176, 16432
      %2554 = vst [vmem:[%s2553] sm:$0xff] %v2552
      %s2555 = scalar_lea.vmem %s150, 16464
      %v2556 = vld [vmem:[%s2555] sm:$0xff]
      %s2557 = scalar_lea.vmem %s176, 80
      %2558 = vst [vmem:[%s2557] sm:$0xff] %v2556
      %s2559 = scalar_lea.vmem %s150, 10320
      %v2560 = vld [vmem:[%s2559] sm:$0xff]
      %s2561 = scalar_lea.vmem %s176, 6224
      %2562 = vst [vmem:[%s2561] sm:$0xff] %v2560
      %s2563 = scalar_lea.vmem %s150, 4176
      %v2564 = vld [vmem:[%s2563] sm:$0xff]
      %s2565 = scalar_lea.vmem %s176, 12368
      %2566 = vst [vmem:[%s2565] sm:$0xff] %v2564
      %s2567 = scalar_lea.vmem %s150, 14416
      %v2568 = vld [vmem:[%s2567] sm:$0xff]
      %s2569 = scalar_lea.vmem %s176, 2128
      %2570 = vst [vmem:[%s2569] sm:$0xff] %v2568
      %s2571 = scalar_lea.vmem %s150, 8272
      %v2572 = vld [vmem:[%s2571] sm:$0xff]
      %s2573 = scalar_lea.vmem %s176, 8272
      %2574 = vst [vmem:[%s2573] sm:$0xff] %v2572
      %s2575 = scalar_lea.vmem %s150, 2128
      %v2576 = vld [vmem:[%s2575] sm:$0xff]
      %s2577 = scalar_lea.vmem %s176, 14416
      %2578 = vst [vmem:[%s2577] sm:$0xff] %v2576
      %s2579 = scalar_lea.vmem %s150, 12368
      %v2580 = vld [vmem:[%s2579] sm:$0xff]
      %s2581 = scalar_lea.vmem %s176, 4176
      %2582 = vst [vmem:[%s2581] sm:$0xff] %v2580
      %s2583 = scalar_lea.vmem %s150, 6224
      %v2584 = vld [vmem:[%s2583] sm:$0xff]
      %s2585 = scalar_lea.vmem %s176, 10320
      %2586 = vst [vmem:[%s2585] sm:$0xff] %v2584
      %s2587 = scalar_lea.vmem %s150, 80
      %v2588 = vld [vmem:[%s2587] sm:$0xff]
      %s2589 = scalar_lea.vmem %s176, 16464
      %2590 = vst [vmem:[%s2589] sm:$0xff] %v2588
      %s2591 = scalar_lea.vmem %s150, 16496
      %v2592 = vld [vmem:[%s2591] sm:$0xff]
      %s2593 = scalar_lea.vmem %s176, 112
      %2594 = vst [vmem:[%s2593] sm:$0xff] %v2592
      %s2595 = scalar_lea.vmem %s150, 10352
      %v2596 = vld [vmem:[%s2595] sm:$0xff]
      %s2597 = scalar_lea.vmem %s176, 6256
      %2598 = vst [vmem:[%s2597] sm:$0xff] %v2596
      %s2599 = scalar_lea.vmem %s150, 4208
      %v2600 = vld [vmem:[%s2599] sm:$0xff]
      %s2601 = scalar_lea.vmem %s176, 12400
      %2602 = vst [vmem:[%s2601] sm:$0xff] %v2600
      %s2603 = scalar_lea.vmem %s150, 14448
      %v2604 = vld [vmem:[%s2603] sm:$0xff]
      %s2605 = scalar_lea.vmem %s176, 2160
      %2606 = vst [vmem:[%s2605] sm:$0xff] %v2604
      %s2607 = scalar_lea.vmem %s150, 8304
      %v2608 = vld [vmem:[%s2607] sm:$0xff]
      %s2609 = scalar_lea.vmem %s176, 8304
      %2610 = vst [vmem:[%s2609] sm:$0xff] %v2608
      %s2611 = scalar_lea.vmem %s150, 2160
      %v2612 = vld [vmem:[%s2611] sm:$0xff]
      %s2613 = scalar_lea.vmem %s176, 14448
      %2614 = vst [vmem:[%s2613] sm:$0xff] %v2612
      %s2615 = scalar_lea.vmem %s150, 12400
      %v2616 = vld [vmem:[%s2615] sm:$0xff]
      %s2617 = scalar_lea.vmem %s176, 4208
      %2618 = vst [vmem:[%s2617] sm:$0xff] %v2616
      %s2619 = scalar_lea.vmem %s150, 6256
      %v2620 = vld [vmem:[%s2619] sm:$0xff]
      %s2621 = scalar_lea.vmem %s176, 10352
      %2622 = vst [vmem:[%s2621] sm:$0xff] %v2620
      %s2623 = scalar_lea.vmem %s150, 112
      %v2624 = vld [vmem:[%s2623] sm:$0xff]
      %s2625 = scalar_lea.vmem %s176, 16496
      %2626 = vst [vmem:[%s2625] sm:$0xff] %v2624
      %s2627 = scalar_lea.vmem %s150, 16528
      %v2628 = vld [vmem:[%s2627] sm:$0xff]
      %s2629 = scalar_lea.vmem %s176, 144
      %2630 = vst [vmem:[%s2629] sm:$0xff] %v2628
      %s2631 = scalar_lea.vmem %s150, 10384
      %v2632 = vld [vmem:[%s2631] sm:$0xff]
      %s2633 = scalar_lea.vmem %s176, 6288
      %2634 = vst [vmem:[%s2633] sm:$0xff] %v2632
      %s2635 = scalar_lea.vmem %s150, 4240
      %v2636 = vld [vmem:[%s2635] sm:$0xff]
      %s2637 = scalar_lea.vmem %s176, 12432
      %2638 = vst [vmem:[%s2637] sm:$0xff] %v2636
      %s2639 = scalar_lea.vmem %s150, 14480
      %v2640 = vld [vmem:[%s2639] sm:$0xff]
      %s2641 = scalar_lea.vmem %s176, 2192
      %2642 = vst [vmem:[%s2641] sm:$0xff] %v2640
      %s2643 = scalar_lea.vmem %s150, 8336
      %v2644 = vld [vmem:[%s2643] sm:$0xff]
      %s2645 = scalar_lea.vmem %s176, 8336
      %2646 = vst [vmem:[%s2645] sm:$0xff] %v2644
      %s2647 = scalar_lea.vmem %s150, 2192
      %v2648 = vld [vmem:[%s2647] sm:$0xff]
      %s2649 = scalar_lea.vmem %s176, 14480
      %2650 = vst [vmem:[%s2649] sm:$0xff] %v2648
      %s2651 = scalar_lea.vmem %s150, 12432
      %v2652 = vld [vmem:[%s2651] sm:$0xff]
      %s2653 = scalar_lea.vmem %s176, 4240
      %2654 = vst [vmem:[%s2653] sm:$0xff] %v2652
      %s2655 = scalar_lea.vmem %s150, 6288
      %v2656 = vld [vmem:[%s2655] sm:$0xff]
      %s2657 = scalar_lea.vmem %s176, 10384
      %2658 = vst [vmem:[%s2657] sm:$0xff] %v2656
      %s2659 = scalar_lea.vmem %s150, 144
      %v2660 = vld [vmem:[%s2659] sm:$0xff]
      %s2661 = scalar_lea.vmem %s176, 16528
      %2662 = vst [vmem:[%s2661] sm:$0xff] %v2660
      %s2663 = scalar_lea.vmem %s150, 16560
      %v2664 = vld [vmem:[%s2663] sm:$0xff]
      %s2665 = scalar_lea.vmem %s176, 176
      %2666 = vst [vmem:[%s2665] sm:$0xff] %v2664
      %s2667 = scalar_lea.vmem %s150, 10416
      %v2668 = vld [vmem:[%s2667] sm:$0xff]
      %s2669 = scalar_lea.vmem %s176, 6320
      %2670 = vst [vmem:[%s2669] sm:$0xff] %v2668
      %s2671 = scalar_lea.vmem %s150, 4272
      %v2672 = vld [vmem:[%s2671] sm:$0xff]
      %s2673 = scalar_lea.vmem %s176, 12464
      %2674 = vst [vmem:[%s2673] sm:$0xff] %v2672
      %s2675 = scalar_lea.vmem %s150, 14512
      %v2676 = vld [vmem:[%s2675] sm:$0xff]
      %s2677 = scalar_lea.vmem %s176, 2224
      %2678 = vst [vmem:[%s2677] sm:$0xff] %v2676
      %s2679 = scalar_lea.vmem %s150, 8368
      %v2680 = vld [vmem:[%s2679] sm:$0xff]
      %s2681 = scalar_lea.vmem %s176, 8368
      %2682 = vst [vmem:[%s2681] sm:$0xff] %v2680
      %s2683 = scalar_lea.vmem %s150, 2224
      %v2684 = vld [vmem:[%s2683] sm:$0xff]
      %s2685 = scalar_lea.vmem %s176, 14512
      %2686 = vst [vmem:[%s2685] sm:$0xff] %v2684
      %s2687 = scalar_lea.vmem %s150, 12464
      %v2688 = vld [vmem:[%s2687] sm:$0xff]
      %s2689 = scalar_lea.vmem %s176, 4272
      %2690 = vst [vmem:[%s2689] sm:$0xff] %v2688
      %s2691 = scalar_lea.vmem %s150, 6320
      %v2692 = vld [vmem:[%s2691] sm:$0xff]
      %s2693 = scalar_lea.vmem %s176, 10416
      %2694 = vst [vmem:[%s2693] sm:$0xff] %v2692
      %s2695 = scalar_lea.vmem %s150, 176
      %v2696 = vld [vmem:[%s2695] sm:$0xff]
      %s2697 = scalar_lea.vmem %s176, 16560
      %2698 = vst [vmem:[%s2697] sm:$0xff] %v2696
      %s2699 = scalar_lea.vmem %s150, 16592
      %v2700 = vld [vmem:[%s2699] sm:$0xff]
      %s2701 = scalar_lea.vmem %s176, 208
      %2702 = vst [vmem:[%s2701] sm:$0xff] %v2700
      %s2703 = scalar_lea.vmem %s150, 10448
      %v2704 = vld [vmem:[%s2703] sm:$0xff]
      %s2705 = scalar_lea.vmem %s176, 6352
      %2706 = vst [vmem:[%s2705] sm:$0xff] %v2704
      %s2707 = scalar_lea.vmem %s150, 4304
      %v2708 = vld [vmem:[%s2707] sm:$0xff]
      %s2709 = scalar_lea.vmem %s176, 12496
      %2710 = vst [vmem:[%s2709] sm:$0xff] %v2708
      %s2711 = scalar_lea.vmem %s150, 14544
      %v2712 = vld [vmem:[%s2711] sm:$0xff]
      %s2713 = scalar_lea.vmem %s176, 2256
      %2714 = vst [vmem:[%s2713] sm:$0xff] %v2712
      %s2715 = scalar_lea.vmem %s150, 8400
      %v2716 = vld [vmem:[%s2715] sm:$0xff]
      %s2717 = scalar_lea.vmem %s176, 8400
      %2718 = vst [vmem:[%s2717] sm:$0xff] %v2716
      %s2719 = scalar_lea.vmem %s150, 2256
      %v2720 = vld [vmem:[%s2719] sm:$0xff]
      %s2721 = scalar_lea.vmem %s176, 14544
      %2722 = vst [vmem:[%s2721] sm:$0xff] %v2720
      %s2723 = scalar_lea.vmem %s150, 12496
      %v2724 = vld [vmem:[%s2723] sm:$0xff]
      %s2725 = scalar_lea.vmem %s176, 4304
      %2726 = vst [vmem:[%s2725] sm:$0xff] %v2724
      %s2727 = scalar_lea.vmem %s150, 6352
      %v2728 = vld [vmem:[%s2727] sm:$0xff]
      %s2729 = scalar_lea.vmem %s176, 10448
      %2730 = vst [vmem:[%s2729] sm:$0xff] %v2728
      %s2731 = scalar_lea.vmem %s150, 208
      %v2732 = vld [vmem:[%s2731] sm:$0xff]
      %s2733 = scalar_lea.vmem %s176, 16592
      %2734 = vst [vmem:[%s2733] sm:$0xff] %v2732
      %s2735 = scalar_lea.vmem %s150, 16624
      %v2736 = vld [vmem:[%s2735] sm:$0xff]
      %s2737 = scalar_lea.vmem %s176, 240
      %2738 = vst [vmem:[%s2737] sm:$0xff] %v2736
      %s2739 = scalar_lea.vmem %s150, 10480
      %v2740 = vld [vmem:[%s2739] sm:$0xff]
      %s2741 = scalar_lea.vmem %s176, 6384
      %2742 = vst [vmem:[%s2741] sm:$0xff] %v2740
      %s2743 = scalar_lea.vmem %s150, 4336
      %v2744 = vld [vmem:[%s2743] sm:$0xff]
      %s2745 = scalar_lea.vmem %s176, 12528
      %2746 = vst [vmem:[%s2745] sm:$0xff] %v2744
      %s2747 = scalar_lea.vmem %s150, 14576
      %v2748 = vld [vmem:[%s2747] sm:$0xff]
      %s2749 = scalar_lea.vmem %s176, 2288
      %2750 = vst [vmem:[%s2749] sm:$0xff] %v2748
      %s2751 = scalar_lea.vmem %s150, 8432
      %v2752 = vld [vmem:[%s2751] sm:$0xff]
      %s2753 = scalar_lea.vmem %s176, 8432
      %2754 = vst [vmem:[%s2753] sm:$0xff] %v2752
      %s2755 = scalar_lea.vmem %s150, 2288
      %v2756 = vld [vmem:[%s2755] sm:$0xff]
      %s2757 = scalar_lea.vmem %s176, 14576
      %2758 = vst [vmem:[%s2757] sm:$0xff] %v2756
      %s2759 = scalar_lea.vmem %s150, 12528
      %v2760 = vld [vmem:[%s2759] sm:$0xff]
      %s2761 = scalar_lea.vmem %s176, 4336
      %2762 = vst [vmem:[%s2761] sm:$0xff] %v2760
      %s2763 = scalar_lea.vmem %s150, 6384
      %v2764 = vld [vmem:[%s2763] sm:$0xff]
      %s2765 = scalar_lea.vmem %s176, 10480
      %2766 = vst [vmem:[%s2765] sm:$0xff] %v2764
      %s2767 = scalar_lea.vmem %s150, 240
      %v2768 = vld [vmem:[%s2767] sm:$0xff]
      %s2769 = scalar_lea.vmem %s176, 16624
      %2770 = vst [vmem:[%s2769] sm:$0xff] %v2768
      %s2771 = scalar_lea.vmem %s150, 16656
      %v2772 = vld [vmem:[%s2771] sm:$0xff]
      %s2773 = scalar_lea.vmem %s176, 272
      %2774 = vst [vmem:[%s2773] sm:$0xff] %v2772
      %s2775 = scalar_lea.vmem %s150, 10512
      %v2776 = vld [vmem:[%s2775] sm:$0xff]
      %s2777 = scalar_lea.vmem %s176, 6416
      %2778 = vst [vmem:[%s2777] sm:$0xff] %v2776
      %s2779 = scalar_lea.vmem %s150, 4368
      %v2780 = vld [vmem:[%s2779] sm:$0xff]
      %s2781 = scalar_lea.vmem %s176, 12560
      %2782 = vst [vmem:[%s2781] sm:$0xff] %v2780
      %s2783 = scalar_lea.vmem %s150, 14608
      %v2784 = vld [vmem:[%s2783] sm:$0xff]
      %s2785 = scalar_lea.vmem %s176, 2320
      %2786 = vst [vmem:[%s2785] sm:$0xff] %v2784
      %s2787 = scalar_lea.vmem %s150, 8464
      %v2788 = vld [vmem:[%s2787] sm:$0xff]
      %s2789 = scalar_lea.vmem %s176, 8464
      %2790 = vst [vmem:[%s2789] sm:$0xff] %v2788
      %s2791 = scalar_lea.vmem %s150, 2320
      %v2792 = vld [vmem:[%s2791] sm:$0xff]
      %s2793 = scalar_lea.vmem %s176, 14608
      %2794 = vst [vmem:[%s2793] sm:$0xff] %v2792
      %s2795 = scalar_lea.vmem %s150, 12560
      %v2796 = vld [vmem:[%s2795] sm:$0xff]
      %s2797 = scalar_lea.vmem %s176, 4368
      %2798 = vst [vmem:[%s2797] sm:$0xff] %v2796
      %s2799 = scalar_lea.vmem %s150, 6416
      %v2800 = vld [vmem:[%s2799] sm:$0xff]
      %s2801 = scalar_lea.vmem %s176, 10512
      %2802 = vst [vmem:[%s2801] sm:$0xff] %v2800
      %s2803 = scalar_lea.vmem %s150, 272
      %v2804 = vld [vmem:[%s2803] sm:$0xff]
      %s2805 = scalar_lea.vmem %s176, 16656
      %2806 = vst [vmem:[%s2805] sm:$0xff] %v2804
      %s2807 = scalar_lea.vmem %s150, 16688
      %v2808 = vld [vmem:[%s2807] sm:$0xff]
      %s2809 = scalar_lea.vmem %s176, 304
      %2810 = vst [vmem:[%s2809] sm:$0xff] %v2808
      %s2811 = scalar_lea.vmem %s150, 10544
      %v2812 = vld [vmem:[%s2811] sm:$0xff]
      %s2813 = scalar_lea.vmem %s176, 6448
      %2814 = vst [vmem:[%s2813] sm:$0xff] %v2812
      %s2815 = scalar_lea.vmem %s150, 4400
      %v2816 = vld [vmem:[%s2815] sm:$0xff]
      %s2817 = scalar_lea.vmem %s176, 12592
      %2818 = vst [vmem:[%s2817] sm:$0xff] %v2816
      %s2819 = scalar_lea.vmem %s150, 14640
      %v2820 = vld [vmem:[%s2819] sm:$0xff]
      %s2821 = scalar_lea.vmem %s176, 2352
      %2822 = vst [vmem:[%s2821] sm:$0xff] %v2820
      %s2823 = scalar_lea.vmem %s150, 8496
      %v2824 = vld [vmem:[%s2823] sm:$0xff]
      %s2825 = scalar_lea.vmem %s176, 8496
      %2826 = vst [vmem:[%s2825] sm:$0xff] %v2824
      %s2827 = scalar_lea.vmem %s150, 2352
      %v2828 = vld [vmem:[%s2827] sm:$0xff]
      %s2829 = scalar_lea.vmem %s176, 14640
      %2830 = vst [vmem:[%s2829] sm:$0xff] %v2828
      %s2831 = scalar_lea.vmem %s150, 12592
      %v2832 = vld [vmem:[%s2831] sm:$0xff]
      %s2833 = scalar_lea.vmem %s176, 4400
      %2834 = vst [vmem:[%s2833] sm:$0xff] %v2832
      %s2835 = scalar_lea.vmem %s150, 6448
      %v2836 = vld [vmem:[%s2835] sm:$0xff]
      %s2837 = scalar_lea.vmem %s176, 10544
      %2838 = vst [vmem:[%s2837] sm:$0xff] %v2836
      %s2839 = scalar_lea.vmem %s150, 304
      %v2840 = vld [vmem:[%s2839] sm:$0xff]
      %s2841 = scalar_lea.vmem %s176, 16688
      %2842 = vst [vmem:[%s2841] sm:$0xff] %v2840
      %s2843 = scalar_lea.vmem %s150, 16720
      %v2844 = vld [vmem:[%s2843] sm:$0xff]
      %s2845 = scalar_lea.vmem %s176, 336
      %2846 = vst [vmem:[%s2845] sm:$0xff] %v2844
      %s2847 = scalar_lea.vmem %s150, 10576
      %v2848 = vld [vmem:[%s2847] sm:$0xff]
      %s2849 = scalar_lea.vmem %s176, 6480
      %2850 = vst [vmem:[%s2849] sm:$0xff] %v2848
      %s2851 = scalar_lea.vmem %s150, 4432
      %v2852 = vld [vmem:[%s2851] sm:$0xff]
      %s2853 = scalar_lea.vmem %s176, 12624
      %2854 = vst [vmem:[%s2853] sm:$0xff] %v2852
      %s2855 = scalar_lea.vmem %s150, 14672
      %v2856 = vld [vmem:[%s2855] sm:$0xff]
      %s2857 = scalar_lea.vmem %s176, 2384
      %2858 = vst [vmem:[%s2857] sm:$0xff] %v2856
      %s2859 = scalar_lea.vmem %s150, 8528
      %v2860 = vld [vmem:[%s2859] sm:$0xff]
      %s2861 = scalar_lea.vmem %s176, 8528
      %2862 = vst [vmem:[%s2861] sm:$0xff] %v2860
      %s2863 = scalar_lea.vmem %s150, 2384
      %v2864 = vld [vmem:[%s2863] sm:$0xff]
      %s2865 = scalar_lea.vmem %s176, 14672
      %2866 = vst [vmem:[%s2865] sm:$0xff] %v2864
      %s2867 = scalar_lea.vmem %s150, 12624
      %v2868 = vld [vmem:[%s2867] sm:$0xff]
      %s2869 = scalar_lea.vmem %s176, 4432
      %2870 = vst [vmem:[%s2869] sm:$0xff] %v2868
      %s2871 = scalar_lea.vmem %s150, 6480
      %v2872 = vld [vmem:[%s2871] sm:$0xff]
      %s2873 = scalar_lea.vmem %s176, 10576
      %2874 = vst [vmem:[%s2873] sm:$0xff] %v2872
      %s2875 = scalar_lea.vmem %s150, 336
      %v2876 = vld [vmem:[%s2875] sm:$0xff]
      %s2877 = scalar_lea.vmem %s176, 16720
      %2878 = vst [vmem:[%s2877] sm:$0xff] %v2876
      %s2879 = scalar_lea.vmem %s150, 16752
      %v2880 = vld [vmem:[%s2879] sm:$0xff]
      %s2881 = scalar_lea.vmem %s176, 368
      %2882 = vst [vmem:[%s2881] sm:$0xff] %v2880
      %s2883 = scalar_lea.vmem %s150, 10608
      %v2884 = vld [vmem:[%s2883] sm:$0xff]
      %s2885 = scalar_lea.vmem %s176, 6512
      %2886 = vst [vmem:[%s2885] sm:$0xff] %v2884
      %s2887 = scalar_lea.vmem %s150, 4464
      %v2888 = vld [vmem:[%s2887] sm:$0xff]
      %s2889 = scalar_lea.vmem %s176, 12656
      %2890 = vst [vmem:[%s2889] sm:$0xff] %v2888
      %s2891 = scalar_lea.vmem %s150, 14704
      %v2892 = vld [vmem:[%s2891] sm:$0xff]
      %s2893 = scalar_lea.vmem %s176, 2416
      %2894 = vst [vmem:[%s2893] sm:$0xff] %v2892
      %s2895 = scalar_lea.vmem %s150, 8560
      %v2896 = vld [vmem:[%s2895] sm:$0xff]
      %s2897 = scalar_lea.vmem %s176, 8560
      %2898 = vst [vmem:[%s2897] sm:$0xff] %v2896
      %s2899 = scalar_lea.vmem %s150, 2416
      %v2900 = vld [vmem:[%s2899] sm:$0xff]
      %s2901 = scalar_lea.vmem %s176, 14704
      %2902 = vst [vmem:[%s2901] sm:$0xff] %v2900
      %s2903 = scalar_lea.vmem %s150, 12656
      %v2904 = vld [vmem:[%s2903] sm:$0xff]
      %s2905 = scalar_lea.vmem %s176, 4464
      %2906 = vst [vmem:[%s2905] sm:$0xff] %v2904
      %s2907 = scalar_lea.vmem %s150, 6512
      %v2908 = vld [vmem:[%s2907] sm:$0xff]
      %s2909 = scalar_lea.vmem %s176, 10608
      %2910 = vst [vmem:[%s2909] sm:$0xff] %v2908
      %s2911 = scalar_lea.vmem %s150, 368
      %v2912 = vld [vmem:[%s2911] sm:$0xff]
      %s2913 = scalar_lea.vmem %s176, 16752
      %2914 = vst [vmem:[%s2913] sm:$0xff] %v2912
      %s2915 = scalar_lea.vmem %s150, 16784
      %v2916 = vld [vmem:[%s2915] sm:$0xff]
      %s2917 = scalar_lea.vmem %s176, 400
      %2918 = vst [vmem:[%s2917] sm:$0xff] %v2916
      %s2919 = scalar_lea.vmem %s150, 10640
      %v2920 = vld [vmem:[%s2919] sm:$0xff]
      %s2921 = scalar_lea.vmem %s176, 6544
      %2922 = vst [vmem:[%s2921] sm:$0xff] %v2920
      %s2923 = scalar_lea.vmem %s150, 4496
      %v2924 = vld [vmem:[%s2923] sm:$0xff]
      %s2925 = scalar_lea.vmem %s176, 12688
      %2926 = vst [vmem:[%s2925] sm:$0xff] %v2924
      %s2927 = scalar_lea.vmem %s150, 14736
      %v2928 = vld [vmem:[%s2927] sm:$0xff]
      %s2929 = scalar_lea.vmem %s176, 2448
      %2930 = vst [vmem:[%s2929] sm:$0xff] %v2928
      %s2931 = scalar_lea.vmem %s150, 8592
      %v2932 = vld [vmem:[%s2931] sm:$0xff]
      %s2933 = scalar_lea.vmem %s176, 8592
      %2934 = vst [vmem:[%s2933] sm:$0xff] %v2932
      %s2935 = scalar_lea.vmem %s150, 2448
      %v2936 = vld [vmem:[%s2935] sm:$0xff]
      %s2937 = scalar_lea.vmem %s176, 14736
      %2938 = vst [vmem:[%s2937] sm:$0xff] %v2936
      %s2939 = scalar_lea.vmem %s150, 12688
      %v2940 = vld [vmem:[%s2939] sm:$0xff]
      %s2941 = scalar_lea.vmem %s176, 4496
      %2942 = vst [vmem:[%s2941] sm:$0xff] %v2940
      %s2943 = scalar_lea.vmem %s150, 6544
      %v2944 = vld [vmem:[%s2943] sm:$0xff]
      %s2945 = scalar_lea.vmem %s176, 10640
      %2946 = vst [vmem:[%s2945] sm:$0xff] %v2944
      %s2947 = scalar_lea.vmem %s150, 400
      %v2948 = vld [vmem:[%s2947] sm:$0xff]
      %s2949 = scalar_lea.vmem %s176, 16784
      %2950 = vst [vmem:[%s2949] sm:$0xff] %v2948
      %s2951 = scalar_lea.vmem %s150, 16816
      %v2952 = vld [vmem:[%s2951] sm:$0xff]
      %s2953 = scalar_lea.vmem %s176, 432
      %2954 = vst [vmem:[%s2953] sm:$0xff] %v2952
      %s2955 = scalar_lea.vmem %s150, 10672
      %v2956 = vld [vmem:[%s2955] sm:$0xff]
      %s2957 = scalar_lea.vmem %s176, 6576
      %2958 = vst [vmem:[%s2957] sm:$0xff] %v2956
      %s2959 = scalar_lea.vmem %s150, 4528
      %v2960 = vld [vmem:[%s2959] sm:$0xff]
      %s2961 = scalar_lea.vmem %s176, 12720
      %2962 = vst [vmem:[%s2961] sm:$0xff] %v2960
      %s2963 = scalar_lea.vmem %s150, 14768
      %v2964 = vld [vmem:[%s2963] sm:$0xff]
      %s2965 = scalar_lea.vmem %s176, 2480
      %2966 = vst [vmem:[%s2965] sm:$0xff] %v2964
      %s2967 = scalar_lea.vmem %s150, 8624
      %v2968 = vld [vmem:[%s2967] sm:$0xff]
      %s2969 = scalar_lea.vmem %s176, 8624
      %2970 = vst [vmem:[%s2969] sm:$0xff] %v2968
      %s2971 = scalar_lea.vmem %s150, 2480
      %v2972 = vld [vmem:[%s2971] sm:$0xff]
      %s2973 = scalar_lea.vmem %s176, 14768
      %2974 = vst [vmem:[%s2973] sm:$0xff] %v2972
      %s2975 = scalar_lea.vmem %s150, 12720
      %v2976 = vld [vmem:[%s2975] sm:$0xff]
      %s2977 = scalar_lea.vmem %s176, 4528
      %2978 = vst [vmem:[%s2977] sm:$0xff] %v2976
      %s2979 = scalar_lea.vmem %s150, 6576
      %v2980 = vld [vmem:[%s2979] sm:$0xff]
      %s2981 = scalar_lea.vmem %s176, 10672
      %2982 = vst [vmem:[%s2981] sm:$0xff] %v2980
      %s2983 = scalar_lea.vmem %s150, 432
      %v2984 = vld [vmem:[%s2983] sm:$0xff]
      %s2985 = scalar_lea.vmem %s176, 16816
      %2986 = vst [vmem:[%s2985] sm:$0xff] %v2984
      %s2987 = scalar_lea.vmem %s150, 16848
      %v2988 = vld [vmem:[%s2987] sm:$0xff]
      %s2989 = scalar_lea.vmem %s176, 464
      %2990 = vst [vmem:[%s2989] sm:$0xff] %v2988
      %s2991 = scalar_lea.vmem %s150, 10704
      %v2992 = vld [vmem:[%s2991] sm:$0xff]
      %s2993 = scalar_lea.vmem %s176, 6608
      %2994 = vst [vmem:[%s2993] sm:$0xff] %v2992
      %s2995 = scalar_lea.vmem %s150, 4560
      %v2996 = vld [vmem:[%s2995] sm:$0xff]
      %s2997 = scalar_lea.vmem %s176, 12752
      %2998 = vst [vmem:[%s2997] sm:$0xff] %v2996
      %s2999 = scalar_lea.vmem %s150, 14800
      %v3000 = vld [vmem:[%s2999] sm:$0xff]
      %s3001 = scalar_lea.vmem %s176, 2512
      %3002 = vst [vmem:[%s3001] sm:$0xff] %v3000
      %s3003 = scalar_lea.vmem %s150, 8656
      %v3004 = vld [vmem:[%s3003] sm:$0xff]
      %s3005 = scalar_lea.vmem %s176, 8656
      %3006 = vst [vmem:[%s3005] sm:$0xff] %v3004
      %s3007 = scalar_lea.vmem %s150, 2512
      %v3008 = vld [vmem:[%s3007] sm:$0xff]
      %s3009 = scalar_lea.vmem %s176, 14800
      %3010 = vst [vmem:[%s3009] sm:$0xff] %v3008
      %s3011 = scalar_lea.vmem %s150, 12752
      %v3012 = vld [vmem:[%s3011] sm:$0xff]
      %s3013 = scalar_lea.vmem %s176, 4560
      %3014 = vst [vmem:[%s3013] sm:$0xff] %v3012
      %s3015 = scalar_lea.vmem %s150, 6608
      %v3016 = vld [vmem:[%s3015] sm:$0xff]
      %s3017 = scalar_lea.vmem %s176, 10704
      %3018 = vst [vmem:[%s3017] sm:$0xff] %v3016
      %s3019 = scalar_lea.vmem %s150, 464
      %v3020 = vld [vmem:[%s3019] sm:$0xff]
      %s3021 = scalar_lea.vmem %s176, 16848
      %3022 = vst [vmem:[%s3021] sm:$0xff] %v3020
      %s3023 = scalar_lea.vmem %s150, 16880
      %v3024 = vld [vmem:[%s3023] sm:$0xff]
      %s3025 = scalar_lea.vmem %s176, 496
      %3026 = vst [vmem:[%s3025] sm:$0xff] %v3024
      %s3027 = scalar_lea.vmem %s150, 10736
      %v3028 = vld [vmem:[%s3027] sm:$0xff]
      %s3029 = scalar_lea.vmem %s176, 6640
      %3030 = vst [vmem:[%s3029] sm:$0xff] %v3028
      %s3031 = scalar_lea.vmem %s150, 4592
      %v3032 = vld [vmem:[%s3031] sm:$0xff]
      %s3033 = scalar_lea.vmem %s176, 12784
      %3034 = vst [vmem:[%s3033] sm:$0xff] %v3032
      %s3035 = scalar_lea.vmem %s150, 14832
      %v3036 = vld [vmem:[%s3035] sm:$0xff]
      %s3037 = scalar_lea.vmem %s176, 2544
      %3038 = vst [vmem:[%s3037] sm:$0xff] %v3036
      %s3039 = scalar_lea.vmem %s150, 8688
      %v3040 = vld [vmem:[%s3039] sm:$0xff]
      %s3041 = scalar_lea.vmem %s176, 8688
      %3042 = vst [vmem:[%s3041] sm:$0xff] %v3040
      %s3043 = scalar_lea.vmem %s150, 2544
      %v3044 = vld [vmem:[%s3043] sm:$0xff]
      %s3045 = scalar_lea.vmem %s176, 14832
      %3046 = vst [vmem:[%s3045] sm:$0xff] %v3044
      %s3047 = scalar_lea.vmem %s150, 12784
      %v3048 = vld [vmem:[%s3047] sm:$0xff]
      %s3049 = scalar_lea.vmem %s176, 4592
      %3050 = vst [vmem:[%s3049] sm:$0xff] %v3048
      %s3051 = scalar_lea.vmem %s150, 6640
      %v3052 = vld [vmem:[%s3051] sm:$0xff]
      %s3053 = scalar_lea.vmem %s176, 10736
      %3054 = vst [vmem:[%s3053] sm:$0xff] %v3052
      %s3055 = scalar_lea.vmem %s150, 496
      %v3056 = vld [vmem:[%s3055] sm:$0xff]
      %s3057 = scalar_lea.vmem %s176, 16880
      %3058 = vst [vmem:[%s3057] sm:$0xff] %v3056
      %s3059 = scalar_lea.vmem %s150, 16912
      %v3060 = vld [vmem:[%s3059] sm:$0xff]
      %s3061 = scalar_lea.vmem %s176, 528
      %3062 = vst [vmem:[%s3061] sm:$0xff] %v3060
      %s3063 = scalar_lea.vmem %s150, 10768
      %v3064 = vld [vmem:[%s3063] sm:$0xff]
      %s3065 = scalar_lea.vmem %s176, 6672
      %3066 = vst [vmem:[%s3065] sm:$0xff] %v3064
      %s3067 = scalar_lea.vmem %s150, 4624
      %v3068 = vld [vmem:[%s3067] sm:$0xff]
      %s3069 = scalar_lea.vmem %s176, 12816
      %3070 = vst [vmem:[%s3069] sm:$0xff] %v3068
      %s3071 = scalar_lea.vmem %s150, 14864
      %v3072 = vld [vmem:[%s3071] sm:$0xff]
      %s3073 = scalar_lea.vmem %s176, 2576
      %3074 = vst [vmem:[%s3073] sm:$0xff] %v3072
      %s3075 = scalar_lea.vmem %s150, 8720
      %v3076 = vld [vmem:[%s3075] sm:$0xff]
      %s3077 = scalar_lea.vmem %s176, 8720
      %3078 = vst [vmem:[%s3077] sm:$0xff] %v3076
      %s3079 = scalar_lea.vmem %s150, 2576
      %v3080 = vld [vmem:[%s3079] sm:$0xff]
      %s3081 = scalar_lea.vmem %s176, 14864
      %3082 = vst [vmem:[%s3081] sm:$0xff] %v3080
      %s3083 = scalar_lea.vmem %s150, 12816
      %v3084 = vld [vmem:[%s3083] sm:$0xff]
      %s3085 = scalar_lea.vmem %s176, 4624
      %3086 = vst [vmem:[%s3085] sm:$0xff] %v3084
      %s3087 = scalar_lea.vmem %s150, 6672
      %v3088 = vld [vmem:[%s3087] sm:$0xff]
      %s3089 = scalar_lea.vmem %s176, 10768
      %3090 = vst [vmem:[%s3089] sm:$0xff] %v3088
      %s3091 = scalar_lea.vmem %s150, 528
      %v3092 = vld [vmem:[%s3091] sm:$0xff]
      %s3093 = scalar_lea.vmem %s176, 16912
      %3094 = vst [vmem:[%s3093] sm:$0xff] %v3092
      %s3095 = scalar_lea.vmem %s150, 16944
      %v3096 = vld [vmem:[%s3095] sm:$0xff]
      %s3097 = scalar_lea.vmem %s176, 560
      %3098 = vst [vmem:[%s3097] sm:$0xff] %v3096
      %s3099 = scalar_lea.vmem %s150, 10800
      %v3100 = vld [vmem:[%s3099] sm:$0xff]
      %s3101 = scalar_lea.vmem %s176, 6704
      %3102 = vst [vmem:[%s3101] sm:$0xff] %v3100
      %s3103 = scalar_lea.vmem %s150, 4656
      %v3104 = vld [vmem:[%s3103] sm:$0xff]
      %s3105 = scalar_lea.vmem %s176, 12848
      %3106 = vst [vmem:[%s3105] sm:$0xff] %v3104
      %s3107 = scalar_lea.vmem %s150, 14896
      %v3108 = vld [vmem:[%s3107] sm:$0xff]
      %s3109 = scalar_lea.vmem %s176, 2608
      %3110 = vst [vmem:[%s3109] sm:$0xff] %v3108
      %s3111 = scalar_lea.vmem %s150, 8752
      %v3112 = vld [vmem:[%s3111] sm:$0xff]
      %s3113 = scalar_lea.vmem %s176, 8752
      %3114 = vst [vmem:[%s3113] sm:$0xff] %v3112
      %s3115 = scalar_lea.vmem %s150, 2608
      %v3116 = vld [vmem:[%s3115] sm:$0xff]
      %s3117 = scalar_lea.vmem %s176, 14896
      %3118 = vst [vmem:[%s3117] sm:$0xff] %v3116
      %s3119 = scalar_lea.vmem %s150, 12848
      %v3120 = vld [vmem:[%s3119] sm:$0xff]
      %s3121 = scalar_lea.vmem %s176, 4656
      %3122 = vst [vmem:[%s3121] sm:$0xff] %v3120
      %s3123 = scalar_lea.vmem %s150, 6704
      %v3124 = vld [vmem:[%s3123] sm:$0xff]
      %s3125 = scalar_lea.vmem %s176, 10800
      %3126 = vst [vmem:[%s3125] sm:$0xff] %v3124
      %s3127 = scalar_lea.vmem %s150, 560
      %v3128 = vld [vmem:[%s3127] sm:$0xff]
      %s3129 = scalar_lea.vmem %s176, 16944
      %3130 = vst [vmem:[%s3129] sm:$0xff] %v3128
      %s3131 = scalar_lea.vmem %s150, 16976
      %v3132 = vld [vmem:[%s3131] sm:$0xff]
      %s3133 = scalar_lea.vmem %s176, 592
      %3134 = vst [vmem:[%s3133] sm:$0xff] %v3132
      %s3135 = scalar_lea.vmem %s150, 10832
      %v3136 = vld [vmem:[%s3135] sm:$0xff]
      %s3137 = scalar_lea.vmem %s176, 6736
      %3138 = vst [vmem:[%s3137] sm:$0xff] %v3136
      %s3139 = scalar_lea.vmem %s150, 4688
      %v3140 = vld [vmem:[%s3139] sm:$0xff]
      %s3141 = scalar_lea.vmem %s176, 12880
      %3142 = vst [vmem:[%s3141] sm:$0xff] %v3140
      %s3143 = scalar_lea.vmem %s150, 14928
      %v3144 = vld [vmem:[%s3143] sm:$0xff]
      %s3145 = scalar_lea.vmem %s176, 2640
      %3146 = vst [vmem:[%s3145] sm:$0xff] %v3144
      %s3147 = scalar_lea.vmem %s150, 8784
      %v3148 = vld [vmem:[%s3147] sm:$0xff]
      %s3149 = scalar_lea.vmem %s176, 8784
      %3150 = vst [vmem:[%s3149] sm:$0xff] %v3148
      %s3151 = scalar_lea.vmem %s150, 2640
      %v3152 = vld [vmem:[%s3151] sm:$0xff]
      %s3153 = scalar_lea.vmem %s176, 14928
      %3154 = vst [vmem:[%s3153] sm:$0xff] %v3152
      %s3155 = scalar_lea.vmem %s150, 12880
      %v3156 = vld [vmem:[%s3155] sm:$0xff]
      %s3157 = scalar_lea.vmem %s176, 4688
      %3158 = vst [vmem:[%s3157] sm:$0xff] %v3156
      %s3159 = scalar_lea.vmem %s150, 6736
      %v3160 = vld [vmem:[%s3159] sm:$0xff]
      %s3161 = scalar_lea.vmem %s176, 10832
      %3162 = vst [vmem:[%s3161] sm:$0xff] %v3160
      %s3163 = scalar_lea.vmem %s150, 592
      %v3164 = vld [vmem:[%s3163] sm:$0xff]
      %s3165 = scalar_lea.vmem %s176, 16976
      %3166 = vst [vmem:[%s3165] sm:$0xff] %v3164
      %s3167 = scalar_lea.vmem %s150, 17008
      %v3168 = vld [vmem:[%s3167] sm:$0xff]
      %s3169 = scalar_lea.vmem %s176, 624
      %3170 = vst [vmem:[%s3169] sm:$0xff] %v3168
      %s3171 = scalar_lea.vmem %s150, 10864
      %v3172 = vld [vmem:[%s3171] sm:$0xff]
      %s3173 = scalar_lea.vmem %s176, 6768
      %3174 = vst [vmem:[%s3173] sm:$0xff] %v3172
      %s3175 = scalar_lea.vmem %s150, 4720
      %v3176 = vld [vmem:[%s3175] sm:$0xff]
      %s3177 = scalar_lea.vmem %s176, 12912
      %3178 = vst [vmem:[%s3177] sm:$0xff] %v3176
      %s3179 = scalar_lea.vmem %s150, 14960
      %v3180 = vld [vmem:[%s3179] sm:$0xff]
      %s3181 = scalar_lea.vmem %s176, 2672
      %3182 = vst [vmem:[%s3181] sm:$0xff] %v3180
      %s3183 = scalar_lea.vmem %s150, 8816
      %v3184 = vld [vmem:[%s3183] sm:$0xff]
      %s3185 = scalar_lea.vmem %s176, 8816
      %3186 = vst [vmem:[%s3185] sm:$0xff] %v3184
      %s3187 = scalar_lea.vmem %s150, 2672
      %v3188 = vld [vmem:[%s3187] sm:$0xff]
      %s3189 = scalar_lea.vmem %s176, 14960
      %3190 = vst [vmem:[%s3189] sm:$0xff] %v3188
      %s3191 = scalar_lea.vmem %s150, 12912
      %v3192 = vld [vmem:[%s3191] sm:$0xff]
      %s3193 = scalar_lea.vmem %s176, 4720
      %3194 = vst [vmem:[%s3193] sm:$0xff] %v3192
      %s3195 = scalar_lea.vmem %s150, 6768
      %v3196 = vld [vmem:[%s3195] sm:$0xff]
      %s3197 = scalar_lea.vmem %s176, 10864
      %3198 = vst [vmem:[%s3197] sm:$0xff] %v3196
      %s3199 = scalar_lea.vmem %s150, 624
      %v3200 = vld [vmem:[%s3199] sm:$0xff]
      %s3201 = scalar_lea.vmem %s176, 17008
      %3202 = vst [vmem:[%s3201] sm:$0xff] %v3200
      %s3203 = scalar_lea.vmem %s150, 17040
      %v3204 = vld [vmem:[%s3203] sm:$0xff]
      %s3205 = scalar_lea.vmem %s176, 656
      %3206 = vst [vmem:[%s3205] sm:$0xff] %v3204
      %s3207 = scalar_lea.vmem %s150, 10896
      %v3208 = vld [vmem:[%s3207] sm:$0xff]
      %s3209 = scalar_lea.vmem %s176, 6800
      %3210 = vst [vmem:[%s3209] sm:$0xff] %v3208
      %s3211 = scalar_lea.vmem %s150, 4752
      %v3212 = vld [vmem:[%s3211] sm:$0xff]
      %s3213 = scalar_lea.vmem %s176, 12944
      %3214 = vst [vmem:[%s3213] sm:$0xff] %v3212
      %s3215 = scalar_lea.vmem %s150, 14992
      %v3216 = vld [vmem:[%s3215] sm:$0xff]
      %s3217 = scalar_lea.vmem %s176, 2704
      %3218 = vst [vmem:[%s3217] sm:$0xff] %v3216
      %s3219 = scalar_lea.vmem %s150, 8848
      %v3220 = vld [vmem:[%s3219] sm:$0xff]
      %s3221 = scalar_lea.vmem %s176, 8848
      %3222 = vst [vmem:[%s3221] sm:$0xff] %v3220
      %s3223 = scalar_lea.vmem %s150, 2704
      %v3224 = vld [vmem:[%s3223] sm:$0xff]
      %s3225 = scalar_lea.vmem %s176, 14992
      %3226 = vst [vmem:[%s3225] sm:$0xff] %v3224
      %s3227 = scalar_lea.vmem %s150, 12944
      %v3228 = vld [vmem:[%s3227] sm:$0xff]
      %s3229 = scalar_lea.vmem %s176, 4752
      %3230 = vst [vmem:[%s3229] sm:$0xff] %v3228
      %s3231 = scalar_lea.vmem %s150, 6800
      %v3232 = vld [vmem:[%s3231] sm:$0xff]
      %s3233 = scalar_lea.vmem %s176, 10896
      %3234 = vst [vmem:[%s3233] sm:$0xff] %v3232
      %s3235 = scalar_lea.vmem %s150, 656
      %v3236 = vld [vmem:[%s3235] sm:$0xff]
      %s3237 = scalar_lea.vmem %s176, 17040
      %3238 = vst [vmem:[%s3237] sm:$0xff] %v3236
      %s3239 = scalar_lea.vmem %s150, 17072
      %v3240 = vld [vmem:[%s3239] sm:$0xff]
      %s3241 = scalar_lea.vmem %s176, 688
      %3242 = vst [vmem:[%s3241] sm:$0xff] %v3240
      %s3243 = scalar_lea.vmem %s150, 10928
      %v3244 = vld [vmem:[%s3243] sm:$0xff]
      %s3245 = scalar_lea.vmem %s176, 6832
      %3246 = vst [vmem:[%s3245] sm:$0xff] %v3244
      %s3247 = scalar_lea.vmem %s150, 4784
      %v3248 = vld [vmem:[%s3247] sm:$0xff]
      %s3249 = scalar_lea.vmem %s176, 12976
      %3250 = vst [vmem:[%s3249] sm:$0xff] %v3248
      %s3251 = scalar_lea.vmem %s150, 15024
      %v3252 = vld [vmem:[%s3251] sm:$0xff]
      %s3253 = scalar_lea.vmem %s176, 2736
      %3254 = vst [vmem:[%s3253] sm:$0xff] %v3252
      %s3255 = scalar_lea.vmem %s150, 8880
      %v3256 = vld [vmem:[%s3255] sm:$0xff]
      %s3257 = scalar_lea.vmem %s176, 8880
      %3258 = vst [vmem:[%s3257] sm:$0xff] %v3256
      %s3259 = scalar_lea.vmem %s150, 2736
      %v3260 = vld [vmem:[%s3259] sm:$0xff]
      %s3261 = scalar_lea.vmem %s176, 15024
      %3262 = vst [vmem:[%s3261] sm:$0xff] %v3260
      %s3263 = scalar_lea.vmem %s150, 12976
      %v3264 = vld [vmem:[%s3263] sm:$0xff]
      %s3265 = scalar_lea.vmem %s176, 4784
      %3266 = vst [vmem:[%s3265] sm:$0xff] %v3264
      %s3267 = scalar_lea.vmem %s150, 6832
      %v3268 = vld [vmem:[%s3267] sm:$0xff]
      %s3269 = scalar_lea.vmem %s176, 10928
      %3270 = vst [vmem:[%s3269] sm:$0xff] %v3268
      %s3271 = scalar_lea.vmem %s150, 688
      %v3272 = vld [vmem:[%s3271] sm:$0xff]
      %s3273 = scalar_lea.vmem %s176, 17072
      %3274 = vst [vmem:[%s3273] sm:$0xff] %v3272
      %s3275 = scalar_lea.vmem %s150, 17104
      %v3276 = vld [vmem:[%s3275] sm:$0xff]
      %s3277 = scalar_lea.vmem %s176, 720
      %3278 = vst [vmem:[%s3277] sm:$0xff] %v3276
      %s3279 = scalar_lea.vmem %s150, 10960
      %v3280 = vld [vmem:[%s3279] sm:$0xff]
      %s3281 = scalar_lea.vmem %s176, 6864
      %3282 = vst [vmem:[%s3281] sm:$0xff] %v3280
      %s3283 = scalar_lea.vmem %s150, 4816
      %v3284 = vld [vmem:[%s3283] sm:$0xff]
      %s3285 = scalar_lea.vmem %s176, 13008
      %3286 = vst [vmem:[%s3285] sm:$0xff] %v3284
      %s3287 = scalar_lea.vmem %s150, 15056
      %v3288 = vld [vmem:[%s3287] sm:$0xff]
      %s3289 = scalar_lea.vmem %s176, 2768
      %3290 = vst [vmem:[%s3289] sm:$0xff] %v3288
      %s3291 = scalar_lea.vmem %s150, 8912
      %v3292 = vld [vmem:[%s3291] sm:$0xff]
      %s3293 = scalar_lea.vmem %s176, 8912
      %3294 = vst [vmem:[%s3293] sm:$0xff] %v3292
      %s3295 = scalar_lea.vmem %s150, 2768
      %v3296 = vld [vmem:[%s3295] sm:$0xff]
      %s3297 = scalar_lea.vmem %s176, 15056
      %3298 = vst [vmem:[%s3297] sm:$0xff] %v3296
      %s3299 = scalar_lea.vmem %s150, 13008
      %v3300 = vld [vmem:[%s3299] sm:$0xff]
      %s3301 = scalar_lea.vmem %s176, 4816
      %3302 = vst [vmem:[%s3301] sm:$0xff] %v3300
      %s3303 = scalar_lea.vmem %s150, 6864
      %v3304 = vld [vmem:[%s3303] sm:$0xff]
      %s3305 = scalar_lea.vmem %s176, 10960
      %3306 = vst [vmem:[%s3305] sm:$0xff] %v3304
      %s3307 = scalar_lea.vmem %s150, 720
      %v3308 = vld [vmem:[%s3307] sm:$0xff]
      %s3309 = scalar_lea.vmem %s176, 17104
      %3310 = vst [vmem:[%s3309] sm:$0xff] %v3308
      %s3311 = scalar_lea.vmem %s150, 17136
      %v3312 = vld [vmem:[%s3311] sm:$0xff]
      %s3313 = scalar_lea.vmem %s176, 752
      %3314 = vst [vmem:[%s3313] sm:$0xff] %v3312
      %s3315 = scalar_lea.vmem %s150, 10992
      %v3316 = vld [vmem:[%s3315] sm:$0xff]
      %s3317 = scalar_lea.vmem %s176, 6896
      %3318 = vst [vmem:[%s3317] sm:$0xff] %v3316
      %s3319 = scalar_lea.vmem %s150, 4848
      %v3320 = vld [vmem:[%s3319] sm:$0xff]
      %s3321 = scalar_lea.vmem %s176, 13040
      %3322 = vst [vmem:[%s3321] sm:$0xff] %v3320
      %s3323 = scalar_lea.vmem %s150, 15088
      %v3324 = vld [vmem:[%s3323] sm:$0xff]
      %s3325 = scalar_lea.vmem %s176, 2800
      %3326 = vst [vmem:[%s3325] sm:$0xff] %v3324
      %s3327 = scalar_lea.vmem %s150, 8944
      %v3328 = vld [vmem:[%s3327] sm:$0xff]
      %s3329 = scalar_lea.vmem %s176, 8944
      %3330 = vst [vmem:[%s3329] sm:$0xff] %v3328
      %s3331 = scalar_lea.vmem %s150, 2800
      %v3332 = vld [vmem:[%s3331] sm:$0xff]
      %s3333 = scalar_lea.vmem %s176, 15088
      %3334 = vst [vmem:[%s3333] sm:$0xff] %v3332
      %s3335 = scalar_lea.vmem %s150, 13040
      %v3336 = vld [vmem:[%s3335] sm:$0xff]
      %s3337 = scalar_lea.vmem %s176, 4848
      %3338 = vst [vmem:[%s3337] sm:$0xff] %v3336
      %s3339 = scalar_lea.vmem %s150, 6896
      %v3340 = vld [vmem:[%s3339] sm:$0xff]
      %s3341 = scalar_lea.vmem %s176, 10992
      %3342 = vst [vmem:[%s3341] sm:$0xff] %v3340
      %s3343 = scalar_lea.vmem %s150, 752
      %v3344 = vld [vmem:[%s3343] sm:$0xff]
      %s3345 = scalar_lea.vmem %s176, 17136
      %3346 = vst [vmem:[%s3345] sm:$0xff] %v3344
      %s3347 = scalar_lea.vmem %s150, 17168
      %v3348 = vld [vmem:[%s3347] sm:$0xff]
      %s3349 = scalar_lea.vmem %s176, 784
      %3350 = vst [vmem:[%s3349] sm:$0xff] %v3348
      %s3351 = scalar_lea.vmem %s150, 11024
      %v3352 = vld [vmem:[%s3351] sm:$0xff]
      %s3353 = scalar_lea.vmem %s176, 6928
      %3354 = vst [vmem:[%s3353] sm:$0xff] %v3352
      %s3355 = scalar_lea.vmem %s150, 4880
      %v3356 = vld [vmem:[%s3355] sm:$0xff]
      %s3357 = scalar_lea.vmem %s176, 13072
      %3358 = vst [vmem:[%s3357] sm:$0xff] %v3356
      %s3359 = scalar_lea.vmem %s150, 15120
      %v3360 = vld [vmem:[%s3359] sm:$0xff]
      %s3361 = scalar_lea.vmem %s176, 2832
      %3362 = vst [vmem:[%s3361] sm:$0xff] %v3360
      %s3363 = scalar_lea.vmem %s150, 8976
      %v3364 = vld [vmem:[%s3363] sm:$0xff]
      %s3365 = scalar_lea.vmem %s176, 8976
      %3366 = vst [vmem:[%s3365] sm:$0xff] %v3364
      %s3367 = scalar_lea.vmem %s150, 2832
      %v3368 = vld [vmem:[%s3367] sm:$0xff]
      %s3369 = scalar_lea.vmem %s176, 15120
      %3370 = vst [vmem:[%s3369] sm:$0xff] %v3368
      %s3371 = scalar_lea.vmem %s150, 13072
      %v3372 = vld [vmem:[%s3371] sm:$0xff]
      %s3373 = scalar_lea.vmem %s176, 4880
      %3374 = vst [vmem:[%s3373] sm:$0xff] %v3372
      %s3375 = scalar_lea.vmem %s150, 6928
      %v3376 = vld [vmem:[%s3375] sm:$0xff]
      %s3377 = scalar_lea.vmem %s176, 11024
      %3378 = vst [vmem:[%s3377] sm:$0xff] %v3376
      %s3379 = scalar_lea.vmem %s150, 784
      %v3380 = vld [vmem:[%s3379] sm:$0xff]
      %s3381 = scalar_lea.vmem %s176, 17168
      %3382 = vst [vmem:[%s3381] sm:$0xff] %v3380
      %s3383 = scalar_lea.vmem %s150, 17200
      %v3384 = vld [vmem:[%s3383] sm:$0xff]
      %s3385 = scalar_lea.vmem %s176, 816
      %3386 = vst [vmem:[%s3385] sm:$0xff] %v3384
      %s3387 = scalar_lea.vmem %s150, 11056
      %v3388 = vld [vmem:[%s3387] sm:$0xff]
      %s3389 = scalar_lea.vmem %s176, 6960
      %3390 = vst [vmem:[%s3389] sm:$0xff] %v3388
      %s3391 = scalar_lea.vmem %s150, 4912
      %v3392 = vld [vmem:[%s3391] sm:$0xff]
      %s3393 = scalar_lea.vmem %s176, 13104
      %3394 = vst [vmem:[%s3393] sm:$0xff] %v3392
      %s3395 = scalar_lea.vmem %s150, 15152
      %v3396 = vld [vmem:[%s3395] sm:$0xff]
      %s3397 = scalar_lea.vmem %s176, 2864
      %3398 = vst [vmem:[%s3397] sm:$0xff] %v3396
      %s3399 = scalar_lea.vmem %s150, 9008
      %v3400 = vld [vmem:[%s3399] sm:$0xff]
      %s3401 = scalar_lea.vmem %s176, 9008
      %3402 = vst [vmem:[%s3401] sm:$0xff] %v3400
      %s3403 = scalar_lea.vmem %s150, 2864
      %v3404 = vld [vmem:[%s3403] sm:$0xff]
      %s3405 = scalar_lea.vmem %s176, 15152
      %3406 = vst [vmem:[%s3405] sm:$0xff] %v3404
      %s3407 = scalar_lea.vmem %s150, 13104
      %v3408 = vld [vmem:[%s3407] sm:$0xff]
      %s3409 = scalar_lea.vmem %s176, 4912
      %3410 = vst [vmem:[%s3409] sm:$0xff] %v3408
      %s3411 = scalar_lea.vmem %s150, 6960
      %v3412 = vld [vmem:[%s3411] sm:$0xff]
      %s3413 = scalar_lea.vmem %s176, 11056
      %3414 = vst [vmem:[%s3413] sm:$0xff] %v3412
      %s3415 = scalar_lea.vmem %s150, 816
      %v3416 = vld [vmem:[%s3415] sm:$0xff]
      %s3417 = scalar_lea.vmem %s176, 17200
      %3418 = vst [vmem:[%s3417] sm:$0xff] %v3416
      %s3419 = scalar_lea.vmem %s150, 17232
      %v3420 = vld [vmem:[%s3419] sm:$0xff]
      %s3421 = scalar_lea.vmem %s176, 848
      %3422 = vst [vmem:[%s3421] sm:$0xff] %v3420
      %s3423 = scalar_lea.vmem %s150, 11088
      %v3424 = vld [vmem:[%s3423] sm:$0xff]
      %s3425 = scalar_lea.vmem %s176, 6992
      %3426 = vst [vmem:[%s3425] sm:$0xff] %v3424
      %s3427 = scalar_lea.vmem %s150, 4944
      %v3428 = vld [vmem:[%s3427] sm:$0xff]
      %s3429 = scalar_lea.vmem %s176, 13136
      %3430 = vst [vmem:[%s3429] sm:$0xff] %v3428
      %s3431 = scalar_lea.vmem %s150, 15184
      %v3432 = vld [vmem:[%s3431] sm:$0xff]
      %s3433 = scalar_lea.vmem %s176, 2896
      %3434 = vst [vmem:[%s3433] sm:$0xff] %v3432
      %s3435 = scalar_lea.vmem %s150, 9040
      %v3436 = vld [vmem:[%s3435] sm:$0xff]
      %s3437 = scalar_lea.vmem %s176, 9040
      %3438 = vst [vmem:[%s3437] sm:$0xff] %v3436
      %s3439 = scalar_lea.vmem %s150, 2896
      %v3440 = vld [vmem:[%s3439] sm:$0xff]
      %s3441 = scalar_lea.vmem %s176, 15184
      %3442 = vst [vmem:[%s3441] sm:$0xff] %v3440
      %s3443 = scalar_lea.vmem %s150, 13136
      %v3444 = vld [vmem:[%s3443] sm:$0xff]
      %s3445 = scalar_lea.vmem %s176, 4944
      %3446 = vst [vmem:[%s3445] sm:$0xff] %v3444
      %s3447 = scalar_lea.vmem %s150, 6992
      %v3448 = vld [vmem:[%s3447] sm:$0xff]
      %s3449 = scalar_lea.vmem %s176, 11088
      %3450 = vst [vmem:[%s3449] sm:$0xff] %v3448
      %s3451 = scalar_lea.vmem %s150, 848
      %v3452 = vld [vmem:[%s3451] sm:$0xff]
      %s3453 = scalar_lea.vmem %s176, 17232
      %3454 = vst [vmem:[%s3453] sm:$0xff] %v3452
      %s3455 = scalar_lea.vmem %s150, 17264
      %v3456 = vld [vmem:[%s3455] sm:$0xff]
      %s3457 = scalar_lea.vmem %s176, 880
      %3458 = vst [vmem:[%s3457] sm:$0xff] %v3456
      %s3459 = scalar_lea.vmem %s150, 11120
      %v3460 = vld [vmem:[%s3459] sm:$0xff]
      %s3461 = scalar_lea.vmem %s176, 7024
      %3462 = vst [vmem:[%s3461] sm:$0xff] %v3460
      %s3463 = scalar_lea.vmem %s150, 4976
      %v3464 = vld [vmem:[%s3463] sm:$0xff]
      %s3465 = scalar_lea.vmem %s176, 13168
      %3466 = vst [vmem:[%s3465] sm:$0xff] %v3464
      %s3467 = scalar_lea.vmem %s150, 15216
      %v3468 = vld [vmem:[%s3467] sm:$0xff]
      %s3469 = scalar_lea.vmem %s176, 2928
      %3470 = vst [vmem:[%s3469] sm:$0xff] %v3468
      %s3471 = scalar_lea.vmem %s150, 9072
      %v3472 = vld [vmem:[%s3471] sm:$0xff]
      %s3473 = scalar_lea.vmem %s176, 9072
      %3474 = vst [vmem:[%s3473] sm:$0xff] %v3472
      %s3475 = scalar_lea.vmem %s150, 2928
      %v3476 = vld [vmem:[%s3475] sm:$0xff]
      %s3477 = scalar_lea.vmem %s176, 15216
      %3478 = vst [vmem:[%s3477] sm:$0xff] %v3476
      %s3479 = scalar_lea.vmem %s150, 13168
      %v3480 = vld [vmem:[%s3479] sm:$0xff]
      %s3481 = scalar_lea.vmem %s176, 4976
      %3482 = vst [vmem:[%s3481] sm:$0xff] %v3480
      %s3483 = scalar_lea.vmem %s150, 7024
      %v3484 = vld [vmem:[%s3483] sm:$0xff]
      %s3485 = scalar_lea.vmem %s176, 11120
      %3486 = vst [vmem:[%s3485] sm:$0xff] %v3484
      %s3487 = scalar_lea.vmem %s150, 880
      %v3488 = vld [vmem:[%s3487] sm:$0xff]
      %s3489 = scalar_lea.vmem %s176, 17264
      %3490 = vst [vmem:[%s3489] sm:$0xff] %v3488
      %s3491 = scalar_lea.vmem %s150, 17296
      %v3492 = vld [vmem:[%s3491] sm:$0xff]
      %s3493 = scalar_lea.vmem %s176, 912
      %3494 = vst [vmem:[%s3493] sm:$0xff] %v3492
      %s3495 = scalar_lea.vmem %s150, 11152
      %v3496 = vld [vmem:[%s3495] sm:$0xff]
      %s3497 = scalar_lea.vmem %s176, 7056
      %3498 = vst [vmem:[%s3497] sm:$0xff] %v3496
      %s3499 = scalar_lea.vmem %s150, 5008
      %v3500 = vld [vmem:[%s3499] sm:$0xff]
      %s3501 = scalar_lea.vmem %s176, 13200
      %3502 = vst [vmem:[%s3501] sm:$0xff] %v3500
      %s3503 = scalar_lea.vmem %s150, 15248
      %v3504 = vld [vmem:[%s3503] sm:$0xff]
      %s3505 = scalar_lea.vmem %s176, 2960
      %3506 = vst [vmem:[%s3505] sm:$0xff] %v3504
      %s3507 = scalar_lea.vmem %s150, 9104
      %v3508 = vld [vmem:[%s3507] sm:$0xff]
      %s3509 = scalar_lea.vmem %s176, 9104
      %3510 = vst [vmem:[%s3509] sm:$0xff] %v3508
      %s3511 = scalar_lea.vmem %s150, 2960
      %v3512 = vld [vmem:[%s3511] sm:$0xff]
      %s3513 = scalar_lea.vmem %s176, 15248
      %3514 = vst [vmem:[%s3513] sm:$0xff] %v3512
      %s3515 = scalar_lea.vmem %s150, 13200
      %v3516 = vld [vmem:[%s3515] sm:$0xff]
      %s3517 = scalar_lea.vmem %s176, 5008
      %3518 = vst [vmem:[%s3517] sm:$0xff] %v3516
      %s3519 = scalar_lea.vmem %s150, 7056
      %v3520 = vld [vmem:[%s3519] sm:$0xff]
      %s3521 = scalar_lea.vmem %s176, 11152
      %3522 = vst [vmem:[%s3521] sm:$0xff] %v3520
      %s3523 = scalar_lea.vmem %s150, 912
      %v3524 = vld [vmem:[%s3523] sm:$0xff]
      %s3525 = scalar_lea.vmem %s176, 17296
      %3526 = vst [vmem:[%s3525] sm:$0xff] %v3524
      %s3527 = scalar_lea.vmem %s150, 17328
      %v3528 = vld [vmem:[%s3527] sm:$0xff]
      %s3529 = scalar_lea.vmem %s176, 944
      %3530 = vst [vmem:[%s3529] sm:$0xff] %v3528
      %s3531 = scalar_lea.vmem %s150, 11184
      %v3532 = vld [vmem:[%s3531] sm:$0xff]
      %s3533 = scalar_lea.vmem %s176, 7088
      %3534 = vst [vmem:[%s3533] sm:$0xff] %v3532
      %s3535 = scalar_lea.vmem %s150, 5040
      %v3536 = vld [vmem:[%s3535] sm:$0xff]
      %s3537 = scalar_lea.vmem %s176, 13232
      %3538 = vst [vmem:[%s3537] sm:$0xff] %v3536
      %s3539 = scalar_lea.vmem %s150, 15280
      %v3540 = vld [vmem:[%s3539] sm:$0xff]
      %s3541 = scalar_lea.vmem %s176, 2992
      %3542 = vst [vmem:[%s3541] sm:$0xff] %v3540
      %s3543 = scalar_lea.vmem %s150, 9136
      %v3544 = vld [vmem:[%s3543] sm:$0xff]
      %s3545 = scalar_lea.vmem %s176, 9136
      %3546 = vst [vmem:[%s3545] sm:$0xff] %v3544
      %s3547 = scalar_lea.vmem %s150, 2992
      %v3548 = vld [vmem:[%s3547] sm:$0xff]
      %s3549 = scalar_lea.vmem %s176, 15280
      %3550 = vst [vmem:[%s3549] sm:$0xff] %v3548
      %s3551 = scalar_lea.vmem %s150, 13232
      %v3552 = vld [vmem:[%s3551] sm:$0xff]
      %s3553 = scalar_lea.vmem %s176, 5040
      %3554 = vst [vmem:[%s3553] sm:$0xff] %v3552
      %s3555 = scalar_lea.vmem %s150, 7088
      %v3556 = vld [vmem:[%s3555] sm:$0xff]
      %s3557 = scalar_lea.vmem %s176, 11184
      %3558 = vst [vmem:[%s3557] sm:$0xff] %v3556
      %s3559 = scalar_lea.vmem %s150, 944
      %v3560 = vld [vmem:[%s3559] sm:$0xff]
      %s3561 = scalar_lea.vmem %s176, 17328
      %3562 = vst [vmem:[%s3561] sm:$0xff] %v3560
      %s3563 = scalar_lea.vmem %s150, 17360
      %v3564 = vld [vmem:[%s3563] sm:$0xff]
      %s3565 = scalar_lea.vmem %s176, 976
      %3566 = vst [vmem:[%s3565] sm:$0xff] %v3564
      %s3567 = scalar_lea.vmem %s150, 11216
      %v3568 = vld [vmem:[%s3567] sm:$0xff]
      %s3569 = scalar_lea.vmem %s176, 7120
      %3570 = vst [vmem:[%s3569] sm:$0xff] %v3568
      %s3571 = scalar_lea.vmem %s150, 5072
      %v3572 = vld [vmem:[%s3571] sm:$0xff]
      %s3573 = scalar_lea.vmem %s176, 13264
      %3574 = vst [vmem:[%s3573] sm:$0xff] %v3572
      %s3575 = scalar_lea.vmem %s150, 15312
      %v3576 = vld [vmem:[%s3575] sm:$0xff]
      %s3577 = scalar_lea.vmem %s176, 3024
      %3578 = vst [vmem:[%s3577] sm:$0xff] %v3576
      %s3579 = scalar_lea.vmem %s150, 9168
      %v3580 = vld [vmem:[%s3579] sm:$0xff]
      %s3581 = scalar_lea.vmem %s176, 9168
      %3582 = vst [vmem:[%s3581] sm:$0xff] %v3580
      %s3583 = scalar_lea.vmem %s150, 3024
      %v3584 = vld [vmem:[%s3583] sm:$0xff]
      %s3585 = scalar_lea.vmem %s176, 15312
      %3586 = vst [vmem:[%s3585] sm:$0xff] %v3584
      %s3587 = scalar_lea.vmem %s150, 13264
      %v3588 = vld [vmem:[%s3587] sm:$0xff]
      %s3589 = scalar_lea.vmem %s176, 5072
      %3590 = vst [vmem:[%s3589] sm:$0xff] %v3588
      %s3591 = scalar_lea.vmem %s150, 7120
      %v3592 = vld [vmem:[%s3591] sm:$0xff]
      %s3593 = scalar_lea.vmem %s176, 11216
      %3594 = vst [vmem:[%s3593] sm:$0xff] %v3592
      %s3595 = scalar_lea.vmem %s150, 976
      %v3596 = vld [vmem:[%s3595] sm:$0xff]
      %s3597 = scalar_lea.vmem %s176, 17360
      %3598 = vst [vmem:[%s3597] sm:$0xff] %v3596
      %s3599 = scalar_lea.vmem %s150, 17392
      %v3600 = vld [vmem:[%s3599] sm:$0xff]
      %s3601 = scalar_lea.vmem %s176, 1008
      %3602 = vst [vmem:[%s3601] sm:$0xff] %v3600
      %s3603 = scalar_lea.vmem %s150, 11248
      %v3604 = vld [vmem:[%s3603] sm:$0xff]
      %s3605 = scalar_lea.vmem %s176, 7152
      %3606 = vst [vmem:[%s3605] sm:$0xff] %v3604
      %s3607 = scalar_lea.vmem %s150, 5104
      %v3608 = vld [vmem:[%s3607] sm:$0xff]
      %s3609 = scalar_lea.vmem %s176, 13296
      %3610 = vst [vmem:[%s3609] sm:$0xff] %v3608
      %s3611 = scalar_lea.vmem %s150, 15344
      %v3612 = vld [vmem:[%s3611] sm:$0xff]
      %s3613 = scalar_lea.vmem %s176, 3056
      %3614 = vst [vmem:[%s3613] sm:$0xff] %v3612
      %s3615 = scalar_lea.vmem %s150, 9200
      %v3616 = vld [vmem:[%s3615] sm:$0xff]
      %s3617 = scalar_lea.vmem %s176, 9200
      %3618 = vst [vmem:[%s3617] sm:$0xff] %v3616
      %s3619 = scalar_lea.vmem %s150, 3056
      %v3620 = vld [vmem:[%s3619] sm:$0xff]
      %s3621 = scalar_lea.vmem %s176, 15344
      %3622 = vst [vmem:[%s3621] sm:$0xff] %v3620
      %s3623 = scalar_lea.vmem %s150, 13296
      %v3624 = vld [vmem:[%s3623] sm:$0xff]
      %s3625 = scalar_lea.vmem %s176, 5104
      %3626 = vst [vmem:[%s3625] sm:$0xff] %v3624
      %s3627 = scalar_lea.vmem %s150, 7152
      %v3628 = vld [vmem:[%s3627] sm:$0xff]
      %s3629 = scalar_lea.vmem %s176, 11248
      %3630 = vst [vmem:[%s3629] sm:$0xff] %v3628
      %s3631 = scalar_lea.vmem %s150, 1008
      %v3632 = vld [vmem:[%s3631] sm:$0xff]
      %s3633 = scalar_lea.vmem %s176, 17392
      %3634 = vst [vmem:[%s3633] sm:$0xff] %v3632
      %s3635 = scalar_lea.vmem %s150, 16408
      %v3636 = vld [vmem:[%s3635] sm:$0xff]
      %s3637 = scalar_lea.vmem %s176, 24
      %3638 = vst [vmem:[%s3637] sm:$0xff] %v3636
      %s3639 = scalar_lea.vmem %s150, 10264
      %v3640 = vld [vmem:[%s3639] sm:$0xff]
      %s3641 = scalar_lea.vmem %s176, 6168
      %3642 = vst [vmem:[%s3641] sm:$0xff] %v3640
      %s3643 = scalar_lea.vmem %s150, 4120
      %v3644 = vld [vmem:[%s3643] sm:$0xff]
      %s3645 = scalar_lea.vmem %s176, 12312
      %3646 = vst [vmem:[%s3645] sm:$0xff] %v3644
      %s3647 = scalar_lea.vmem %s150, 14360
      %v3648 = vld [vmem:[%s3647] sm:$0xff]
      %s3649 = scalar_lea.vmem %s176, 2072
      %3650 = vst [vmem:[%s3649] sm:$0xff] %v3648
      %s3651 = scalar_lea.vmem %s150, 8216
      %v3652 = vld [vmem:[%s3651] sm:$0xff]
      %s3653 = scalar_lea.vmem %s176, 8216
      %3654 = vst [vmem:[%s3653] sm:$0xff] %v3652
      %s3655 = scalar_lea.vmem %s150, 2072
      %v3656 = vld [vmem:[%s3655] sm:$0xff]
      %s3657 = scalar_lea.vmem %s176, 14360
      %3658 = vst [vmem:[%s3657] sm:$0xff] %v3656
      %s3659 = scalar_lea.vmem %s150, 12312
      %v3660 = vld [vmem:[%s3659] sm:$0xff]
      %s3661 = scalar_lea.vmem %s176, 4120
      %3662 = vst [vmem:[%s3661] sm:$0xff] %v3660
      %s3663 = scalar_lea.vmem %s150, 6168
      %v3664 = vld [vmem:[%s3663] sm:$0xff]
      %s3665 = scalar_lea.vmem %s176, 10264
      %3666 = vst [vmem:[%s3665] sm:$0xff] %v3664
      %s3667 = scalar_lea.vmem %s150, 24
      %v3668 = vld [vmem:[%s3667] sm:$0xff]
      %s3669 = scalar_lea.vmem %s176, 16408
      %3670 = vst [vmem:[%s3669] sm:$0xff] %v3668
      %s3671 = scalar_lea.vmem %s150, 16440
      %v3672 = vld [vmem:[%s3671] sm:$0xff]
      %s3673 = scalar_lea.vmem %s176, 56
      %3674 = vst [vmem:[%s3673] sm:$0xff] %v3672
      %s3675 = scalar_lea.vmem %s150, 10296
      %v3676 = vld [vmem:[%s3675] sm:$0xff]
      %s3677 = scalar_lea.vmem %s176, 6200
      %3678 = vst [vmem:[%s3677] sm:$0xff] %v3676
      %s3679 = scalar_lea.vmem %s150, 4152
      %v3680 = vld [vmem:[%s3679] sm:$0xff]
      %s3681 = scalar_lea.vmem %s176, 12344
      %3682 = vst [vmem:[%s3681] sm:$0xff] %v3680
      %s3683 = scalar_lea.vmem %s150, 14392
      %v3684 = vld [vmem:[%s3683] sm:$0xff]
      %s3685 = scalar_lea.vmem %s176, 2104
      %3686 = vst [vmem:[%s3685] sm:$0xff] %v3684
      %s3687 = scalar_lea.vmem %s150, 8248
      %v3688 = vld [vmem:[%s3687] sm:$0xff]
      %s3689 = scalar_lea.vmem %s176, 8248
      %3690 = vst [vmem:[%s3689] sm:$0xff] %v3688
      %s3691 = scalar_lea.vmem %s150, 2104
      %v3692 = vld [vmem:[%s3691] sm:$0xff]
      %s3693 = scalar_lea.vmem %s176, 14392
      %3694 = vst [vmem:[%s3693] sm:$0xff] %v3692
      %s3695 = scalar_lea.vmem %s150, 12344
      %v3696 = vld [vmem:[%s3695] sm:$0xff]
      %s3697 = scalar_lea.vmem %s176, 4152
      %3698 = vst [vmem:[%s3697] sm:$0xff] %v3696
      %s3699 = scalar_lea.vmem %s150, 6200
      %v3700 = vld [vmem:[%s3699] sm:$0xff]
      %s3701 = scalar_lea.vmem %s176, 10296
      %3702 = vst [vmem:[%s3701] sm:$0xff] %v3700
      %s3703 = scalar_lea.vmem %s150, 56
      %v3704 = vld [vmem:[%s3703] sm:$0xff]
      %s3705 = scalar_lea.vmem %s176, 16440
      %3706 = vst [vmem:[%s3705] sm:$0xff] %v3704
      %s3707 = scalar_lea.vmem %s150, 16472
      %v3708 = vld [vmem:[%s3707] sm:$0xff]
      %s3709 = scalar_lea.vmem %s176, 88
      %3710 = vst [vmem:[%s3709] sm:$0xff] %v3708
      %s3711 = scalar_lea.vmem %s150, 10328
      %v3712 = vld [vmem:[%s3711] sm:$0xff]
      %s3713 = scalar_lea.vmem %s176, 6232
      %3714 = vst [vmem:[%s3713] sm:$0xff] %v3712
      %s3715 = scalar_lea.vmem %s150, 4184
      %v3716 = vld [vmem:[%s3715] sm:$0xff]
      %s3717 = scalar_lea.vmem %s176, 12376
      %3718 = vst [vmem:[%s3717] sm:$0xff] %v3716
      %s3719 = scalar_lea.vmem %s150, 14424
      %v3720 = vld [vmem:[%s3719] sm:$0xff]
      %s3721 = scalar_lea.vmem %s176, 2136
      %3722 = vst [vmem:[%s3721] sm:$0xff] %v3720
      %s3723 = scalar_lea.vmem %s150, 8280
      %v3724 = vld [vmem:[%s3723] sm:$0xff]
      %s3725 = scalar_lea.vmem %s176, 8280
      %3726 = vst [vmem:[%s3725] sm:$0xff] %v3724
      %s3727 = scalar_lea.vmem %s150, 2136
      %v3728 = vld [vmem:[%s3727] sm:$0xff]
      %s3729 = scalar_lea.vmem %s176, 14424
      %3730 = vst [vmem:[%s3729] sm:$0xff] %v3728
      %s3731 = scalar_lea.vmem %s150, 12376
      %v3732 = vld [vmem:[%s3731] sm:$0xff]
      %s3733 = scalar_lea.vmem %s176, 4184
      %3734 = vst [vmem:[%s3733] sm:$0xff] %v3732
      %s3735 = scalar_lea.vmem %s150, 6232
      %v3736 = vld [vmem:[%s3735] sm:$0xff]
      %s3737 = scalar_lea.vmem %s176, 10328
      %3738 = vst [vmem:[%s3737] sm:$0xff] %v3736
      %s3739 = scalar_lea.vmem %s150, 88
      %v3740 = vld [vmem:[%s3739] sm:$0xff]
      %s3741 = scalar_lea.vmem %s176, 16472
      %3742 = vst [vmem:[%s3741] sm:$0xff] %v3740
      %s3743 = scalar_lea.vmem %s150, 16504
      %v3744 = vld [vmem:[%s3743] sm:$0xff]
      %s3745 = scalar_lea.vmem %s176, 120
      %3746 = vst [vmem:[%s3745] sm:$0xff] %v3744
      %s3747 = scalar_lea.vmem %s150, 10360
      %v3748 = vld [vmem:[%s3747] sm:$0xff]
      %s3749 = scalar_lea.vmem %s176, 6264
      %3750 = vst [vmem:[%s3749] sm:$0xff] %v3748
      %s3751 = scalar_lea.vmem %s150, 4216
      %v3752 = vld [vmem:[%s3751] sm:$0xff]
      %s3753 = scalar_lea.vmem %s176, 12408
      %3754 = vst [vmem:[%s3753] sm:$0xff] %v3752
      %s3755 = scalar_lea.vmem %s150, 14456
      %v3756 = vld [vmem:[%s3755] sm:$0xff]
      %s3757 = scalar_lea.vmem %s176, 2168
      %3758 = vst [vmem:[%s3757] sm:$0xff] %v3756
      %s3759 = scalar_lea.vmem %s150, 8312
      %v3760 = vld [vmem:[%s3759] sm:$0xff]
      %s3761 = scalar_lea.vmem %s176, 8312
      %3762 = vst [vmem:[%s3761] sm:$0xff] %v3760
      %s3763 = scalar_lea.vmem %s150, 2168
      %v3764 = vld [vmem:[%s3763] sm:$0xff]
      %s3765 = scalar_lea.vmem %s176, 14456
      %3766 = vst [vmem:[%s3765] sm:$0xff] %v3764
      %s3767 = scalar_lea.vmem %s150, 12408
      %v3768 = vld [vmem:[%s3767] sm:$0xff]
      %s3769 = scalar_lea.vmem %s176, 4216
      %3770 = vst [vmem:[%s3769] sm:$0xff] %v3768
      %s3771 = scalar_lea.vmem %s150, 6264
      %v3772 = vld [vmem:[%s3771] sm:$0xff]
      %s3773 = scalar_lea.vmem %s176, 10360
      %3774 = vst [vmem:[%s3773] sm:$0xff] %v3772
      %s3775 = scalar_lea.vmem %s150, 120
      %v3776 = vld [vmem:[%s3775] sm:$0xff]
      %s3777 = scalar_lea.vmem %s176, 16504
      %3778 = vst [vmem:[%s3777] sm:$0xff] %v3776
      %s3779 = scalar_lea.vmem %s150, 16536
      %v3780 = vld [vmem:[%s3779] sm:$0xff]
      %s3781 = scalar_lea.vmem %s176, 152
      %3782 = vst [vmem:[%s3781] sm:$0xff] %v3780
      %s3783 = scalar_lea.vmem %s150, 10392
      %v3784 = vld [vmem:[%s3783] sm:$0xff]
      %s3785 = scalar_lea.vmem %s176, 6296
      %3786 = vst [vmem:[%s3785] sm:$0xff] %v3784
      %s3787 = scalar_lea.vmem %s150, 4248
      %v3788 = vld [vmem:[%s3787] sm:$0xff]
      %s3789 = scalar_lea.vmem %s176, 12440
      %3790 = vst [vmem:[%s3789] sm:$0xff] %v3788
      %s3791 = scalar_lea.vmem %s150, 14488
      %v3792 = vld [vmem:[%s3791] sm:$0xff]
      %s3793 = scalar_lea.vmem %s176, 2200
      %3794 = vst [vmem:[%s3793] sm:$0xff] %v3792
      %s3795 = scalar_lea.vmem %s150, 8344
      %v3796 = vld [vmem:[%s3795] sm:$0xff]
      %s3797 = scalar_lea.vmem %s176, 8344
      %3798 = vst [vmem:[%s3797] sm:$0xff] %v3796
      %s3799 = scalar_lea.vmem %s150, 2200
      %v3800 = vld [vmem:[%s3799] sm:$0xff]
      %s3801 = scalar_lea.vmem %s176, 14488
      %3802 = vst [vmem:[%s3801] sm:$0xff] %v3800
      %s3803 = scalar_lea.vmem %s150, 12440
      %v3804 = vld [vmem:[%s3803] sm:$0xff]
      %s3805 = scalar_lea.vmem %s176, 4248
      %3806 = vst [vmem:[%s3805] sm:$0xff] %v3804
      %s3807 = scalar_lea.vmem %s150, 6296
      %v3808 = vld [vmem:[%s3807] sm:$0xff]
      %s3809 = scalar_lea.vmem %s176, 10392
      %3810 = vst [vmem:[%s3809] sm:$0xff] %v3808
      %s3811 = scalar_lea.vmem %s150, 152
      %v3812 = vld [vmem:[%s3811] sm:$0xff]
      %s3813 = scalar_lea.vmem %s176, 16536
      %3814 = vst [vmem:[%s3813] sm:$0xff] %v3812
      %s3815 = scalar_lea.vmem %s150, 16568
      %v3816 = vld [vmem:[%s3815] sm:$0xff]
      %s3817 = scalar_lea.vmem %s176, 184
      %3818 = vst [vmem:[%s3817] sm:$0xff] %v3816
      %s3819 = scalar_lea.vmem %s150, 10424
      %v3820 = vld [vmem:[%s3819] sm:$0xff]
      %s3821 = scalar_lea.vmem %s176, 6328
      %3822 = vst [vmem:[%s3821] sm:$0xff] %v3820
      %s3823 = scalar_lea.vmem %s150, 4280
      %v3824 = vld [vmem:[%s3823] sm:$0xff]
      %s3825 = scalar_lea.vmem %s176, 12472
      %3826 = vst [vmem:[%s3825] sm:$0xff] %v3824
      %s3827 = scalar_lea.vmem %s150, 14520
      %v3828 = vld [vmem:[%s3827] sm:$0xff]
      %s3829 = scalar_lea.vmem %s176, 2232
      %3830 = vst [vmem:[%s3829] sm:$0xff] %v3828
      %s3831 = scalar_lea.vmem %s150, 8376
      %v3832 = vld [vmem:[%s3831] sm:$0xff]
      %s3833 = scalar_lea.vmem %s176, 8376
      %3834 = vst [vmem:[%s3833] sm:$0xff] %v3832
      %s3835 = scalar_lea.vmem %s150, 2232
      %v3836 = vld [vmem:[%s3835] sm:$0xff]
      %s3837 = scalar_lea.vmem %s176, 14520
      %3838 = vst [vmem:[%s3837] sm:$0xff] %v3836
      %s3839 = scalar_lea.vmem %s150, 12472
      %v3840 = vld [vmem:[%s3839] sm:$0xff]
      %s3841 = scalar_lea.vmem %s176, 4280
      %3842 = vst [vmem:[%s3841] sm:$0xff] %v3840
      %s3843 = scalar_lea.vmem %s150, 6328
      %v3844 = vld [vmem:[%s3843] sm:$0xff]
      %s3845 = scalar_lea.vmem %s176, 10424
      %3846 = vst [vmem:[%s3845] sm:$0xff] %v3844
      %s3847 = scalar_lea.vmem %s150, 184
      %v3848 = vld [vmem:[%s3847] sm:$0xff]
      %s3849 = scalar_lea.vmem %s176, 16568
      %3850 = vst [vmem:[%s3849] sm:$0xff] %v3848
      %s3851 = scalar_lea.vmem %s150, 16600
      %v3852 = vld [vmem:[%s3851] sm:$0xff]
      %s3853 = scalar_lea.vmem %s176, 216
      %3854 = vst [vmem:[%s3853] sm:$0xff] %v3852
      %s3855 = scalar_lea.vmem %s150, 10456
      %v3856 = vld [vmem:[%s3855] sm:$0xff]
      %s3857 = scalar_lea.vmem %s176, 6360
      %3858 = vst [vmem:[%s3857] sm:$0xff] %v3856
      %s3859 = scalar_lea.vmem %s150, 4312
      %v3860 = vld [vmem:[%s3859] sm:$0xff]
      %s3861 = scalar_lea.vmem %s176, 12504
      %3862 = vst [vmem:[%s3861] sm:$0xff] %v3860
      %s3863 = scalar_lea.vmem %s150, 14552
      %v3864 = vld [vmem:[%s3863] sm:$0xff]
      %s3865 = scalar_lea.vmem %s176, 2264
      %3866 = vst [vmem:[%s3865] sm:$0xff] %v3864
      %s3867 = scalar_lea.vmem %s150, 8408
      %v3868 = vld [vmem:[%s3867] sm:$0xff]
      %s3869 = scalar_lea.vmem %s176, 8408
      %3870 = vst [vmem:[%s3869] sm:$0xff] %v3868
      %s3871 = scalar_lea.vmem %s150, 2264
      %v3872 = vld [vmem:[%s3871] sm:$0xff]
      %s3873 = scalar_lea.vmem %s176, 14552
      %3874 = vst [vmem:[%s3873] sm:$0xff] %v3872
      %s3875 = scalar_lea.vmem %s150, 12504
      %v3876 = vld [vmem:[%s3875] sm:$0xff]
      %s3877 = scalar_lea.vmem %s176, 4312
      %3878 = vst [vmem:[%s3877] sm:$0xff] %v3876
      %s3879 = scalar_lea.vmem %s150, 6360
      %v3880 = vld [vmem:[%s3879] sm:$0xff]
      %s3881 = scalar_lea.vmem %s176, 10456
      %3882 = vst [vmem:[%s3881] sm:$0xff] %v3880
      %s3883 = scalar_lea.vmem %s150, 216
      %v3884 = vld [vmem:[%s3883] sm:$0xff]
      %s3885 = scalar_lea.vmem %s176, 16600
      %3886 = vst [vmem:[%s3885] sm:$0xff] %v3884
      %s3887 = scalar_lea.vmem %s150, 16632
      %v3888 = vld [vmem:[%s3887] sm:$0xff]
      %s3889 = scalar_lea.vmem %s176, 248
      %3890 = vst [vmem:[%s3889] sm:$0xff] %v3888
      %s3891 = scalar_lea.vmem %s150, 10488
      %v3892 = vld [vmem:[%s3891] sm:$0xff]
      %s3893 = scalar_lea.vmem %s176, 6392
      %3894 = vst [vmem:[%s3893] sm:$0xff] %v3892
      %s3895 = scalar_lea.vmem %s150, 4344
      %v3896 = vld [vmem:[%s3895] sm:$0xff]
      %s3897 = scalar_lea.vmem %s176, 12536
      %3898 = vst [vmem:[%s3897] sm:$0xff] %v3896
      %s3899 = scalar_lea.vmem %s150, 14584
      %v3900 = vld [vmem:[%s3899] sm:$0xff]
      %s3901 = scalar_lea.vmem %s176, 2296
      %3902 = vst [vmem:[%s3901] sm:$0xff] %v3900
      %s3903 = scalar_lea.vmem %s150, 8440
      %v3904 = vld [vmem:[%s3903] sm:$0xff]
      %s3905 = scalar_lea.vmem %s176, 8440
      %3906 = vst [vmem:[%s3905] sm:$0xff] %v3904
      %s3907 = scalar_lea.vmem %s150, 2296
      %v3908 = vld [vmem:[%s3907] sm:$0xff]
      %s3909 = scalar_lea.vmem %s176, 14584
      %3910 = vst [vmem:[%s3909] sm:$0xff] %v3908
      %s3911 = scalar_lea.vmem %s150, 12536
      %v3912 = vld [vmem:[%s3911] sm:$0xff]
      %s3913 = scalar_lea.vmem %s176, 4344
      %3914 = vst [vmem:[%s3913] sm:$0xff] %v3912
      %s3915 = scalar_lea.vmem %s150, 6392
      %v3916 = vld [vmem:[%s3915] sm:$0xff]
      %s3917 = scalar_lea.vmem %s176, 10488
      %3918 = vst [vmem:[%s3917] sm:$0xff] %v3916
      %s3919 = scalar_lea.vmem %s150, 248
      %v3920 = vld [vmem:[%s3919] sm:$0xff]
      %s3921 = scalar_lea.vmem %s176, 16632
      %3922 = vst [vmem:[%s3921] sm:$0xff] %v3920
      %s3923 = scalar_lea.vmem %s150, 16664
      %v3924 = vld [vmem:[%s3923] sm:$0xff]
      %s3925 = scalar_lea.vmem %s176, 280
      %3926 = vst [vmem:[%s3925] sm:$0xff] %v3924
      %s3927 = scalar_lea.vmem %s150, 10520
      %v3928 = vld [vmem:[%s3927] sm:$0xff]
      %s3929 = scalar_lea.vmem %s176, 6424
      %3930 = vst [vmem:[%s3929] sm:$0xff] %v3928
      %s3931 = scalar_lea.vmem %s150, 4376
      %v3932 = vld [vmem:[%s3931] sm:$0xff]
      %s3933 = scalar_lea.vmem %s176, 12568
      %3934 = vst [vmem:[%s3933] sm:$0xff] %v3932
      %s3935 = scalar_lea.vmem %s150, 14616
      %v3936 = vld [vmem:[%s3935] sm:$0xff]
      %s3937 = scalar_lea.vmem %s176, 2328
      %3938 = vst [vmem:[%s3937] sm:$0xff] %v3936
      %s3939 = scalar_lea.vmem %s150, 8472
      %v3940 = vld [vmem:[%s3939] sm:$0xff]
      %s3941 = scalar_lea.vmem %s176, 8472
      %3942 = vst [vmem:[%s3941] sm:$0xff] %v3940
      %s3943 = scalar_lea.vmem %s150, 2328
      %v3944 = vld [vmem:[%s3943] sm:$0xff]
      %s3945 = scalar_lea.vmem %s176, 14616
      %3946 = vst [vmem:[%s3945] sm:$0xff] %v3944
      %s3947 = scalar_lea.vmem %s150, 12568
      %v3948 = vld [vmem:[%s3947] sm:$0xff]
      %s3949 = scalar_lea.vmem %s176, 4376
      %3950 = vst [vmem:[%s3949] sm:$0xff] %v3948
      %s3951 = scalar_lea.vmem %s150, 6424
      %v3952 = vld [vmem:[%s3951] sm:$0xff]
      %s3953 = scalar_lea.vmem %s176, 10520
      %3954 = vst [vmem:[%s3953] sm:$0xff] %v3952
      %s3955 = scalar_lea.vmem %s150, 280
      %v3956 = vld [vmem:[%s3955] sm:$0xff]
      %s3957 = scalar_lea.vmem %s176, 16664
      %3958 = vst [vmem:[%s3957] sm:$0xff] %v3956
      %s3959 = scalar_lea.vmem %s150, 16696
      %v3960 = vld [vmem:[%s3959] sm:$0xff]
      %s3961 = scalar_lea.vmem %s176, 312
      %3962 = vst [vmem:[%s3961] sm:$0xff] %v3960
      %s3963 = scalar_lea.vmem %s150, 10552
      %v3964 = vld [vmem:[%s3963] sm:$0xff]
      %s3965 = scalar_lea.vmem %s176, 6456
      %3966 = vst [vmem:[%s3965] sm:$0xff] %v3964
      %s3967 = scalar_lea.vmem %s150, 4408
      %v3968 = vld [vmem:[%s3967] sm:$0xff]
      %s3969 = scalar_lea.vmem %s176, 12600
      %3970 = vst [vmem:[%s3969] sm:$0xff] %v3968
      %s3971 = scalar_lea.vmem %s150, 14648
      %v3972 = vld [vmem:[%s3971] sm:$0xff]
      %s3973 = scalar_lea.vmem %s176, 2360
      %3974 = vst [vmem:[%s3973] sm:$0xff] %v3972
      %s3975 = scalar_lea.vmem %s150, 8504
      %v3976 = vld [vmem:[%s3975] sm:$0xff]
      %s3977 = scalar_lea.vmem %s176, 8504
      %3978 = vst [vmem:[%s3977] sm:$0xff] %v3976
      %s3979 = scalar_lea.vmem %s150, 2360
      %v3980 = vld [vmem:[%s3979] sm:$0xff]
      %s3981 = scalar_lea.vmem %s176, 14648
      %3982 = vst [vmem:[%s3981] sm:$0xff] %v3980
      %s3983 = scalar_lea.vmem %s150, 12600
      %v3984 = vld [vmem:[%s3983] sm:$0xff]
      %s3985 = scalar_lea.vmem %s176, 4408
      %3986 = vst [vmem:[%s3985] sm:$0xff] %v3984
      %s3987 = scalar_lea.vmem %s150, 6456
      %v3988 = vld [vmem:[%s3987] sm:$0xff]
      %s3989 = scalar_lea.vmem %s176, 10552
      %3990 = vst [vmem:[%s3989] sm:$0xff] %v3988
      %s3991 = scalar_lea.vmem %s150, 312
      %v3992 = vld [vmem:[%s3991] sm:$0xff]
      %s3993 = scalar_lea.vmem %s176, 16696
      %3994 = vst [vmem:[%s3993] sm:$0xff] %v3992
      %s3995 = scalar_lea.vmem %s150, 16728
      %v3996 = vld [vmem:[%s3995] sm:$0xff]
      %s3997 = scalar_lea.vmem %s176, 344
      %3998 = vst [vmem:[%s3997] sm:$0xff] %v3996
      %s3999 = scalar_lea.vmem %s150, 10584
      %v4000 = vld [vmem:[%s3999] sm:$0xff]
      %s4001 = scalar_lea.vmem %s176, 6488
      %4002 = vst [vmem:[%s4001] sm:$0xff] %v4000
      %s4003 = scalar_lea.vmem %s150, 4440
      %v4004 = vld [vmem:[%s4003] sm:$0xff]
      %s4005 = scalar_lea.vmem %s176, 12632
      %4006 = vst [vmem:[%s4005] sm:$0xff] %v4004
      %s4007 = scalar_lea.vmem %s150, 14680
      %v4008 = vld [vmem:[%s4007] sm:$0xff]
      %s4009 = scalar_lea.vmem %s176, 2392
      %4010 = vst [vmem:[%s4009] sm:$0xff] %v4008
      %s4011 = scalar_lea.vmem %s150, 8536
      %v4012 = vld [vmem:[%s4011] sm:$0xff]
      %s4013 = scalar_lea.vmem %s176, 8536
      %4014 = vst [vmem:[%s4013] sm:$0xff] %v4012
      %s4015 = scalar_lea.vmem %s150, 2392
      %v4016 = vld [vmem:[%s4015] sm:$0xff]
      %s4017 = scalar_lea.vmem %s176, 14680
      %4018 = vst [vmem:[%s4017] sm:$0xff] %v4016
      %s4019 = scalar_lea.vmem %s150, 12632
      %v4020 = vld [vmem:[%s4019] sm:$0xff]
      %s4021 = scalar_lea.vmem %s176, 4440
      %4022 = vst [vmem:[%s4021] sm:$0xff] %v4020
      %s4023 = scalar_lea.vmem %s150, 6488
      %v4024 = vld [vmem:[%s4023] sm:$0xff]
      %s4025 = scalar_lea.vmem %s176, 10584
      %4026 = vst [vmem:[%s4025] sm:$0xff] %v4024
      %s4027 = scalar_lea.vmem %s150, 344
      %v4028 = vld [vmem:[%s4027] sm:$0xff]
      %s4029 = scalar_lea.vmem %s176, 16728
      %4030 = vst [vmem:[%s4029] sm:$0xff] %v4028
      %s4031 = scalar_lea.vmem %s150, 16760
      %v4032 = vld [vmem:[%s4031] sm:$0xff]
      %s4033 = scalar_lea.vmem %s176, 376
      %4034 = vst [vmem:[%s4033] sm:$0xff] %v4032
      %s4035 = scalar_lea.vmem %s150, 10616
      %v4036 = vld [vmem:[%s4035] sm:$0xff]
      %s4037 = scalar_lea.vmem %s176, 6520
      %4038 = vst [vmem:[%s4037] sm:$0xff] %v4036
      %s4039 = scalar_lea.vmem %s150, 4472
      %v4040 = vld [vmem:[%s4039] sm:$0xff]
      %s4041 = scalar_lea.vmem %s176, 12664
      %4042 = vst [vmem:[%s4041] sm:$0xff] %v4040
      %s4043 = scalar_lea.vmem %s150, 14712
      %v4044 = vld [vmem:[%s4043] sm:$0xff]
      %s4045 = scalar_lea.vmem %s176, 2424
      %4046 = vst [vmem:[%s4045] sm:$0xff] %v4044
      %s4047 = scalar_lea.vmem %s150, 8568
      %v4048 = vld [vmem:[%s4047] sm:$0xff]
      %s4049 = scalar_lea.vmem %s176, 8568
      %4050 = vst [vmem:[%s4049] sm:$0xff] %v4048
      %s4051 = scalar_lea.vmem %s150, 2424
      %v4052 = vld [vmem:[%s4051] sm:$0xff]
      %s4053 = scalar_lea.vmem %s176, 14712
      %4054 = vst [vmem:[%s4053] sm:$0xff] %v4052
      %s4055 = scalar_lea.vmem %s150, 12664
      %v4056 = vld [vmem:[%s4055] sm:$0xff]
      %s4057 = scalar_lea.vmem %s176, 4472
      %4058 = vst [vmem:[%s4057] sm:$0xff] %v4056
      %s4059 = scalar_lea.vmem %s150, 6520
      %v4060 = vld [vmem:[%s4059] sm:$0xff]
      %s4061 = scalar_lea.vmem %s176, 10616
      %4062 = vst [vmem:[%s4061] sm:$0xff] %v4060
      %s4063 = scalar_lea.vmem %s150, 376
      %v4064 = vld [vmem:[%s4063] sm:$0xff]
      %s4065 = scalar_lea.vmem %s176, 16760
      %4066 = vst [vmem:[%s4065] sm:$0xff] %v4064
      %s4067 = scalar_lea.vmem %s150, 16792
      %v4068 = vld [vmem:[%s4067] sm:$0xff]
      %s4069 = scalar_lea.vmem %s176, 408
      %4070 = vst [vmem:[%s4069] sm:$0xff] %v4068
      %s4071 = scalar_lea.vmem %s150, 10648
      %v4072 = vld [vmem:[%s4071] sm:$0xff]
      %s4073 = scalar_lea.vmem %s176, 6552
      %4074 = vst [vmem:[%s4073] sm:$0xff] %v4072
      %s4075 = scalar_lea.vmem %s150, 4504
      %v4076 = vld [vmem:[%s4075] sm:$0xff]
      %s4077 = scalar_lea.vmem %s176, 12696
      %4078 = vst [vmem:[%s4077] sm:$0xff] %v4076
      %s4079 = scalar_lea.vmem %s150, 14744
      %v4080 = vld [vmem:[%s4079] sm:$0xff]
      %s4081 = scalar_lea.vmem %s176, 2456
      %4082 = vst [vmem:[%s4081] sm:$0xff] %v4080
      %s4083 = scalar_lea.vmem %s150, 8600
      %v4084 = vld [vmem:[%s4083] sm:$0xff]
      %s4085 = scalar_lea.vmem %s176, 8600
      %4086 = vst [vmem:[%s4085] sm:$0xff] %v4084
      %s4087 = scalar_lea.vmem %s150, 2456
      %v4088 = vld [vmem:[%s4087] sm:$0xff]
      %s4089 = scalar_lea.vmem %s176, 14744
      %4090 = vst [vmem:[%s4089] sm:$0xff] %v4088
      %s4091 = scalar_lea.vmem %s150, 12696
      %v4092 = vld [vmem:[%s4091] sm:$0xff]
      %s4093 = scalar_lea.vmem %s176, 4504
      %4094 = vst [vmem:[%s4093] sm:$0xff] %v4092
      %s4095 = scalar_lea.vmem %s150, 6552
      %v4096 = vld [vmem:[%s4095] sm:$0xff]
      %s4097 = scalar_lea.vmem %s176, 10648
      %4098 = vst [vmem:[%s4097] sm:$0xff] %v4096
      %s4099 = scalar_lea.vmem %s150, 408
      %v4100 = vld [vmem:[%s4099] sm:$0xff]
      %s4101 = scalar_lea.vmem %s176, 16792
      %4102 = vst [vmem:[%s4101] sm:$0xff] %v4100
      %s4103 = scalar_lea.vmem %s150, 16824
      %v4104 = vld [vmem:[%s4103] sm:$0xff]
      %s4105 = scalar_lea.vmem %s176, 440
      %4106 = vst [vmem:[%s4105] sm:$0xff] %v4104
      %s4107 = scalar_lea.vmem %s150, 10680
      %v4108 = vld [vmem:[%s4107] sm:$0xff]
      %s4109 = scalar_lea.vmem %s176, 6584
      %4110 = vst [vmem:[%s4109] sm:$0xff] %v4108
      %s4111 = scalar_lea.vmem %s150, 4536
      %v4112 = vld [vmem:[%s4111] sm:$0xff]
      %s4113 = scalar_lea.vmem %s176, 12728
      %4114 = vst [vmem:[%s4113] sm:$0xff] %v4112
      %s4115 = scalar_lea.vmem %s150, 14776
      %v4116 = vld [vmem:[%s4115] sm:$0xff]
      %s4117 = scalar_lea.vmem %s176, 2488
      %4118 = vst [vmem:[%s4117] sm:$0xff] %v4116
      %s4119 = scalar_lea.vmem %s150, 8632
      %v4120 = vld [vmem:[%s4119] sm:$0xff]
      %s4121 = scalar_lea.vmem %s176, 8632
      %4122 = vst [vmem:[%s4121] sm:$0xff] %v4120
      %s4123 = scalar_lea.vmem %s150, 2488
      %v4124 = vld [vmem:[%s4123] sm:$0xff]
      %s4125 = scalar_lea.vmem %s176, 14776
      %4126 = vst [vmem:[%s4125] sm:$0xff] %v4124
      %s4127 = scalar_lea.vmem %s150, 12728
      %v4128 = vld [vmem:[%s4127] sm:$0xff]
      %s4129 = scalar_lea.vmem %s176, 4536
      %4130 = vst [vmem:[%s4129] sm:$0xff] %v4128
      %s4131 = scalar_lea.vmem %s150, 6584
      %v4132 = vld [vmem:[%s4131] sm:$0xff]
      %s4133 = scalar_lea.vmem %s176, 10680
      %4134 = vst [vmem:[%s4133] sm:$0xff] %v4132
      %s4135 = scalar_lea.vmem %s150, 440
      %v4136 = vld [vmem:[%s4135] sm:$0xff]
      %s4137 = scalar_lea.vmem %s176, 16824
      %4138 = vst [vmem:[%s4137] sm:$0xff] %v4136
      %s4139 = scalar_lea.vmem %s150, 16856
      %v4140 = vld [vmem:[%s4139] sm:$0xff]
      %s4141 = scalar_lea.vmem %s176, 472
      %4142 = vst [vmem:[%s4141] sm:$0xff] %v4140
      %s4143 = scalar_lea.vmem %s150, 10712
      %v4144 = vld [vmem:[%s4143] sm:$0xff]
      %s4145 = scalar_lea.vmem %s176, 6616
      %4146 = vst [vmem:[%s4145] sm:$0xff] %v4144
      %s4147 = scalar_lea.vmem %s150, 4568
      %v4148 = vld [vmem:[%s4147] sm:$0xff]
      %s4149 = scalar_lea.vmem %s176, 12760
      %4150 = vst [vmem:[%s4149] sm:$0xff] %v4148
      %s4151 = scalar_lea.vmem %s150, 14808
      %v4152 = vld [vmem:[%s4151] sm:$0xff]
      %s4153 = scalar_lea.vmem %s176, 2520
      %4154 = vst [vmem:[%s4153] sm:$0xff] %v4152
      %s4155 = scalar_lea.vmem %s150, 8664
      %v4156 = vld [vmem:[%s4155] sm:$0xff]
      %s4157 = scalar_lea.vmem %s176, 8664
      %4158 = vst [vmem:[%s4157] sm:$0xff] %v4156
      %s4159 = scalar_lea.vmem %s150, 2520
      %v4160 = vld [vmem:[%s4159] sm:$0xff]
      %s4161 = scalar_lea.vmem %s176, 14808
      %4162 = vst [vmem:[%s4161] sm:$0xff] %v4160
      %s4163 = scalar_lea.vmem %s150, 12760
      %v4164 = vld [vmem:[%s4163] sm:$0xff]
      %s4165 = scalar_lea.vmem %s176, 4568
      %4166 = vst [vmem:[%s4165] sm:$0xff] %v4164
      %s4167 = scalar_lea.vmem %s150, 6616
      %v4168 = vld [vmem:[%s4167] sm:$0xff]
      %s4169 = scalar_lea.vmem %s176, 10712
      %4170 = vst [vmem:[%s4169] sm:$0xff] %v4168
      %s4171 = scalar_lea.vmem %s150, 472
      %v4172 = vld [vmem:[%s4171] sm:$0xff]
      %s4173 = scalar_lea.vmem %s176, 16856
      %4174 = vst [vmem:[%s4173] sm:$0xff] %v4172
      %s4175 = scalar_lea.vmem %s150, 16888
      %v4176 = vld [vmem:[%s4175] sm:$0xff]
      %s4177 = scalar_lea.vmem %s176, 504
      %4178 = vst [vmem:[%s4177] sm:$0xff] %v4176
      %s4179 = scalar_lea.vmem %s150, 10744
      %v4180 = vld [vmem:[%s4179] sm:$0xff]
      %s4181 = scalar_lea.vmem %s176, 6648
      %4182 = vst [vmem:[%s4181] sm:$0xff] %v4180
      %s4183 = scalar_lea.vmem %s150, 4600
      %v4184 = vld [vmem:[%s4183] sm:$0xff]
      %s4185 = scalar_lea.vmem %s176, 12792
      %4186 = vst [vmem:[%s4185] sm:$0xff] %v4184
      %s4187 = scalar_lea.vmem %s150, 14840
      %v4188 = vld [vmem:[%s4187] sm:$0xff]
      %s4189 = scalar_lea.vmem %s176, 2552
      %4190 = vst [vmem:[%s4189] sm:$0xff] %v4188
      %s4191 = scalar_lea.vmem %s150, 8696
      %v4192 = vld [vmem:[%s4191] sm:$0xff]
      %s4193 = scalar_lea.vmem %s176, 8696
      %4194 = vst [vmem:[%s4193] sm:$0xff] %v4192
      %s4195 = scalar_lea.vmem %s150, 2552
      %v4196 = vld [vmem:[%s4195] sm:$0xff]
      %s4197 = scalar_lea.vmem %s176, 14840
      %4198 = vst [vmem:[%s4197] sm:$0xff] %v4196
      %s4199 = scalar_lea.vmem %s150, 12792
      %v4200 = vld [vmem:[%s4199] sm:$0xff]
      %s4201 = scalar_lea.vmem %s176, 4600
      %4202 = vst [vmem:[%s4201] sm:$0xff] %v4200
      %s4203 = scalar_lea.vmem %s150, 6648
      %v4204 = vld [vmem:[%s4203] sm:$0xff]
      %s4205 = scalar_lea.vmem %s176, 10744
      %4206 = vst [vmem:[%s4205] sm:$0xff] %v4204
      %s4207 = scalar_lea.vmem %s150, 504
      %v4208 = vld [vmem:[%s4207] sm:$0xff]
      %s4209 = scalar_lea.vmem %s176, 16888
      %4210 = vst [vmem:[%s4209] sm:$0xff] %v4208
      %s4211 = scalar_lea.vmem %s150, 16920
      %v4212 = vld [vmem:[%s4211] sm:$0xff]
      %s4213 = scalar_lea.vmem %s176, 536
      %4214 = vst [vmem:[%s4213] sm:$0xff] %v4212
      %s4215 = scalar_lea.vmem %s150, 10776
      %v4216 = vld [vmem:[%s4215] sm:$0xff]
      %s4217 = scalar_lea.vmem %s176, 6680
      %4218 = vst [vmem:[%s4217] sm:$0xff] %v4216
      %s4219 = scalar_lea.vmem %s150, 4632
      %v4220 = vld [vmem:[%s4219] sm:$0xff]
      %s4221 = scalar_lea.vmem %s176, 12824
      %4222 = vst [vmem:[%s4221] sm:$0xff] %v4220
      %s4223 = scalar_lea.vmem %s150, 14872
      %v4224 = vld [vmem:[%s4223] sm:$0xff]
      %s4225 = scalar_lea.vmem %s176, 2584
      %4226 = vst [vmem:[%s4225] sm:$0xff] %v4224
      %s4227 = scalar_lea.vmem %s150, 8728
      %v4228 = vld [vmem:[%s4227] sm:$0xff]
      %s4229 = scalar_lea.vmem %s176, 8728
      %4230 = vst [vmem:[%s4229] sm:$0xff] %v4228
      %s4231 = scalar_lea.vmem %s150, 2584
      %v4232 = vld [vmem:[%s4231] sm:$0xff]
      %s4233 = scalar_lea.vmem %s176, 14872
      %4234 = vst [vmem:[%s4233] sm:$0xff] %v4232
      %s4235 = scalar_lea.vmem %s150, 12824
      %v4236 = vld [vmem:[%s4235] sm:$0xff]
      %s4237 = scalar_lea.vmem %s176, 4632
      %4238 = vst [vmem:[%s4237] sm:$0xff] %v4236
      %s4239 = scalar_lea.vmem %s150, 6680
      %v4240 = vld [vmem:[%s4239] sm:$0xff]
      %s4241 = scalar_lea.vmem %s176, 10776
      %4242 = vst [vmem:[%s4241] sm:$0xff] %v4240
      %s4243 = scalar_lea.vmem %s150, 536
      %v4244 = vld [vmem:[%s4243] sm:$0xff]
      %s4245 = scalar_lea.vmem %s176, 16920
      %4246 = vst [vmem:[%s4245] sm:$0xff] %v4244
      %s4247 = scalar_lea.vmem %s150, 16952
      %v4248 = vld [vmem:[%s4247] sm:$0xff]
      %s4249 = scalar_lea.vmem %s176, 568
      %4250 = vst [vmem:[%s4249] sm:$0xff] %v4248
      %s4251 = scalar_lea.vmem %s150, 10808
      %v4252 = vld [vmem:[%s4251] sm:$0xff]
      %s4253 = scalar_lea.vmem %s176, 6712
      %4254 = vst [vmem:[%s4253] sm:$0xff] %v4252
      %s4255 = scalar_lea.vmem %s150, 4664
      %v4256 = vld [vmem:[%s4255] sm:$0xff]
      %s4257 = scalar_lea.vmem %s176, 12856
      %4258 = vst [vmem:[%s4257] sm:$0xff] %v4256
      %s4259 = scalar_lea.vmem %s150, 14904
      %v4260 = vld [vmem:[%s4259] sm:$0xff]
      %s4261 = scalar_lea.vmem %s176, 2616
      %4262 = vst [vmem:[%s4261] sm:$0xff] %v4260
      %s4263 = scalar_lea.vmem %s150, 8760
      %v4264 = vld [vmem:[%s4263] sm:$0xff]
      %s4265 = scalar_lea.vmem %s176, 8760
      %4266 = vst [vmem:[%s4265] sm:$0xff] %v4264
      %s4267 = scalar_lea.vmem %s150, 2616
      %v4268 = vld [vmem:[%s4267] sm:$0xff]
      %s4269 = scalar_lea.vmem %s176, 14904
      %4270 = vst [vmem:[%s4269] sm:$0xff] %v4268
      %s4271 = scalar_lea.vmem %s150, 12856
      %v4272 = vld [vmem:[%s4271] sm:$0xff]
      %s4273 = scalar_lea.vmem %s176, 4664
      %4274 = vst [vmem:[%s4273] sm:$0xff] %v4272
      %s4275 = scalar_lea.vmem %s150, 6712
      %v4276 = vld [vmem:[%s4275] sm:$0xff]
      %s4277 = scalar_lea.vmem %s176, 10808
      %4278 = vst [vmem:[%s4277] sm:$0xff] %v4276
      %s4279 = scalar_lea.vmem %s150, 568
      %v4280 = vld [vmem:[%s4279] sm:$0xff]
      %s4281 = scalar_lea.vmem %s176, 16952
      %4282 = vst [vmem:[%s4281] sm:$0xff] %v4280
      %s4283 = scalar_lea.vmem %s150, 16984
      %v4284 = vld [vmem:[%s4283] sm:$0xff]
      %s4285 = scalar_lea.vmem %s176, 600
      %4286 = vst [vmem:[%s4285] sm:$0xff] %v4284
      %s4287 = scalar_lea.vmem %s150, 10840
      %v4288 = vld [vmem:[%s4287] sm:$0xff]
      %s4289 = scalar_lea.vmem %s176, 6744
      %4290 = vst [vmem:[%s4289] sm:$0xff] %v4288
      %s4291 = scalar_lea.vmem %s150, 4696
      %v4292 = vld [vmem:[%s4291] sm:$0xff]
      %s4293 = scalar_lea.vmem %s176, 12888
      %4294 = vst [vmem:[%s4293] sm:$0xff] %v4292
      %s4295 = scalar_lea.vmem %s150, 14936
      %v4296 = vld [vmem:[%s4295] sm:$0xff]
      %s4297 = scalar_lea.vmem %s176, 2648
      %4298 = vst [vmem:[%s4297] sm:$0xff] %v4296
      %s4299 = scalar_lea.vmem %s150, 8792
      %v4300 = vld [vmem:[%s4299] sm:$0xff]
      %s4301 = scalar_lea.vmem %s176, 8792
      %4302 = vst [vmem:[%s4301] sm:$0xff] %v4300
      %s4303 = scalar_lea.vmem %s150, 2648
      %v4304 = vld [vmem:[%s4303] sm:$0xff]
      %s4305 = scalar_lea.vmem %s176, 14936
      %4306 = vst [vmem:[%s4305] sm:$0xff] %v4304
      %s4307 = scalar_lea.vmem %s150, 12888
      %v4308 = vld [vmem:[%s4307] sm:$0xff]
      %s4309 = scalar_lea.vmem %s176, 4696
      %4310 = vst [vmem:[%s4309] sm:$0xff] %v4308
      %s4311 = scalar_lea.vmem %s150, 6744
      %v4312 = vld [vmem:[%s4311] sm:$0xff]
      %s4313 = scalar_lea.vmem %s176, 10840
      %4314 = vst [vmem:[%s4313] sm:$0xff] %v4312
      %s4315 = scalar_lea.vmem %s150, 600
      %v4316 = vld [vmem:[%s4315] sm:$0xff]
      %s4317 = scalar_lea.vmem %s176, 16984
      %4318 = vst [vmem:[%s4317] sm:$0xff] %v4316
      %s4319 = scalar_lea.vmem %s150, 17016
      %v4320 = vld [vmem:[%s4319] sm:$0xff]
      %s4321 = scalar_lea.vmem %s176, 632
      %4322 = vst [vmem:[%s4321] sm:$0xff] %v4320
      %s4323 = scalar_lea.vmem %s150, 10872
      %v4324 = vld [vmem:[%s4323] sm:$0xff]
      %s4325 = scalar_lea.vmem %s176, 6776
      %4326 = vst [vmem:[%s4325] sm:$0xff] %v4324
      %s4327 = scalar_lea.vmem %s150, 4728
      %v4328 = vld [vmem:[%s4327] sm:$0xff]
      %s4329 = scalar_lea.vmem %s176, 12920
      %4330 = vst [vmem:[%s4329] sm:$0xff] %v4328
      %s4331 = scalar_lea.vmem %s150, 14968
      %v4332 = vld [vmem:[%s4331] sm:$0xff]
      %s4333 = scalar_lea.vmem %s176, 2680
      %4334 = vst [vmem:[%s4333] sm:$0xff] %v4332
      %s4335 = scalar_lea.vmem %s150, 8824
      %v4336 = vld [vmem:[%s4335] sm:$0xff]
      %s4337 = scalar_lea.vmem %s176, 8824
      %4338 = vst [vmem:[%s4337] sm:$0xff] %v4336
      %s4339 = scalar_lea.vmem %s150, 2680
      %v4340 = vld [vmem:[%s4339] sm:$0xff]
      %s4341 = scalar_lea.vmem %s176, 14968
      %4342 = vst [vmem:[%s4341] sm:$0xff] %v4340
      %s4343 = scalar_lea.vmem %s150, 12920
      %v4344 = vld [vmem:[%s4343] sm:$0xff]
      %s4345 = scalar_lea.vmem %s176, 4728
      %4346 = vst [vmem:[%s4345] sm:$0xff] %v4344
      %s4347 = scalar_lea.vmem %s150, 6776
      %v4348 = vld [vmem:[%s4347] sm:$0xff]
      %s4349 = scalar_lea.vmem %s176, 10872
      %4350 = vst [vmem:[%s4349] sm:$0xff] %v4348
      %s4351 = scalar_lea.vmem %s150, 632
      %v4352 = vld [vmem:[%s4351] sm:$0xff]
      %s4353 = scalar_lea.vmem %s176, 17016
      %4354 = vst [vmem:[%s4353] sm:$0xff] %v4352
      %s4355 = scalar_lea.vmem %s150, 17048
      %v4356 = vld [vmem:[%s4355] sm:$0xff]
      %s4357 = scalar_lea.vmem %s176, 664
      %4358 = vst [vmem:[%s4357] sm:$0xff] %v4356
      %s4359 = scalar_lea.vmem %s150, 10904
      %v4360 = vld [vmem:[%s4359] sm:$0xff]
      %s4361 = scalar_lea.vmem %s176, 6808
      %4362 = vst [vmem:[%s4361] sm:$0xff] %v4360
      %s4363 = scalar_lea.vmem %s150, 4760
      %v4364 = vld [vmem:[%s4363] sm:$0xff]
      %s4365 = scalar_lea.vmem %s176, 12952
      %4366 = vst [vmem:[%s4365] sm:$0xff] %v4364
      %s4367 = scalar_lea.vmem %s150, 15000
      %v4368 = vld [vmem:[%s4367] sm:$0xff]
      %s4369 = scalar_lea.vmem %s176, 2712
      %4370 = vst [vmem:[%s4369] sm:$0xff] %v4368
      %s4371 = scalar_lea.vmem %s150, 8856
      %v4372 = vld [vmem:[%s4371] sm:$0xff]
      %s4373 = scalar_lea.vmem %s176, 8856
      %4374 = vst [vmem:[%s4373] sm:$0xff] %v4372
      %s4375 = scalar_lea.vmem %s150, 2712
      %v4376 = vld [vmem:[%s4375] sm:$0xff]
      %s4377 = scalar_lea.vmem %s176, 15000
      %4378 = vst [vmem:[%s4377] sm:$0xff] %v4376
      %s4379 = scalar_lea.vmem %s150, 12952
      %v4380 = vld [vmem:[%s4379] sm:$0xff]
      %s4381 = scalar_lea.vmem %s176, 4760
      %4382 = vst [vmem:[%s4381] sm:$0xff] %v4380
      %s4383 = scalar_lea.vmem %s150, 6808
      %v4384 = vld [vmem:[%s4383] sm:$0xff]
      %s4385 = scalar_lea.vmem %s176, 10904
      %4386 = vst [vmem:[%s4385] sm:$0xff] %v4384
      %s4387 = scalar_lea.vmem %s150, 664
      %v4388 = vld [vmem:[%s4387] sm:$0xff]
      %s4389 = scalar_lea.vmem %s176, 17048
      %4390 = vst [vmem:[%s4389] sm:$0xff] %v4388
      %s4391 = scalar_lea.vmem %s150, 17080
      %v4392 = vld [vmem:[%s4391] sm:$0xff]
      %s4393 = scalar_lea.vmem %s176, 696
      %4394 = vst [vmem:[%s4393] sm:$0xff] %v4392
      %s4395 = scalar_lea.vmem %s150, 10936
      %v4396 = vld [vmem:[%s4395] sm:$0xff]
      %s4397 = scalar_lea.vmem %s176, 6840
      %4398 = vst [vmem:[%s4397] sm:$0xff] %v4396
      %s4399 = scalar_lea.vmem %s150, 4792
      %v4400 = vld [vmem:[%s4399] sm:$0xff]
      %s4401 = scalar_lea.vmem %s176, 12984
      %4402 = vst [vmem:[%s4401] sm:$0xff] %v4400
      %s4403 = scalar_lea.vmem %s150, 15032
      %v4404 = vld [vmem:[%s4403] sm:$0xff]
      %s4405 = scalar_lea.vmem %s176, 2744
      %4406 = vst [vmem:[%s4405] sm:$0xff] %v4404
      %s4407 = scalar_lea.vmem %s150, 8888
      %v4408 = vld [vmem:[%s4407] sm:$0xff]
      %s4409 = scalar_lea.vmem %s176, 8888
      %4410 = vst [vmem:[%s4409] sm:$0xff] %v4408
      %s4411 = scalar_lea.vmem %s150, 2744
      %v4412 = vld [vmem:[%s4411] sm:$0xff]
      %s4413 = scalar_lea.vmem %s176, 15032
      %4414 = vst [vmem:[%s4413] sm:$0xff] %v4412
      %s4415 = scalar_lea.vmem %s150, 12984
      %v4416 = vld [vmem:[%s4415] sm:$0xff]
      %s4417 = scalar_lea.vmem %s176, 4792
      %4418 = vst [vmem:[%s4417] sm:$0xff] %v4416
      %s4419 = scalar_lea.vmem %s150, 6840
      %v4420 = vld [vmem:[%s4419] sm:$0xff]
      %s4421 = scalar_lea.vmem %s176, 10936
      %4422 = vst [vmem:[%s4421] sm:$0xff] %v4420
      %s4423 = scalar_lea.vmem %s150, 696
      %v4424 = vld [vmem:[%s4423] sm:$0xff]
      %s4425 = scalar_lea.vmem %s176, 17080
      %4426 = vst [vmem:[%s4425] sm:$0xff] %v4424
      %s4427 = scalar_lea.vmem %s150, 17112
      %v4428 = vld [vmem:[%s4427] sm:$0xff]
      %s4429 = scalar_lea.vmem %s176, 728
      %4430 = vst [vmem:[%s4429] sm:$0xff] %v4428
      %s4431 = scalar_lea.vmem %s150, 10968
      %v4432 = vld [vmem:[%s4431] sm:$0xff]
      %s4433 = scalar_lea.vmem %s176, 6872
      %4434 = vst [vmem:[%s4433] sm:$0xff] %v4432
      %s4435 = scalar_lea.vmem %s150, 4824
      %v4436 = vld [vmem:[%s4435] sm:$0xff]
      %s4437 = scalar_lea.vmem %s176, 13016
      %4438 = vst [vmem:[%s4437] sm:$0xff] %v4436
      %s4439 = scalar_lea.vmem %s150, 15064
      %v4440 = vld [vmem:[%s4439] sm:$0xff]
      %s4441 = scalar_lea.vmem %s176, 2776
      %4442 = vst [vmem:[%s4441] sm:$0xff] %v4440
      %s4443 = scalar_lea.vmem %s150, 8920
      %v4444 = vld [vmem:[%s4443] sm:$0xff]
      %s4445 = scalar_lea.vmem %s176, 8920
      %4446 = vst [vmem:[%s4445] sm:$0xff] %v4444
      %s4447 = scalar_lea.vmem %s150, 2776
      %v4448 = vld [vmem:[%s4447] sm:$0xff]
      %s4449 = scalar_lea.vmem %s176, 15064
      %4450 = vst [vmem:[%s4449] sm:$0xff] %v4448
      %s4451 = scalar_lea.vmem %s150, 13016
      %v4452 = vld [vmem:[%s4451] sm:$0xff]
      %s4453 = scalar_lea.vmem %s176, 4824
      %4454 = vst [vmem:[%s4453] sm:$0xff] %v4452
      %s4455 = scalar_lea.vmem %s150, 6872
      %v4456 = vld [vmem:[%s4455] sm:$0xff]
      %s4457 = scalar_lea.vmem %s176, 10968
      %4458 = vst [vmem:[%s4457] sm:$0xff] %v4456
      %s4459 = scalar_lea.vmem %s150, 728
      %v4460 = vld [vmem:[%s4459] sm:$0xff]
      %s4461 = scalar_lea.vmem %s176, 17112
      %4462 = vst [vmem:[%s4461] sm:$0xff] %v4460
      %s4463 = scalar_lea.vmem %s150, 17144
      %v4464 = vld [vmem:[%s4463] sm:$0xff]
      %s4465 = scalar_lea.vmem %s176, 760
      %4466 = vst [vmem:[%s4465] sm:$0xff] %v4464
      %s4467 = scalar_lea.vmem %s150, 11000
      %v4468 = vld [vmem:[%s4467] sm:$0xff]
      %s4469 = scalar_lea.vmem %s176, 6904
      %4470 = vst [vmem:[%s4469] sm:$0xff] %v4468
      %s4471 = scalar_lea.vmem %s150, 4856
      %v4472 = vld [vmem:[%s4471] sm:$0xff]
      %s4473 = scalar_lea.vmem %s176, 13048
      %4474 = vst [vmem:[%s4473] sm:$0xff] %v4472
      %s4475 = scalar_lea.vmem %s150, 15096
      %v4476 = vld [vmem:[%s4475] sm:$0xff]
      %s4477 = scalar_lea.vmem %s176, 2808
      %4478 = vst [vmem:[%s4477] sm:$0xff] %v4476
      %s4479 = scalar_lea.vmem %s150, 8952
      %v4480 = vld [vmem:[%s4479] sm:$0xff]
      %s4481 = scalar_lea.vmem %s176, 8952
      %4482 = vst [vmem:[%s4481] sm:$0xff] %v4480
      %s4483 = scalar_lea.vmem %s150, 2808
      %v4484 = vld [vmem:[%s4483] sm:$0xff]
      %s4485 = scalar_lea.vmem %s176, 15096
      %4486 = vst [vmem:[%s4485] sm:$0xff] %v4484
      %s4487 = scalar_lea.vmem %s150, 13048
      %v4488 = vld [vmem:[%s4487] sm:$0xff]
      %s4489 = scalar_lea.vmem %s176, 4856
      %4490 = vst [vmem:[%s4489] sm:$0xff] %v4488
      %s4491 = scalar_lea.vmem %s150, 6904
      %v4492 = vld [vmem:[%s4491] sm:$0xff]
      %s4493 = scalar_lea.vmem %s176, 11000
      %4494 = vst [vmem:[%s4493] sm:$0xff] %v4492
      %s4495 = scalar_lea.vmem %s150, 760
      %v4496 = vld [vmem:[%s4495] sm:$0xff]
      %s4497 = scalar_lea.vmem %s176, 17144
      %4498 = vst [vmem:[%s4497] sm:$0xff] %v4496
      %s4499 = scalar_lea.vmem %s150, 17176
      %v4500 = vld [vmem:[%s4499] sm:$0xff]
      %s4501 = scalar_lea.vmem %s176, 792
      %4502 = vst [vmem:[%s4501] sm:$0xff] %v4500
      %s4503 = scalar_lea.vmem %s150, 11032
      %v4504 = vld [vmem:[%s4503] sm:$0xff]
      %s4505 = scalar_lea.vmem %s176, 6936
      %4506 = vst [vmem:[%s4505] sm:$0xff] %v4504
      %s4507 = scalar_lea.vmem %s150, 4888
      %v4508 = vld [vmem:[%s4507] sm:$0xff]
      %s4509 = scalar_lea.vmem %s176, 13080
      %4510 = vst [vmem:[%s4509] sm:$0xff] %v4508
      %s4511 = scalar_lea.vmem %s150, 15128
      %v4512 = vld [vmem:[%s4511] sm:$0xff]
      %s4513 = scalar_lea.vmem %s176, 2840
      %4514 = vst [vmem:[%s4513] sm:$0xff] %v4512
      %s4515 = scalar_lea.vmem %s150, 8984
      %v4516 = vld [vmem:[%s4515] sm:$0xff]
      %s4517 = scalar_lea.vmem %s176, 8984
      %4518 = vst [vmem:[%s4517] sm:$0xff] %v4516
      %s4519 = scalar_lea.vmem %s150, 2840
      %v4520 = vld [vmem:[%s4519] sm:$0xff]
      %s4521 = scalar_lea.vmem %s176, 15128
      %4522 = vst [vmem:[%s4521] sm:$0xff] %v4520
      %s4523 = scalar_lea.vmem %s150, 13080
      %v4524 = vld [vmem:[%s4523] sm:$0xff]
      %s4525 = scalar_lea.vmem %s176, 4888
      %4526 = vst [vmem:[%s4525] sm:$0xff] %v4524
      %s4527 = scalar_lea.vmem %s150, 6936
      %v4528 = vld [vmem:[%s4527] sm:$0xff]
      %s4529 = scalar_lea.vmem %s176, 11032
      %4530 = vst [vmem:[%s4529] sm:$0xff] %v4528
      %s4531 = scalar_lea.vmem %s150, 792
      %v4532 = vld [vmem:[%s4531] sm:$0xff]
      %s4533 = scalar_lea.vmem %s176, 17176
      %4534 = vst [vmem:[%s4533] sm:$0xff] %v4532
      %s4535 = scalar_lea.vmem %s150, 17208
      %v4536 = vld [vmem:[%s4535] sm:$0xff]
      %s4537 = scalar_lea.vmem %s176, 824
      %4538 = vst [vmem:[%s4537] sm:$0xff] %v4536
      %s4539 = scalar_lea.vmem %s150, 11064
      %v4540 = vld [vmem:[%s4539] sm:$0xff]
      %s4541 = scalar_lea.vmem %s176, 6968
      %4542 = vst [vmem:[%s4541] sm:$0xff] %v4540
      %s4543 = scalar_lea.vmem %s150, 4920
      %v4544 = vld [vmem:[%s4543] sm:$0xff]
      %s4545 = scalar_lea.vmem %s176, 13112
      %4546 = vst [vmem:[%s4545] sm:$0xff] %v4544
      %s4547 = scalar_lea.vmem %s150, 15160
      %v4548 = vld [vmem:[%s4547] sm:$0xff]
      %s4549 = scalar_lea.vmem %s176, 2872
      %4550 = vst [vmem:[%s4549] sm:$0xff] %v4548
      %s4551 = scalar_lea.vmem %s150, 9016
      %v4552 = vld [vmem:[%s4551] sm:$0xff]
      %s4553 = scalar_lea.vmem %s176, 9016
      %4554 = vst [vmem:[%s4553] sm:$0xff] %v4552
      %s4555 = scalar_lea.vmem %s150, 2872
      %v4556 = vld [vmem:[%s4555] sm:$0xff]
      %s4557 = scalar_lea.vmem %s176, 15160
      %4558 = vst [vmem:[%s4557] sm:$0xff] %v4556
      %s4559 = scalar_lea.vmem %s150, 13112
      %v4560 = vld [vmem:[%s4559] sm:$0xff]
      %s4561 = scalar_lea.vmem %s176, 4920
      %4562 = vst [vmem:[%s4561] sm:$0xff] %v4560
      %s4563 = scalar_lea.vmem %s150, 6968
      %v4564 = vld [vmem:[%s4563] sm:$0xff]
      %s4565 = scalar_lea.vmem %s176, 11064
      %4566 = vst [vmem:[%s4565] sm:$0xff] %v4564
      %s4567 = scalar_lea.vmem %s150, 824
      %v4568 = vld [vmem:[%s4567] sm:$0xff]
      %s4569 = scalar_lea.vmem %s176, 17208
      %4570 = vst [vmem:[%s4569] sm:$0xff] %v4568
      %s4571 = scalar_lea.vmem %s150, 17240
      %v4572 = vld [vmem:[%s4571] sm:$0xff]
      %s4573 = scalar_lea.vmem %s176, 856
      %4574 = vst [vmem:[%s4573] sm:$0xff] %v4572
      %s4575 = scalar_lea.vmem %s150, 11096
      %v4576 = vld [vmem:[%s4575] sm:$0xff]
      %s4577 = scalar_lea.vmem %s176, 7000
      %4578 = vst [vmem:[%s4577] sm:$0xff] %v4576
      %s4579 = scalar_lea.vmem %s150, 4952
      %v4580 = vld [vmem:[%s4579] sm:$0xff]
      %s4581 = scalar_lea.vmem %s176, 13144
      %4582 = vst [vmem:[%s4581] sm:$0xff] %v4580
      %s4583 = scalar_lea.vmem %s150, 15192
      %v4584 = vld [vmem:[%s4583] sm:$0xff]
      %s4585 = scalar_lea.vmem %s176, 2904
      %4586 = vst [vmem:[%s4585] sm:$0xff] %v4584
      %s4587 = scalar_lea.vmem %s150, 9048
      %v4588 = vld [vmem:[%s4587] sm:$0xff]
      %s4589 = scalar_lea.vmem %s176, 9048
      %4590 = vst [vmem:[%s4589] sm:$0xff] %v4588
      %s4591 = scalar_lea.vmem %s150, 2904
      %v4592 = vld [vmem:[%s4591] sm:$0xff]
      %s4593 = scalar_lea.vmem %s176, 15192
      %4594 = vst [vmem:[%s4593] sm:$0xff] %v4592
      %s4595 = scalar_lea.vmem %s150, 13144
      %v4596 = vld [vmem:[%s4595] sm:$0xff]
      %s4597 = scalar_lea.vmem %s176, 4952
      %4598 = vst [vmem:[%s4597] sm:$0xff] %v4596
      %s4599 = scalar_lea.vmem %s150, 7000
      %v4600 = vld [vmem:[%s4599] sm:$0xff]
      %s4601 = scalar_lea.vmem %s176, 11096
      %4602 = vst [vmem:[%s4601] sm:$0xff] %v4600
      %s4603 = scalar_lea.vmem %s150, 856
      %v4604 = vld [vmem:[%s4603] sm:$0xff]
      %s4605 = scalar_lea.vmem %s176, 17240
      %4606 = vst [vmem:[%s4605] sm:$0xff] %v4604
      %s4607 = scalar_lea.vmem %s150, 17272
      %v4608 = vld [vmem:[%s4607] sm:$0xff]
      %s4609 = scalar_lea.vmem %s176, 888
      %4610 = vst [vmem:[%s4609] sm:$0xff] %v4608
      %s4611 = scalar_lea.vmem %s150, 11128
      %v4612 = vld [vmem:[%s4611] sm:$0xff]
      %s4613 = scalar_lea.vmem %s176, 7032
      %4614 = vst [vmem:[%s4613] sm:$0xff] %v4612
      %s4615 = scalar_lea.vmem %s150, 4984
      %v4616 = vld [vmem:[%s4615] sm:$0xff]
      %s4617 = scalar_lea.vmem %s176, 13176
      %4618 = vst [vmem:[%s4617] sm:$0xff] %v4616
      %s4619 = scalar_lea.vmem %s150, 15224
      %v4620 = vld [vmem:[%s4619] sm:$0xff]
      %s4621 = scalar_lea.vmem %s176, 2936
      %4622 = vst [vmem:[%s4621] sm:$0xff] %v4620
      %s4623 = scalar_lea.vmem %s150, 9080
      %v4624 = vld [vmem:[%s4623] sm:$0xff]
      %s4625 = scalar_lea.vmem %s176, 9080
      %4626 = vst [vmem:[%s4625] sm:$0xff] %v4624
      %s4627 = scalar_lea.vmem %s150, 2936
      %v4628 = vld [vmem:[%s4627] sm:$0xff]
      %s4629 = scalar_lea.vmem %s176, 15224
      %4630 = vst [vmem:[%s4629] sm:$0xff] %v4628
      %s4631 = scalar_lea.vmem %s150, 13176
      %v4632 = vld [vmem:[%s4631] sm:$0xff]
      %s4633 = scalar_lea.vmem %s176, 4984
      %4634 = vst [vmem:[%s4633] sm:$0xff] %v4632
      %s4635 = scalar_lea.vmem %s150, 7032
      %v4636 = vld [vmem:[%s4635] sm:$0xff]
      %s4637 = scalar_lea.vmem %s176, 11128
      %4638 = vst [vmem:[%s4637] sm:$0xff] %v4636
      %s4639 = scalar_lea.vmem %s150, 888
      %v4640 = vld [vmem:[%s4639] sm:$0xff]
      %s4641 = scalar_lea.vmem %s176, 17272
      %4642 = vst [vmem:[%s4641] sm:$0xff] %v4640
      %s4643 = scalar_lea.vmem %s150, 17304
      %v4644 = vld [vmem:[%s4643] sm:$0xff]
      %s4645 = scalar_lea.vmem %s176, 920
      %4646 = vst [vmem:[%s4645] sm:$0xff] %v4644
      %s4647 = scalar_lea.vmem %s150, 11160
      %v4648 = vld [vmem:[%s4647] sm:$0xff]
      %s4649 = scalar_lea.vmem %s176, 7064
      %4650 = vst [vmem:[%s4649] sm:$0xff] %v4648
      %s4651 = scalar_lea.vmem %s150, 5016
      %v4652 = vld [vmem:[%s4651] sm:$0xff]
      %s4653 = scalar_lea.vmem %s176, 13208
      %4654 = vst [vmem:[%s4653] sm:$0xff] %v4652
      %s4655 = scalar_lea.vmem %s150, 15256
      %v4656 = vld [vmem:[%s4655] sm:$0xff]
      %s4657 = scalar_lea.vmem %s176, 2968
      %4658 = vst [vmem:[%s4657] sm:$0xff] %v4656
      %s4659 = scalar_lea.vmem %s150, 9112
      %v4660 = vld [vmem:[%s4659] sm:$0xff]
      %s4661 = scalar_lea.vmem %s176, 9112
      %4662 = vst [vmem:[%s4661] sm:$0xff] %v4660
      %s4663 = scalar_lea.vmem %s150, 2968
      %v4664 = vld [vmem:[%s4663] sm:$0xff]
      %s4665 = scalar_lea.vmem %s176, 15256
      %4666 = vst [vmem:[%s4665] sm:$0xff] %v4664
      %s4667 = scalar_lea.vmem %s150, 13208
      %v4668 = vld [vmem:[%s4667] sm:$0xff]
      %s4669 = scalar_lea.vmem %s176, 5016
      %4670 = vst [vmem:[%s4669] sm:$0xff] %v4668
      %s4671 = scalar_lea.vmem %s150, 7064
      %v4672 = vld [vmem:[%s4671] sm:$0xff]
      %s4673 = scalar_lea.vmem %s176, 11160
      %4674 = vst [vmem:[%s4673] sm:$0xff] %v4672
      %s4675 = scalar_lea.vmem %s150, 920
      %v4676 = vld [vmem:[%s4675] sm:$0xff]
      %s4677 = scalar_lea.vmem %s176, 17304
      %4678 = vst [vmem:[%s4677] sm:$0xff] %v4676
      %s4679 = scalar_lea.vmem %s150, 17336
      %v4680 = vld [vmem:[%s4679] sm:$0xff]
      %s4681 = scalar_lea.vmem %s176, 952
      %4682 = vst [vmem:[%s4681] sm:$0xff] %v4680
      %s4683 = scalar_lea.vmem %s150, 11192
      %v4684 = vld [vmem:[%s4683] sm:$0xff]
      %s4685 = scalar_lea.vmem %s176, 7096
      %4686 = vst [vmem:[%s4685] sm:$0xff] %v4684
      %s4687 = scalar_lea.vmem %s150, 5048
      %v4688 = vld [vmem:[%s4687] sm:$0xff]
      %s4689 = scalar_lea.vmem %s176, 13240
      %4690 = vst [vmem:[%s4689] sm:$0xff] %v4688
      %s4691 = scalar_lea.vmem %s150, 15288
      %v4692 = vld [vmem:[%s4691] sm:$0xff]
      %s4693 = scalar_lea.vmem %s176, 3000
      %4694 = vst [vmem:[%s4693] sm:$0xff] %v4692
      %s4695 = scalar_lea.vmem %s150, 9144
      %v4696 = vld [vmem:[%s4695] sm:$0xff]
      %s4697 = scalar_lea.vmem %s176, 9144
      %4698 = vst [vmem:[%s4697] sm:$0xff] %v4696
      %s4699 = scalar_lea.vmem %s150, 3000
      %v4700 = vld [vmem:[%s4699] sm:$0xff]
      %s4701 = scalar_lea.vmem %s176, 15288
      %4702 = vst [vmem:[%s4701] sm:$0xff] %v4700
      %s4703 = scalar_lea.vmem %s150, 13240
      %v4704 = vld [vmem:[%s4703] sm:$0xff]
      %s4705 = scalar_lea.vmem %s176, 5048
      %4706 = vst [vmem:[%s4705] sm:$0xff] %v4704
      %s4707 = scalar_lea.vmem %s150, 7096
      %v4708 = vld [vmem:[%s4707] sm:$0xff]
      %s4709 = scalar_lea.vmem %s176, 11192
      %4710 = vst [vmem:[%s4709] sm:$0xff] %v4708
      %s4711 = scalar_lea.vmem %s150, 952
      %v4712 = vld [vmem:[%s4711] sm:$0xff]
      %s4713 = scalar_lea.vmem %s176, 17336
      %4714 = vst [vmem:[%s4713] sm:$0xff] %v4712
      %s4715 = scalar_lea.vmem %s150, 17368
      %v4716 = vld [vmem:[%s4715] sm:$0xff]
      %s4717 = scalar_lea.vmem %s176, 984
      %4718 = vst [vmem:[%s4717] sm:$0xff] %v4716
      %s4719 = scalar_lea.vmem %s150, 11224
      %v4720 = vld [vmem:[%s4719] sm:$0xff]
      %s4721 = scalar_lea.vmem %s176, 7128
      %4722 = vst [vmem:[%s4721] sm:$0xff] %v4720
      %s4723 = scalar_lea.vmem %s150, 5080
      %v4724 = vld [vmem:[%s4723] sm:$0xff]
      %s4725 = scalar_lea.vmem %s176, 13272
      %4726 = vst [vmem:[%s4725] sm:$0xff] %v4724
      %s4727 = scalar_lea.vmem %s150, 15320
      %v4728 = vld [vmem:[%s4727] sm:$0xff]
      %s4729 = scalar_lea.vmem %s176, 3032
      %4730 = vst [vmem:[%s4729] sm:$0xff] %v4728
      %s4731 = scalar_lea.vmem %s150, 9176
      %v4732 = vld [vmem:[%s4731] sm:$0xff]
      %s4733 = scalar_lea.vmem %s176, 9176
      %4734 = vst [vmem:[%s4733] sm:$0xff] %v4732
      %s4735 = scalar_lea.vmem %s150, 3032
      %v4736 = vld [vmem:[%s4735] sm:$0xff]
      %s4737 = scalar_lea.vmem %s176, 15320
      %4738 = vst [vmem:[%s4737] sm:$0xff] %v4736
      %s4739 = scalar_lea.vmem %s150, 13272
      %v4740 = vld [vmem:[%s4739] sm:$0xff]
      %s4741 = scalar_lea.vmem %s176, 5080
      %4742 = vst [vmem:[%s4741] sm:$0xff] %v4740
      %s4743 = scalar_lea.vmem %s150, 7128
      %v4744 = vld [vmem:[%s4743] sm:$0xff]
      %s4745 = scalar_lea.vmem %s176, 11224
      %4746 = vst [vmem:[%s4745] sm:$0xff] %v4744
      %s4747 = scalar_lea.vmem %s150, 984
      %v4748 = vld [vmem:[%s4747] sm:$0xff]
      %s4749 = scalar_lea.vmem %s176, 17368
      %4750 = vst [vmem:[%s4749] sm:$0xff] %v4748
      %s4751 = scalar_lea.vmem %s150, 17400
      %v4752 = vld [vmem:[%s4751] sm:$0xff]
      %s4753 = scalar_lea.vmem %s176, 1016
      %4754 = vst [vmem:[%s4753] sm:$0xff] %v4752
      %s4755 = scalar_lea.vmem %s150, 11256
      %v4756 = vld [vmem:[%s4755] sm:$0xff]
      %s4757 = scalar_lea.vmem %s176, 7160
      %4758 = vst [vmem:[%s4757] sm:$0xff] %v4756
      %s4759 = scalar_lea.vmem %s150, 5112
      %v4760 = vld [vmem:[%s4759] sm:$0xff]
      %s4761 = scalar_lea.vmem %s176, 13304
      %4762 = vst [vmem:[%s4761] sm:$0xff] %v4760
      %s4763 = scalar_lea.vmem %s150, 15352
      %v4764 = vld [vmem:[%s4763] sm:$0xff]
      %s4765 = scalar_lea.vmem %s176, 3064
      %4766 = vst [vmem:[%s4765] sm:$0xff] %v4764
      %s4767 = scalar_lea.vmem %s150, 9208
      %v4768 = vld [vmem:[%s4767] sm:$0xff]
      %s4769 = scalar_lea.vmem %s176, 9208
      %4770 = vst [vmem:[%s4769] sm:$0xff] %v4768
      %s4771 = scalar_lea.vmem %s150, 3064
      %v4772 = vld [vmem:[%s4771] sm:$0xff]
      %s4773 = scalar_lea.vmem %s176, 15352
      %4774 = vst [vmem:[%s4773] sm:$0xff] %v4772
      %s4775 = scalar_lea.vmem %s150, 13304
      %v4776 = vld [vmem:[%s4775] sm:$0xff]
      %s4777 = scalar_lea.vmem %s176, 5112
      %4778 = vst [vmem:[%s4777] sm:$0xff] %v4776
      %s4779 = scalar_lea.vmem %s150, 7160
      %v4780 = vld [vmem:[%s4779] sm:$0xff]
      %s4781 = scalar_lea.vmem %s176, 11256
      %4782 = vst [vmem:[%s4781] sm:$0xff] %v4780
      %s4783 = scalar_lea.vmem %s150, 1016
      %v4784 = vld [vmem:[%s4783] sm:$0xff]
      %s4785 = scalar_lea.vmem %s176, 17400
      %4786 = vst [vmem:[%s4785] sm:$0xff] %v4784
      %s4787 = smul.u32 3, %s14
      %s4788 = smul.u32 3, %s15
      %s4789 = smul.u32 32, %s16
      %s4790 = smul.u32 4, %s17
      %p4791 = scmp.lt.s32.totalorder %s4787, 2
      %s4792 = scalar_select %p4791, %s4787, 2
      %p4793 = scmp.lt.s32.totalorder %s4788, 2
      %s4794 = scalar_select %p4793, %s4788, 2
      %p4795 = scmp.lt.s32.totalorder %s4789, 63
      %s4796 = scalar_select %p4795, %s4789, 63
      %p4797 = scmp.lt.s32.totalorder %s4790, 3
      %s4798 = scalar_select %p4797, %s4790, 3
      %s4799 = smul.addr %s4796, 4
      %s4800 = sadd.s32 %s4798, %s4799
      %s4801 = smul.addr %s4794, 256
      %s4802 = sadd.s32 %s4800, %s4801
      %s4803 = smul.addr %s4792, 768
      %s4804 = sadd.s32 %s4802, %s4803
      %s4805 = smul.addr %s4804, 8
      %s4806 = scalar_lea.vmem %s1, %s4805
      %s4807 = smul.u32 3, %s14
      %s4808 = smul.u32 3, %s15
      %s4809 = smul.u32 32, %s16
      %s4810 = smul.u32 4, %s17
    $region20: #{reverse} parent=5 // pred_fallthru
      _
    %p4811 = scmp.le.s32.totalorder 2, %s3
    // Predicated region
    $region21: #{reverse} parent=5 // pred_check
      %p4812 = pneg %p4811
    $region22: #{reverse} parent=5 // pred_check_branch
      %4814 = sbr.rel (%p4812) target = $region24
    $region23: #{reverse} parent=5 // pred_region
      %s4815 = ssub.s32 %s3, 2
      %s4816 = smul.u32 3, %s18
      %s4817 = smul.u32 3, %s19
      %s4818 = smul.u32 32, %s20
      %s4819 = smul.u32 4, %s21
      %p4820 = scmp.lt.s32.totalorder %s4816, 2
      %s4821 = scalar_select %p4820, %s4816, 2
      %p4822 = scmp.lt.s32.totalorder %s4817, 2
      %s4823 = scalar_select %p4822, %s4817, 2
      %p4824 = scmp.lt.s32.totalorder %s4818, 63
      %s4825 = scalar_select %p4824, %s4818, 63
      %p4826 = scmp.lt.s32.totalorder %s4819, 3
      %s4827 = scalar_select %p4826, %s4819, 3
      %s4828 = smul.addr %s4825, 4
      %s4829 = sadd.s32 %s4827, %s4828
      %s4830 = smul.addr %s4823, 256
      %s4831 = sadd.s32 %s4829, %s4830
      %s4832 = smul.addr %s4821, 768
      %s4833 = sadd.s32 %s4831, %s4832
      %s4834 = smul.addr %s4833, 8
      %s4835 = scalar_lea.vmem %s1, %s4834
    $region24: #{reverse} parent=5 // pred_fallthru
      _
  $region6: #{reverse} parent=0 // loop_footer
    %s7 = sadd.s32 1, %s3
  $region7: #{reverse} parent=0 // loop_footer_branch
    %2 = sbr.rel target = $region3
  $region8: #{reverse} parent=0 // loop_exit
    _

// kernel: _perceptual_loss.9
$region0: #{_perceptual_loss.9}
  #allocation0 [shape = 'u32[]', space=smem, size = 0x4, offset = 0x4, fixed_abs, tag = 'smem constant byte address 0x4 - core index']
  #allocation1 [shape = 'u32[144,128]{1,0:T(1,128)}', space=vmem, size = 0x12000, scoped, tag = 'internal scratch']
  %s0 = inlined_call_operand.vmem [shape: f32[8,512], index: 0, kind: input, shape index: {}]
  %s1 = inlined_call_operand.vmem [shape: f32[8,512], index: 1, kind: input, shape index: {}]
  %s2 = inlined_call_operand.vmem [shape: f32[16,512], index: 2, kind: output, shape index: {}]
  %s3 = sld [smem:[#allocation0]]
  $region45: #{_perceptual_loss.9} parent=0
    _
  %s5 = ssub.s32 1, %s3
  %s6 = scalar_select 0, %s5, %s3
  loop: start=0, step=1, limit=4
  $region2: #{_perceptual_loss.9} parent=0 // loop_pre_header
    _
  $region3: #{_perceptual_loss.9} parent=0 // loop_header
    %s8 = sphi 0, %s12
    %p9 = scmp.ge.s32.totalorder %s8, 4
    %s15 = sphi 0, %s27
    %s16 = sphi 0, %s23
    %s17 = sphi 0, %s15
    %s18 = sphi 0, %s16
    %s19 = sphi 0, %s17
    %s20 = sphi 0, %s18
    %s36 = sphi 0, %s38
    %s39 = sphi 0, %s36
    %s40 = sphi 0, %s39
    %s56 = sphi 0, %s40
    %s68 = sphi 0, %s70
    %s71 = sphi 0, %s68
    %s72 = sphi 0, %s71
    %s88 = sphi 0, %s72
    %s94 = sphi 0, %s96
    %s97 = sphi 0, %s94
    %s98 = sphi 0, %s97
    %s114 = sphi 0, %s98
  $region4: #{_perceptual_loss.9} parent=0 // loop_header_branch
    %11 = sbr.rel (%p9) target = $region8
  $region5: #{_perceptual_loss.9} parent=0 // loop_body
    %s13 = ssub.s32 %s8, 1
    %s14 = ssub.s32 %s8, 2
    %s21 = sadd.s32 1, %s16
    %p22 = scmp.ge.s32.totalorder %s21, 1
    %s23 = scalar_select %p22, 0, %s21
    %s24 = sadd.s32 1, %s15
    %s25 = scalar_select %p22, %s24, %s15
    %p26 = scmp.ge.s32.totalorder %s25, 2
    %s27 = scalar_select %p26, 0, %s25
    %s28 = sadd.s32 %s15, %s16
    %p29 = scmp.lt.s32.totalorder %s28, 0
    %s30 = scalar_select %p29, %s28, 0
    %s31 = sadd.s32 %s27, %s23
    %p32 = scmp.lt.s32.totalorder %s31, 0
    %s33 = scalar_select %p32, %s31, 0
    %s34 = ssub.s32 %s30, %s33
    %p35 = scmp.eq.s32.totalorder %s34, 0
    %s37 = sadd.s32 %s36, 1
    %s38 = scalar_select %p35, %s36, %s37
    %p41 = pneg %p35
    %p42 = scmp.eq.s32.totalorder %s8, 1
    %p43 = por %p41, %p42
    %p44 = scmp.ne.s32.totalorder %s36, %s39
    %p45 = scmp.eq.s32.totalorder %s8, 0
    %p46 = por %p44, %p45
    %p47 = scmp.ne.s32.totalorder %s36, %s39
    %p48 = scmp.eq.s32.totalorder %s13, 1
    %p49 = por %p47, %p48
    %p50 = scmp.ne.s32.totalorder %s39, %s40
    %p51 = scmp.eq.s32.totalorder %s13, 0
    %p52 = por %p50, %p51
    %p53 = scmp.ne.s32.totalorder %s39, %s40
    %p54 = scmp.eq.s32.totalorder %s14, 1
    %p55 = por %p53, %p54
    %p57 = scmp.ne.s32.totalorder %s40, %s56
    %p58 = scmp.eq.s32.totalorder %s14, 0
    %p59 = por %p57, %p58
    %s60 = sadd.s32 %s15, %s16
    %p61 = scmp.lt.s32.totalorder %s60, 0
    %s62 = scalar_select %p61, %s60, 0
    %s63 = sadd.s32 %s27, %s23
    %p64 = scmp.lt.s32.totalorder %s63, 0
    %s65 = scalar_select %p64, %s63, 0
    %s66 = ssub.s32 %s62, %s65
    %p67 = scmp.eq.s32.totalorder %s66, 0
    %s69 = sadd.s32 %s68, 1
    %s70 = scalar_select %p67, %s68, %s69
    %p73 = pneg %p67
    %p74 = scmp.eq.s32.totalorder %s8, 1
    %p75 = por %p73, %p74
    %p76 = scmp.ne.s32.totalorder %s68, %s71
    %p77 = scmp.eq.s32.totalorder %s8, 0
    %p78 = por %p76, %p77
    %p79 = scmp.ne.s32.totalorder %s68, %s71
    %p80 = scmp.eq.s32.totalorder %s13, 1
    %p81 = por %p79, %p80
    %p82 = scmp.ne.s32.totalorder %s71, %s72
    %p83 = scmp.eq.s32.totalorder %s13, 0
    %p84 = por %p82, %p83
    %p85 = scmp.ne.s32.totalorder %s71, %s72
    %p86 = scmp.eq.s32.totalorder %s14, 1
    %p87 = por %p85, %p86
    %p89 = scmp.ne.s32.totalorder %s72, %s88
    %p90 = scmp.eq.s32.totalorder %s14, 0
    %p91 = por %p89, %p90
    %s92 = ssub.s32 %s15, %s27
    %p93 = scmp.eq.s32.totalorder %s92, 0
    %s95 = sadd.s32 %s94, 1
    %s96 = scalar_select %p93, %s94, %s95
    %p99 = pneg %p93
    %p100 = scmp.eq.s32.totalorder %s8, 1
    %p101 = por %p99, %p100
    %p102 = scmp.ne.s32.totalorder %s94, %s97
    %p103 = scmp.eq.s32.totalorder %s8, 0
    %p104 = por %p102, %p103
    %p105 = scmp.ne.s32.totalorder %s94, %s97
    %p106 = scmp.eq.s32.totalorder %s13, 1
    %p107 = por %p105, %p106
    %p108 = scmp.ne.s32.totalorder %s97, %s98
    %p109 = scmp.eq.s32.totalorder %s13, 0
    %p110 = por %p108, %p109
    %p111 = scmp.ne.s32.totalorder %s97, %s98
    %p112 = scmp.eq.s32.totalorder %s14, 1
    %p113 = por %p111, %p112
    %p115 = scmp.ne.s32.totalorder %s98, %s114
    %p116 = scmp.eq.s32.totalorder %s14, 0
    %p117 = por %p115, %p116
    %p118 = scmp.le.s32.totalorder 1, %s8
    %p119 = scmp.lt.s32.totalorder %s8, 3
    %p120 = pnand %p118, %p119
    %p121 = pneg %p120
    // Predicated region
    $region9: #{_perceptual_loss.9} parent=5 // pred_check
      _
    $region10: #{_perceptual_loss.9} parent=5 // pred_check_branch
      %123 = sbr.rel (%p120) target = $region12
    $region11: #{_perceptual_loss.9} parent=5 // pred_region
      %s124 = ssub.s32 %s8, 1
    $region12: #{_perceptual_loss.9} parent=5 // pred_fallthru
      _
    %p125 = scmp.lt.s32.totalorder %s8, 2
    // Predicated region
    $region13: #{_perceptual_loss.9} parent=5 // pred_check
      %p126 = pneg %p125
    $region14: #{_perceptual_loss.9} parent=5 // pred_check_branch
      %128 = sbr.rel (%p126) target = $region16
    $region15: #{_perceptual_loss.9} parent=5 // pred_region
      // Predicated region
      $region17: #{_perceptual_loss.9} parent=15 // pred_check
        %p129 = pneg %p46
      $region18: #{_perceptual_loss.9} parent=15 // pred_check_branch
        %131 = sbr.rel (%p129) target = $region20
      $region19: #{_perceptual_loss.9} parent=15 // pred_region
        %s132 = sadd.s32 %s15, %s16
        %p133 = scmp.lt.s32.totalorder %s132, 0
        %s134 = scalar_select %p133, %s132, 0
        %p135 = scmp.lt.s32.totalorder %s134, 0
        %s136 = scalar_select %p135, %s134, 0
        %s137 = smul.addr %s136, 4
        %s138 = smul.addr %s137, 8
        %s139 = scalar_lea.vmem %s0, %s138
        %s140 = sadd.s32 %s15, %s16
        %p141 = scmp.lt.s32.totalorder %s140, 0
        %s142 = scalar_select %p141, %s140, 0
      $region20: #{_perceptual_loss.9} parent=15 // pred_fallthru
        _
      // Predicated region
      $region21: #{_perceptual_loss.9} parent=15 // pred_check
        %p143 = pneg %p78
      $region22: #{_perceptual_loss.9} parent=15 // pred_check_branch
        %145 = sbr.rel (%p143) target = $region24
      $region23: #{_perceptual_loss.9} parent=15 // pred_region
        %s146 = sadd.s32 %s15, %s16
        %p147 = scmp.lt.s32.totalorder %s146, 0
        %s148 = scalar_select %p147, %s146, 0
        %p149 = scmp.lt.s32.totalorder %s148, 0
        %s150 = scalar_select %p149, %s148, 0
        %s151 = smul.addr %s150, 4
        %s152 = smul.addr %s151, 8
        %s153 = scalar_lea.vmem %s1, %s152
        %s154 = sadd.s32 %s15, %s16
        %p155 = scmp.lt.s32.totalorder %s154, 0
        %s156 = scalar_select %p155, %s154, 0
      $region24: #{_perceptual_loss.9} parent=15 // pred_fallthru
        _
    $region16: #{_perceptual_loss.9} parent=5 // pred_fallthru
      _
    %p157 = scmp.le.s32.totalorder 1, %s8
    %p158 = scmp.lt.s32.totalorder %s8, 3
    %p159 = pnand %p157, %p158
    %p160 = pneg %p159
    // Predicated region
    $region25: #{_perceptual_loss.9} parent=5 // pred_check
      _
    $region26: #{_perceptual_loss.9} parent=5 // pred_check_branch
      %162 = sbr.rel (%p159) target = $region28
    $region27: #{_perceptual_loss.9} parent=5 // pred_region
      %s163 = ssub.s32 %s8, 1
      %s164 = sadd.s32 %s17, %s18
      %p165 = scmp.lt.s32.totalorder %s164, 0
      %s166 = scalar_select %p165, %s164, 0
      %p167 = scmp.lt.s32.totalorder %s166, 0
      %s168 = scalar_select %p167, %s166, 0
      %s169 = smul.addr %s168, 4
      %s170 = smul.addr %s169, 8
      %s171 = scalar_lea.vmem %s0, %s170
      %p172 = pneg %p52
      %p173 = pneg %p49
      %s174 = sadd.s32 %s17, %s18
      %p175 = scmp.lt.s32.totalorder %s174, 0
      %s176 = scalar_select %p175, %s174, 0
      %p177 = scmp.lt.s32.totalorder %s176, 0
      %s178 = scalar_select %p177, %s176, 0
      %s179 = smul.addr %s178, 4
      %s180 = smul.addr %s179, 8
      %s181 = scalar_lea.vmem %s1, %s180
      %p182 = pneg %p84
      %p183 = pneg %p81
      %p184 = pneg %p110
      %p185 = pneg %p107
      %p186 = scmp.lt.s32.totalorder %s17, 1
      %s187 = scalar_select %p186, %s17, 1
      %s188 = smul.addr %s187, 4
      %s189 = smul.addr %s188, 8
      %s190 = scalar_lea.vmem %s2, %s189
      %s191 = sadd.s32 %s17, %s18
      %p192 = scmp.lt.s32.totalorder %s191, 0
      %s193 = scalar_select %p192, %s191, 0
      %p194 = scmp.lt.s32.totalorder %s193, 0
      %s195 = scalar_select %p194, %s193, 0
      %s196 = smul.addr %s195, 4
      %s197 = smul.addr %s196, 8
      %s198 = scalar_lea.vmem %s0, %s197
      %s199 = sadd.s32 %s17, %s18
      %p200 = scmp.lt.s32.totalorder %s199, 0
      %s201 = scalar_select %p200, %s199, 0
      %s202 = sadd.s32 %s17, %s18
      %p203 = scmp.lt.s32.totalorder %s202, 0
      %s204 = scalar_select %p203, %s202, 0
      %p205 = scmp.lt.s32.totalorder %s204, 0
      %s206 = scalar_select %p205, %s204, 0
      %s207 = smul.addr %s206, 4
      %s208 = smul.addr %s207, 8
      %s209 = scalar_lea.vmem %s1, %s208
      %s210 = sadd.s32 %s17, %s18
      %p211 = scmp.lt.s32.totalorder %s210, 0
      %s212 = scalar_select %p211, %s210, 0
      %p213 = scmp.lt.s32.totalorder %s17, 1
      %s214 = scalar_select %p213, %s17, 1
      %s215 = smul.addr %s214, 4
      %s216 = smul.addr %s215, 8
      %s217 = scalar_lea.vmem %s2, %s216
      %p218 = scmp.eq.s32.totalorder %s18, 0
      // Predicated region
      $region29: #{_perceptual_loss.9} parent=27 // pred_check
        %p219 = pneg %p218
      $region30: #{_perceptual_loss.9} parent=27 // pred_check_branch
        %221 = sbr.rel (%p219) target = $region32
      $region31: #{_perceptual_loss.9} parent=27 // pred_region
        %222 = vst [vmem:[%s217] sm:$0xff] 0.0
        %223 = vst [vmem:[%s217 + $0x8] sm:$0xff] 0.0
        %224 = vst [vmem:[%s217 + $0x10] sm:$0xff] 0.0
        %225 = vst [vmem:[%s217 + $0x18] sm:$0xff] 0.0
      $region32: #{_perceptual_loss.9} parent=27 // pred_fallthru
        _
      %v226 = vld [vmem:[%s198] sm:$0xff]
      %v227 = vld [vmem:[%s198 + $0x8] sm:$0xff]
      %v228 = vld [vmem:[%s198 + $0x10] sm:$0xff]
      %v229 = vld [vmem:[%s198 + $0x18] sm:$0xff]
      %v230 = vld [vmem:[%s209] sm:$0xff]
      %v231 = vld [vmem:[%s209 + $0x8] sm:$0xff]
      %v232 = vld [vmem:[%s209 + $0x10] sm:$0xff]
      %v233 = vld [vmem:[%s209 + $0x18] sm:$0xff]
      %v234 = vsub.f32 %v226, %v230
      %v235 = vsub.f32 %v227, %v231
      %v236 = vsub.f32 %v228, %v232
      %v237 = vsub.f32 %v229, %v233
      %v238 = vand.u32 2147483647, %v234
      %v239 = vand.u32 2147483647, %v235
      %v240 = vand.u32 2147483647, %v236
      %v241 = vand.u32 2147483647, %v237
      %s242 = sadd.s32 %s17, %s18
      %s243 = smul.u32 %s242, 8
      %v244 = vlaneseq
      %v245 = vshrl.u32 %v244, 7
      %v246 = vstv %s243
      %v247 = vadd.s32 %v246, %v245
      %vm248 = vcmp.lt.s32.totalorder %v247, 8
      %v249 = vsel %vm248, %v238, 0.0
      %v250 = vsel %vm248, %v239, 0.0
      %v251 = vsel %vm248, %v240, 0.0
      %v252 = vsel %vm248, %v241, 0.0
      %v253 = vld [vmem:[%s217] sm:$0xff]
      %v254 = vld [vmem:[%s217 + $0x8] sm:$0xff]
      %v255 = vld [vmem:[%s217 + $0x10] sm:$0xff]
      %v256 = vld [vmem:[%s217 + $0x18] sm:$0xff]
      %v257 = vadd.f32 %v249, 0.0
      %v258 = vadd.f32 %v250, 0.0
      %v259 = vadd.f32 %v251, 0.0
      %v260 = vadd.f32 %v252, 0.0
      %v261 = vadd.f32 %v253, %v257
      %v262 = vadd.f32 %v254, %v258
      %v263 = vadd.f32 %v255, %v259
      %v264 = vadd.f32 %v256, %v260
      %265 = vst [vmem:[%s217] sm:$0xff] %v261
      %266 = vst [vmem:[%s217 + $0x8] sm:$0xff] %v262
      %267 = vst [vmem:[%s217 + $0x10] sm:$0xff] %v263
      %268 = vst [vmem:[%s217 + $0x18] sm:$0xff] %v264
      %p269 = scmp.lt.s32.totalorder %s17, 1
      %s270 = scalar_select %p269, %s17, 1
      %s271 = smul.addr %s270, 4
      %s272 = smul.addr %s271, 8
      %s273 = scalar_lea.vmem %s2, %s272
      // Predicated region
      $region33: #{_perceptual_loss.9} parent=27 // pred_check
        %p274 = pneg %p107
      $region34: #{_perceptual_loss.9} parent=27 // pred_check_branch
        %276 = sbr.rel (%p274) target = $region36
      $region35: #{_perceptual_loss.9} parent=27 // pred_region
        _
      $region36: #{_perceptual_loss.9} parent=27 // pred_fallthru
        _
    $region28: #{_perceptual_loss.9} parent=5 // pred_fallthru
      _
    %p277 = scmp.le.s32.totalorder 2, %s8
    // Predicated region
    $region37: #{_perceptual_loss.9} parent=5 // pred_check
      %p278 = pneg %p277
    $region38: #{_perceptual_loss.9} parent=5 // pred_check_branch
      %280 = sbr.rel (%p278) target = $region40
    $region39: #{_perceptual_loss.9} parent=5 // pred_region
      %s281 = ssub.s32 %s8, 2
      // Predicated region
      $region41: #{_perceptual_loss.9} parent=39 // pred_check
        %p282 = pneg %p113
      $region42: #{_perceptual_loss.9} parent=39 // pred_check_branch
        %284 = sbr.rel (%p282) target = $region44
      $region43: #{_perceptual_loss.9} parent=39 // pred_region
        %p285 = scmp.lt.s32.totalorder %s19, 1
        %s286 = scalar_select %p285, %s19, 1
        %s287 = smul.addr %s286, 4
        %s288 = smul.addr %s287, 8
        %s289 = scalar_lea.vmem %s2, %s288
      $region44: #{_perceptual_loss.9} parent=39 // pred_fallthru
        _
    $region40: #{_perceptual_loss.9} parent=5 // pred_fallthru
      _
  $region6: #{_perceptual_loss.9} parent=0 // loop_footer
    %s12 = sadd.s32 1, %s8
  $region7: #{_perceptual_loss.9} parent=0 // loop_footer_branch
    %7 = sbr.rel target = $region3
  $region8: #{_perceptual_loss.9} parent=0 // loop_exit
    _

</llo_original>
